<compile_context>
chip_gen: v6e
topology: v6e:2x2x1
jax: 0.10.0
libtpu: 0.0.40
codegen_flags: <defaults>
</compile_context>

<pallas_src>
import functools

import jax
import jax.numpy as jnp
from jax import lax
from jax.experimental import pallas as pl
from jax.experimental.pallas import tpu as pltpu


C_PAD = 128        # lane-padded channel width for every conv layer
F_HID = 512        # fc hidden width (already a multiple of 128)


def _round_up(n, m):
    return ((n + m - 1) // m) * m


def _pad_to(a, shape):
    pads = [(0, t - s) for s, t in zip(a.shape, shape)]
    return jnp.pad(a, pads)


def _vmem_spec(shape):
    ndim = len(shape)
    return pl.BlockSpec(shape, lambda i, _n=ndim: (0,) * _n)


# ----------------------------------------------------------------------------
# Fused kernel: conv1 (as matmul) -> conv2 -> conv3 -> fc1 -> fc2 -> fc3.
# All channel dims are padded to 128; padded channels carry exact zeros
# (zero-padded weights + zero-padded biases, and ReLU(0) == 0).
# ----------------------------------------------------------------------------
def _fused_kernel(p1_ref, w1_ref, b1_ref, w2_ref, b2_ref, w3_ref, b3_ref,
                  f1w_ref, f1b_ref, f2w_ref, f2b_ref, f3w_ref, f3b_ref,
                  out_ref, a1_ref, *, B, h1, h2, h3):
    f32 = jnp.float32
    bf16 = jnp.bfloat16

    # ---- conv1: pre-im2col'd patches [h1*h1*B, K1p] x [K1p, 128] -------------
    a1 = jnp.dot(p1_ref[...], w1_ref[...], preferred_element_type=f32)
    a1 = jnp.maximum(a1 + b1_ref[...], 0.0)
    # scratch rows ordered (ih * h1 + iw) * B + b
    a1_ref[...] = a1.astype(bf16)

    # ---- conv2: k=4, s=2, (h1 x h1) -> (h2 x h2), shifted matmul-accumulate --
    # taps outer so each [128,128] weight slab is loaded once per tap.
    b2 = b2_ref[...]
    acc2 = [jnp.zeros((B, C_PAD), f32) for _ in range(h2 * h2)]
    for kh in range(4):
        for kw in range(4):
            w_t = w2_ref[kh * 4 + kw]                       # [128, 128] bf16
            for oh in range(h2):
                for ow in range(h2):
                    r = ((oh * 2 + kh) * h1 + (ow * 2 + kw)) * B
                    p = oh * h2 + ow
                    acc2[p] = acc2[p] + jnp.dot(
                        a1_ref[r:r + B, :], w_t, preferred_element_type=f32)
    a2 = [jnp.maximum(a + b2, 0.0).astype(bf16) for a in acc2]   # [B,128] each

    # ---- conv3 (k=3, s=1) fused with the fc1 accumulation ---------------------
    # PyTorch's flatten order (c, oh3, ow3) is honored via per-position fc1
    # weight slabs, so no explicit flatten / transpose is needed.
    b3 = b3_ref[...]
    hacc = jnp.zeros((B, F_HID), f32)
    for oh in range(h3):
        for ow in range(h3):
            acc = jnp.zeros((B, C_PAD), f32)
            for kh in range(3):
                for kw in range(3):
                    acc = acc + jnp.dot(a2[(oh + kh) * h2 + (ow + kw)],
                                        w3_ref[kh * 3 + kw],
                                        preferred_element_type=f32)
            a3 = jnp.maximum(acc + b3, 0.0).astype(bf16)
            hacc = hacc + jnp.dot(a3, f1w_ref[oh * h3 + ow],
                                  preferred_element_type=f32)

    # ---- MLP head --------------------------------------------------------------
    h = jnp.maximum(hacc + f1b_ref[...], 0.0).astype(bf16)
    h = jnp.dot(h, f2w_ref[...], preferred_element_type=f32) + f2b_ref[...]
    h = jnp.maximum(h, 0.0).astype(bf16)
    out = jnp.dot(h, f3w_ref[...], preferred_element_type=f32) + f3b_ref[...]
    out_ref[...] = out.astype(out_ref.dtype)


# ----------------------------------------------------------------------------
# Wrapper glue
# ----------------------------------------------------------------------------
def _im2col_conv1(x, k=8, s=4):
    """x: [B, C, H, W] -> patches [OH*OW*B, C*k*k].
    Rows ordered (oh, ow, b); features ordered (ci, kh, kw) to match the
    OIHW weight flattening."""
    B, C, H, W = x.shape
    OH = (H - k) // s + 1
    OW = (W - k) // s + 1
    cols = []
    for ci in range(C):
        for kh in range(k):
            for kw in range(k):
                cols.append(x[:, ci, kh:kh + s * OH:s, kw:kw + s * OW:s])
    p = jnp.stack(cols, axis=-1)                       # [B, OH, OW, C*k*k]
    p = p.transpose(1, 2, 0, 3).reshape(OH * OW * B, C * k * k)
    return p, OH, OW


def _prepare_weights(params, in_ch, h3):
    bf16 = jnp.bfloat16
    f32 = jnp.float32

    k1 = in_ch * 64
    k1p = _round_up(k1, 128)
    w1 = params["c1_w"].reshape(32, k1).T                            # [k1, 32]
    w1 = _pad_to(w1, (k1p, C_PAD)).astype(bf16)
    b1 = _pad_to(params["c1_b"], (C_PAD,)).reshape(1, C_PAD).astype(f32)

    w2 = jnp.transpose(params["c2_w"], (2, 3, 1, 0))                 # [4,4,32,64]
    w2 = _pad_to(w2, (4, 4, C_PAD, C_PAD)).reshape(16, C_PAD, C_PAD).astype(bf16)
    b2 = _pad_to(params["c2_b"], (C_PAD,)).reshape(1, C_PAD).astype(f32)

    w3 = jnp.transpose(params["c3_w"], (2, 3, 1, 0))                 # [3,3,64,64]
    w3 = _pad_to(w3, (3, 3, C_PAD, C_PAD)).reshape(9, C_PAD, C_PAD).astype(bf16)
    b3 = _pad_to(params["c3_b"], (C_PAD,)).reshape(1, C_PAD).astype(f32)

    # fc1 rows follow flatten index c*h3*h3 + oh3*h3 + ow3; regroup by conv3
    # output position so the kernel accumulates per position.
    f1 = params["f1_w"].reshape(64, h3 * h3, F_HID).transpose(1, 0, 2)
    f1 = _pad_to(f1, (h3 * h3, C_PAD, F_HID)).astype(bf16)
    f1b = params["f1_b"].reshape(1, F_HID).astype(f32)

    f2 = params["f2_w"].astype(bf16)
    f2b = params["f2_b"].reshape(1, F_HID).astype(f32)

    n3 = params["f3_w"].shape[1]
    n3p = _round_up(n3, 128)
    f3 = _pad_to(params["f3_w"], (F_HID, n3p)).astype(bf16)
    f3b = _pad_to(params["f3_b"], (n3p,)).reshape(1, n3p).astype(f32)

    return (w1, b1, w2, b2, w3, b3, f1, f1b, f2, f2b, f3, f3b)


def predictor_rnd_forward(x, params):
    B, C, H, W = x.shape
    h1 = (H - 8) // 4 + 1
    h2 = (h1 - 4) // 2 + 1
    h3 = (h2 - 3) // 1 + 1
    n_out = params["f3_w"].shape[1]

    weights = _prepare_weights(params, C, h3)
    k1p = weights[0].shape[0]
    n3p = weights[-2].shape[1]

    p1, _, _ = _im2col_conv1(x)
    p1 = _pad_to(p1, (p1.shape[0], k1p)).astype(jnp.bfloat16)

    args = (p1,) + weights
    flops = 2 * (h1 * h1 * B * k1p * C_PAD
                 + h2 * h2 * 16 * B * C_PAD * C_PAD
                 + h3 * h3 * 9 * B * C_PAD * C_PAD
                 + h3 * h3 * B * C_PAD * F_HID
                 + B * F_HID * F_HID
                 + B * F_HID * n3p)
    bytes_accessed = int(sum(a.size * a.dtype.itemsize for a in args)
                         + B * n3p * 4)

    out = pl.pallas_call(
        functools.partial(_fused_kernel, B=B, h1=h1, h2=h2, h3=h3),
        out_shape=jax.ShapeDtypeStruct((B, n3p), jnp.float32),
        grid=(1,),
        in_specs=[_vmem_spec(a.shape) for a in args],
        out_specs=_vmem_spec((B, n3p)),
        scratch_shapes=[pltpu.VMEM((h1 * h1 * B, C_PAD), jnp.bfloat16)],
        compiler_params=pltpu.CompilerParams(
            dimension_semantics=("arbitrary",)),
        cost_estimate=pl.CostEstimate(flops=flops, transcendentals=0,
                                      bytes_accessed=bytes_accessed),
    )(*args)
    return out[:, :n_out]


# ----------------------------------------------------------------------------
# Pure-JAX reference (f32) for correctness check of the Pallas path
# ----------------------------------------------------------------------------
def predictor_rnd_reference(x, params):
    def conv(x, w, b, s):
        y = lax.conv_general_dilated(
            x, w, window_strides=(s, s), padding="VALID",
            dimension_numbers=("NCHW", "OIHW", "NCHW"))
        return jnp.maximum(y + b[None, :, None, None], 0.0)

    x = conv(x, params["c1_w"], params["c1_b"], 4)
    x = conv(x, params["c2_w"], params["c2_b"], 2)
    x = conv(x, params["c3_w"], params["c3_b"], 1)
    x = x.reshape(x.shape[0], -1)
    x = jnp.maximum(x @ params["f1_w"] + params["f1_b"], 0.0)
    x = jnp.maximum(x @ params["f2_w"] + params["f2_b"], 0.0)
    return x @ params["f3_w"] + params["f3_b"]


# ----------------------------------------------------------------------------
# Deterministic parameter init (shapes from Predictor_RND.__init__)
# ----------------------------------------------------------------------------
def init_params(key, in_ch, spatial, rnd_rep_size):
    h1 = (spatial - 8) // 4 + 1
    h2 = (h1 - 4) // 2 + 1
    h3 = (h2 - 3) // 1 + 1
    feat = 64 * h3 * h3

    ks = jax.random.split(key, 12)

    def w(k, shape, fan_in):
        return jax.random.normal(k, shape, jnp.float32) * (1.0 / jnp.sqrt(fan_in))

    return {
        "c1_w": w(ks[0], (32, in_ch, 8, 8), in_ch * 8 * 8),
        "c1_b": w(ks[1], (32,), in_ch * 8 * 8),
        "c2_w": w(ks[2], (64, 32, 4, 4), 32 * 4 * 4),
        "c2_b": w(ks[3], (64,), 32 * 4 * 4),
        "c3_w": w(ks[4], (64, 64, 3, 3), 64 * 3 * 3),
        "c3_b": w(ks[5], (64,), 64 * 3 * 3),
        "f1_w": w(ks[6], (feat, 512), feat),
        "f1_b": w(ks[7], (512,), feat),
        "f2_w": w(ks[8], (512, 512), 512),
        "f2_b": w(ks[9], (512,), 512),
        "f3_w": w(ks[10], (512, rnd_rep_size), 512),
        "f3_b": w(ks[11], (rnd_rep_size,), 512),
    }


if __name__ == "__main__":
    # args.state_shape[:2] = (36, 36) -> predictor input (1, 36, 36),
    # args.rnd_rep_size = 32, batch = 2.
    B, C, H = 2, 1, 36
    RND_REP = 32

    key = jax.random.PRNGKey(0)
    kx, kp = jax.random.split(key)
    x = jax.random.normal(kx, (B, C, H, H), jnp.float32)
    params = init_params(kp, C, H, RND_REP)

    fwd = jax.jit(predictor_rnd_forward)
    out = jax.block_until_ready(fwd(x, params))

    ref = jax.block_until_ready(predictor_rnd_reference(x, params))
    assert out.shape == (B, RND_REP), out.shape
    # bf16 matmuls with f32 accumulation -> loosened tolerance vs f32 reference
    assert jnp.allclose(out, ref, atol=5e-2, rtol=5e-2), \
        float(jnp.max(jnp.abs(out - ref)))

    print("KERNEL_OK")
</pallas_src>

<mosaic_0001>
module attributes {stable_mosaic.version = 11 : i64} {
  func.func @_fused_kernel(%arg0: i32, %arg1: memref<128x128xbf16, #tpu.memory_space<vmem>>, %arg2: memref<128x128xbf16, #tpu.memory_space<vmem>>, %arg3: memref<1x128xf32, #tpu.memory_space<vmem>>, %arg4: memref<16x128x128xbf16, #tpu.memory_space<vmem>>, %arg5: memref<1x128xf32, #tpu.memory_space<vmem>>, %arg6: memref<9x128x128xbf16, #tpu.memory_space<vmem>>, %arg7: memref<1x128xf32, #tpu.memory_space<vmem>>, %arg8: memref<1x128x512xbf16, #tpu.memory_space<vmem>>, %arg9: memref<1x512xf32, #tpu.memory_space<vmem>>, %arg10: memref<512x512xbf16, #tpu.memory_space<vmem>>, %arg11: memref<1x512xf32, #tpu.memory_space<vmem>>, %arg12: memref<512x128xbf16, #tpu.memory_space<vmem>>, %arg13: memref<1x128xf32, #tpu.memory_space<vmem>>, %arg14: memref<2x128xf32, #tpu.memory_space<vmem>>, %arg15: memref<128x128xbf16, #tpu.memory_space<vmem>>) attributes {dimension_semantics = [#tpu.dimension_semantics<arbitrary>], iteration_bounds = array<i64: 1>, scalar_prefetch = 0 : i64, scratch_operands = 1 : i64, tpu.core_type = #tpu.core_type<tc>, window_params = [{pipeline_mode = #tpu.pipeline_mode<synchronous>, transform_indices = @transform_0, window_bounds = array<i64: 128, 128>}, {pipeline_mode = #tpu.pipeline_mode<synchronous>, transform_indices = @transform_1, window_bounds = array<i64: 128, 128>}, {pipeline_mode = #tpu.pipeline_mode<synchronous>, transform_indices = @transform_2, window_bounds = array<i64: 1, 128>}, {pipeline_mode = #tpu.pipeline_mode<synchronous>, transform_indices = @transform_3, window_bounds = array<i64: 16, 128, 128>}, {pipeline_mode = #tpu.pipeline_mode<synchronous>, transform_indices = @transform_4, window_bounds = array<i64: 1, 128>}, {pipeline_mode = #tpu.pipeline_mode<synchronous>, transform_indices = @transform_5, window_bounds = array<i64: 9, 128, 128>}, {pipeline_mode = #tpu.pipeline_mode<synchronous>, transform_indices = @transform_6, window_bounds = array<i64: 1, 128>}, {pipeline_mode = #tpu.pipeline_mode<synchronous>, transform_indices = @transform_7, window_bounds = array<i64: 1, 128, 512>}, {pipeline_mode = #tpu.pipeline_mode<synchronous>, transform_indices = @transform_8, window_bounds = array<i64: 1, 512>}, {pipeline_mode = #tpu.pipeline_mode<synchronous>, transform_indices = @transform_9, window_bounds = array<i64: 512, 512>}, {pipeline_mode = #tpu.pipeline_mode<synchronous>, transform_indices = @transform_10, window_bounds = array<i64: 1, 512>}, {pipeline_mode = #tpu.pipeline_mode<synchronous>, transform_indices = @transform_11, window_bounds = array<i64: 512, 128>}, {pipeline_mode = #tpu.pipeline_mode<synchronous>, transform_indices = @transform_12, window_bounds = array<i64: 1, 128>}, {pipeline_mode = #tpu.pipeline_mode<synchronous>, transform_indices = @transform_13, window_bounds = array<i64: 2, 128>}]} {
    %c0 = arith.constant 0 : index
    %c0_0 = arith.constant 0 : index
    %0 = vector.load %arg1[%c0, %c0_0] : memref<128x128xbf16, #tpu.memory_space<vmem>>, vector<128x128xbf16>
    %c0_1 = arith.constant 0 : index
    %c0_2 = arith.constant 0 : index
    %1 = vector.load %arg2[%c0_1, %c0_2] : memref<128x128xbf16, #tpu.memory_space<vmem>>, vector<128x128xbf16>
    %cst = arith.constant dense<0.000000e+00> : vector<128x128xf32>
    %2 = tpu.matmul %0, %1, %cst {dimension_numbers = #tpu.dot_dimension_numbers<[1], [0], [0], [1], [0, 0, 1, 1], [], []>} : vector<128x128xbf16>, vector<128x128xbf16>, vector<128x128xf32> -> vector<128x128xf32>
    %c0_3 = arith.constant 0 : index
    %c0_4 = arith.constant 0 : index
    %3 = vector.load %arg3[%c0_3, %c0_4] : memref<1x128xf32, #tpu.memory_space<vmem>>, vector<1x128xf32>
    %4 = vector.broadcast %3 : vector<1x128xf32> to vector<128x128xf32>
    %5 = arith.addf %2, %4 : vector<128x128xf32>
    %cst_5 = arith.constant 0.000000e+00 : f32
    %6 = vector.broadcast %cst_5 : f32 to vector<128x128xf32>
    %7 = arith.maximumf %5, %6 : vector<128x128xf32>
    %8 = arith.truncf %7 : vector<128x128xf32> to vector<128x128xbf16>
    %c0_6 = arith.constant 0 : index
    %c0_7 = arith.constant 0 : index
    %9 = vector.load %arg15[%c0_6, %c0_7] : memref<128x128xbf16, #tpu.memory_space<vmem>>, vector<128x128xbf16>
    tpu.vector_store %arg15[%c0_6, %c0_7], %8 {strides = array<i32>} : memref<128x128xbf16, #tpu.memory_space<vmem>>, vector<128x128xbf16>,
    %c0_8 = arith.constant 0 : index
    %c0_9 = arith.constant 0 : index
    %10 = vector.load %arg5[%c0_8, %c0_9] : memref<1x128xf32, #tpu.memory_space<vmem>>, vector<1x128xf32>
    %cst_10 = arith.constant 0.000000e+00 : f32
    %11 = vector.broadcast %cst_10 : f32 to vector<2x128xf32>
    %cst_11 = arith.constant 0.000000e+00 : f32
    %12 = vector.broadcast %cst_11 : f32 to vector<2x128xf32>
    %cst_12 = arith.constant 0.000000e+00 : f32
    %13 = vector.broadcast %cst_12 : f32 to vector<2x128xf32>
    %cst_13 = arith.constant 0.000000e+00 : f32
    %14 = vector.broadcast %cst_13 : f32 to vector<2x128xf32>
    %cst_14 = arith.constant 0.000000e+00 : f32
    %15 = vector.broadcast %cst_14 : f32 to vector<2x128xf32>
    %cst_15 = arith.constant 0.000000e+00 : f32
    %16 = vector.broadcast %cst_15 : f32 to vector<2x128xf32>
    %cst_16 = arith.constant 0.000000e+00 : f32
    %17 = vector.broadcast %cst_16 : f32 to vector<2x128xf32>
    %cst_17 = arith.constant 0.000000e+00 : f32
    %18 = vector.broadcast %cst_17 : f32 to vector<2x128xf32>
    %cst_18 = arith.constant 0.000000e+00 : f32
    %19 = vector.broadcast %cst_18 : f32 to vector<2x128xf32>
    %c0_19 = arith.constant 0 : index
    %c0_20 = arith.constant 0 : index
    %c0_21 = arith.constant 0 : index
    %20 = vector.load %arg4[%c0_19, %c0_20, %c0_21] : memref<16x128x128xbf16, #tpu.memory_space<vmem>>, vector<1x128x128xbf16>
    %21 = vector.shape_cast %20 : vector<1x128x128xbf16> to vector<128x128xbf16>
    %c0_22 = arith.constant 0 : index
    %c0_23 = arith.constant 0 : index
    %22 = vector.load %arg15[%c0_22, %c0_23] : memref<128x128xbf16, #tpu.memory_space<vmem>>, vector<2x128xbf16>
    %cst_24 = arith.constant dense<0.000000e+00> : vector<2x128xf32>
    %23 = tpu.matmul %22, %21, %cst_24 {dimension_numbers = #tpu.dot_dimension_numbers<[1], [0], [0], [1], [0, 0, 1, 1], [], []>} : vector<2x128xbf16>, vector<128x128xbf16>, vector<2x128xf32> -> vector<2x128xf32>
    %24 = arith.addf %11, %23 : vector<2x128xf32>
    %c4 = arith.constant 4 : index
    %c0_25 = arith.constant 0 : index
    %25 = vector.load %arg15[%c4, %c0_25] : memref<128x128xbf16, #tpu.memory_space<vmem>>, vector<2x128xbf16>
    %cst_26 = arith.constant dense<0.000000e+00> : vector<2x128xf32>
    %26 = tpu.matmul %25, %21, %cst_26 {dimension_numbers = #tpu.dot_dimension_numbers<[1], [0], [0], [1], [0, 0, 1, 1], [], []>} : vector<2x128xbf16>, vector<128x128xbf16>, vector<2x128xf32> -> vector<2x128xf32>
    %27 = arith.addf %12, %26 : vector<2x128xf32>
    %c8 = arith.constant 8 : index
    %c0_27 = arith.constant 0 : index
    %28 = vector.load %arg15[%c8, %c0_27] : memref<128x128xbf16, #tpu.memory_space<vmem>>, vector<2x128xbf16>
    %cst_28 = arith.constant dense<0.000000e+00> : vector<2x128xf32>
    %29 = tpu.matmul %28, %21, %cst_28 {dimension_numbers = #tpu.dot_dimension_numbers<[1], [0], [0], [1], [0, 0, 1, 1], [], []>} : vector<2x128xbf16>, vector<128x128xbf16>, vector<2x128xf32> -> vector<2x128xf32>
    %30 = arith.addf %13, %29 : vector<2x128xf32>
    %c32 = arith.constant 32 : index
    %c0_29 = arith.constant 0 : index
    %31 = vector.load %arg15[%c32, %c0_29] : memref<128x128xbf16, #tpu.memory_space<vmem>>, vector<2x128xbf16>
    %cst_30 = arith.constant dense<0.000000e+00> : vector<2x128xf32>
    %32 = tpu.matmul %31, %21, %cst_30 {dimension_numbers = #tpu.dot_dimension_numbers<[1], [0], [0], [1], [0, 0, 1, 1], [], []>} : vector<2x128xbf16>, vector<128x128xbf16>, vector<2x128xf32> -> vector<2x128xf32>
    %33 = arith.addf %14, %32 : vector<2x128xf32>
    %c36 = arith.constant 36 : index
    %c0_31 = arith.constant 0 : index
    %34 = vector.load %arg15[%c36, %c0_31] : memref<128x128xbf16, #tpu.memory_space<vmem>>, vector<2x128xbf16>
    %cst_32 = arith.constant dense<0.000000e+00> : vector<2x128xf32>
    %35 = tpu.matmul %34, %21, %cst_32 {dimension_numbers = #tpu.dot_dimension_numbers<[1], [0], [0], [1], [0, 0, 1, 1], [], []>} : vector<2x128xbf16>, vector<128x128xbf16>, vector<2x128xf32> -> vector<2x128xf32>
    %36 = arith.addf %15, %35 : vector<2x128xf32>
    %c40 = arith.constant 40 : index
    %c0_33 = arith.constant 0 : index
    %37 = vector.load %arg15[%c40, %c0_33] : memref<128x128xbf16, #tpu.memory_space<vmem>>, vector<2x128xbf16>
    %cst_34 = arith.constant dense<0.000000e+00> : vector<2x128xf32>
    %38 = tpu.matmul %37, %21, %cst_34 {dimension_numbers = #tpu.dot_dimension_numbers<[1], [0], [0], [1], [0, 0, 1, 1], [], []>} : vector<2x128xbf16>, vector<128x128xbf16>, vector<2x128xf32> -> vector<2x128xf32>
    %39 = arith.addf %16, %38 : vector<2x128xf32>
    %c64 = arith.constant 64 : index
    %c0_35 = arith.constant 0 : index
    %40 = vector.load %arg15[%c64, %c0_35] : memref<128x128xbf16, #tpu.memory_space<vmem>>, vector<2x128xbf16>
    %cst_36 = arith.constant dense<0.000000e+00> : vector<2x128xf32>
    %41 = tpu.matmul %40, %21, %cst_36 {dimension_numbers = #tpu.dot_dimension_numbers<[1], [0], [0], [1], [0, 0, 1, 1], [], []>} : vector<2x128xbf16>, vector<128x128xbf16>, vector<2x128xf32> -> vector<2x128xf32>
    %42 = arith.addf %17, %41 : vector<2x128xf32>
    %c68 = arith.constant 68 : index
    %c0_37 = arith.constant 0 : index
    %43 = vector.load %arg15[%c68, %c0_37] : memref<128x128xbf16, #tpu.memory_space<vmem>>, vector<2x128xbf16>
    %cst_38 = arith.constant dense<0.000000e+00> : vector<2x128xf32>
    %44 = tpu.matmul %43, %21, %cst_38 {dimension_numbers = #tpu.dot_dimension_numbers<[1], [0], [0], [1], [0, 0, 1, 1], [], []>} : vector<2x128xbf16>, vector<128x128xbf16>, vector<2x128xf32> -> vector<2x128xf32>
    %45 = arith.addf %18, %44 : vector<2x128xf32>
    %c72 = arith.constant 72 : index
    %c0_39 = arith.constant 0 : index
    %46 = vector.load %arg15[%c72, %c0_39] : memref<128x128xbf16, #tpu.memory_space<vmem>>, vector<2x128xbf16>
    %cst_40 = arith.constant dense<0.000000e+00> : vector<2x128xf32>
    %47 = tpu.matmul %46, %21, %cst_40 {dimension_numbers = #tpu.dot_dimension_numbers<[1], [0], [0], [1], [0, 0, 1, 1], [], []>} : vector<2x128xbf16>, vector<128x128xbf16>, vector<2x128xf32> -> vector<2x128xf32>
    %48 = arith.addf %19, %47 : vector<2x128xf32>
    %c1 = arith.constant 1 : index
    %c0_41 = arith.constant 0 : index
    %c0_42 = arith.constant 0 : index
    %49 = vector.load %arg4[%c1, %c0_41, %c0_42] : memref<16x128x128xbf16, #tpu.memory_space<vmem>>, vector<1x128x128xbf16>
    %50 = vector.shape_cast %49 : vector<1x128x128xbf16> to vector<128x128xbf16>
    %c2 = arith.constant 2 : index
    %c0_43 = arith.constant 0 : index
    %51 = vector.load %arg15[%c2, %c0_43] : memref<128x128xbf16, #tpu.memory_space<vmem>>, vector<2x128xbf16>
    %cst_44 = arith.constant dense<0.000000e+00> : vector<2x128xf32>
    %52 = tpu.matmul %51, %50, %cst_44 {dimension_numbers = #tpu.dot_dimension_numbers<[1], [0], [0], [1], [0, 0, 1, 1], [], []>} : vector<2x128xbf16>, vector<128x128xbf16>, vector<2x128xf32> -> vector<2x128xf32>
    %53 = arith.addf %24, %52 : vector<2x128xf32>
    %c6 = arith.constant 6 : index
    %c0_45 = arith.constant 0 : index
    %54 = vector.load %arg15[%c6, %c0_45] : memref<128x128xbf16, #tpu.memory_space<vmem>>, vector<2x128xbf16>
    %cst_46 = arith.constant dense<0.000000e+00> : vector<2x128xf32>
    %55 = tpu.matmul %54, %50, %cst_46 {dimension_numbers = #tpu.dot_dimension_numbers<[1], [0], [0], [1], [0, 0, 1, 1], [], []>} : vector<2x128xbf16>, vector<128x128xbf16>, vector<2x128xf32> -> vector<2x128xf32>
    %56 = arith.addf %27, %55 : vector<2x128xf32>
    %c10 = arith.constant 10 : index
    %c0_47 = arith.constant 0 : index
    %57 = vector.load %arg15[%c10, %c0_47] : memref<128x128xbf16, #tpu.memory_space<vmem>>, vector<2x128xbf16>
    %cst_48 = arith.constant dense<0.000000e+00> : vector<2x128xf32>
    %58 = tpu.matmul %57, %50, %cst_48 {dimension_numbers = #tpu.dot_dimension_numbers<[1], [0], [0], [1], [0, 0, 1, 1], [], []>} : vector<2x128xbf16>, vector<128x128xbf16>, vector<2x128xf32> -> vector<2x128xf32>
    %59 = arith.addf %30, %58 : vector<2x128xf32>
    %c34 = arith.constant 34 : index
    %c0_49 = arith.constant 0 : index
    %60 = vector.load %arg15[%c34, %c0_49] : memref<128x128xbf16, #tpu.memory_space<vmem>>, vector<2x128xbf16>
    %cst_50 = arith.constant dense<0.000000e+00> : vector<2x128xf32>
    %61 = tpu.matmul %60, %50, %cst_50 {dimension_numbers = #tpu.dot_dimension_numbers<[1], [0], [0], [1], [0, 0, 1, 1], [], []>} : vector<2x128xbf16>, vector<128x128xbf16>, vector<2x128xf32> -> vector<2x128xf32>
    %62 = arith.addf %33, %61 : vector<2x128xf32>
    %c38 = arith.constant 38 : index
    %c0_51 = arith.constant 0 : index
    %63 = vector.load %arg15[%c38, %c0_51] : memref<128x128xbf16, #tpu.memory_space<vmem>>, vector<2x128xbf16>
    %cst_52 = arith.constant dense<0.000000e+00> : vector<2x128xf32>
    %64 = tpu.matmul %63, %50, %cst_52 {dimension_numbers = #tpu.dot_dimension_numbers<[1], [0], [0], [1], [0, 0, 1, 1], [], []>} : vector<2x128xbf16>, vector<128x128xbf16>, vector<2x128xf32> -> vector<2x128xf32>
    %65 = arith.addf %36, %64 : vector<2x128xf32>
    %c42 = arith.constant 42 : index
    %c0_53 = arith.constant 0 : index
    %66 = vector.load %arg15[%c42, %c0_53] : memref<128x128xbf16, #tpu.memory_space<vmem>>, vector<2x128xbf16>
    %cst_54 = arith.constant dense<0.000000e+00> : vector<2x128xf32>
    %67 = tpu.matmul %66, %50, %cst_54 {dimension_numbers = #tpu.dot_dimension_numbers<[1], [0], [0], [1], [0, 0, 1, 1], [], []>} : vector<2x128xbf16>, vector<128x128xbf16>, vector<2x128xf32> -> vector<2x128xf32>
    %68 = arith.addf %39, %67 : vector<2x128xf32>
    %c66 = arith.constant 66 : index
    %c0_55 = arith.constant 0 : index
    %69 = vector.load %arg15[%c66, %c0_55] : memref<128x128xbf16, #tpu.memory_space<vmem>>, vector<2x128xbf16>
    %cst_56 = arith.constant dense<0.000000e+00> : vector<2x128xf32>
    %70 = tpu.matmul %69, %50, %cst_56 {dimension_numbers = #tpu.dot_dimension_numbers<[1], [0], [0], [1], [0, 0, 1, 1], [], []>} : vector<2x128xbf16>, vector<128x128xbf16>, vector<2x128xf32> -> vector<2x128xf32>
    %71 = arith.addf %42, %70 : vector<2x128xf32>
    %c70 = arith.constant 70 : index
    %c0_57 = arith.constant 0 : index
    %72 = vector.load %arg15[%c70, %c0_57] : memref<128x128xbf16, #tpu.memory_space<vmem>>, vector<2x128xbf16>
    %cst_58 = arith.constant dense<0.000000e+00> : vector<2x128xf32>
    %73 = tpu.matmul %72, %50, %cst_58 {dimension_numbers = #tpu.dot_dimension_numbers<[1], [0], [0], [1], [0, 0, 1, 1], [], []>} : vector<2x128xbf16>, vector<128x128xbf16>, vector<2x128xf32> -> vector<2x128xf32>
    %74 = arith.addf %45, %73 : vector<2x128xf32>
    %c74 = arith.constant 74 : index
    %c0_59 = arith.constant 0 : index
    %75 = vector.load %arg15[%c74, %c0_59] : memref<128x128xbf16, #tpu.memory_space<vmem>>, vector<2x128xbf16>
    %cst_60 = arith.constant dense<0.000000e+00> : vector<2x128xf32>
    %76 = tpu.matmul %75, %50, %cst_60 {dimension_numbers = #tpu.dot_dimension_numbers<[1], [0], [0], [1], [0, 0, 1, 1], [], []>} : vector<2x128xbf16>, vector<128x128xbf16>, vector<2x128xf32> -> vector<2x128xf32>
    %77 = arith.addf %48, %76 : vector<2x128xf32>
    %c2_61 = arith.constant 2 : index
    %c0_62 = arith.constant 0 : index
    %c0_63 = arith.constant 0 : index
    %78 = vector.load %arg4[%c2_61, %c0_62, %c0_63] : memref<16x128x128xbf16, #tpu.memory_space<vmem>>, vector<1x128x128xbf16>
    %79 = vector.shape_cast %78 : vector<1x128x128xbf16> to vector<128x128xbf16>
    %c4_64 = arith.constant 4 : index
    %c0_65 = arith.constant 0 : index
    %80 = vector.load %arg15[%c4_64, %c0_65] : memref<128x128xbf16, #tpu.memory_space<vmem>>, vector<2x128xbf16>
    %cst_66 = arith.constant dense<0.000000e+00> : vector<2x128xf32>
    %81 = tpu.matmul %80, %79, %cst_66 {dimension_numbers = #tpu.dot_dimension_numbers<[1], [0], [0], [1], [0, 0, 1, 1], [], []>} : vector<2x128xbf16>, vector<128x128xbf16>, vector<2x128xf32> -> vector<2x128xf32>
    %82 = arith.addf %53, %81 : vector<2x128xf32>
    %c8_67 = arith.constant 8 : index
    %c0_68 = arith.constant 0 : index
    %83 = vector.load %arg15[%c8_67, %c0_68] : memref<128x128xbf16, #tpu.memory_space<vmem>>, vector<2x128xbf16>
    %cst_69 = arith.constant dense<0.000000e+00> : vector<2x128xf32>
    %84 = tpu.matmul %83, %79, %cst_69 {dimension_numbers = #tpu.dot_dimension_numbers<[1], [0], [0], [1], [0, 0, 1, 1], [], []>} : vector<2x128xbf16>, vector<128x128xbf16>, vector<2x128xf32> -> vector<2x128xf32>
    %85 = arith.addf %56, %84 : vector<2x128xf32>
    %c12 = arith.constant 12 : index
    %c0_70 = arith.constant 0 : index
    %86 = vector.load %arg15[%c12, %c0_70] : memref<128x128xbf16, #tpu.memory_space<vmem>>, vector<2x128xbf16>
    %cst_71 = arith.constant dense<0.000000e+00> : vector<2x128xf32>
    %87 = tpu.matmul %86, %79, %cst_71 {dimension_numbers = #tpu.dot_dimension_numbers<[1], [0], [0], [1], [0, 0, 1, 1], [], []>} : vector<2x128xbf16>, vector<128x128xbf16>, vector<2x128xf32> -> vector<2x128xf32>
    %88 = arith.addf %59, %87 : vector<2x128xf32>
    %c36_72 = arith.constant 36 : index
    %c0_73 = arith.constant 0 : index
    %89 = vector.load %arg15[%c36_72, %c0_73] : memref<128x128xbf16, #tpu.memory_space<vmem>>, vector<2x128xbf16>
    %cst_74 = arith.constant dense<0.000000e+00> : vector<2x128xf32>
    %90 = tpu.matmul %89, %79, %cst_74 {dimension_numbers = #tpu.dot_dimension_numbers<[1], [0], [0], [1], [0, 0, 1, 1], [], []>} : vector<2x128xbf16>, vector<128x128xbf16>, vector<2x128xf32> -> vector<2x128xf32>
    %91 = arith.addf %62, %90 : vector<2x128xf32>
    %c40_75 = arith.constant 40 : index
    %c0_76 = arith.constant 0 : index
    %92 = vector.load %arg15[%c40_75, %c0_76] : memref<128x128xbf16, #tpu.memory_space<vmem>>, vector<2x128xbf16>
    %cst_77 = arith.constant dense<0.000000e+00> : vector<2x128xf32>
    %93 = tpu.matmul %92, %79, %cst_77 {dimension_numbers = #tpu.dot_dimension_numbers<[1], [0], [0], [1], [0, 0, 1, 1], [], []>} : vector<2x128xbf16>, vector<128x128xbf16>, vector<2x128xf32> -> vector<2x128xf32>
    %94 = arith.addf %65, %93 : vector<2x128xf32>
    %c44 = arith.constant 44 : index
    %c0_78 = arith.constant 0 : index
    %95 = vector.load %arg15[%c44, %c0_78] : memref<128x128xbf16, #tpu.memory_space<vmem>>, vector<2x128xbf16>
    %cst_79 = arith.constant dense<0.000000e+00> : vector<2x128xf32>
    %96 = tpu.matmul %95, %79, %cst_79 {dimension_numbers = #tpu.dot_dimension_numbers<[1], [0], [0], [1], [0, 0, 1, 1], [], []>} : vector<2x128xbf16>, vector<128x128xbf16>, vector<2x128xf32> -> vector<2x128xf32>
    %97 = arith.addf %68, %96 : vector<2x128xf32>
    %c68_80 = arith.constant 68 : index
    %c0_81 = arith.constant 0 : index
    %98 = vector.load %arg15[%c68_80, %c0_81] : memref<128x128xbf16, #tpu.memory_space<vmem>>, vector<2x128xbf16>
    %cst_82 = arith.constant dense<0.000000e+00> : vector<2x128xf32>
    %99 = tpu.matmul %98, %79, %cst_82 {dimension_numbers = #tpu.dot_dimension_numbers<[1], [0], [0], [1], [0, 0, 1, 1], [], []>} : vector<2x128xbf16>, vector<128x128xbf16>, vector<2x128xf32> -> vector<2x128xf32>
    %100 = arith.addf %71, %99 : vector<2x128xf32>
    %c72_83 = arith.constant 72 : index
    %c0_84 = arith.constant 0 : index
    %101 = vector.load %arg15[%c72_83, %c0_84] : memref<128x128xbf16, #tpu.memory_space<vmem>>, vector<2x128xbf16>
    %cst_85 = arith.constant dense<0.000000e+00> : vector<2x128xf32>
    %102 = tpu.matmul %101, %79, %cst_85 {dimension_numbers = #tpu.dot_dimension_numbers<[1], [0], [0], [1], [0, 0, 1, 1], [], []>} : vector<2x128xbf16>, vector<128x128xbf16>, vector<2x128xf32> -> vector<2x128xf32>
    %103 = arith.addf %74, %102 : vector<2x128xf32>
    %c76 = arith.constant 76 : index
    %c0_86 = arith.constant 0 : index
    %104 = vector.load %arg15[%c76, %c0_86] : memref<128x128xbf16, #tpu.memory_space<vmem>>, vector<2x128xbf16>
    %cst_87 = arith.constant dense<0.000000e+00> : vector<2x128xf32>
    %105 = tpu.matmul %104, %79, %cst_87 {dimension_numbers = #tpu.dot_dimension_numbers<[1], [0], [0], [1], [0, 0, 1, 1], [], []>} : vector<2x128xbf16>, vector<128x128xbf16>, vector<2x128xf32> -> vector<2x128xf32>
    %106 = arith.addf %77, %105 : vector<2x128xf32>
    %c3 = arith.constant 3 : index
    %c0_88 = arith.constant 0 : index
    %c0_89 = arith.constant 0 : index
    %107 = vector.load %arg4[%c3, %c0_88, %c0_89] : memref<16x128x128xbf16, #tpu.memory_space<vmem>>, vector<1x128x128xbf16>
    %108 = vector.shape_cast %107 : vector<1x128x128xbf16> to vector<128x128xbf16>
    %c6_90 = arith.constant 6 : index
    %c0_91 = arith.constant 0 : index
    %109 = vector.load %arg15[%c6_90, %c0_91] : memref<128x128xbf16, #tpu.memory_space<vmem>>, vector<2x128xbf16>
    %cst_92 = arith.constant dense<0.000000e+00> : vector<2x128xf32>
    %110 = tpu.matmul %109, %108, %cst_92 {dimension_numbers = #tpu.dot_dimension_numbers<[1], [0], [0], [1], [0, 0, 1, 1], [], []>} : vector<2x128xbf16>, vector<128x128xbf16>, vector<2x128xf32> -> vector<2x128xf32>
    %111 = arith.addf %82, %110 : vector<2x128xf32>
    %c10_93 = arith.constant 10 : index
    %c0_94 = arith.constant 0 : index
    %112 = vector.load %arg15[%c10_93, %c0_94] : memref<128x128xbf16, #tpu.memory_space<vmem>>, vector<2x128xbf16>
    %cst_95 = arith.constant dense<0.000000e+00> : vector<2x128xf32>
    %113 = tpu.matmul %112, %108, %cst_95 {dimension_numbers = #tpu.dot_dimension_numbers<[1], [0], [0], [1], [0, 0, 1, 1], [], []>} : vector<2x128xbf16>, vector<128x128xbf16>, vector<2x128xf32> -> vector<2x128xf32>
    %114 = arith.addf %85, %113 : vector<2x128xf32>
    %c14 = arith.constant 14 : index
    %c0_96 = arith.constant 0 : index
    %115 = vector.load %arg15[%c14, %c0_96] : memref<128x128xbf16, #tpu.memory_space<vmem>>, vector<2x128xbf16>
    %cst_97 = arith.constant dense<0.000000e+00> : vector<2x128xf32>
    %116 = tpu.matmul %115, %108, %cst_97 {dimension_numbers = #tpu.dot_dimension_numbers<[1], [0], [0], [1], [0, 0, 1, 1], [], []>} : vector<2x128xbf16>, vector<128x128xbf16>, vector<2x128xf32> -> vector<2x128xf32>
    %117 = arith.addf %88, %116 : vector<2x128xf32>
    %c38_98 = arith.constant 38 : index
    %c0_99 = arith.constant 0 : index
    %118 = vector.load %arg15[%c38_98, %c0_99] : memref<128x128xbf16, #tpu.memory_space<vmem>>, vector<2x128xbf16>
    %cst_100 = arith.constant dense<0.000000e+00> : vector<2x128xf32>
    %119 = tpu.matmul %118, %108, %cst_100 {dimension_numbers = #tpu.dot_dimension_numbers<[1], [0], [0], [1], [0, 0, 1, 1], [], []>} : vector<2x128xbf16>, vector<128x128xbf16>, vector<2x128xf32> -> vector<2x128xf32>
    %120 = arith.addf %91, %119 : vector<2x128xf32>
    %c42_101 = arith.constant 42 : index
    %c0_102 = arith.constant 0 : index
    %121 = vector.load %arg15[%c42_101, %c0_102] : memref<128x128xbf16, #tpu.memory_space<vmem>>, vector<2x128xbf16>
    %cst_103 = arith.constant dense<0.000000e+00> : vector<2x128xf32>
    %122 = tpu.matmul %121, %108, %cst_103 {dimension_numbers = #tpu.dot_dimension_numbers<[1], [0], [0], [1], [0, 0, 1, 1], [], []>} : vector<2x128xbf16>, vector<128x128xbf16>, vector<2x128xf32> -> vector<2x128xf32>
    %123 = arith.addf %94, %122 : vector<2x128xf32>
    %c46 = arith.constant 46 : index
    %c0_104 = arith.constant 0 : index
    %124 = vector.load %arg15[%c46, %c0_104] : memref<128x128xbf16, #tpu.memory_space<vmem>>, vector<2x128xbf16>
    %cst_105 = arith.constant dense<0.000000e+00> : vector<2x128xf32>
    %125 = tpu.matmul %124, %108, %cst_105 {dimension_numbers = #tpu.dot_dimension_numbers<[1], [0], [0], [1], [0, 0, 1, 1], [], []>} : vector<2x128xbf16>, vector<128x128xbf16>, vector<2x128xf32> -> vector<2x128xf32>
    %126 = arith.addf %97, %125 : vector<2x128xf32>
    %c70_106 = arith.constant 70 : index
    %c0_107 = arith.constant 0 : index
    %127 = vector.load %arg15[%c70_106, %c0_107] : memref<128x128xbf16, #tpu.memory_space<vmem>>, vector<2x128xbf16>
    %cst_108 = arith.constant dense<0.000000e+00> : vector<2x128xf32>
    %128 = tpu.matmul %127, %108, %cst_108 {dimension_numbers = #tpu.dot_dimension_numbers<[1], [0], [0], [1], [0, 0, 1, 1], [], []>} : vector<2x128xbf16>, vector<128x128xbf16>, vector<2x128xf32> -> vector<2x128xf32>
    %129 = arith.addf %100, %128 : vector<2x128xf32>
    %c74_109 = arith.constant 74 : index
    %c0_110 = arith.constant 0 : index
    %130 = vector.load %arg15[%c74_109, %c0_110] : memref<128x128xbf16, #tpu.memory_space<vmem>>, vector<2x128xbf16>
    %cst_111 = arith.constant dense<0.000000e+00> : vector<2x128xf32>
    %131 = tpu.matmul %130, %108, %cst_111 {dimension_numbers = #tpu.dot_dimension_numbers<[1], [0], [0], [1], [0, 0, 1, 1], [], []>} : vector<2x128xbf16>, vector<128x128xbf16>, vector<2x128xf32> -> vector<2x128xf32>
    %132 = arith.addf %103, %131 : vector<2x128xf32>
    %c78 = arith.constant 78 : index
    %c0_112 = arith.constant 0 : index
    %133 = vector.load %arg15[%c78, %c0_112] : memref<128x128xbf16, #tpu.memory_space<vmem>>, vector<2x128xbf16>
    %cst_113 = arith.constant dense<0.000000e+00> : vector<2x128xf32>
    %134 = tpu.matmul %133, %108, %cst_113 {dimension_numbers = #tpu.dot_dimension_numbers<[1], [0], [0], [1], [0, 0, 1, 1], [], []>} : vector<2x128xbf16>, vector<128x128xbf16>, vector<2x128xf32> -> vector<2x128xf32>
    %135 = arith.addf %106, %134 : vector<2x128xf32>
    %c4_114 = arith.constant 4 : index
    %c0_115 = arith.constant 0 : index
    %c0_116 = arith.constant 0 : index
    %136 = vector.load %arg4[%c4_114, %c0_115, %c0_116] : memref<16x128x128xbf16, #tpu.memory_space<vmem>>, vector<1x128x128xbf16>
    %137 = vector.shape_cast %136 : vector<1x128x128xbf16> to vector<128x128xbf16>
    %c16 = arith.constant 16 : index
    %c0_117 = arith.constant 0 : index
    %138 = vector.load %arg15[%c16, %c0_117] : memref<128x128xbf16, #tpu.memory_space<vmem>>, vector<2x128xbf16>
    %cst_118 = arith.constant dense<0.000000e+00> : vector<2x128xf32>
    %139 = tpu.matmul %138, %137, %cst_118 {dimension_numbers = #tpu.dot_dimension_numbers<[1], [0], [0], [1], [0, 0, 1, 1], [], []>} : vector<2x128xbf16>, vector<128x128xbf16>, vector<2x128xf32> -> vector<2x128xf32>
    %140 = arith.addf %111, %139 : vector<2x128xf32>
    %c20 = arith.constant 20 : index
    %c0_119 = arith.constant 0 : index
    %141 = vector.load %arg15[%c20, %c0_119] : memref<128x128xbf16, #tpu.memory_space<vmem>>, vector<2x128xbf16>
    %cst_120 = arith.constant dense<0.000000e+00> : vector<2x128xf32>
    %142 = tpu.matmul %141, %137, %cst_120 {dimension_numbers = #tpu.dot_dimension_numbers<[1], [0], [0], [1], [0, 0, 1, 1], [], []>} : vector<2x128xbf16>, vector<128x128xbf16>, vector<2x128xf32> -> vector<2x128xf32>
    %143 = arith.addf %114, %142 : vector<2x128xf32>
    %c24 = arith.constant 24 : index
    %c0_121 = arith.constant 0 : index
    %144 = vector.load %arg15[%c24, %c0_121] : memref<128x128xbf16, #tpu.memory_space<vmem>>, vector<2x128xbf16>
    %cst_122 = arith.constant dense<0.000000e+00> : vector<2x128xf32>
    %145 = tpu.matmul %144, %137, %cst_122 {dimension_numbers = #tpu.dot_dimension_numbers<[1], [0], [0], [1], [0, 0, 1, 1], [], []>} : vector<2x128xbf16>, vector<128x128xbf16>, vector<2x128xf32> -> vector<2x128xf32>
    %146 = arith.addf %117, %145 : vector<2x128xf32>
    %c48 = arith.constant 48 : index
    %c0_123 = arith.constant 0 : index
    %147 = vector.load %arg15[%c48, %c0_123] : memref<128x128xbf16, #tpu.memory_space<vmem>>, vector<2x128xbf16>
    %cst_124 = arith.constant dense<0.000000e+00> : vector<2x128xf32>
    %148 = tpu.matmul %147, %137, %cst_124 {dimension_numbers = #tpu.dot_dimension_numbers<[1], [0], [0], [1], [0, 0, 1, 1], [], []>} : vector<2x128xbf16>, vector<128x128xbf16>, vector<2x128xf32> -> vector<2x128xf32>
    %149 = arith.addf %120, %148 : vector<2x128xf32>
    %c52 = arith.constant 52 : index
    %c0_125 = arith.constant 0 : index
    %150 = vector.load %arg15[%c52, %c0_125] : memref<128x128xbf16, #tpu.memory_space<vmem>>, vector<2x128xbf16>
    %cst_126 = arith.constant dense<0.000000e+00> : vector<2x128xf32>
    %151 = tpu.matmul %150, %137, %cst_126 {dimension_numbers = #tpu.dot_dimension_numbers<[1], [0], [0], [1], [0, 0, 1, 1], [], []>} : vector<2x128xbf16>, vector<128x128xbf16>, vector<2x128xf32> -> vector<2x128xf32>
    %152 = arith.addf %123, %151 : vector<2x128xf32>
    %c56 = arith.constant 56 : index
    %c0_127 = arith.constant 0 : index
    %153 = vector.load %arg15[%c56, %c0_127] : memref<128x128xbf16, #tpu.memory_space<vmem>>, vector<2x128xbf16>
    %cst_128 = arith.constant dense<0.000000e+00> : vector<2x128xf32>
    %154 = tpu.matmul %153, %137, %cst_128 {dimension_numbers = #tpu.dot_dimension_numbers<[1], [0], [0], [1], [0, 0, 1, 1], [], []>} : vector<2x128xbf16>, vector<128x128xbf16>, vector<2x128xf32> -> vector<2x128xf32>
    %155 = arith.addf %126, %154 : vector<2x128xf32>
    %c80 = arith.constant 80 : index
    %c0_129 = arith.constant 0 : index
    %156 = vector.load %arg15[%c80, %c0_129] : memref<128x128xbf16, #tpu.memory_space<vmem>>, vector<2x128xbf16>
    %cst_130 = arith.constant dense<0.000000e+00> : vector<2x128xf32>
    %157 = tpu.matmul %156, %137, %cst_130 {dimension_numbers = #tpu.dot_dimension_numbers<[1], [0], [0], [1], [0, 0, 1, 1], [], []>} : vector<2x128xbf16>, vector<128x128xbf16>, vector<2x128xf32> -> vector<2x128xf32>
    %158 = arith.addf %129, %157 : vector<2x128xf32>
    %c84 = arith.constant 84 : index
    %c0_131 = arith.constant 0 : index
    %159 = vector.load %arg15[%c84, %c0_131] : memref<128x128xbf16, #tpu.memory_space<vmem>>, vector<2x128xbf16>
    %cst_132 = arith.constant dense<0.000000e+00> : vector<2x128xf32>
    %160 = tpu.matmul %159, %137, %cst_132 {dimension_numbers = #tpu.dot_dimension_numbers<[1], [0], [0], [1], [0, 0, 1, 1], [], []>} : vector<2x128xbf16>, vector<128x128xbf16>, vector<2x128xf32> -> vector<2x128xf32>
    %161 = arith.addf %132, %160 : vector<2x128xf32>
    %c88 = arith.constant 88 : index
    %c0_133 = arith.constant 0 : index
    %162 = vector.load %arg15[%c88, %c0_133] : memref<128x128xbf16, #tpu.memory_space<vmem>>, vector<2x128xbf16>
    %cst_134 = arith.constant dense<0.000000e+00> : vector<2x128xf32>
    %163 = tpu.matmul %162, %137, %cst_134 {dimension_numbers = #tpu.dot_dimension_numbers<[1], [0], [0], [1], [0, 0, 1, 1], [], []>} : vector<2x128xbf16>, vector<128x128xbf16>, vector<2x128xf32> -> vector<2x128xf32>
    %164 = arith.addf %135, %163 : vector<2x128xf32>
    %c5 = arith.constant 5 : index
    %c0_135 = arith.constant 0 : index
    %c0_136 = arith.constant 0 : index
    %165 = vector.load %arg4[%c5, %c0_135, %c0_136] : memref<16x128x128xbf16, #tpu.memory_space<vmem>>, vector<1x128x128xbf16>
    %166 = vector.shape_cast %165 : vector<1x128x128xbf16> to vector<128x128xbf16>
    %c18 = arith.constant 18 : index
    %c0_137 = arith.constant 0 : index
    %167 = vector.load %arg15[%c18, %c0_137] : memref<128x128xbf16, #tpu.memory_space<vmem>>, vector<2x128xbf16>
    %cst_138 = arith.constant dense<0.000000e+00> : vector<2x128xf32>
    %168 = tpu.matmul %167, %166, %cst_138 {dimension_numbers = #tpu.dot_dimension_numbers<[1], [0], [0], [1], [0, 0, 1, 1], [], []>} : vector<2x128xbf16>, vector<128x128xbf16>, vector<2x128xf32> -> vector<2x128xf32>
    %169 = arith.addf %140, %168 : vector<2x128xf32>
    %c22 = arith.constant 22 : index
    %c0_139 = arith.constant 0 : index
    %170 = vector.load %arg15[%c22, %c0_139] : memref<128x128xbf16, #tpu.memory_space<vmem>>, vector<2x128xbf16>
    %cst_140 = arith.constant dense<0.000000e+00> : vector<2x128xf32>
    %171 = tpu.matmul %170, %166, %cst_140 {dimension_numbers = #tpu.dot_dimension_numbers<[1], [0], [0], [1], [0, 0, 1, 1], [], []>} : vector<2x128xbf16>, vector<128x128xbf16>, vector<2x128xf32> -> vector<2x128xf32>
    %172 = arith.addf %143, %171 : vector<2x128xf32>
    %c26 = arith.constant 26 : index
    %c0_141 = arith.constant 0 : index
    %173 = vector.load %arg15[%c26, %c0_141] : memref<128x128xbf16, #tpu.memory_space<vmem>>, vector<2x128xbf16>
    %cst_142 = arith.constant dense<0.000000e+00> : vector<2x128xf32>
    %174 = tpu.matmul %173, %166, %cst_142 {dimension_numbers = #tpu.dot_dimension_numbers<[1], [0], [0], [1], [0, 0, 1, 1], [], []>} : vector<2x128xbf16>, vector<128x128xbf16>, vector<2x128xf32> -> vector<2x128xf32>
    %175 = arith.addf %146, %174 : vector<2x128xf32>
    %c50 = arith.constant 50 : index
    %c0_143 = arith.constant 0 : index
    %176 = vector.load %arg15[%c50, %c0_143] : memref<128x128xbf16, #tpu.memory_space<vmem>>, vector<2x128xbf16>
    %cst_144 = arith.constant dense<0.000000e+00> : vector<2x128xf32>
    %177 = tpu.matmul %176, %166, %cst_144 {dimension_numbers = #tpu.dot_dimension_numbers<[1], [0], [0], [1], [0, 0, 1, 1], [], []>} : vector<2x128xbf16>, vector<128x128xbf16>, vector<2x128xf32> -> vector<2x128xf32>
    %178 = arith.addf %149, %177 : vector<2x128xf32>
    %c54 = arith.constant 54 : index
    %c0_145 = arith.constant 0 : index
    %179 = vector.load %arg15[%c54, %c0_145] : memref<128x128xbf16, #tpu.memory_space<vmem>>, vector<2x128xbf16>
    %cst_146 = arith.constant dense<0.000000e+00> : vector<2x128xf32>
    %180 = tpu.matmul %179, %166, %cst_146 {dimension_numbers = #tpu.dot_dimension_numbers<[1], [0], [0], [1], [0, 0, 1, 1], [], []>} : vector<2x128xbf16>, vector<128x128xbf16>, vector<2x128xf32> -> vector<2x128xf32>
    %181 = arith.addf %152, %180 : vector<2x128xf32>
    %c58 = arith.constant 58 : index
    %c0_147 = arith.constant 0 : index
    %182 = vector.load %arg15[%c58, %c0_147] : memref<128x128xbf16, #tpu.memory_space<vmem>>, vector<2x128xbf16>
    %cst_148 = arith.constant dense<0.000000e+00> : vector<2x128xf32>
    %183 = tpu.matmul %182, %166, %cst_148 {dimension_numbers = #tpu.dot_dimension_numbers<[1], [0], [0], [1], [0, 0, 1, 1], [], []>} : vector<2x128xbf16>, vector<128x128xbf16>, vector<2x128xf32> -> vector<2x128xf32>
    %184 = arith.addf %155, %183 : vector<2x128xf32>
    %c82 = arith.constant 82 : index
    %c0_149 = arith.constant 0 : index
    %185 = vector.load %arg15[%c82, %c0_149] : memref<128x128xbf16, #tpu.memory_space<vmem>>, vector<2x128xbf16>
    %cst_150 = arith.constant dense<0.000000e+00> : vector<2x128xf32>
    %186 = tpu.matmul %185, %166, %cst_150 {dimension_numbers = #tpu.dot_dimension_numbers<[1], [0], [0], [1], [0, 0, 1, 1], [], []>} : vector<2x128xbf16>, vector<128x128xbf16>, vector<2x128xf32> -> vector<2x128xf32>
    %187 = arith.addf %158, %186 : vector<2x128xf32>
    %c86 = arith.constant 86 : index
    %c0_151 = arith.constant 0 : index
    %188 = vector.load %arg15[%c86, %c0_151] : memref<128x128xbf16, #tpu.memory_space<vmem>>, vector<2x128xbf16>
    %cst_152 = arith.constant dense<0.000000e+00> : vector<2x128xf32>
    %189 = tpu.matmul %188, %166, %cst_152 {dimension_numbers = #tpu.dot_dimension_numbers<[1], [0], [0], [1], [0, 0, 1, 1], [], []>} : vector<2x128xbf16>, vector<128x128xbf16>, vector<2x128xf32> -> vector<2x128xf32>
    %190 = arith.addf %161, %189 : vector<2x128xf32>
    %c90 = arith.constant 90 : index
    %c0_153 = arith.constant 0 : index
    %191 = vector.load %arg15[%c90, %c0_153] : memref<128x128xbf16, #tpu.memory_space<vmem>>, vector<2x128xbf16>
    %cst_154 = arith.constant dense<0.000000e+00> : vector<2x128xf32>
    %192 = tpu.matmul %191, %166, %cst_154 {dimension_numbers = #tpu.dot_dimension_numbers<[1], [0], [0], [1], [0, 0, 1, 1], [], []>} : vector<2x128xbf16>, vector<128x128xbf16>, vector<2x128xf32> -> vector<2x128xf32>
    %193 = arith.addf %164, %192 : vector<2x128xf32>
    %c6_155 = arith.constant 6 : index
    %c0_156 = arith.constant 0 : index
    %c0_157 = arith.constant 0 : index
    %194 = vector.load %arg4[%c6_155, %c0_156, %c0_157] : memref<16x128x128xbf16, #tpu.memory_space<vmem>>, vector<1x128x128xbf16>
    %195 = vector.shape_cast %194 : vector<1x128x128xbf16> to vector<128x128xbf16>
    %c20_158 = arith.constant 20 : index
    %c0_159 = arith.constant 0 : index
    %196 = vector.load %arg15[%c20_158, %c0_159] : memref<128x128xbf16, #tpu.memory_space<vmem>>, vector<2x128xbf16>
    %cst_160 = arith.constant dense<0.000000e+00> : vector<2x128xf32>
    %197 = tpu.matmul %196, %195, %cst_160 {dimension_numbers = #tpu.dot_dimension_numbers<[1], [0], [0], [1], [0, 0, 1, 1], [], []>} : vector<2x128xbf16>, vector<128x128xbf16>, vector<2x128xf32> -> vector<2x128xf32>
    %198 = arith.addf %169, %197 : vector<2x128xf32>
    %c24_161 = arith.constant 24 : index
    %c0_162 = arith.constant 0 : index
    %199 = vector.load %arg15[%c24_161, %c0_162] : memref<128x128xbf16, #tpu.memory_space<vmem>>, vector<2x128xbf16>
    %cst_163 = arith.constant dense<0.000000e+00> : vector<2x128xf32>
    %200 = tpu.matmul %199, %195, %cst_163 {dimension_numbers = #tpu.dot_dimension_numbers<[1], [0], [0], [1], [0, 0, 1, 1], [], []>} : vector<2x128xbf16>, vector<128x128xbf16>, vector<2x128xf32> -> vector<2x128xf32>
    %201 = arith.addf %172, %200 : vector<2x128xf32>
    %c28 = arith.constant 28 : index
    %c0_164 = arith.constant 0 : index
    %202 = vector.load %arg15[%c28, %c0_164] : memref<128x128xbf16, #tpu.memory_space<vmem>>, vector<2x128xbf16>
    %cst_165 = arith.constant dense<0.000000e+00> : vector<2x128xf32>
    %203 = tpu.matmul %202, %195, %cst_165 {dimension_numbers = #tpu.dot_dimension_numbers<[1], [0], [0], [1], [0, 0, 1, 1], [], []>} : vector<2x128xbf16>, vector<128x128xbf16>, vector<2x128xf32> -> vector<2x128xf32>
    %204 = arith.addf %175, %203 : vector<2x128xf32>
    %c52_166 = arith.constant 52 : index
    %c0_167 = arith.constant 0 : index
    %205 = vector.load %arg15[%c52_166, %c0_167] : memref<128x128xbf16, #tpu.memory_space<vmem>>, vector<2x128xbf16>
    %cst_168 = arith.constant dense<0.000000e+00> : vector<2x128xf32>
    %206 = tpu.matmul %205, %195, %cst_168 {dimension_numbers = #tpu.dot_dimension_numbers<[1], [0], [0], [1], [0, 0, 1, 1], [], []>} : vector<2x128xbf16>, vector<128x128xbf16>, vector<2x128xf32> -> vector<2x128xf32>
    %207 = arith.addf %178, %206 : vector<2x128xf32>
    %c56_169 = arith.constant 56 : index
    %c0_170 = arith.constant 0 : index
    %208 = vector.load %arg15[%c56_169, %c0_170] : memref<128x128xbf16, #tpu.memory_space<vmem>>, vector<2x128xbf16>
    %cst_171 = arith.constant dense<0.000000e+00> : vector<2x128xf32>
    %209 = tpu.matmul %208, %195, %cst_171 {dimension_numbers = #tpu.dot_dimension_numbers<[1], [0], [0], [1], [0, 0, 1, 1], [], []>} : vector<2x128xbf16>, vector<128x128xbf16>, vector<2x128xf32> -> vector<2x128xf32>
    %210 = arith.addf %181, %209 : vector<2x128xf32>
    %c60 = arith.constant 60 : index
    %c0_172 = arith.constant 0 : index
    %211 = vector.load %arg15[%c60, %c0_172] : memref<128x128xbf16, #tpu.memory_space<vmem>>, vector<2x128xbf16>
    %cst_173 = arith.constant dense<0.000000e+00> : vector<2x128xf32>
    %212 = tpu.matmul %211, %195, %cst_173 {dimension_numbers = #tpu.dot_dimension_numbers<[1], [0], [0], [1], [0, 0, 1, 1], [], []>} : vector<2x128xbf16>, vector<128x128xbf16>, vector<2x128xf32> -> vector<2x128xf32>
    %213 = arith.addf %184, %212 : vector<2x128xf32>
    %c84_174 = arith.constant 84 : index
    %c0_175 = arith.constant 0 : index
    %214 = vector.load %arg15[%c84_174, %c0_175] : memref<128x128xbf16, #tpu.memory_space<vmem>>, vector<2x128xbf16>
    %cst_176 = arith.constant dense<0.000000e+00> : vector<2x128xf32>
    %215 = tpu.matmul %214, %195, %cst_176 {dimension_numbers = #tpu.dot_dimension_numbers<[1], [0], [0], [1], [0, 0, 1, 1], [], []>} : vector<2x128xbf16>, vector<128x128xbf16>, vector<2x128xf32> -> vector<2x128xf32>
    %216 = arith.addf %187, %215 : vector<2x128xf32>
    %c88_177 = arith.constant 88 : index
    %c0_178 = arith.constant 0 : index
    %217 = vector.load %arg15[%c88_177, %c0_178] : memref<128x128xbf16, #tpu.memory_space<vmem>>, vector<2x128xbf16>
    %cst_179 = arith.constant dense<0.000000e+00> : vector<2x128xf32>
    %218 = tpu.matmul %217, %195, %cst_179 {dimension_numbers = #tpu.dot_dimension_numbers<[1], [0], [0], [1], [0, 0, 1, 1], [], []>} : vector<2x128xbf16>, vector<128x128xbf16>, vector<2x128xf32> -> vector<2x128xf32>
    %219 = arith.addf %190, %218 : vector<2x128xf32>
    %c92 = arith.constant 92 : index
    %c0_180 = arith.constant 0 : index
    %220 = vector.load %arg15[%c92, %c0_180] : memref<128x128xbf16, #tpu.memory_space<vmem>>, vector<2x128xbf16>
    %cst_181 = arith.constant dense<0.000000e+00> : vector<2x128xf32>
    %221 = tpu.matmul %220, %195, %cst_181 {dimension_numbers = #tpu.dot_dimension_numbers<[1], [0], [0], [1], [0, 0, 1, 1], [], []>} : vector<2x128xbf16>, vector<128x128xbf16>, vector<2x128xf32> -> vector<2x128xf32>
    %222 = arith.addf %193, %221 : vector<2x128xf32>
    %c7 = arith.constant 7 : index
    %c0_182 = arith.constant 0 : index
    %c0_183 = arith.constant 0 : index
    %223 = vector.load %arg4[%c7, %c0_182, %c0_183] : memref<16x128x128xbf16, #tpu.memory_space<vmem>>, vector<1x128x128xbf16>
    %224 = vector.shape_cast %223 : vector<1x128x128xbf16> to vector<128x128xbf16>
    %c22_184 = arith.constant 22 : index
    %c0_185 = arith.constant 0 : index
    %225 = vector.load %arg15[%c22_184, %c0_185] : memref<128x128xbf16, #tpu.memory_space<vmem>>, vector<2x128xbf16>
    %cst_186 = arith.constant dense<0.000000e+00> : vector<2x128xf32>
    %226 = tpu.matmul %225, %224, %cst_186 {dimension_numbers = #tpu.dot_dimension_numbers<[1], [0], [0], [1], [0, 0, 1, 1], [], []>} : vector<2x128xbf16>, vector<128x128xbf16>, vector<2x128xf32> -> vector<2x128xf32>
    %227 = arith.addf %198, %226 : vector<2x128xf32>
    %c26_187 = arith.constant 26 : index
    %c0_188 = arith.constant 0 : index
    %228 = vector.load %arg15[%c26_187, %c0_188] : memref<128x128xbf16, #tpu.memory_space<vmem>>, vector<2x128xbf16>
    %cst_189 = arith.constant dense<0.000000e+00> : vector<2x128xf32>
    %229 = tpu.matmul %228, %224, %cst_189 {dimension_numbers = #tpu.dot_dimension_numbers<[1], [0], [0], [1], [0, 0, 1, 1], [], []>} : vector<2x128xbf16>, vector<128x128xbf16>, vector<2x128xf32> -> vector<2x128xf32>
    %230 = arith.addf %201, %229 : vector<2x128xf32>
    %c30 = arith.constant 30 : index
    %c0_190 = arith.constant 0 : index
    %231 = vector.load %arg15[%c30, %c0_190] : memref<128x128xbf16, #tpu.memory_space<vmem>>, vector<2x128xbf16>
    %cst_191 = arith.constant dense<0.000000e+00> : vector<2x128xf32>
    %232 = tpu.matmul %231, %224, %cst_191 {dimension_numbers = #tpu.dot_dimension_numbers<[1], [0], [0], [1], [0, 0, 1, 1], [], []>} : vector<2x128xbf16>, vector<128x128xbf16>, vector<2x128xf32> -> vector<2x128xf32>
    %233 = arith.addf %204, %232 : vector<2x128xf32>
    %c54_192 = arith.constant 54 : index
    %c0_193 = arith.constant 0 : index
    %234 = vector.load %arg15[%c54_192, %c0_193] : memref<128x128xbf16, #tpu.memory_space<vmem>>, vector<2x128xbf16>
    %cst_194 = arith.constant dense<0.000000e+00> : vector<2x128xf32>
    %235 = tpu.matmul %234, %224, %cst_194 {dimension_numbers = #tpu.dot_dimension_numbers<[1], [0], [0], [1], [0, 0, 1, 1], [], []>} : vector<2x128xbf16>, vector<128x128xbf16>, vector<2x128xf32> -> vector<2x128xf32>
    %236 = arith.addf %207, %235 : vector<2x128xf32>
    %c58_195 = arith.constant 58 : index
    %c0_196 = arith.constant 0 : index
    %237 = vector.load %arg15[%c58_195, %c0_196] : memref<128x128xbf16, #tpu.memory_space<vmem>>, vector<2x128xbf16>
    %cst_197 = arith.constant dense<0.000000e+00> : vector<2x128xf32>
    %238 = tpu.matmul %237, %224, %cst_197 {dimension_numbers = #tpu.dot_dimension_numbers<[1], [0], [0], [1], [0, 0, 1, 1], [], []>} : vector<2x128xbf16>, vector<128x128xbf16>, vector<2x128xf32> -> vector<2x128xf32>
    %239 = arith.addf %210, %238 : vector<2x128xf32>
    %c62 = arith.constant 62 : index
    %c0_198 = arith.constant 0 : index
    %240 = vector.load %arg15[%c62, %c0_198] : memref<128x128xbf16, #tpu.memory_space<vmem>>, vector<2x128xbf16>
    %cst_199 = arith.constant dense<0.000000e+00> : vector<2x128xf32>
    %241 = tpu.matmul %240, %224, %cst_199 {dimension_numbers = #tpu.dot_dimension_numbers<[1], [0], [0], [1], [0, 0, 1, 1], [], []>} : vector<2x128xbf16>, vector<128x128xbf16>, vector<2x128xf32> -> vector<2x128xf32>
    %242 = arith.addf %213, %241 : vector<2x128xf32>
    %c86_200 = arith.constant 86 : index
    %c0_201 = arith.constant 0 : index
    %243 = vector.load %arg15[%c86_200, %c0_201] : memref<128x128xbf16, #tpu.memory_space<vmem>>, vector<2x128xbf16>
    %cst_202 = arith.constant dense<0.000000e+00> : vector<2x128xf32>
    %244 = tpu.matmul %243, %224, %cst_202 {dimension_numbers = #tpu.dot_dimension_numbers<[1], [0], [0], [1], [0, 0, 1, 1], [], []>} : vector<2x128xbf16>, vector<128x128xbf16>, vector<2x128xf32> -> vector<2x128xf32>
    %245 = arith.addf %216, %244 : vector<2x128xf32>
    %c90_203 = arith.constant 90 : index
    %c0_204 = arith.constant 0 : index
    %246 = vector.load %arg15[%c90_203, %c0_204] : memref<128x128xbf16, #tpu.memory_space<vmem>>, vector<2x128xbf16>
    %cst_205 = arith.constant dense<0.000000e+00> : vector<2x128xf32>
    %247 = tpu.matmul %246, %224, %cst_205 {dimension_numbers = #tpu.dot_dimension_numbers<[1], [0], [0], [1], [0, 0, 1, 1], [], []>} : vector<2x128xbf16>, vector<128x128xbf16>, vector<2x128xf32> -> vector<2x128xf32>
    %248 = arith.addf %219, %247 : vector<2x128xf32>
    %c94 = arith.constant 94 : index
    %c0_206 = arith.constant 0 : index
    %249 = vector.load %arg15[%c94, %c0_206] : memref<128x128xbf16, #tpu.memory_space<vmem>>, vector<2x128xbf16>
    %cst_207 = arith.constant dense<0.000000e+00> : vector<2x128xf32>
    %250 = tpu.matmul %249, %224, %cst_207 {dimension_numbers = #tpu.dot_dimension_numbers<[1], [0], [0], [1], [0, 0, 1, 1], [], []>} : vector<2x128xbf16>, vector<128x128xbf16>, vector<2x128xf32> -> vector<2x128xf32>
    %251 = arith.addf %222, %250 : vector<2x128xf32>
    %c8_208 = arith.constant 8 : index
    %c0_209 = arith.constant 0 : index
    %c0_210 = arith.constant 0 : index
    %252 = vector.load %arg4[%c8_208, %c0_209, %c0_210] : memref<16x128x128xbf16, #tpu.memory_space<vmem>>, vector<1x128x128xbf16>
    %253 = vector.shape_cast %252 : vector<1x128x128xbf16> to vector<128x128xbf16>
    %c32_211 = arith.constant 32 : index
    %c0_212 = arith.constant 0 : index
    %254 = vector.load %arg15[%c32_211, %c0_212] : memref<128x128xbf16, #tpu.memory_space<vmem>>, vector<2x128xbf16>
    %cst_213 = arith.constant dense<0.000000e+00> : vector<2x128xf32>
    %255 = tpu.matmul %254, %253, %cst_213 {dimension_numbers = #tpu.dot_dimension_numbers<[1], [0], [0], [1], [0, 0, 1, 1], [], []>} : vector<2x128xbf16>, vector<128x128xbf16>, vector<2x128xf32> -> vector<2x128xf32>
    %256 = arith.addf %227, %255 : vector<2x128xf32>
    %c36_214 = arith.constant 36 : index
    %c0_215 = arith.constant 0 : index
    %257 = vector.load %arg15[%c36_214, %c0_215] : memref<128x128xbf16, #tpu.memory_space<vmem>>, vector<2x128xbf16>
    %cst_216 = arith.constant dense<0.000000e+00> : vector<2x128xf32>
    %258 = tpu.matmul %257, %253, %cst_216 {dimension_numbers = #tpu.dot_dimension_numbers<[1], [0], [0], [1], [0, 0, 1, 1], [], []>} : vector<2x128xbf16>, vector<128x128xbf16>, vector<2x128xf32> -> vector<2x128xf32>
    %259 = arith.addf %230, %258 : vector<2x128xf32>
    %c40_217 = arith.constant 40 : index
    %c0_218 = arith.constant 0 : index
    %260 = vector.load %arg15[%c40_217, %c0_218] : memref<128x128xbf16, #tpu.memory_space<vmem>>, vector<2x128xbf16>
    %cst_219 = arith.constant dense<0.000000e+00> : vector<2x128xf32>
    %261 = tpu.matmul %260, %253, %cst_219 {dimension_numbers = #tpu.dot_dimension_numbers<[1], [0], [0], [1], [0, 0, 1, 1], [], []>} : vector<2x128xbf16>, vector<128x128xbf16>, vector<2x128xf32> -> vector<2x128xf32>
    %262 = arith.addf %233, %261 : vector<2x128xf32>
    %c64_220 = arith.constant 64 : index
    %c0_221 = arith.constant 0 : index
    %263 = vector.load %arg15[%c64_220, %c0_221] : memref<128x128xbf16, #tpu.memory_space<vmem>>, vector<2x128xbf16>
    %cst_222 = arith.constant dense<0.000000e+00> : vector<2x128xf32>
    %264 = tpu.matmul %263, %253, %cst_222 {dimension_numbers = #tpu.dot_dimension_numbers<[1], [0], [0], [1], [0, 0, 1, 1], [], []>} : vector<2x128xbf16>, vector<128x128xbf16>, vector<2x128xf32> -> vector<2x128xf32>
    %265 = arith.addf %236, %264 : vector<2x128xf32>
    %c68_223 = arith.constant 68 : index
    %c0_224 = arith.constant 0 : index
    %266 = vector.load %arg15[%c68_223, %c0_224] : memref<128x128xbf16, #tpu.memory_space<vmem>>, vector<2x128xbf16>
    %cst_225 = arith.constant dense<0.000000e+00> : vector<2x128xf32>
    %267 = tpu.matmul %266, %253, %cst_225 {dimension_numbers = #tpu.dot_dimension_numbers<[1], [0], [0], [1], [0, 0, 1, 1], [], []>} : vector<2x128xbf16>, vector<128x128xbf16>, vector<2x128xf32> -> vector<2x128xf32>
    %268 = arith.addf %239, %267 : vector<2x128xf32>
    %c72_226 = arith.constant 72 : index
    %c0_227 = arith.constant 0 : index
    %269 = vector.load %arg15[%c72_226, %c0_227] : memref<128x128xbf16, #tpu.memory_space<vmem>>, vector<2x128xbf16>
    %cst_228 = arith.constant dense<0.000000e+00> : vector<2x128xf32>
    %270 = tpu.matmul %269, %253, %cst_228 {dimension_numbers = #tpu.dot_dimension_numbers<[1], [0], [0], [1], [0, 0, 1, 1], [], []>} : vector<2x128xbf16>, vector<128x128xbf16>, vector<2x128xf32> -> vector<2x128xf32>
    %271 = arith.addf %242, %270 : vector<2x128xf32>
    %c96 = arith.constant 96 : index
    %c0_229 = arith.constant 0 : index
    %272 = vector.load %arg15[%c96, %c0_229] : memref<128x128xbf16, #tpu.memory_space<vmem>>, vector<2x128xbf16>
    %cst_230 = arith.constant dense<0.000000e+00> : vector<2x128xf32>
    %273 = tpu.matmul %272, %253, %cst_230 {dimension_numbers = #tpu.dot_dimension_numbers<[1], [0], [0], [1], [0, 0, 1, 1], [], []>} : vector<2x128xbf16>, vector<128x128xbf16>, vector<2x128xf32> -> vector<2x128xf32>
    %274 = arith.addf %245, %273 : vector<2x128xf32>
    %c100 = arith.constant 100 : index
    %c0_231 = arith.constant 0 : index
    %275 = vector.load %arg15[%c100, %c0_231] : memref<128x128xbf16, #tpu.memory_space<vmem>>, vector<2x128xbf16>
    %cst_232 = arith.constant dense<0.000000e+00> : vector<2x128xf32>
    %276 = tpu.matmul %275, %253, %cst_232 {dimension_numbers = #tpu.dot_dimension_numbers<[1], [0], [0], [1], [0, 0, 1, 1], [], []>} : vector<2x128xbf16>, vector<128x128xbf16>, vector<2x128xf32> -> vector<2x128xf32>
    %277 = arith.addf %248, %276 : vector<2x128xf32>
    %c104 = arith.constant 104 : index
    %c0_233 = arith.constant 0 : index
    %278 = vector.load %arg15[%c104, %c0_233] : memref<128x128xbf16, #tpu.memory_space<vmem>>, vector<2x128xbf16>
    %cst_234 = arith.constant dense<0.000000e+00> : vector<2x128xf32>
    %279 = tpu.matmul %278, %253, %cst_234 {dimension_numbers = #tpu.dot_dimension_numbers<[1], [0], [0], [1], [0, 0, 1, 1], [], []>} : vector<2x128xbf16>, vector<128x128xbf16>, vector<2x128xf32> -> vector<2x128xf32>
    %280 = arith.addf %251, %279 : vector<2x128xf32>
    %c9 = arith.constant 9 : index
    %c0_235 = arith.constant 0 : index
    %c0_236 = arith.constant 0 : index
    %281 = vector.load %arg4[%c9, %c0_235, %c0_236] : memref<16x128x128xbf16, #tpu.memory_space<vmem>>, vector<1x128x128xbf16>
    %282 = vector.shape_cast %281 : vector<1x128x128xbf16> to vector<128x128xbf16>
    %c34_237 = arith.constant 34 : index
    %c0_238 = arith.constant 0 : index
    %283 = vector.load %arg15[%c34_237, %c0_238] : memref<128x128xbf16, #tpu.memory_space<vmem>>, vector<2x128xbf16>
    %cst_239 = arith.constant dense<0.000000e+00> : vector<2x128xf32>
    %284 = tpu.matmul %283, %282, %cst_239 {dimension_numbers = #tpu.dot_dimension_numbers<[1], [0], [0], [1], [0, 0, 1, 1], [], []>} : vector<2x128xbf16>, vector<128x128xbf16>, vector<2x128xf32> -> vector<2x128xf32>
    %285 = arith.addf %256, %284 : vector<2x128xf32>
    %c38_240 = arith.constant 38 : index
    %c0_241 = arith.constant 0 : index
    %286 = vector.load %arg15[%c38_240, %c0_241] : memref<128x128xbf16, #tpu.memory_space<vmem>>, vector<2x128xbf16>
    %cst_242 = arith.constant dense<0.000000e+00> : vector<2x128xf32>
    %287 = tpu.matmul %286, %282, %cst_242 {dimension_numbers = #tpu.dot_dimension_numbers<[1], [0], [0], [1], [0, 0, 1, 1], [], []>} : vector<2x128xbf16>, vector<128x128xbf16>, vector<2x128xf32> -> vector<2x128xf32>
    %288 = arith.addf %259, %287 : vector<2x128xf32>
    %c42_243 = arith.constant 42 : index
    %c0_244 = arith.constant 0 : index
    %289 = vector.load %arg15[%c42_243, %c0_244] : memref<128x128xbf16, #tpu.memory_space<vmem>>, vector<2x128xbf16>
    %cst_245 = arith.constant dense<0.000000e+00> : vector<2x128xf32>
    %290 = tpu.matmul %289, %282, %cst_245 {dimension_numbers = #tpu.dot_dimension_numbers<[1], [0], [0], [1], [0, 0, 1, 1], [], []>} : vector<2x128xbf16>, vector<128x128xbf16>, vector<2x128xf32> -> vector<2x128xf32>
    %291 = arith.addf %262, %290 : vector<2x128xf32>
    %c66_246 = arith.constant 66 : index
    %c0_247 = arith.constant 0 : index
    %292 = vector.load %arg15[%c66_246, %c0_247] : memref<128x128xbf16, #tpu.memory_space<vmem>>, vector<2x128xbf16>
    %cst_248 = arith.constant dense<0.000000e+00> : vector<2x128xf32>
    %293 = tpu.matmul %292, %282, %cst_248 {dimension_numbers = #tpu.dot_dimension_numbers<[1], [0], [0], [1], [0, 0, 1, 1], [], []>} : vector<2x128xbf16>, vector<128x128xbf16>, vector<2x128xf32> -> vector<2x128xf32>
    %294 = arith.addf %265, %293 : vector<2x128xf32>
    %c70_249 = arith.constant 70 : index
    %c0_250 = arith.constant 0 : index
    %295 = vector.load %arg15[%c70_249, %c0_250] : memref<128x128xbf16, #tpu.memory_space<vmem>>, vector<2x128xbf16>
    %cst_251 = arith.constant dense<0.000000e+00> : vector<2x128xf32>
    %296 = tpu.matmul %295, %282, %cst_251 {dimension_numbers = #tpu.dot_dimension_numbers<[1], [0], [0], [1], [0, 0, 1, 1], [], []>} : vector<2x128xbf16>, vector<128x128xbf16>, vector<2x128xf32> -> vector<2x128xf32>
    %297 = arith.addf %268, %296 : vector<2x128xf32>
    %c74_252 = arith.constant 74 : index
    %c0_253 = arith.constant 0 : index
    %298 = vector.load %arg15[%c74_252, %c0_253] : memref<128x128xbf16, #tpu.memory_space<vmem>>, vector<2x128xbf16>
    %cst_254 = arith.constant dense<0.000000e+00> : vector<2x128xf32>
    %299 = tpu.matmul %298, %282, %cst_254 {dimension_numbers = #tpu.dot_dimension_numbers<[1], [0], [0], [1], [0, 0, 1, 1], [], []>} : vector<2x128xbf16>, vector<128x128xbf16>, vector<2x128xf32> -> vector<2x128xf32>
    %300 = arith.addf %271, %299 : vector<2x128xf32>
    %c98 = arith.constant 98 : index
    %c0_255 = arith.constant 0 : index
    %301 = vector.load %arg15[%c98, %c0_255] : memref<128x128xbf16, #tpu.memory_space<vmem>>, vector<2x128xbf16>
    %cst_256 = arith.constant dense<0.000000e+00> : vector<2x128xf32>
    %302 = tpu.matmul %301, %282, %cst_256 {dimension_numbers = #tpu.dot_dimension_numbers<[1], [0], [0], [1], [0, 0, 1, 1], [], []>} : vector<2x128xbf16>, vector<128x128xbf16>, vector<2x128xf32> -> vector<2x128xf32>
    %303 = arith.addf %274, %302 : vector<2x128xf32>
    %c102 = arith.constant 102 : index
    %c0_257 = arith.constant 0 : index
    %304 = vector.load %arg15[%c102, %c0_257] : memref<128x128xbf16, #tpu.memory_space<vmem>>, vector<2x128xbf16>
    %cst_258 = arith.constant dense<0.000000e+00> : vector<2x128xf32>
    %305 = tpu.matmul %304, %282, %cst_258 {dimension_numbers = #tpu.dot_dimension_numbers<[1], [0], [0], [1], [0, 0, 1, 1], [], []>} : vector<2x128xbf16>, vector<128x128xbf16>, vector<2x128xf32> -> vector<2x128xf32>
    %306 = arith.addf %277, %305 : vector<2x128xf32>
    %c106 = arith.constant 106 : index
    %c0_259 = arith.constant 0 : index
    %307 = vector.load %arg15[%c106, %c0_259] : memref<128x128xbf16, #tpu.memory_space<vmem>>, vector<2x128xbf16>
    %cst_260 = arith.constant dense<0.000000e+00> : vector<2x128xf32>
    %308 = tpu.matmul %307, %282, %cst_260 {dimension_numbers = #tpu.dot_dimension_numbers<[1], [0], [0], [1], [0, 0, 1, 1], [], []>} : vector<2x128xbf16>, vector<128x128xbf16>, vector<2x128xf32> -> vector<2x128xf32>
    %309 = arith.addf %280, %308 : vector<2x128xf32>
    %c10_261 = arith.constant 10 : index
    %c0_262 = arith.constant 0 : index
    %c0_263 = arith.constant 0 : index
    %310 = vector.load %arg4[%c10_261, %c0_262, %c0_263] : memref<16x128x128xbf16, #tpu.memory_space<vmem>>, vector<1x128x128xbf16>
    %311 = vector.shape_cast %310 : vector<1x128x128xbf16> to vector<128x128xbf16>
    %c36_264 = arith.constant 36 : index
    %c0_265 = arith.constant 0 : index
    %312 = vector.load %arg15[%c36_264, %c0_265] : memref<128x128xbf16, #tpu.memory_space<vmem>>, vector<2x128xbf16>
    %cst_266 = arith.constant dense<0.000000e+00> : vector<2x128xf32>
    %313 = tpu.matmul %312, %311, %cst_266 {dimension_numbers = #tpu.dot_dimension_numbers<[1], [0], [0], [1], [0, 0, 1, 1], [], []>} : vector<2x128xbf16>, vector<128x128xbf16>, vector<2x128xf32> -> vector<2x128xf32>
    %314 = arith.addf %285, %313 : vector<2x128xf32>
    %c40_267 = arith.constant 40 : index
    %c0_268 = arith.constant 0 : index
    %315 = vector.load %arg15[%c40_267, %c0_268] : memref<128x128xbf16, #tpu.memory_space<vmem>>, vector<2x128xbf16>
    %cst_269 = arith.constant dense<0.000000e+00> : vector<2x128xf32>
    %316 = tpu.matmul %315, %311, %cst_269 {dimension_numbers = #tpu.dot_dimension_numbers<[1], [0], [0], [1], [0, 0, 1, 1], [], []>} : vector<2x128xbf16>, vector<128x128xbf16>, vector<2x128xf32> -> vector<2x128xf32>
    %317 = arith.addf %288, %316 : vector<2x128xf32>
    %c44_270 = arith.constant 44 : index
    %c0_271 = arith.constant 0 : index
    %318 = vector.load %arg15[%c44_270, %c0_271] : memref<128x128xbf16, #tpu.memory_space<vmem>>, vector<2x128xbf16>
    %cst_272 = arith.constant dense<0.000000e+00> : vector<2x128xf32>
    %319 = tpu.matmul %318, %311, %cst_272 {dimension_numbers = #tpu.dot_dimension_numbers<[1], [0], [0], [1], [0, 0, 1, 1], [], []>} : vector<2x128xbf16>, vector<128x128xbf16>, vector<2x128xf32> -> vector<2x128xf32>
    %320 = arith.addf %291, %319 : vector<2x128xf32>
    %c68_273 = arith.constant 68 : index
    %c0_274 = arith.constant 0 : index
    %321 = vector.load %arg15[%c68_273, %c0_274] : memref<128x128xbf16, #tpu.memory_space<vmem>>, vector<2x128xbf16>
    %cst_275 = arith.constant dense<0.000000e+00> : vector<2x128xf32>
    %322 = tpu.matmul %321, %311, %cst_275 {dimension_numbers = #tpu.dot_dimension_numbers<[1], [0], [0], [1], [0, 0, 1, 1], [], []>} : vector<2x128xbf16>, vector<128x128xbf16>, vector<2x128xf32> -> vector<2x128xf32>
    %323 = arith.addf %294, %322 : vector<2x128xf32>
    %c72_276 = arith.constant 72 : index
    %c0_277 = arith.constant 0 : index
    %324 = vector.load %arg15[%c72_276, %c0_277] : memref<128x128xbf16, #tpu.memory_space<vmem>>, vector<2x128xbf16>
    %cst_278 = arith.constant dense<0.000000e+00> : vector<2x128xf32>
    %325 = tpu.matmul %324, %311, %cst_278 {dimension_numbers = #tpu.dot_dimension_numbers<[1], [0], [0], [1], [0, 0, 1, 1], [], []>} : vector<2x128xbf16>, vector<128x128xbf16>, vector<2x128xf32> -> vector<2x128xf32>
    %326 = arith.addf %297, %325 : vector<2x128xf32>
    %c76_279 = arith.constant 76 : index
    %c0_280 = arith.constant 0 : index
    %327 = vector.load %arg15[%c76_279, %c0_280] : memref<128x128xbf16, #tpu.memory_space<vmem>>, vector<2x128xbf16>
    %cst_281 = arith.constant dense<0.000000e+00> : vector<2x128xf32>
    %328 = tpu.matmul %327, %311, %cst_281 {dimension_numbers = #tpu.dot_dimension_numbers<[1], [0], [0], [1], [0, 0, 1, 1], [], []>} : vector<2x128xbf16>, vector<128x128xbf16>, vector<2x128xf32> -> vector<2x128xf32>
    %329 = arith.addf %300, %328 : vector<2x128xf32>
    %c100_282 = arith.constant 100 : index
    %c0_283 = arith.constant 0 : index
    %330 = vector.load %arg15[%c100_282, %c0_283] : memref<128x128xbf16, #tpu.memory_space<vmem>>, vector<2x128xbf16>
    %cst_284 = arith.constant dense<0.000000e+00> : vector<2x128xf32>
    %331 = tpu.matmul %330, %311, %cst_284 {dimension_numbers = #tpu.dot_dimension_numbers<[1], [0], [0], [1], [0, 0, 1, 1], [], []>} : vector<2x128xbf16>, vector<128x128xbf16>, vector<2x128xf32> -> vector<2x128xf32>
    %332 = arith.addf %303, %331 : vector<2x128xf32>
    %c104_285 = arith.constant 104 : index
    %c0_286 = arith.constant 0 : index
    %333 = vector.load %arg15[%c104_285, %c0_286] : memref<128x128xbf16, #tpu.memory_space<vmem>>, vector<2x128xbf16>
    %cst_287 = arith.constant dense<0.000000e+00> : vector<2x128xf32>
    %334 = tpu.matmul %333, %311, %cst_287 {dimension_numbers = #tpu.dot_dimension_numbers<[1], [0], [0], [1], [0, 0, 1, 1], [], []>} : vector<2x128xbf16>, vector<128x128xbf16>, vector<2x128xf32> -> vector<2x128xf32>
    %335 = arith.addf %306, %334 : vector<2x128xf32>
    %c108 = arith.constant 108 : index
    %c0_288 = arith.constant 0 : index
    %336 = vector.load %arg15[%c108, %c0_288] : memref<128x128xbf16, #tpu.memory_space<vmem>>, vector<2x128xbf16>
    %cst_289 = arith.constant dense<0.000000e+00> : vector<2x128xf32>
    %337 = tpu.matmul %336, %311, %cst_289 {dimension_numbers = #tpu.dot_dimension_numbers<[1], [0], [0], [1], [0, 0, 1, 1], [], []>} : vector<2x128xbf16>, vector<128x128xbf16>, vector<2x128xf32> -> vector<2x128xf32>
    %338 = arith.addf %309, %337 : vector<2x128xf32>
    %c11 = arith.constant 11 : index
    %c0_290 = arith.constant 0 : index
    %c0_291 = arith.constant 0 : index
    %339 = vector.load %arg4[%c11, %c0_290, %c0_291] : memref<16x128x128xbf16, #tpu.memory_space<vmem>>, vector<1x128x128xbf16>
    %340 = vector.shape_cast %339 : vector<1x128x128xbf16> to vector<128x128xbf16>
    %c38_292 = arith.constant 38 : index
    %c0_293 = arith.constant 0 : index
    %341 = vector.load %arg15[%c38_292, %c0_293] : memref<128x128xbf16, #tpu.memory_space<vmem>>, vector<2x128xbf16>
    %cst_294 = arith.constant dense<0.000000e+00> : vector<2x128xf32>
    %342 = tpu.matmul %341, %340, %cst_294 {dimension_numbers = #tpu.dot_dimension_numbers<[1], [0], [0], [1], [0, 0, 1, 1], [], []>} : vector<2x128xbf16>, vector<128x128xbf16>, vector<2x128xf32> -> vector<2x128xf32>
    %343 = arith.addf %314, %342 : vector<2x128xf32>
    %c42_295 = arith.constant 42 : index
    %c0_296 = arith.constant 0 : index
    %344 = vector.load %arg15[%c42_295, %c0_296] : memref<128x128xbf16, #tpu.memory_space<vmem>>, vector<2x128xbf16>
    %cst_297 = arith.constant dense<0.000000e+00> : vector<2x128xf32>
    %345 = tpu.matmul %344, %340, %cst_297 {dimension_numbers = #tpu.dot_dimension_numbers<[1], [0], [0], [1], [0, 0, 1, 1], [], []>} : vector<2x128xbf16>, vector<128x128xbf16>, vector<2x128xf32> -> vector<2x128xf32>
    %346 = arith.addf %317, %345 : vector<2x128xf32>
    %c46_298 = arith.constant 46 : index
    %c0_299 = arith.constant 0 : index
    %347 = vector.load %arg15[%c46_298, %c0_299] : memref<128x128xbf16, #tpu.memory_space<vmem>>, vector<2x128xbf16>
    %cst_300 = arith.constant dense<0.000000e+00> : vector<2x128xf32>
    %348 = tpu.matmul %347, %340, %cst_300 {dimension_numbers = #tpu.dot_dimension_numbers<[1], [0], [0], [1], [0, 0, 1, 1], [], []>} : vector<2x128xbf16>, vector<128x128xbf16>, vector<2x128xf32> -> vector<2x128xf32>
    %349 = arith.addf %320, %348 : vector<2x128xf32>
    %c70_301 = arith.constant 70 : index
    %c0_302 = arith.constant 0 : index
    %350 = vector.load %arg15[%c70_301, %c0_302] : memref<128x128xbf16, #tpu.memory_space<vmem>>, vector<2x128xbf16>
    %cst_303 = arith.constant dense<0.000000e+00> : vector<2x128xf32>
    %351 = tpu.matmul %350, %340, %cst_303 {dimension_numbers = #tpu.dot_dimension_numbers<[1], [0], [0], [1], [0, 0, 1, 1], [], []>} : vector<2x128xbf16>, vector<128x128xbf16>, vector<2x128xf32> -> vector<2x128xf32>
    %352 = arith.addf %323, %351 : vector<2x128xf32>
    %c74_304 = arith.constant 74 : index
    %c0_305 = arith.constant 0 : index
    %353 = vector.load %arg15[%c74_304, %c0_305] : memref<128x128xbf16, #tpu.memory_space<vmem>>, vector<2x128xbf16>
    %cst_306 = arith.constant dense<0.000000e+00> : vector<2x128xf32>
    %354 = tpu.matmul %353, %340, %cst_306 {dimension_numbers = #tpu.dot_dimension_numbers<[1], [0], [0], [1], [0, 0, 1, 1], [], []>} : vector<2x128xbf16>, vector<128x128xbf16>, vector<2x128xf32> -> vector<2x128xf32>
    %355 = arith.addf %326, %354 : vector<2x128xf32>
    %c78_307 = arith.constant 78 : index
    %c0_308 = arith.constant 0 : index
    %356 = vector.load %arg15[%c78_307, %c0_308] : memref<128x128xbf16, #tpu.memory_space<vmem>>, vector<2x128xbf16>
    %cst_309 = arith.constant dense<0.000000e+00> : vector<2x128xf32>
    %357 = tpu.matmul %356, %340, %cst_309 {dimension_numbers = #tpu.dot_dimension_numbers<[1], [0], [0], [1], [0, 0, 1, 1], [], []>} : vector<2x128xbf16>, vector<128x128xbf16>, vector<2x128xf32> -> vector<2x128xf32>
    %358 = arith.addf %329, %357 : vector<2x128xf32>
    %c102_310 = arith.constant 102 : index
    %c0_311 = arith.constant 0 : index
    %359 = vector.load %arg15[%c102_310, %c0_311] : memref<128x128xbf16, #tpu.memory_space<vmem>>, vector<2x128xbf16>
    %cst_312 = arith.constant dense<0.000000e+00> : vector<2x128xf32>
    %360 = tpu.matmul %359, %340, %cst_312 {dimension_numbers = #tpu.dot_dimension_numbers<[1], [0], [0], [1], [0, 0, 1, 1], [], []>} : vector<2x128xbf16>, vector<128x128xbf16>, vector<2x128xf32> -> vector<2x128xf32>
    %361 = arith.addf %332, %360 : vector<2x128xf32>
    %c106_313 = arith.constant 106 : index
    %c0_314 = arith.constant 0 : index
    %362 = vector.load %arg15[%c106_313, %c0_314] : memref<128x128xbf16, #tpu.memory_space<vmem>>, vector<2x128xbf16>
    %cst_315 = arith.constant dense<0.000000e+00> : vector<2x128xf32>
    %363 = tpu.matmul %362, %340, %cst_315 {dimension_numbers = #tpu.dot_dimension_numbers<[1], [0], [0], [1], [0, 0, 1, 1], [], []>} : vector<2x128xbf16>, vector<128x128xbf16>, vector<2x128xf32> -> vector<2x128xf32>
    %364 = arith.addf %335, %363 : vector<2x128xf32>
    %c110 = arith.constant 110 : index
    %c0_316 = arith.constant 0 : index
    %365 = vector.load %arg15[%c110, %c0_316] : memref<128x128xbf16, #tpu.memory_space<vmem>>, vector<2x128xbf16>
    %cst_317 = arith.constant dense<0.000000e+00> : vector<2x128xf32>
    %366 = tpu.matmul %365, %340, %cst_317 {dimension_numbers = #tpu.dot_dimension_numbers<[1], [0], [0], [1], [0, 0, 1, 1], [], []>} : vector<2x128xbf16>, vector<128x128xbf16>, vector<2x128xf32> -> vector<2x128xf32>
    %367 = arith.addf %338, %366 : vector<2x128xf32>
    %c12_318 = arith.constant 12 : index
    %c0_319 = arith.constant 0 : index
    %c0_320 = arith.constant 0 : index
    %368 = vector.load %arg4[%c12_318, %c0_319, %c0_320] : memref<16x128x128xbf16, #tpu.memory_space<vmem>>, vector<1x128x128xbf16>
    %369 = vector.shape_cast %368 : vector<1x128x128xbf16> to vector<128x128xbf16>
    %c48_321 = arith.constant 48 : index
    %c0_322 = arith.constant 0 : index
    %370 = vector.load %arg15[%c48_321, %c0_322] : memref<128x128xbf16, #tpu.memory_space<vmem>>, vector<2x128xbf16>
    %cst_323 = arith.constant dense<0.000000e+00> : vector<2x128xf32>
    %371 = tpu.matmul %370, %369, %cst_323 {dimension_numbers = #tpu.dot_dimension_numbers<[1], [0], [0], [1], [0, 0, 1, 1], [], []>} : vector<2x128xbf16>, vector<128x128xbf16>, vector<2x128xf32> -> vector<2x128xf32>
    %372 = arith.addf %343, %371 : vector<2x128xf32>
    %c52_324 = arith.constant 52 : index
    %c0_325 = arith.constant 0 : index
    %373 = vector.load %arg15[%c52_324, %c0_325] : memref<128x128xbf16, #tpu.memory_space<vmem>>, vector<2x128xbf16>
    %cst_326 = arith.constant dense<0.000000e+00> : vector<2x128xf32>
    %374 = tpu.matmul %373, %369, %cst_326 {dimension_numbers = #tpu.dot_dimension_numbers<[1], [0], [0], [1], [0, 0, 1, 1], [], []>} : vector<2x128xbf16>, vector<128x128xbf16>, vector<2x128xf32> -> vector<2x128xf32>
    %375 = arith.addf %346, %374 : vector<2x128xf32>
    %c56_327 = arith.constant 56 : index
    %c0_328 = arith.constant 0 : index
    %376 = vector.load %arg15[%c56_327, %c0_328] : memref<128x128xbf16, #tpu.memory_space<vmem>>, vector<2x128xbf16>
    %cst_329 = arith.constant dense<0.000000e+00> : vector<2x128xf32>
    %377 = tpu.matmul %376, %369, %cst_329 {dimension_numbers = #tpu.dot_dimension_numbers<[1], [0], [0], [1], [0, 0, 1, 1], [], []>} : vector<2x128xbf16>, vector<128x128xbf16>, vector<2x128xf32> -> vector<2x128xf32>
    %378 = arith.addf %349, %377 : vector<2x128xf32>
    %c80_330 = arith.constant 80 : index
    %c0_331 = arith.constant 0 : index
    %379 = vector.load %arg15[%c80_330, %c0_331] : memref<128x128xbf16, #tpu.memory_space<vmem>>, vector<2x128xbf16>
    %cst_332 = arith.constant dense<0.000000e+00> : vector<2x128xf32>
    %380 = tpu.matmul %379, %369, %cst_332 {dimension_numbers = #tpu.dot_dimension_numbers<[1], [0], [0], [1], [0, 0, 1, 1], [], []>} : vector<2x128xbf16>, vector<128x128xbf16>, vector<2x128xf32> -> vector<2x128xf32>
    %381 = arith.addf %352, %380 : vector<2x128xf32>
    %c84_333 = arith.constant 84 : index
    %c0_334 = arith.constant 0 : index
    %382 = vector.load %arg15[%c84_333, %c0_334] : memref<128x128xbf16, #tpu.memory_space<vmem>>, vector<2x128xbf16>
    %cst_335 = arith.constant dense<0.000000e+00> : vector<2x128xf32>
    %383 = tpu.matmul %382, %369, %cst_335 {dimension_numbers = #tpu.dot_dimension_numbers<[1], [0], [0], [1], [0, 0, 1, 1], [], []>} : vector<2x128xbf16>, vector<128x128xbf16>, vector<2x128xf32> -> vector<2x128xf32>
    %384 = arith.addf %355, %383 : vector<2x128xf32>
    %c88_336 = arith.constant 88 : index
    %c0_337 = arith.constant 0 : index
    %385 = vector.load %arg15[%c88_336, %c0_337] : memref<128x128xbf16, #tpu.memory_space<vmem>>, vector<2x128xbf16>
    %cst_338 = arith.constant dense<0.000000e+00> : vector<2x128xf32>
    %386 = tpu.matmul %385, %369, %cst_338 {dimension_numbers = #tpu.dot_dimension_numbers<[1], [0], [0], [1], [0, 0, 1, 1], [], []>} : vector<2x128xbf16>, vector<128x128xbf16>, vector<2x128xf32> -> vector<2x128xf32>
    %387 = arith.addf %358, %386 : vector<2x128xf32>
    %c112 = arith.constant 112 : index
    %c0_339 = arith.constant 0 : index
    %388 = vector.load %arg15[%c112, %c0_339] : memref<128x128xbf16, #tpu.memory_space<vmem>>, vector<2x128xbf16>
    %cst_340 = arith.constant dense<0.000000e+00> : vector<2x128xf32>
    %389 = tpu.matmul %388, %369, %cst_340 {dimension_numbers = #tpu.dot_dimension_numbers<[1], [0], [0], [1], [0, 0, 1, 1], [], []>} : vector<2x128xbf16>, vector<128x128xbf16>, vector<2x128xf32> -> vector<2x128xf32>
    %390 = arith.addf %361, %389 : vector<2x128xf32>
    %c116 = arith.constant 116 : index
    %c0_341 = arith.constant 0 : index
    %391 = vector.load %arg15[%c116, %c0_341] : memref<128x128xbf16, #tpu.memory_space<vmem>>, vector<2x128xbf16>
    %cst_342 = arith.constant dense<0.000000e+00> : vector<2x128xf32>
    %392 = tpu.matmul %391, %369, %cst_342 {dimension_numbers = #tpu.dot_dimension_numbers<[1], [0], [0], [1], [0, 0, 1, 1], [], []>} : vector<2x128xbf16>, vector<128x128xbf16>, vector<2x128xf32> -> vector<2x128xf32>
    %393 = arith.addf %364, %392 : vector<2x128xf32>
    %c120 = arith.constant 120 : index
    %c0_343 = arith.constant 0 : index
    %394 = vector.load %arg15[%c120, %c0_343] : memref<128x128xbf16, #tpu.memory_space<vmem>>, vector<2x128xbf16>
    %cst_344 = arith.constant dense<0.000000e+00> : vector<2x128xf32>
    %395 = tpu.matmul %394, %369, %cst_344 {dimension_numbers = #tpu.dot_dimension_numbers<[1], [0], [0], [1], [0, 0, 1, 1], [], []>} : vector<2x128xbf16>, vector<128x128xbf16>, vector<2x128xf32> -> vector<2x128xf32>
    %396 = arith.addf %367, %395 : vector<2x128xf32>
    %c13 = arith.constant 13 : index
    %c0_345 = arith.constant 0 : index
    %c0_346 = arith.constant 0 : index
    %397 = vector.load %arg4[%c13, %c0_345, %c0_346] : memref<16x128x128xbf16, #tpu.memory_space<vmem>>, vector<1x128x128xbf16>
    %398 = vector.shape_cast %397 : vector<1x128x128xbf16> to vector<128x128xbf16>
    %c50_347 = arith.constant 50 : index
    %c0_348 = arith.constant 0 : index
    %399 = vector.load %arg15[%c50_347, %c0_348] : memref<128x128xbf16, #tpu.memory_space<vmem>>, vector<2x128xbf16>
    %cst_349 = arith.constant dense<0.000000e+00> : vector<2x128xf32>
    %400 = tpu.matmul %399, %398, %cst_349 {dimension_numbers = #tpu.dot_dimension_numbers<[1], [0], [0], [1], [0, 0, 1, 1], [], []>} : vector<2x128xbf16>, vector<128x128xbf16>, vector<2x128xf32> -> vector<2x128xf32>
    %401 = arith.addf %372, %400 : vector<2x128xf32>
    %c54_350 = arith.constant 54 : index
    %c0_351 = arith.constant 0 : index
    %402 = vector.load %arg15[%c54_350, %c0_351] : memref<128x128xbf16, #tpu.memory_space<vmem>>, vector<2x128xbf16>
    %cst_352 = arith.constant dense<0.000000e+00> : vector<2x128xf32>
    %403 = tpu.matmul %402, %398, %cst_352 {dimension_numbers = #tpu.dot_dimension_numbers<[1], [0], [0], [1], [0, 0, 1, 1], [], []>} : vector<2x128xbf16>, vector<128x128xbf16>, vector<2x128xf32> -> vector<2x128xf32>
    %404 = arith.addf %375, %403 : vector<2x128xf32>
    %c58_353 = arith.constant 58 : index
    %c0_354 = arith.constant 0 : index
    %405 = vector.load %arg15[%c58_353, %c0_354] : memref<128x128xbf16, #tpu.memory_space<vmem>>, vector<2x128xbf16>
    %cst_355 = arith.constant dense<0.000000e+00> : vector<2x128xf32>
    %406 = tpu.matmul %405, %398, %cst_355 {dimension_numbers = #tpu.dot_dimension_numbers<[1], [0], [0], [1], [0, 0, 1, 1], [], []>} : vector<2x128xbf16>, vector<128x128xbf16>, vector<2x128xf32> -> vector<2x128xf32>
    %407 = arith.addf %378, %406 : vector<2x128xf32>
    %c82_356 = arith.constant 82 : index
    %c0_357 = arith.constant 0 : index
    %408 = vector.load %arg15[%c82_356, %c0_357] : memref<128x128xbf16, #tpu.memory_space<vmem>>, vector<2x128xbf16>
    %cst_358 = arith.constant dense<0.000000e+00> : vector<2x128xf32>
    %409 = tpu.matmul %408, %398, %cst_358 {dimension_numbers = #tpu.dot_dimension_numbers<[1], [0], [0], [1], [0, 0, 1, 1], [], []>} : vector<2x128xbf16>, vector<128x128xbf16>, vector<2x128xf32> -> vector<2x128xf32>
    %410 = arith.addf %381, %409 : vector<2x128xf32>
    %c86_359 = arith.constant 86 : index
    %c0_360 = arith.constant 0 : index
    %411 = vector.load %arg15[%c86_359, %c0_360] : memref<128x128xbf16, #tpu.memory_space<vmem>>, vector<2x128xbf16>
    %cst_361 = arith.constant dense<0.000000e+00> : vector<2x128xf32>
    %412 = tpu.matmul %411, %398, %cst_361 {dimension_numbers = #tpu.dot_dimension_numbers<[1], [0], [0], [1], [0, 0, 1, 1], [], []>} : vector<2x128xbf16>, vector<128x128xbf16>, vector<2x128xf32> -> vector<2x128xf32>
    %413 = arith.addf %384, %412 : vector<2x128xf32>
    %c90_362 = arith.constant 90 : index
    %c0_363 = arith.constant 0 : index
    %414 = vector.load %arg15[%c90_362, %c0_363] : memref<128x128xbf16, #tpu.memory_space<vmem>>, vector<2x128xbf16>
    %cst_364 = arith.constant dense<0.000000e+00> : vector<2x128xf32>
    %415 = tpu.matmul %414, %398, %cst_364 {dimension_numbers = #tpu.dot_dimension_numbers<[1], [0], [0], [1], [0, 0, 1, 1], [], []>} : vector<2x128xbf16>, vector<128x128xbf16>, vector<2x128xf32> -> vector<2x128xf32>
    %416 = arith.addf %387, %415 : vector<2x128xf32>
    %c114 = arith.constant 114 : index
    %c0_365 = arith.constant 0 : index
    %417 = vector.load %arg15[%c114, %c0_365] : memref<128x128xbf16, #tpu.memory_space<vmem>>, vector<2x128xbf16>
    %cst_366 = arith.constant dense<0.000000e+00> : vector<2x128xf32>
    %418 = tpu.matmul %417, %398, %cst_366 {dimension_numbers = #tpu.dot_dimension_numbers<[1], [0], [0], [1], [0, 0, 1, 1], [], []>} : vector<2x128xbf16>, vector<128x128xbf16>, vector<2x128xf32> -> vector<2x128xf32>
    %419 = arith.addf %390, %418 : vector<2x128xf32>
    %c118 = arith.constant 118 : index
    %c0_367 = arith.constant 0 : index
    %420 = vector.load %arg15[%c118, %c0_367] : memref<128x128xbf16, #tpu.memory_space<vmem>>, vector<2x128xbf16>
    %cst_368 = arith.constant dense<0.000000e+00> : vector<2x128xf32>
    %421 = tpu.matmul %420, %398, %cst_368 {dimension_numbers = #tpu.dot_dimension_numbers<[1], [0], [0], [1], [0, 0, 1, 1], [], []>} : vector<2x128xbf16>, vector<128x128xbf16>, vector<2x128xf32> -> vector<2x128xf32>
    %422 = arith.addf %393, %421 : vector<2x128xf32>
    %c122 = arith.constant 122 : index
    %c0_369 = arith.constant 0 : index
    %423 = vector.load %arg15[%c122, %c0_369] : memref<128x128xbf16, #tpu.memory_space<vmem>>, vector<2x128xbf16>
    %cst_370 = arith.constant dense<0.000000e+00> : vector<2x128xf32>
    %424 = tpu.matmul %423, %398, %cst_370 {dimension_numbers = #tpu.dot_dimension_numbers<[1], [0], [0], [1], [0, 0, 1, 1], [], []>} : vector<2x128xbf16>, vector<128x128xbf16>, vector<2x128xf32> -> vector<2x128xf32>
    %425 = arith.addf %396, %424 : vector<2x128xf32>
    %c14_371 = arith.constant 14 : index
    %c0_372 = arith.constant 0 : index
    %c0_373 = arith.constant 0 : index
    %426 = vector.load %arg4[%c14_371, %c0_372, %c0_373] : memref<16x128x128xbf16, #tpu.memory_space<vmem>>, vector<1x128x128xbf16>
    %427 = vector.shape_cast %426 : vector<1x128x128xbf16> to vector<128x128xbf16>
    %c52_374 = arith.constant 52 : index
    %c0_375 = arith.constant 0 : index
    %428 = vector.load %arg15[%c52_374, %c0_375] : memref<128x128xbf16, #tpu.memory_space<vmem>>, vector<2x128xbf16>
    %cst_376 = arith.constant dense<0.000000e+00> : vector<2x128xf32>
    %429 = tpu.matmul %428, %427, %cst_376 {dimension_numbers = #tpu.dot_dimension_numbers<[1], [0], [0], [1], [0, 0, 1, 1], [], []>} : vector<2x128xbf16>, vector<128x128xbf16>, vector<2x128xf32> -> vector<2x128xf32>
    %430 = arith.addf %401, %429 : vector<2x128xf32>
    %c56_377 = arith.constant 56 : index
    %c0_378 = arith.constant 0 : index
    %431 = vector.load %arg15[%c56_377, %c0_378] : memref<128x128xbf16, #tpu.memory_space<vmem>>, vector<2x128xbf16>
    %cst_379 = arith.constant dense<0.000000e+00> : vector<2x128xf32>
    %432 = tpu.matmul %431, %427, %cst_379 {dimension_numbers = #tpu.dot_dimension_numbers<[1], [0], [0], [1], [0, 0, 1, 1], [], []>} : vector<2x128xbf16>, vector<128x128xbf16>, vector<2x128xf32> -> vector<2x128xf32>
    %433 = arith.addf %404, %432 : vector<2x128xf32>
    %c60_380 = arith.constant 60 : index
    %c0_381 = arith.constant 0 : index
    %434 = vector.load %arg15[%c60_380, %c0_381] : memref<128x128xbf16, #tpu.memory_space<vmem>>, vector<2x128xbf16>
    %cst_382 = arith.constant dense<0.000000e+00> : vector<2x128xf32>
    %435 = tpu.matmul %434, %427, %cst_382 {dimension_numbers = #tpu.dot_dimension_numbers<[1], [0], [0], [1], [0, 0, 1, 1], [], []>} : vector<2x128xbf16>, vector<128x128xbf16>, vector<2x128xf32> -> vector<2x128xf32>
    %436 = arith.addf %407, %435 : vector<2x128xf32>
    %c84_383 = arith.constant 84 : index
    %c0_384 = arith.constant 0 : index
    %437 = vector.load %arg15[%c84_383, %c0_384] : memref<128x128xbf16, #tpu.memory_space<vmem>>, vector<2x128xbf16>
    %cst_385 = arith.constant dense<0.000000e+00> : vector<2x128xf32>
    %438 = tpu.matmul %437, %427, %cst_385 {dimension_numbers = #tpu.dot_dimension_numbers<[1], [0], [0], [1], [0, 0, 1, 1], [], []>} : vector<2x128xbf16>, vector<128x128xbf16>, vector<2x128xf32> -> vector<2x128xf32>
    %439 = arith.addf %410, %438 : vector<2x128xf32>
    %c88_386 = arith.constant 88 : index
    %c0_387 = arith.constant 0 : index
    %440 = vector.load %arg15[%c88_386, %c0_387] : memref<128x128xbf16, #tpu.memory_space<vmem>>, vector<2x128xbf16>
    %cst_388 = arith.constant dense<0.000000e+00> : vector<2x128xf32>
    %441 = tpu.matmul %440, %427, %cst_388 {dimension_numbers = #tpu.dot_dimension_numbers<[1], [0], [0], [1], [0, 0, 1, 1], [], []>} : vector<2x128xbf16>, vector<128x128xbf16>, vector<2x128xf32> -> vector<2x128xf32>
    %442 = arith.addf %413, %441 : vector<2x128xf32>
    %c92_389 = arith.constant 92 : index
    %c0_390 = arith.constant 0 : index
    %443 = vector.load %arg15[%c92_389, %c0_390] : memref<128x128xbf16, #tpu.memory_space<vmem>>, vector<2x128xbf16>
    %cst_391 = arith.constant dense<0.000000e+00> : vector<2x128xf32>
    %444 = tpu.matmul %443, %427, %cst_391 {dimension_numbers = #tpu.dot_dimension_numbers<[1], [0], [0], [1], [0, 0, 1, 1], [], []>} : vector<2x128xbf16>, vector<128x128xbf16>, vector<2x128xf32> -> vector<2x128xf32>
    %445 = arith.addf %416, %444 : vector<2x128xf32>
    %c116_392 = arith.constant 116 : index
    %c0_393 = arith.constant 0 : index
    %446 = vector.load %arg15[%c116_392, %c0_393] : memref<128x128xbf16, #tpu.memory_space<vmem>>, vector<2x128xbf16>
    %cst_394 = arith.constant dense<0.000000e+00> : vector<2x128xf32>
    %447 = tpu.matmul %446, %427, %cst_394 {dimension_numbers = #tpu.dot_dimension_numbers<[1], [0], [0], [1], [0, 0, 1, 1], [], []>} : vector<2x128xbf16>, vector<128x128xbf16>, vector<2x128xf32> -> vector<2x128xf32>
    %448 = arith.addf %419, %447 : vector<2x128xf32>
    %c120_395 = arith.constant 120 : index
    %c0_396 = arith.constant 0 : index
    %449 = vector.load %arg15[%c120_395, %c0_396] : memref<128x128xbf16, #tpu.memory_space<vmem>>, vector<2x128xbf16>
    %cst_397 = arith.constant dense<0.000000e+00> : vector<2x128xf32>
    %450 = tpu.matmul %449, %427, %cst_397 {dimension_numbers = #tpu.dot_dimension_numbers<[1], [0], [0], [1], [0, 0, 1, 1], [], []>} : vector<2x128xbf16>, vector<128x128xbf16>, vector<2x128xf32> -> vector<2x128xf32>
    %451 = arith.addf %422, %450 : vector<2x128xf32>
    %c124 = arith.constant 124 : index
    %c0_398 = arith.constant 0 : index
    %452 = vector.load %arg15[%c124, %c0_398] : memref<128x128xbf16, #tpu.memory_space<vmem>>, vector<2x128xbf16>
    %cst_399 = arith.constant dense<0.000000e+00> : vector<2x128xf32>
    %453 = tpu.matmul %452, %427, %cst_399 {dimension_numbers = #tpu.dot_dimension_numbers<[1], [0], [0], [1], [0, 0, 1, 1], [], []>} : vector<2x128xbf16>, vector<128x128xbf16>, vector<2x128xf32> -> vector<2x128xf32>
    %454 = arith.addf %425, %453 : vector<2x128xf32>
    %c15 = arith.constant 15 : index
    %c0_400 = arith.constant 0 : index
    %c0_401 = arith.constant 0 : index
    %455 = vector.load %arg4[%c15, %c0_400, %c0_401] : memref<16x128x128xbf16, #tpu.memory_space<vmem>>, vector<1x128x128xbf16>
    %456 = vector.shape_cast %455 : vector<1x128x128xbf16> to vector<128x128xbf16>
    %c54_402 = arith.constant 54 : index
    %c0_403 = arith.constant 0 : index
    %457 = vector.load %arg15[%c54_402, %c0_403] : memref<128x128xbf16, #tpu.memory_space<vmem>>, vector<2x128xbf16>
    %cst_404 = arith.constant dense<0.000000e+00> : vector<2x128xf32>
    %458 = tpu.matmul %457, %456, %cst_404 {dimension_numbers = #tpu.dot_dimension_numbers<[1], [0], [0], [1], [0, 0, 1, 1], [], []>} : vector<2x128xbf16>, vector<128x128xbf16>, vector<2x128xf32> -> vector<2x128xf32>
    %459 = arith.addf %430, %458 : vector<2x128xf32>
    %c58_405 = arith.constant 58 : index
    %c0_406 = arith.constant 0 : index
    %460 = vector.load %arg15[%c58_405, %c0_406] : memref<128x128xbf16, #tpu.memory_space<vmem>>, vector<2x128xbf16>
    %cst_407 = arith.constant dense<0.000000e+00> : vector<2x128xf32>
    %461 = tpu.matmul %460, %456, %cst_407 {dimension_numbers = #tpu.dot_dimension_numbers<[1], [0], [0], [1], [0, 0, 1, 1], [], []>} : vector<2x128xbf16>, vector<128x128xbf16>, vector<2x128xf32> -> vector<2x128xf32>
    %462 = arith.addf %433, %461 : vector<2x128xf32>
    %c62_408 = arith.constant 62 : index
    %c0_409 = arith.constant 0 : index
    %463 = vector.load %arg15[%c62_408, %c0_409] : memref<128x128xbf16, #tpu.memory_space<vmem>>, vector<2x128xbf16>
    %cst_410 = arith.constant dense<0.000000e+00> : vector<2x128xf32>
    %464 = tpu.matmul %463, %456, %cst_410 {dimension_numbers = #tpu.dot_dimension_numbers<[1], [0], [0], [1], [0, 0, 1, 1], [], []>} : vector<2x128xbf16>, vector<128x128xbf16>, vector<2x128xf32> -> vector<2x128xf32>
    %465 = arith.addf %436, %464 : vector<2x128xf32>
    %c86_411 = arith.constant 86 : index
    %c0_412 = arith.constant 0 : index
    %466 = vector.load %arg15[%c86_411, %c0_412] : memref<128x128xbf16, #tpu.memory_space<vmem>>, vector<2x128xbf16>
    %cst_413 = arith.constant dense<0.000000e+00> : vector<2x128xf32>
    %467 = tpu.matmul %466, %456, %cst_413 {dimension_numbers = #tpu.dot_dimension_numbers<[1], [0], [0], [1], [0, 0, 1, 1], [], []>} : vector<2x128xbf16>, vector<128x128xbf16>, vector<2x128xf32> -> vector<2x128xf32>
    %468 = arith.addf %439, %467 : vector<2x128xf32>
    %c90_414 = arith.constant 90 : index
    %c0_415 = arith.constant 0 : index
    %469 = vector.load %arg15[%c90_414, %c0_415] : memref<128x128xbf16, #tpu.memory_space<vmem>>, vector<2x128xbf16>
    %cst_416 = arith.constant dense<0.000000e+00> : vector<2x128xf32>
    %470 = tpu.matmul %469, %456, %cst_416 {dimension_numbers = #tpu.dot_dimension_numbers<[1], [0], [0], [1], [0, 0, 1, 1], [], []>} : vector<2x128xbf16>, vector<128x128xbf16>, vector<2x128xf32> -> vector<2x128xf32>
    %471 = arith.addf %442, %470 : vector<2x128xf32>
    %c94_417 = arith.constant 94 : index
    %c0_418 = arith.constant 0 : index
    %472 = vector.load %arg15[%c94_417, %c0_418] : memref<128x128xbf16, #tpu.memory_space<vmem>>, vector<2x128xbf16>
    %cst_419 = arith.constant dense<0.000000e+00> : vector<2x128xf32>
    %473 = tpu.matmul %472, %456, %cst_419 {dimension_numbers = #tpu.dot_dimension_numbers<[1], [0], [0], [1], [0, 0, 1, 1], [], []>} : vector<2x128xbf16>, vector<128x128xbf16>, vector<2x128xf32> -> vector<2x128xf32>
    %474 = arith.addf %445, %473 : vector<2x128xf32>
    %c118_420 = arith.constant 118 : index
    %c0_421 = arith.constant 0 : index
    %475 = vector.load %arg15[%c118_420, %c0_421] : memref<128x128xbf16, #tpu.memory_space<vmem>>, vector<2x128xbf16>
    %cst_422 = arith.constant dense<0.000000e+00> : vector<2x128xf32>
    %476 = tpu.matmul %475, %456, %cst_422 {dimension_numbers = #tpu.dot_dimension_numbers<[1], [0], [0], [1], [0, 0, 1, 1], [], []>} : vector<2x128xbf16>, vector<128x128xbf16>, vector<2x128xf32> -> vector<2x128xf32>
    %477 = arith.addf %448, %476 : vector<2x128xf32>
    %c122_423 = arith.constant 122 : index
    %c0_424 = arith.constant 0 : index
    %478 = vector.load %arg15[%c122_423, %c0_424] : memref<128x128xbf16, #tpu.memory_space<vmem>>, vector<2x128xbf16>
    %cst_425 = arith.constant dense<0.000000e+00> : vector<2x128xf32>
    %479 = tpu.matmul %478, %456, %cst_425 {dimension_numbers = #tpu.dot_dimension_numbers<[1], [0], [0], [1], [0, 0, 1, 1], [], []>} : vector<2x128xbf16>, vector<128x128xbf16>, vector<2x128xf32> -> vector<2x128xf32>
    %480 = arith.addf %451, %479 : vector<2x128xf32>
    %c126 = arith.constant 126 : index
    %c0_426 = arith.constant 0 : index
    %481 = vector.load %arg15[%c126, %c0_426] : memref<128x128xbf16, #tpu.memory_space<vmem>>, vector<2x128xbf16>
    %cst_427 = arith.constant dense<0.000000e+00> : vector<2x128xf32>
    %482 = tpu.matmul %481, %456, %cst_427 {dimension_numbers = #tpu.dot_dimension_numbers<[1], [0], [0], [1], [0, 0, 1, 1], [], []>} : vector<2x128xbf16>, vector<128x128xbf16>, vector<2x128xf32> -> vector<2x128xf32>
    %483 = arith.addf %454, %482 : vector<2x128xf32>
    %484 = vector.broadcast %10 : vector<1x128xf32> to vector<2x128xf32>
    %485 = arith.addf %459, %484 : vector<2x128xf32>
    %cst_428 = arith.constant 0.000000e+00 : f32
    %486 = vector.broadcast %cst_428 : f32 to vector<2x128xf32>
    %487 = arith.maximumf %485, %486 : vector<2x128xf32>
    %488 = arith.truncf %487 : vector<2x128xf32> to vector<2x128xbf16>
    %489 = vector.broadcast %10 : vector<1x128xf32> to vector<2x128xf32>
    %490 = arith.addf %462, %489 : vector<2x128xf32>
    %cst_429 = arith.constant 0.000000e+00 : f32
    %491 = vector.broadcast %cst_429 : f32 to vector<2x128xf32>
    %492 = arith.maximumf %490, %491 : vector<2x128xf32>
    %493 = arith.truncf %492 : vector<2x128xf32> to vector<2x128xbf16>
    %494 = vector.broadcast %10 : vector<1x128xf32> to vector<2x128xf32>
    %495 = arith.addf %465, %494 : vector<2x128xf32>
    %cst_430 = arith.constant 0.000000e+00 : f32
    %496 = vector.broadcast %cst_430 : f32 to vector<2x128xf32>
    %497 = arith.maximumf %495, %496 : vector<2x128xf32>
    %498 = arith.truncf %497 : vector<2x128xf32> to vector<2x128xbf16>
    %499 = vector.broadcast %10 : vector<1x128xf32> to vector<2x128xf32>
    %500 = arith.addf %468, %499 : vector<2x128xf32>
    %cst_431 = arith.constant 0.000000e+00 : f32
    %501 = vector.broadcast %cst_431 : f32 to vector<2x128xf32>
    %502 = arith.maximumf %500, %501 : vector<2x128xf32>
    %503 = arith.truncf %502 : vector<2x128xf32> to vector<2x128xbf16>
    %504 = vector.broadcast %10 : vector<1x128xf32> to vector<2x128xf32>
    %505 = arith.addf %471, %504 : vector<2x128xf32>
    %cst_432 = arith.constant 0.000000e+00 : f32
    %506 = vector.broadcast %cst_432 : f32 to vector<2x128xf32>
    %507 = arith.maximumf %505, %506 : vector<2x128xf32>
    %508 = arith.truncf %507 : vector<2x128xf32> to vector<2x128xbf16>
    %509 = vector.broadcast %10 : vector<1x128xf32> to vector<2x128xf32>
    %510 = arith.addf %474, %509 : vector<2x128xf32>
    %cst_433 = arith.constant 0.000000e+00 : f32
    %511 = vector.broadcast %cst_433 : f32 to vector<2x128xf32>
    %512 = arith.maximumf %510, %511 : vector<2x128xf32>
    %513 = arith.truncf %512 : vector<2x128xf32> to vector<2x128xbf16>
    %514 = vector.broadcast %10 : vector<1x128xf32> to vector<2x128xf32>
    %515 = arith.addf %477, %514 : vector<2x128xf32>
    %cst_434 = arith.constant 0.000000e+00 : f32
    %516 = vector.broadcast %cst_434 : f32 to vector<2x128xf32>
    %517 = arith.maximumf %515, %516 : vector<2x128xf32>
    %518 = arith.truncf %517 : vector<2x128xf32> to vector<2x128xbf16>
    %519 = vector.broadcast %10 : vector<1x128xf32> to vector<2x128xf32>
    %520 = arith.addf %480, %519 : vector<2x128xf32>
    %cst_435 = arith.constant 0.000000e+00 : f32
    %521 = vector.broadcast %cst_435 : f32 to vector<2x128xf32>
    %522 = arith.maximumf %520, %521 : vector<2x128xf32>
    %523 = arith.truncf %522 : vector<2x128xf32> to vector<2x128xbf16>
    %524 = vector.broadcast %10 : vector<1x128xf32> to vector<2x128xf32>
    %525 = arith.addf %483, %524 : vector<2x128xf32>
    %cst_436 = arith.constant 0.000000e+00 : f32
    %526 = vector.broadcast %cst_436 : f32 to vector<2x128xf32>
    %527 = arith.maximumf %525, %526 : vector<2x128xf32>
    %528 = arith.truncf %527 : vector<2x128xf32> to vector<2x128xbf16>
    %c0_437 = arith.constant 0 : index
    %c0_438 = arith.constant 0 : index
    %529 = vector.load %arg7[%c0_437, %c0_438] : memref<1x128xf32, #tpu.memory_space<vmem>>, vector<1x128xf32>
    %cst_439 = arith.constant 0.000000e+00 : f32
    %530 = vector.broadcast %cst_439 : f32 to vector<2x512xf32>
    %cst_440 = arith.constant 0.000000e+00 : f32
    %531 = vector.broadcast %cst_440 : f32 to vector<2x128xf32>
    %c0_441 = arith.constant 0 : index
    %c0_442 = arith.constant 0 : index
    %c0_443 = arith.constant 0 : index
    %532 = vector.load %arg6[%c0_441, %c0_442, %c0_443] : memref<9x128x128xbf16, #tpu.memory_space<vmem>>, vector<1x128x128xbf16>
    %533 = vector.shape_cast %532 : vector<1x128x128xbf16> to vector<128x128xbf16>
    %cst_444 = arith.constant dense<0.000000e+00> : vector<2x128xf32>
    %534 = tpu.matmul %488, %533, %cst_444 {dimension_numbers = #tpu.dot_dimension_numbers<[1], [0], [0], [1], [0, 0, 1, 1], [], []>} : vector<2x128xbf16>, vector<128x128xbf16>, vector<2x128xf32> -> vector<2x128xf32>
    %535 = arith.addf %531, %534 : vector<2x128xf32>
    %c1_445 = arith.constant 1 : index
    %c0_446 = arith.constant 0 : index
    %c0_447 = arith.constant 0 : index
    %536 = vector.load %arg6[%c1_445, %c0_446, %c0_447] : memref<9x128x128xbf16, #tpu.memory_space<vmem>>, vector<1x128x128xbf16>
    %537 = vector.shape_cast %536 : vector<1x128x128xbf16> to vector<128x128xbf16>
    %cst_448 = arith.constant dense<0.000000e+00> : vector<2x128xf32>
    %538 = tpu.matmul %493, %537, %cst_448 {dimension_numbers = #tpu.dot_dimension_numbers<[1], [0], [0], [1], [0, 0, 1, 1], [], []>} : vector<2x128xbf16>, vector<128x128xbf16>, vector<2x128xf32> -> vector<2x128xf32>
    %539 = arith.addf %535, %538 : vector<2x128xf32>
    %c2_449 = arith.constant 2 : index
    %c0_450 = arith.constant 0 : index
    %c0_451 = arith.constant 0 : index
    %540 = vector.load %arg6[%c2_449, %c0_450, %c0_451] : memref<9x128x128xbf16, #tpu.memory_space<vmem>>, vector<1x128x128xbf16>
    %541 = vector.shape_cast %540 : vector<1x128x128xbf16> to vector<128x128xbf16>
    %cst_452 = arith.constant dense<0.000000e+00> : vector<2x128xf32>
    %542 = tpu.matmul %498, %541, %cst_452 {dimension_numbers = #tpu.dot_dimension_numbers<[1], [0], [0], [1], [0, 0, 1, 1], [], []>} : vector<2x128xbf16>, vector<128x128xbf16>, vector<2x128xf32> -> vector<2x128xf32>
    %543 = arith.addf %539, %542 : vector<2x128xf32>
    %c3_453 = arith.constant 3 : index
    %c0_454 = arith.constant 0 : index
    %c0_455 = arith.constant 0 : index
    %544 = vector.load %arg6[%c3_453, %c0_454, %c0_455] : memref<9x128x128xbf16, #tpu.memory_space<vmem>>, vector<1x128x128xbf16>
    %545 = vector.shape_cast %544 : vector<1x128x128xbf16> to vector<128x128xbf16>
    %cst_456 = arith.constant dense<0.000000e+00> : vector<2x128xf32>
    %546 = tpu.matmul %503, %545, %cst_456 {dimension_numbers = #tpu.dot_dimension_numbers<[1], [0], [0], [1], [0, 0, 1, 1], [], []>} : vector<2x128xbf16>, vector<128x128xbf16>, vector<2x128xf32> -> vector<2x128xf32>
    %547 = arith.addf %543, %546 : vector<2x128xf32>
    %c4_457 = arith.constant 4 : index
    %c0_458 = arith.constant 0 : index
    %c0_459 = arith.constant 0 : index
    %548 = vector.load %arg6[%c4_457, %c0_458, %c0_459] : memref<9x128x128xbf16, #tpu.memory_space<vmem>>, vector<1x128x128xbf16>
    %549 = vector.shape_cast %548 : vector<1x128x128xbf16> to vector<128x128xbf16>
    %cst_460 = arith.constant dense<0.000000e+00> : vector<2x128xf32>
    %550 = tpu.matmul %508, %549, %cst_460 {dimension_numbers = #tpu.dot_dimension_numbers<[1], [0], [0], [1], [0, 0, 1, 1], [], []>} : vector<2x128xbf16>, vector<128x128xbf16>, vector<2x128xf32> -> vector<2x128xf32>
    %551 = arith.addf %547, %550 : vector<2x128xf32>
    %c5_461 = arith.constant 5 : index
    %c0_462 = arith.constant 0 : index
    %c0_463 = arith.constant 0 : index
    %552 = vector.load %arg6[%c5_461, %c0_462, %c0_463] : memref<9x128x128xbf16, #tpu.memory_space<vmem>>, vector<1x128x128xbf16>
    %553 = vector.shape_cast %552 : vector<1x128x128xbf16> to vector<128x128xbf16>
    %cst_464 = arith.constant dense<0.000000e+00> : vector<2x128xf32>
    %554 = tpu.matmul %513, %553, %cst_464 {dimension_numbers = #tpu.dot_dimension_numbers<[1], [0], [0], [1], [0, 0, 1, 1], [], []>} : vector<2x128xbf16>, vector<128x128xbf16>, vector<2x128xf32> -> vector<2x128xf32>
    %555 = arith.addf %551, %554 : vector<2x128xf32>
    %c6_465 = arith.constant 6 : index
    %c0_466 = arith.constant 0 : index
    %c0_467 = arith.constant 0 : index
    %556 = vector.load %arg6[%c6_465, %c0_466, %c0_467] : memref<9x128x128xbf16, #tpu.memory_space<vmem>>, vector<1x128x128xbf16>
    %557 = vector.shape_cast %556 : vector<1x128x128xbf16> to vector<128x128xbf16>
    %cst_468 = arith.constant dense<0.000000e+00> : vector<2x128xf32>
    %558 = tpu.matmul %518, %557, %cst_468 {dimension_numbers = #tpu.dot_dimension_numbers<[1], [0], [0], [1], [0, 0, 1, 1], [], []>} : vector<2x128xbf16>, vector<128x128xbf16>, vector<2x128xf32> -> vector<2x128xf32>
    %559 = arith.addf %555, %558 : vector<2x128xf32>
    %c7_469 = arith.constant 7 : index
    %c0_470 = arith.constant 0 : index
    %c0_471 = arith.constant 0 : index
    %560 = vector.load %arg6[%c7_469, %c0_470, %c0_471] : memref<9x128x128xbf16, #tpu.memory_space<vmem>>, vector<1x128x128xbf16>
    %561 = vector.shape_cast %560 : vector<1x128x128xbf16> to vector<128x128xbf16>
    %cst_472 = arith.constant dense<0.000000e+00> : vector<2x128xf32>
    %562 = tpu.matmul %523, %561, %cst_472 {dimension_numbers = #tpu.dot_dimension_numbers<[1], [0], [0], [1], [0, 0, 1, 1], [], []>} : vector<2x128xbf16>, vector<128x128xbf16>, vector<2x128xf32> -> vector<2x128xf32>
    %563 = arith.addf %559, %562 : vector<2x128xf32>
    %c8_473 = arith.constant 8 : index
    %c0_474 = arith.constant 0 : index
    %c0_475 = arith.constant 0 : index
    %564 = vector.load %arg6[%c8_473, %c0_474, %c0_475] : memref<9x128x128xbf16, #tpu.memory_space<vmem>>, vector<1x128x128xbf16>
    %565 = vector.shape_cast %564 : vector<1x128x128xbf16> to vector<128x128xbf16>
    %cst_476 = arith.constant dense<0.000000e+00> : vector<2x128xf32>
    %566 = tpu.matmul %528, %565, %cst_476 {dimension_numbers = #tpu.dot_dimension_numbers<[1], [0], [0], [1], [0, 0, 1, 1], [], []>} : vector<2x128xbf16>, vector<128x128xbf16>, vector<2x128xf32> -> vector<2x128xf32>
    %567 = arith.addf %563, %566 : vector<2x128xf32>
    %568 = vector.broadcast %529 : vector<1x128xf32> to vector<2x128xf32>
    %569 = arith.addf %567, %568 : vector<2x128xf32>
    %cst_477 = arith.constant 0.000000e+00 : f32
    %570 = vector.broadcast %cst_477 : f32 to vector<2x128xf32>
    %571 = arith.maximumf %569, %570 : vector<2x128xf32>
    %572 = arith.truncf %571 : vector<2x128xf32> to vector<2x128xbf16>
    %c0_478 = arith.constant 0 : index
    %c0_479 = arith.constant 0 : index
    %c0_480 = arith.constant 0 : index
    %573 = vector.load %arg8[%c0_478, %c0_479, %c0_480] : memref<1x128x512xbf16, #tpu.memory_space<vmem>>, vector<1x128x512xbf16>
    %574 = vector.shape_cast %573 : vector<1x128x512xbf16> to vector<128x512xbf16>
    %cst_481 = arith.constant dense<0.000000e+00> : vector<2x512xf32>
    %575 = tpu.matmul %572, %574, %cst_481 {dimension_numbers = #tpu.dot_dimension_numbers<[1], [0], [0], [1], [0, 0, 1, 1], [], []>} : vector<2x128xbf16>, vector<128x512xbf16>, vector<2x512xf32> -> vector<2x512xf32>
    %576 = arith.addf %530, %575 : vector<2x512xf32>
    %c0_482 = arith.constant 0 : index
    %c0_483 = arith.constant 0 : index
    %577 = vector.load %arg9[%c0_482, %c0_483] : memref<1x512xf32, #tpu.memory_space<vmem>>, vector<1x512xf32>
    %578 = vector.broadcast %577 : vector<1x512xf32> to vector<2x512xf32>
    %579 = arith.addf %576, %578 : vector<2x512xf32>
    %cst_484 = arith.constant 0.000000e+00 : f32
    %580 = vector.broadcast %cst_484 : f32 to vector<2x512xf32>
    %581 = arith.maximumf %579, %580 : vector<2x512xf32>
    %582 = arith.truncf %581 : vector<2x512xf32> to vector<2x512xbf16>
    %c0_485 = arith.constant 0 : index
    %c0_486 = arith.constant 0 : index
    %583 = vector.load %arg10[%c0_485, %c0_486] : memref<512x512xbf16, #tpu.memory_space<vmem>>, vector<512x512xbf16>
    %cst_487 = arith.constant dense<0.000000e+00> : vector<2x512xf32>
    %584 = tpu.matmul %582, %583, %cst_487 {dimension_numbers = #tpu.dot_dimension_numbers<[1], [0], [0], [1], [0, 0, 1, 1], [], []>} : vector<2x512xbf16>, vector<512x512xbf16>, vector<2x512xf32> -> vector<2x512xf32>
    %c0_488 = arith.constant 0 : index
    %c0_489 = arith.constant 0 : index
    %585 = vector.load %arg11[%c0_488, %c0_489] : memref<1x512xf32, #tpu.memory_space<vmem>>, vector<1x512xf32>
    %586 = vector.broadcast %585 : vector<1x512xf32> to vector<2x512xf32>
    %587 = arith.addf %584, %586 : vector<2x512xf32>
    %cst_490 = arith.constant 0.000000e+00 : f32
    %588 = vector.broadcast %cst_490 : f32 to vector<2x512xf32>
    %589 = arith.maximumf %587, %588 : vector<2x512xf32>
    %590 = arith.truncf %589 : vector<2x512xf32> to vector<2x512xbf16>
    %c0_491 = arith.constant 0 : index
    %c0_492 = arith.constant 0 : index
    %591 = vector.load %arg12[%c0_491, %c0_492] : memref<512x128xbf16, #tpu.memory_space<vmem>>, vector<512x128xbf16>
    %cst_493 = arith.constant dense<0.000000e+00> : vector<2x128xf32>
    %592 = tpu.matmul %590, %591, %cst_493 {dimension_numbers = #tpu.dot_dimension_numbers<[1], [0], [0], [1], [0, 0, 1, 1], [], []>} : vector<2x512xbf16>, vector<512x128xbf16>, vector<2x128xf32> -> vector<2x128xf32>
    %c0_494 = arith.constant 0 : index
    %c0_495 = arith.constant 0 : index
    %593 = vector.load %arg13[%c0_494, %c0_495] : memref<1x128xf32, #tpu.memory_space<vmem>>, vector<1x128xf32>
    %594 = vector.broadcast %593 : vector<1x128xf32> to vector<2x128xf32>
    %595 = arith.addf %592, %594 : vector<2x128xf32>
    %c0_496 = arith.constant 0 : index
    %c0_497 = arith.constant 0 : index
    %596 = vector.load %arg14[%c0_496, %c0_497] : memref<2x128xf32, #tpu.memory_space<vmem>>, vector<2x128xf32>
    tpu.vector_store %arg14[%c0_496, %c0_497], %595 {strides = array<i32>} : memref<2x128xf32, #tpu.memory_space<vmem>>, vector<2x128xf32>,
    return
  }
  func.func @transform_0(%arg0: i32) -> (i32, i32) {
    %c0_i32 = arith.constant 0 : i32
    %c0_i32_0 = arith.constant 0 : i32
    %c0_i32_1 = arith.constant 0 : i32
    return %c0_i32, %c0_i32_0 : i32, i32
  }
  func.func @transform_1(%arg0: i32) -> (i32, i32) {
    %c0_i32 = arith.constant 0 : i32
    %c0_i32_0 = arith.constant 0 : i32
    %c0_i32_1 = arith.constant 0 : i32
    return %c0_i32, %c0_i32_0 : i32, i32
  }
  func.func @transform_2(%arg0: i32) -> (i32, i32) {
    %c0_i32 = arith.constant 0 : i32
    %c0_i32_0 = arith.constant 0 : i32
    %c0_i32_1 = arith.constant 0 : i32
    return %c0_i32, %c0_i32_0 : i32, i32
  }
  func.func @transform_3(%arg0: i32) -> (i32, i32, i32) {
    %c0_i32 = arith.constant 0 : i32
    %c0_i32_0 = arith.constant 0 : i32
    %c0_i32_1 = arith.constant 0 : i32
    %c0_i32_2 = arith.constant 0 : i32
    return %c0_i32, %c0_i32_0, %c0_i32_1 : i32, i32, i32
  }
  func.func @transform_4(%arg0: i32) -> (i32, i32) {
    %c0_i32 = arith.constant 0 : i32
    %c0_i32_0 = arith.constant 0 : i32
    %c0_i32_1 = arith.constant 0 : i32
    return %c0_i32, %c0_i32_0 : i32, i32
  }
  func.func @transform_5(%arg0: i32) -> (i32, i32, i32) {
    %c0_i32 = arith.constant 0 : i32
    %c0_i32_0 = arith.constant 0 : i32
    %c0_i32_1 = arith.constant 0 : i32
    %c0_i32_2 = arith.constant 0 : i32
    return %c0_i32, %c0_i32_0, %c0_i32_1 : i32, i32, i32
  }
  func.func @transform_6(%arg0: i32) -> (i32, i32) {
    %c0_i32 = arith.constant 0 : i32
    %c0_i32_0 = arith.constant 0 : i32
    %c0_i32_1 = arith.constant 0 : i32
    return %c0_i32, %c0_i32_0 : i32, i32
  }
  func.func @transform_7(%arg0: i32) -> (i32, i32, i32) {
    %c0_i32 = arith.constant 0 : i32
    %c0_i32_0 = arith.constant 0 : i32
    %c0_i32_1 = arith.constant 0 : i32
    %c0_i32_2 = arith.constant 0 : i32
    return %c0_i32, %c0_i32_0, %c0_i32_1 : i32, i32, i32
  }
  func.func @transform_8(%arg0: i32) -> (i32, i32) {
    %c0_i32 = arith.constant 0 : i32
    %c0_i32_0 = arith.constant 0 : i32
    %c0_i32_1 = arith.constant 0 : i32
    return %c0_i32, %c0_i32_0 : i32, i32
  }
  func.func @transform_9(%arg0: i32) -> (i32, i32) {
    %c0_i32 = arith.constant 0 : i32
    %c0_i32_0 = arith.constant 0 : i32
    %c0_i32_1 = arith.constant 0 : i32
    return %c0_i32, %c0_i32_0 : i32, i32
  }
  func.func @transform_10(%arg0: i32) -> (i32, i32) {
    %c0_i32 = arith.constant 0 : i32
    %c0_i32_0 = arith.constant 0 : i32
    %c0_i32_1 = arith.constant 0 : i32
    return %c0_i32, %c0_i32_0 : i32, i32
  }
  func.func @transform_11(%arg0: i32) -> (i32, i32) {
    %c0_i32 = arith.constant 0 : i32
    %c0_i32_0 = arith.constant 0 : i32
    %c0_i32_1 = arith.constant 0 : i32
    return %c0_i32, %c0_i32_0 : i32, i32
  }
  func.func @transform_12(%arg0: i32) -> (i32, i32) {
    %c0_i32 = arith.constant 0 : i32
    %c0_i32_0 = arith.constant 0 : i32
    %c0_i32_1 = arith.constant 0 : i32
    return %c0_i32, %c0_i32_0 : i32, i32
  }
  func.func @transform_13(%arg0: i32) -> (i32, i32) {
    %c0_i32 = arith.constant 0 : i32
    %c0_i32_0 = arith.constant 0 : i32
    %c0_i32_1 = arith.constant 0 : i32
    return %c0_i32, %c0_i32_0 : i32, i32
  }
}

</mosaic_0001>

<llo_original>
// kernel: predictor_rnd_forward.1
$region0: #{predictor_rnd_forward.1}
  #allocation0 [shape = 'u32[]', space=smem, size = 0x4, offset = 0x4, fixed_abs, tag = 'smem constant byte address 0x4 - core index']
  #allocation1 [shape = 'u32[144,128]{1,0:T(1,128)}', space=vmem, size = 0x12000, scoped, tag = 'internal scratch']
  #allocation2 [shape = 'bf16[128,128]{1,0:T(8,128)(2,1)}', space=vmem, size = 0x8000, scoped, tag = 'scratch operand']
  %s0 = inlined_call_operand.vmem [shape: bf16[128,128], index: 0, kind: input, shape index: {}]
  %s1 = inlined_call_operand.vmem [shape: bf16[128,128], index: 1, kind: input, shape index: {}]
  %s2 = inlined_call_operand.vmem [shape: f32[1,128], index: 2, kind: input, shape index: {}]
  %s3 = inlined_call_operand.vmem [shape: bf16[16,128,128], index: 3, kind: input, shape index: {}]
  %s4 = inlined_call_operand.vmem [shape: f32[1,128], index: 4, kind: input, shape index: {}]
  %s5 = inlined_call_operand.vmem [shape: bf16[9,128,128], index: 5, kind: input, shape index: {}]
  %s6 = inlined_call_operand.vmem [shape: f32[1,128], index: 6, kind: input, shape index: {}]
  %s7 = inlined_call_operand.vmem [shape: bf16[1,128,512], index: 7, kind: input, shape index: {}]
  %s8 = inlined_call_operand.vmem [shape: f32[1,512], index: 8, kind: input, shape index: {}]
  %s9 = inlined_call_operand.vmem [shape: bf16[512,512], index: 9, kind: input, shape index: {}]
  %s10 = inlined_call_operand.vmem [shape: f32[1,512], index: 10, kind: input, shape index: {}]
  %s11 = inlined_call_operand.vmem [shape: bf16[512,128], index: 11, kind: input, shape index: {}]
  %s12 = inlined_call_operand.vmem [shape: f32[1,128], index: 12, kind: input, shape index: {}]
  %s13 = inlined_call_operand.hbm [shape: f32[2,128], index: 13, kind: output, shape index: {}]
  %s14 = sld [smem:[#allocation0]]
  $region62: #{predictor_rnd_forward.1} parent=0
    _
  %s16 = ssub.s32 1, %s14
  %s17 = scalar_select 0, %s16, %s14
  $region1: #{predictor_rnd_forward.1} parent=0
    #allocation3 [shape = 'u8[1024]{0}', space=vmem, size = 0x400, scoped, tag = 'output window, operand 0, single buffered']
    #allocation4 [shape = 's32[1]{0}', space=sflag, size = 0x4, scoped, tag = 'scoped memory for predictor_rnd_forward.1']
    %18 = vsyncpa [#allocation4], 0
    // Predicated region
    $region2: #{predictor_rnd_forward.1} parent=1 // pred_check
      _
    $region3: #{predictor_rnd_forward.1} parent=1 // pred_check_branch
      %20 = sbr.rel (0) target = $region5
    $region4: #{predictor_rnd_forward.1} parent=1 // pred_region
      _
    $region5: #{predictor_rnd_forward.1} parent=1 // pred_fallthru
      _
    // Predicated region
    $region6: #{predictor_rnd_forward.1} parent=1 // pred_check
      _
    $region7: #{predictor_rnd_forward.1} parent=1 // pred_check_branch
      %22 = sbr.rel (0) target = $region9
    $region8: #{predictor_rnd_forward.1} parent=1 // pred_region
      _
    $region9: #{predictor_rnd_forward.1} parent=1 // pred_fallthru
      _
    // Predicated region
    $region10: #{predictor_rnd_forward.1} parent=1 // pred_check
      _
    $region11: #{predictor_rnd_forward.1} parent=1 // pred_check_branch
      %24 = sbr.rel (0) target = $region13
    $region12: #{predictor_rnd_forward.1} parent=1 // pred_region
      _
    $region13: #{predictor_rnd_forward.1} parent=1 // pred_fallthru
      _
    // Predicated region
    $region14: #{predictor_rnd_forward.1} parent=1 // pred_check
      _
    $region15: #{predictor_rnd_forward.1} parent=1 // pred_check_branch
      %26 = sbr.rel (0) target = $region17
    $region16: #{predictor_rnd_forward.1} parent=1 // pred_region
      _
    $region17: #{predictor_rnd_forward.1} parent=1 // pred_fallthru
      _
    // Predicated region
    $region18: #{predictor_rnd_forward.1} parent=1 // pred_check
      _
    $region19: #{predictor_rnd_forward.1} parent=1 // pred_check_branch
      %28 = sbr.rel (0) target = $region21
    $region20: #{predictor_rnd_forward.1} parent=1 // pred_region
      _
    $region21: #{predictor_rnd_forward.1} parent=1 // pred_fallthru
      _
    // Predicated region
    $region22: #{predictor_rnd_forward.1} parent=1 // pred_check
      _
    $region23: #{predictor_rnd_forward.1} parent=1 // pred_check_branch
      %30 = sbr.rel (0) target = $region25
    $region24: #{predictor_rnd_forward.1} parent=1 // pred_region
      _
    $region25: #{predictor_rnd_forward.1} parent=1 // pred_fallthru
      _
    // Predicated region
    $region26: #{predictor_rnd_forward.1} parent=1 // pred_check
      _
    $region27: #{predictor_rnd_forward.1} parent=1 // pred_check_branch
      %32 = sbr.rel (0) target = $region29
    $region28: #{predictor_rnd_forward.1} parent=1 // pred_region
      _
    $region29: #{predictor_rnd_forward.1} parent=1 // pred_fallthru
      _
    // Predicated region
    $region30: #{predictor_rnd_forward.1} parent=1 // pred_check
      _
    $region31: #{predictor_rnd_forward.1} parent=1 // pred_check_branch
      %34 = sbr.rel (0) target = $region33
    $region32: #{predictor_rnd_forward.1} parent=1 // pred_region
      _
    $region33: #{predictor_rnd_forward.1} parent=1 // pred_fallthru
      _
    // Predicated region
    $region34: #{predictor_rnd_forward.1} parent=1 // pred_check
      _
    $region35: #{predictor_rnd_forward.1} parent=1 // pred_check_branch
      %36 = sbr.rel (0) target = $region37
    $region36: #{predictor_rnd_forward.1} parent=1 // pred_region
      _
    $region37: #{predictor_rnd_forward.1} parent=1 // pred_fallthru
      _
    // Predicated region
    $region38: #{predictor_rnd_forward.1} parent=1 // pred_check
      _
    $region39: #{predictor_rnd_forward.1} parent=1 // pred_check_branch
      %38 = sbr.rel (0) target = $region41
    $region40: #{predictor_rnd_forward.1} parent=1 // pred_region
      _
    $region41: #{predictor_rnd_forward.1} parent=1 // pred_fallthru
      _
    // Predicated region
    $region42: #{predictor_rnd_forward.1} parent=1 // pred_check
      _
    $region43: #{predictor_rnd_forward.1} parent=1 // pred_check_branch
      %40 = sbr.rel (0) target = $region45
    $region44: #{predictor_rnd_forward.1} parent=1 // pred_region
      _
    $region45: #{predictor_rnd_forward.1} parent=1 // pred_fallthru
      _
    // Predicated region
    $region46: #{predictor_rnd_forward.1} parent=1 // pred_check
      _
    $region47: #{predictor_rnd_forward.1} parent=1 // pred_check_branch
      %42 = sbr.rel (0) target = $region49
    $region48: #{predictor_rnd_forward.1} parent=1 // pred_region
      _
    $region49: #{predictor_rnd_forward.1} parent=1 // pred_fallthru
      _
    // Predicated region
    $region50: #{predictor_rnd_forward.1} parent=1 // pred_check
      _
    $region51: #{predictor_rnd_forward.1} parent=1 // pred_check_branch
      %44 = sbr.rel (0) target = $region53
    $region52: #{predictor_rnd_forward.1} parent=1 // pred_region
      _
    $region53: #{predictor_rnd_forward.1} parent=1 // pred_fallthru
      _
    %v46 = vld [vmem:[%s0] sm:$0xf]
    %v47 = vld [vmem:[%s0 + $0x4] sm:$0xf]
    %v48 = vld [vmem:[%s0 + $0x8] sm:$0xf]
    %v49 = vld [vmem:[%s0 + $0xc] sm:$0xf]
    %v50 = vld [vmem:[%s0 + $0x10] sm:$0xf]
    %v51 = vld [vmem:[%s0 + $0x14] sm:$0xf]
    %v52 = vld [vmem:[%s0 + $0x18] sm:$0xf]
    %v53 = vld [vmem:[%s0 + $0x1c] sm:$0xf]
    %v54 = vld [vmem:[%s0 + $0x20] sm:$0xf]
    %v55 = vld [vmem:[%s0 + $0x24] sm:$0xf]
    %v56 = vld [vmem:[%s0 + $0x28] sm:$0xf]
    %v57 = vld [vmem:[%s0 + $0x2c] sm:$0xf]
    %v58 = vld [vmem:[%s0 + $0x30] sm:$0xf]
    %v59 = vld [vmem:[%s0 + $0x34] sm:$0xf]
    %v60 = vld [vmem:[%s0 + $0x38] sm:$0xf]
    %v61 = vld [vmem:[%s0 + $0x3c] sm:$0xf]
    %v62 = vld [vmem:[%s1] sm:$0xf]
    %v63 = vld [vmem:[%s1 + $0x4] sm:$0xf]
    %v64 = vld [vmem:[%s1 + $0x8] sm:$0xf]
    %v65 = vld [vmem:[%s1 + $0xc] sm:$0xf]
    %v66 = vld [vmem:[%s1 + $0x10] sm:$0xf]
    %v67 = vld [vmem:[%s1 + $0x14] sm:$0xf]
    %v68 = vld [vmem:[%s1 + $0x18] sm:$0xf]
    %v69 = vld [vmem:[%s1 + $0x1c] sm:$0xf]
    %v70 = vld [vmem:[%s1 + $0x20] sm:$0xf]
    %v71 = vld [vmem:[%s1 + $0x24] sm:$0xf]
    %v72 = vld [vmem:[%s1 + $0x28] sm:$0xf]
    %v73 = vld [vmem:[%s1 + $0x2c] sm:$0xf]
    %v74 = vld [vmem:[%s1 + $0x30] sm:$0xf]
    %v75 = vld [vmem:[%s1 + $0x34] sm:$0xf]
    %v76 = vld [vmem:[%s1 + $0x38] sm:$0xf]
    %v77 = vld [vmem:[%s1 + $0x3c] sm:$0xf]
    %v78 = vld [vmem:[%s2] sm:$0x1]
    %v80 = vlaneseq
    %v81 = vshrl.u32 %v80, 7
    %v82 = vsub.s32 0, %v81
    %v83 = vrot.slane %v78, %v82
    %v101 = vunpack.c.l.b16 %v46
    %v102 = vunpack.c.l.b16 %v47
    %v103 = vunpack.c.l.b16 %v48
    %v104 = vunpack.c.l.b16 %v49
    %v105 = vunpack.c.l.b16 %v50
    %v106 = vunpack.c.l.b16 %v51
    %v107 = vunpack.c.l.b16 %v52
    %v108 = vunpack.c.l.b16 %v53
    %v109 = vunpack.c.l.b16 %v54
    %v110 = vunpack.c.l.b16 %v55
    %v111 = vunpack.c.l.b16 %v56
    %v112 = vunpack.c.l.b16 %v57
    %v113 = vunpack.c.l.b16 %v58
    %v114 = vunpack.c.l.b16 %v59
    %v115 = vunpack.c.l.b16 %v60
    %v116 = vunpack.c.l.b16 %v61
    %v117 = vpack.c.b16 %v102, %v101
    %v118 = vpack.c.b16 %v104, %v103
    %v119 = vpack.c.b16 %v106, %v105
    %v120 = vpack.c.b16 %v108, %v107
    %v121 = vpack.c.b16 %v110, %v109
    %v122 = vpack.c.b16 %v112, %v111
    %v123 = vpack.c.b16 %v114, %v113
    %v124 = vpack.c.b16 %v116, %v115
    %v149 = vunpack.c.l.b16 %v62
    %v150 = vunpack.c.l.b16 %v63
    %v151 = vunpack.c.l.b16 %v64
    %v152 = vunpack.c.l.b16 %v65
    %v153 = vunpack.c.l.b16 %v66
    %v154 = vunpack.c.l.b16 %v67
    %v155 = vunpack.c.l.b16 %v68
    %v156 = vunpack.c.l.b16 %v69
    %v157 = vunpack.c.l.b16 %v70
    %v158 = vunpack.c.l.b16 %v71
    %v159 = vunpack.c.l.b16 %v72
    %v160 = vunpack.c.l.b16 %v73
    %v161 = vunpack.c.l.b16 %v74
    %v162 = vunpack.c.l.b16 %v75
    %v163 = vunpack.c.l.b16 %v76
    %v164 = vunpack.c.l.b16 %v77
    %v165 = vpack.c.b16 %v150, %v149
    %v166 = vpack.c.b16 %v152, %v151
    %v167 = vpack.c.b16 %v154, %v153
    %v168 = vpack.c.b16 %v156, %v155
    %v169 = vpack.c.b16 %v158, %v157
    %v170 = vpack.c.b16 %v160, %v159
    %v171 = vpack.c.b16 %v162, %v161
    %v172 = vpack.c.b16 %v164, %v163
    %181 = vmatprep.subr.bf16.mxu0 0
    %182 = vmatpush1.bf16.msra.mxu0 %v172
    %183 = vmatprep.subr.bf16.mxu0 0
    %184 = vmatpush1.bf16.msra.mxu0 %v171
    %185 = vmatprep.subr.bf16.mxu0 0
    %186 = vmatpush1.bf16.msra.mxu0 %v170
    %187 = vmatprep.subr.bf16.mxu0 0
    %188 = vmatpush1.bf16.msra.mxu0 %v169
    %189 = vmatprep.subr.bf16.mxu0 0
    %190 = vmatpush1.bf16.msra.mxu0 %v168
    %191 = vmatprep.subr.bf16.mxu0 0
    %192 = vmatpush1.bf16.msra.mxu0 %v167
    %193 = vmatprep.subr.bf16.mxu0 0
    %194 = vmatpush1.bf16.msra.mxu0 %v166
    %195 = vmatprep.subr.bf16.mxu0 0
    %196 = vmatpush1.bf16.msra.mxu0 %v165
    %197 = vmatprep.subr.bf16.mxu0 0
    %198 = vmatpush2.bf16.msra.mxu0 0
    %199 = vmatprep.subr.bf16.mxu0 0
    %200 = vmatpush2.bf16.msra.mxu0 0
    %201 = vmatprep.subr.bf16.mxu0 0
    %202 = vmatpush2.bf16.msra.mxu0 0
    %203 = vmatprep.subr.bf16.mxu0 0
    %204 = vmatpush2.bf16.msra.mxu0 0
    %205 = vmatprep.subr.bf16.mxu0 0
    %206 = vmatpush2.bf16.msra.mxu0 0
    %207 = vmatprep.subr.bf16.mxu0 0
    %208 = vmatpush2.bf16.msra.mxu0 0
    %209 = vmatprep.subr.bf16.mxu0 0
    %210 = vmatpush2.bf16.msra.mxu0 0
    %211 = vmatprep.subr.bf16.mxu0 0
    %212 = vmatpush2.bf16.msra.mxu0 0
    %213 = vmatprep.mubr.bf16.mxu0 0
    %214 = vmatmul.mubr.bf16.gmra.mxu0 %v117
    %v215 = vpop.f32.mrf.mxu0
    %v216 = vadd.f32 %v83, %v215
    %v217 = vpop.f32.mrf.mxu0
    %v218 = vpop.f32.mrf.mxu0
    %v219 = vadd.f32 %v83, %v218
    %v220 = vpop.f32.mrf.mxu0
    %221 = vmatprep.mubr.bf16.mxu0 0
    %222 = vmatmul.mubr.bf16.gmra.mxu0 %v118
    %v223 = vpop.f32.mrf.mxu0
    %v224 = vadd.f32 %v83, %v223
    %v225 = vpop.f32.mrf.mxu0
    %v226 = vpop.f32.mrf.mxu0
    %v227 = vadd.f32 %v83, %v226
    %v228 = vpop.f32.mrf.mxu0
    %229 = vmatprep.mubr.bf16.mxu0 0
    %230 = vmatmul.mubr.bf16.gmra.mxu0 %v119
    %v231 = vpop.f32.mrf.mxu0
    %v232 = vadd.f32 %v83, %v231
    %v233 = vpop.f32.mrf.mxu0
    %v234 = vpop.f32.mrf.mxu0
    %v235 = vadd.f32 %v83, %v234
    %v236 = vpop.f32.mrf.mxu0
    %237 = vmatprep.mubr.bf16.mxu0 0
    %238 = vmatmul.mubr.bf16.gmra.mxu0 %v120
    %v239 = vpop.f32.mrf.mxu0
    %v240 = vadd.f32 %v83, %v239
    %v241 = vpop.f32.mrf.mxu0
    %v242 = vpop.f32.mrf.mxu0
    %v243 = vadd.f32 %v83, %v242
    %v244 = vpop.f32.mrf.mxu0
    %245 = vmatprep.mubr.bf16.mxu0 0
    %246 = vmatmul.mubr.bf16.gmra.mxu0 %v121
    %v247 = vpop.f32.mrf.mxu0
    %v248 = vadd.f32 %v83, %v247
    %v249 = vpop.f32.mrf.mxu0
    %v250 = vpop.f32.mrf.mxu0
    %v251 = vadd.f32 %v83, %v250
    %v252 = vpop.f32.mrf.mxu0
    %253 = vmatprep.mubr.bf16.mxu0 0
    %254 = vmatmul.mubr.bf16.gmra.mxu0 %v122
    %v255 = vpop.f32.mrf.mxu0
    %v256 = vadd.f32 %v83, %v255
    %v257 = vpop.f32.mrf.mxu0
    %v258 = vpop.f32.mrf.mxu0
    %v259 = vadd.f32 %v83, %v258
    %v260 = vpop.f32.mrf.mxu0
    %261 = vmatprep.mubr.bf16.mxu0 0
    %262 = vmatmul.mubr.bf16.gmra.mxu0 %v123
    %v263 = vpop.f32.mrf.mxu0
    %v264 = vadd.f32 %v83, %v263
    %v265 = vpop.f32.mrf.mxu0
    %v266 = vpop.f32.mrf.mxu0
    %v267 = vadd.f32 %v83, %v266
    %v268 = vpop.f32.mrf.mxu0
    %269 = vmatprep.mubr.bf16.mxu0 0
    %270 = vmatmul.mubr.bf16.gmra.mxu0 %v124
    %v271 = vpop.f32.mrf.mxu0
    %v272 = vadd.f32 %v83, %v271
    %v273 = vpop.f32.mrf.mxu0
    %v274 = vpop.f32.mrf.mxu0
    %v275 = vadd.f32 %v83, %v274
    %v276 = vpop.f32.mrf.mxu0
    %277 = vdwg.mxu0
    %v278 = vmax.f32 %v216, 0.0
    %v279 = vmax.f32 %v219, 0.0
    %v280 = vmax.f32 %v224, 0.0
    %v281 = vmax.f32 %v227, 0.0
    %v282 = vmax.f32 %v232, 0.0
    %v283 = vmax.f32 %v235, 0.0
    %v284 = vmax.f32 %v240, 0.0
    %v285 = vmax.f32 %v243, 0.0
    %v286 = vmax.f32 %v248, 0.0
    %v287 = vmax.f32 %v251, 0.0
    %v288 = vmax.f32 %v256, 0.0
    %v289 = vmax.f32 %v259, 0.0
    %v290 = vmax.f32 %v264, 0.0
    %v291 = vmax.f32 %v267, 0.0
    %v292 = vmax.f32 %v272, 0.0
    %v293 = vmax.f32 %v275, 0.0
    %v294 = vpack.c.bf16 %v279, %v278
    %v295 = vpack.c.bf16 %v281, %v280
    %v296 = vpack.c.bf16 %v283, %v282
    %v297 = vpack.c.bf16 %v285, %v284
    %v298 = vpack.c.bf16 %v287, %v286
    %v299 = vpack.c.bf16 %v289, %v288
    %v300 = vpack.c.bf16 %v291, %v290
    %v301 = vpack.c.bf16 %v293, %v292
    %v310 = vunpack.c.l.b16 %v294
    %v311 = vunpack.c.h.b16 %v294
    %v312 = vunpack.c.l.b16 %v295
    %v313 = vunpack.c.h.b16 %v295
    %v314 = vunpack.c.l.b16 %v296
    %v315 = vunpack.c.h.b16 %v296
    %v316 = vunpack.c.l.b16 %v297
    %v317 = vunpack.c.h.b16 %v297
    %v318 = vunpack.c.l.b16 %v298
    %v319 = vunpack.c.h.b16 %v298
    %v320 = vunpack.c.l.b16 %v299
    %v321 = vunpack.c.h.b16 %v299
    %v322 = vunpack.c.l.b16 %v300
    %v323 = vunpack.c.h.b16 %v300
    %v324 = vunpack.c.l.b16 %v301
    %v325 = vunpack.c.h.b16 %v301
    %v326 = vpack.c.b16 %v310, %v310
    %v327 = vpack.c.b16 %v311, %v311
    %v328 = vpack.c.b16 %v312, %v312
    %v329 = vpack.c.b16 %v313, %v313
    %v330 = vpack.c.b16 %v314, %v314
    %v331 = vpack.c.b16 %v315, %v315
    %v332 = vpack.c.b16 %v316, %v316
    %v333 = vpack.c.b16 %v317, %v317
    %v334 = vpack.c.b16 %v318, %v318
    %v335 = vpack.c.b16 %v319, %v319
    %v336 = vpack.c.b16 %v320, %v320
    %v337 = vpack.c.b16 %v321, %v321
    %v338 = vpack.c.b16 %v322, %v322
    %v339 = vpack.c.b16 %v323, %v323
    %v340 = vpack.c.b16 %v324, %v324
    %v341 = vpack.c.b16 %v325, %v325
    %358 = vst [vmem:[#allocation2] sm:$0xf] %v326
    %359 = vst [vmem:[#allocation2 + $0x4] sm:$0xf] %v327
    %360 = vst [vmem:[#allocation2 + $0x8] sm:$0xf] %v328
    %361 = vst [vmem:[#allocation2 + $0xc] sm:$0xf] %v329
    %362 = vst [vmem:[#allocation2 + $0x10] sm:$0xf] %v330
    %363 = vst [vmem:[#allocation2 + $0x14] sm:$0xf] %v331
    %364 = vst [vmem:[#allocation2 + $0x18] sm:$0xf] %v332
    %365 = vst [vmem:[#allocation2 + $0x1c] sm:$0xf] %v333
    %366 = vst [vmem:[#allocation2 + $0x20] sm:$0xf] %v334
    %367 = vst [vmem:[#allocation2 + $0x24] sm:$0xf] %v335
    %368 = vst [vmem:[#allocation2 + $0x28] sm:$0xf] %v336
    %369 = vst [vmem:[#allocation2 + $0x2c] sm:$0xf] %v337
    %370 = vst [vmem:[#allocation2 + $0x30] sm:$0xf] %v338
    %371 = vst [vmem:[#allocation2 + $0x34] sm:$0xf] %v339
    %372 = vst [vmem:[#allocation2 + $0x38] sm:$0xf] %v340
    %373 = vst [vmem:[#allocation2 + $0x3c] sm:$0xf] %v341
    %v374 = vld [vmem:[%s4] sm:$0x1]
    %v375 = vld [vmem:[%s3] sm:$0xf]
    %v376 = vld [vmem:[%s3 + $0x4] sm:$0xf]
    %v377 = vld [vmem:[%s3 + $0x8] sm:$0xf]
    %v378 = vld [vmem:[%s3 + $0xc] sm:$0xf]
    %v379 = vld [vmem:[%s3 + $0x10] sm:$0xf]
    %v380 = vld [vmem:[%s3 + $0x14] sm:$0xf]
    %v381 = vld [vmem:[%s3 + $0x18] sm:$0xf]
    %v382 = vld [vmem:[%s3 + $0x1c] sm:$0xf]
    %v383 = vld [vmem:[%s3 + $0x20] sm:$0xf]
    %v384 = vld [vmem:[%s3 + $0x24] sm:$0xf]
    %v385 = vld [vmem:[%s3 + $0x28] sm:$0xf]
    %v386 = vld [vmem:[%s3 + $0x2c] sm:$0xf]
    %v387 = vld [vmem:[%s3 + $0x30] sm:$0xf]
    %v388 = vld [vmem:[%s3 + $0x34] sm:$0xf]
    %v389 = vld [vmem:[%s3 + $0x38] sm:$0xf]
    %v390 = vld [vmem:[%s3 + $0x3c] sm:$0xf]
    %v391 = vld [vmem:[#allocation2] sm:$0x1]
    %v392 = vld [vmem:[#allocation2] sm:$0x4]
    %v393 = vld [vmem:[#allocation2 + $0x4] sm:$0x1]
    %v394 = vld [vmem:[#allocation2 + $0x10] sm:$0x1]
    %v395 = vld [vmem:[#allocation2 + $0x10] sm:$0x4]
    %v396 = vld [vmem:[#allocation2 + $0x14] sm:$0x1]
    %v397 = vld [vmem:[#allocation2 + $0x20] sm:$0x1]
    %v398 = vld [vmem:[#allocation2 + $0x20] sm:$0x4]
    %v399 = vld [vmem:[#allocation2 + $0x24] sm:$0x1]
    %s400 = scalar_lea.vmem %s3, 64
    %v401 = vld [vmem:[%s400] sm:$0xf]
    %v402 = vld [vmem:[%s400 + $0x4] sm:$0xf]
    %v403 = vld [vmem:[%s400 + $0x8] sm:$0xf]
    %v404 = vld [vmem:[%s400 + $0xc] sm:$0xf]
    %v405 = vld [vmem:[%s400 + $0x10] sm:$0xf]
    %v406 = vld [vmem:[%s400 + $0x14] sm:$0xf]
    %v407 = vld [vmem:[%s400 + $0x18] sm:$0xf]
    %v408 = vld [vmem:[%s400 + $0x1c] sm:$0xf]
    %v409 = vld [vmem:[%s400 + $0x20] sm:$0xf]
    %v410 = vld [vmem:[%s400 + $0x24] sm:$0xf]
    %v411 = vld [vmem:[%s400 + $0x28] sm:$0xf]
    %v412 = vld [vmem:[%s400 + $0x2c] sm:$0xf]
    %v413 = vld [vmem:[%s400 + $0x30] sm:$0xf]
    %v414 = vld [vmem:[%s400 + $0x34] sm:$0xf]
    %v415 = vld [vmem:[%s400 + $0x38] sm:$0xf]
    %v416 = vld [vmem:[%s400 + $0x3c] sm:$0xf]
    %v417 = vld [vmem:[#allocation2] sm:$0x2]
    %v419 = vunpack.c.l.b16 %v417
    %v420 = vpack.c.b16 %v419, %v419
    %v421 = vrot.slane %v420, 1
    %v439 = vunpack.c.l.b16 %v401
    %v440 = vunpack.c.l.b16 %v402
    %v441 = vunpack.c.l.b16 %v403
    %v442 = vunpack.c.l.b16 %v404
    %v443 = vunpack.c.l.b16 %v405
    %v444 = vunpack.c.l.b16 %v406
    %v445 = vunpack.c.l.b16 %v407
    %v446 = vunpack.c.l.b16 %v408
    %v447 = vunpack.c.l.b16 %v409
    %v448 = vunpack.c.l.b16 %v410
    %v449 = vunpack.c.l.b16 %v411
    %v450 = vunpack.c.l.b16 %v412
    %v451 = vunpack.c.l.b16 %v413
    %v452 = vunpack.c.l.b16 %v414
    %v453 = vunpack.c.l.b16 %v415
    %v454 = vunpack.c.l.b16 %v416
    %v455 = vpack.c.b16 %v440, %v439
    %v456 = vpack.c.b16 %v442, %v441
    %v457 = vpack.c.b16 %v444, %v443
    %v458 = vpack.c.b16 %v446, %v445
    %v459 = vpack.c.b16 %v448, %v447
    %v460 = vpack.c.b16 %v450, %v449
    %v461 = vpack.c.b16 %v452, %v451
    %v462 = vpack.c.b16 %v454, %v453
    %471 = vmatprep.subr.bf16.mxu0 0
    %472 = vmatpush1.bf16.msra.mxu0 %v462
    %473 = vmatprep.subr.bf16.mxu0 0
    %474 = vmatpush1.bf16.msra.mxu0 %v461
    %475 = vmatprep.subr.bf16.mxu0 0
    %476 = vmatpush1.bf16.msra.mxu0 %v460
    %477 = vmatprep.subr.bf16.mxu0 0
    %478 = vmatpush1.bf16.msra.mxu0 %v459
    %479 = vmatprep.subr.bf16.mxu0 0
    %480 = vmatpush1.bf16.msra.mxu0 %v458
    %481 = vmatprep.subr.bf16.mxu0 0
    %482 = vmatpush1.bf16.msra.mxu0 %v457
    %483 = vmatprep.subr.bf16.mxu0 0
    %484 = vmatpush1.bf16.msra.mxu0 %v456
    %485 = vmatprep.subr.bf16.mxu0 0
    %486 = vmatpush1.bf16.msra.mxu0 %v455
    %487 = vmatprep.subr.bf16.mxu0 0
    %488 = vmatpush2.bf16.msra.mxu0 0
    %489 = vmatprep.subr.bf16.mxu0 0
    %490 = vmatpush2.bf16.msra.mxu0 0
    %491 = vmatprep.subr.bf16.mxu0 0
    %492 = vmatpush2.bf16.msra.mxu0 0
    %493 = vmatprep.subr.bf16.mxu0 0
    %494 = vmatpush2.bf16.msra.mxu0 0
    %495 = vmatprep.subr.bf16.mxu0 0
    %496 = vmatpush2.bf16.msra.mxu0 0
    %497 = vmatprep.subr.bf16.mxu0 0
    %498 = vmatpush2.bf16.msra.mxu0 0
    %499 = vmatprep.subr.bf16.mxu0 0
    %500 = vmatpush2.bf16.msra.mxu0 0
    %501 = vmatprep.subr.bf16.mxu0 0
    %502 = vmatpush2.bf16.msra.mxu0 0
    %503 = vmatprep.mubr.bf16.mxu0 0
    %504 = vmatmul.mubr.bf16.gmra.mxu0 %v421
    %v505 = vpop.f32.mrf.mxu0
    %v506 = vadd.f32 0.0, %v505
    %v507 = vpop.f32.mrf.mxu0
    %v508 = vpop.f32.mrf.mxu0
    %v509 = vpop.f32.mrf.mxu0
    %510 = vdwg.mxu0
    %v527 = vunpack.c.l.b16 %v375
    %v528 = vunpack.c.l.b16 %v376
    %v529 = vunpack.c.l.b16 %v377
    %v530 = vunpack.c.l.b16 %v378
    %v531 = vunpack.c.l.b16 %v379
    %v532 = vunpack.c.l.b16 %v380
    %v533 = vunpack.c.l.b16 %v381
    %v534 = vunpack.c.l.b16 %v382
    %v535 = vunpack.c.l.b16 %v383
    %v536 = vunpack.c.l.b16 %v384
    %v537 = vunpack.c.l.b16 %v385
    %v538 = vunpack.c.l.b16 %v386
    %v539 = vunpack.c.l.b16 %v387
    %v540 = vunpack.c.l.b16 %v388
    %v541 = vunpack.c.l.b16 %v389
    %v542 = vunpack.c.l.b16 %v390
    %v543 = vpack.c.b16 %v528, %v527
    %v544 = vpack.c.b16 %v530, %v529
    %v545 = vpack.c.b16 %v532, %v531
    %v546 = vpack.c.b16 %v534, %v533
    %v547 = vpack.c.b16 %v536, %v535
    %v548 = vpack.c.b16 %v538, %v537
    %v549 = vpack.c.b16 %v540, %v539
    %v550 = vpack.c.b16 %v542, %v541
    %559 = vmatprep.subr.bf16.mxu0 0
    %560 = vmatpush1.bf16.msra.mxu0 %v550
    %561 = vmatprep.subr.bf16.mxu0 0
    %562 = vmatpush1.bf16.msra.mxu0 %v549
    %563 = vmatprep.subr.bf16.mxu0 0
    %564 = vmatpush1.bf16.msra.mxu0 %v548
    %565 = vmatprep.subr.bf16.mxu0 0
    %566 = vmatpush1.bf16.msra.mxu0 %v547
    %567 = vmatprep.subr.bf16.mxu0 0
    %568 = vmatpush1.bf16.msra.mxu0 %v546
    %569 = vmatprep.subr.bf16.mxu0 0
    %570 = vmatpush1.bf16.msra.mxu0 %v545
    %571 = vmatprep.subr.bf16.mxu0 0
    %572 = vmatpush1.bf16.msra.mxu0 %v544
    %573 = vmatprep.subr.bf16.mxu0 0
    %574 = vmatpush1.bf16.msra.mxu0 %v543
    %575 = vmatprep.subr.bf16.mxu0 0
    %576 = vmatpush2.bf16.msra.mxu0 0
    %577 = vmatprep.subr.bf16.mxu0 0
    %578 = vmatpush2.bf16.msra.mxu0 0
    %579 = vmatprep.subr.bf16.mxu0 0
    %580 = vmatpush2.bf16.msra.mxu0 0
    %581 = vmatprep.subr.bf16.mxu0 0
    %582 = vmatpush2.bf16.msra.mxu0 0
    %583 = vmatprep.subr.bf16.mxu0 0
    %584 = vmatpush2.bf16.msra.mxu0 0
    %585 = vmatprep.subr.bf16.mxu0 0
    %586 = vmatpush2.bf16.msra.mxu0 0
    %587 = vmatprep.subr.bf16.mxu0 0
    %588 = vmatpush2.bf16.msra.mxu0 0
    %589 = vmatprep.subr.bf16.mxu0 0
    %590 = vmatpush2.bf16.msra.mxu0 0
    %591 = vmatprep.mubr.bf16.mxu0 0
    %592 = vmatmul.mubr.bf16.gmra.mxu0 %v391
    %v593 = vpop.f32.mrf.mxu0
    %v594 = vadd.f32 %v506, %v593
    %v595 = vpop.f32.mrf.mxu0
    %v596 = vpop.f32.mrf.mxu0
    %v597 = vpop.f32.mrf.mxu0
    %598 = vdwg.mxu0
    %v599 = vld [vmem:[#allocation2] sm:$0x8]
    %v601 = vunpack.c.l.b16 %v599
    %v602 = vpack.c.b16 %v601, %v601
    %v603 = vrot.slane %v602, 3
    %605 = vmatprep.subr.bf16.mxu0 0
    %606 = vmatpush1.bf16.msra.mxu0 %v462
    %607 = vmatprep.subr.bf16.mxu0 0
    %608 = vmatpush1.bf16.msra.mxu0 %v461
    %609 = vmatprep.subr.bf16.mxu0 0
    %610 = vmatpush1.bf16.msra.mxu0 %v460
    %611 = vmatprep.subr.bf16.mxu0 0
    %612 = vmatpush1.bf16.msra.mxu0 %v459
    %613 = vmatprep.subr.bf16.mxu0 0
    %614 = vmatpush1.bf16.msra.mxu0 %v458
    %615 = vmatprep.subr.bf16.mxu0 0
    %616 = vmatpush1.bf16.msra.mxu0 %v457
    %617 = vmatprep.subr.bf16.mxu0 0
    %618 = vmatpush1.bf16.msra.mxu0 %v456
    %619 = vmatprep.subr.bf16.mxu0 0
    %620 = vmatpush1.bf16.msra.mxu0 %v455
    %621 = vmatprep.subr.bf16.mxu0 0
    %622 = vmatpush2.bf16.msra.mxu0 0
    %623 = vmatprep.subr.bf16.mxu0 0
    %624 = vmatpush2.bf16.msra.mxu0 0
    %625 = vmatprep.subr.bf16.mxu0 0
    %626 = vmatpush2.bf16.msra.mxu0 0
    %627 = vmatprep.subr.bf16.mxu0 0
    %628 = vmatpush2.bf16.msra.mxu0 0
    %629 = vmatprep.subr.bf16.mxu0 0
    %630 = vmatpush2.bf16.msra.mxu0 0
    %631 = vmatprep.subr.bf16.mxu0 0
    %632 = vmatpush2.bf16.msra.mxu0 0
    %633 = vmatprep.subr.bf16.mxu0 0
    %634 = vmatpush2.bf16.msra.mxu0 0
    %635 = vmatprep.subr.bf16.mxu0 0
    %636 = vmatpush2.bf16.msra.mxu0 0
    %637 = vmatprep.mubr.bf16.mxu0 0
    %638 = vmatmul.mubr.bf16.gmra.mxu0 %v603
    %v639 = vpop.f32.mrf.mxu0
    %v640 = vadd.f32 0.0, %v639
    %v641 = vpop.f32.mrf.mxu0
    %v642 = vpop.f32.mrf.mxu0
    %v643 = vpop.f32.mrf.mxu0
    %644 = vdwg.mxu0
    %v646 = vunpack.c.l.b16 %v392
    %v647 = vpack.c.b16 %v646, %v646
    %v648 = vrot.slane %v647, 2
    %650 = vmatprep.subr.bf16.mxu0 0
    %651 = vmatpush1.bf16.msra.mxu0 %v550
    %652 = vmatprep.subr.bf16.mxu0 0
    %653 = vmatpush1.bf16.msra.mxu0 %v549
    %654 = vmatprep.subr.bf16.mxu0 0
    %655 = vmatpush1.bf16.msra.mxu0 %v548
    %656 = vmatprep.subr.bf16.mxu0 0
    %657 = vmatpush1.bf16.msra.mxu0 %v547
    %658 = vmatprep.subr.bf16.mxu0 0
    %659 = vmatpush1.bf16.msra.mxu0 %v546
    %660 = vmatprep.subr.bf16.mxu0 0
    %661 = vmatpush1.bf16.msra.mxu0 %v545
    %662 = vmatprep.subr.bf16.mxu0 0
    %663 = vmatpush1.bf16.msra.mxu0 %v544
    %664 = vmatprep.subr.bf16.mxu0 0
    %665 = vmatpush1.bf16.msra.mxu0 %v543
    %666 = vmatprep.subr.bf16.mxu0 0
    %667 = vmatpush2.bf16.msra.mxu0 0
    %668 = vmatprep.subr.bf16.mxu0 0
    %669 = vmatpush2.bf16.msra.mxu0 0
    %670 = vmatprep.subr.bf16.mxu0 0
    %671 = vmatpush2.bf16.msra.mxu0 0
    %672 = vmatprep.subr.bf16.mxu0 0
    %673 = vmatpush2.bf16.msra.mxu0 0
    %674 = vmatprep.subr.bf16.mxu0 0
    %675 = vmatpush2.bf16.msra.mxu0 0
    %676 = vmatprep.subr.bf16.mxu0 0
    %677 = vmatpush2.bf16.msra.mxu0 0
    %678 = vmatprep.subr.bf16.mxu0 0
    %679 = vmatpush2.bf16.msra.mxu0 0
    %680 = vmatprep.subr.bf16.mxu0 0
    %681 = vmatpush2.bf16.msra.mxu0 0
    %682 = vmatprep.mubr.bf16.mxu0 0
    %683 = vmatmul.mubr.bf16.gmra.mxu0 %v648
    %v684 = vpop.f32.mrf.mxu0
    %v685 = vadd.f32 %v640, %v684
    %v686 = vpop.f32.mrf.mxu0
    %v687 = vpop.f32.mrf.mxu0
    %v688 = vpop.f32.mrf.mxu0
    %689 = vdwg.mxu0
    %v690 = vld [vmem:[#allocation2 + $0x4] sm:$0x2]
    %v692 = vunpack.c.l.b16 %v690
    %v693 = vpack.c.b16 %v692, %v692
    %v694 = vrot.slane %v693, 1
    %696 = vmatprep.subr.bf16.mxu0 0
    %697 = vmatpush1.bf16.msra.mxu0 %v462
    %698 = vmatprep.subr.bf16.mxu0 0
    %699 = vmatpush1.bf16.msra.mxu0 %v461
    %700 = vmatprep.subr.bf16.mxu0 0
    %701 = vmatpush1.bf16.msra.mxu0 %v460
    %702 = vmatprep.subr.bf16.mxu0 0
    %703 = vmatpush1.bf16.msra.mxu0 %v459
    %704 = vmatprep.subr.bf16.mxu0 0
    %705 = vmatpush1.bf16.msra.mxu0 %v458
    %706 = vmatprep.subr.bf16.mxu0 0
    %707 = vmatpush1.bf16.msra.mxu0 %v457
    %708 = vmatprep.subr.bf16.mxu0 0
    %709 = vmatpush1.bf16.msra.mxu0 %v456
    %710 = vmatprep.subr.bf16.mxu0 0
    %711 = vmatpush1.bf16.msra.mxu0 %v455
    %712 = vmatprep.subr.bf16.mxu0 0
    %713 = vmatpush2.bf16.msra.mxu0 0
    %714 = vmatprep.subr.bf16.mxu0 0
    %715 = vmatpush2.bf16.msra.mxu0 0
    %716 = vmatprep.subr.bf16.mxu0 0
    %717 = vmatpush2.bf16.msra.mxu0 0
    %718 = vmatprep.subr.bf16.mxu0 0
    %719 = vmatpush2.bf16.msra.mxu0 0
    %720 = vmatprep.subr.bf16.mxu0 0
    %721 = vmatpush2.bf16.msra.mxu0 0
    %722 = vmatprep.subr.bf16.mxu0 0
    %723 = vmatpush2.bf16.msra.mxu0 0
    %724 = vmatprep.subr.bf16.mxu0 0
    %725 = vmatpush2.bf16.msra.mxu0 0
    %726 = vmatprep.subr.bf16.mxu0 0
    %727 = vmatpush2.bf16.msra.mxu0 0
    %728 = vmatprep.mubr.bf16.mxu0 0
    %729 = vmatmul.mubr.bf16.gmra.mxu0 %v694
    %v730 = vpop.f32.mrf.mxu0
    %v731 = vadd.f32 0.0, %v730
    %v732 = vpop.f32.mrf.mxu0
    %v733 = vpop.f32.mrf.mxu0
    %v734 = vpop.f32.mrf.mxu0
    %735 = vdwg.mxu0
    %736 = vmatprep.subr.bf16.mxu0 0
    %737 = vmatpush1.bf16.msra.mxu0 %v550
    %738 = vmatprep.subr.bf16.mxu0 0
    %739 = vmatpush1.bf16.msra.mxu0 %v549
    %740 = vmatprep.subr.bf16.mxu0 0
    %741 = vmatpush1.bf16.msra.mxu0 %v548
    %742 = vmatprep.subr.bf16.mxu0 0
    %743 = vmatpush1.bf16.msra.mxu0 %v547
    %744 = vmatprep.subr.bf16.mxu0 0
    %745 = vmatpush1.bf16.msra.mxu0 %v546
    %746 = vmatprep.subr.bf16.mxu0 0
    %747 = vmatpush1.bf16.msra.mxu0 %v545
    %748 = vmatprep.subr.bf16.mxu0 0
    %749 = vmatpush1.bf16.msra.mxu0 %v544
    %750 = vmatprep.subr.bf16.mxu0 0
    %751 = vmatpush1.bf16.msra.mxu0 %v543
    %752 = vmatprep.subr.bf16.mxu0 0
    %753 = vmatpush2.bf16.msra.mxu0 0
    %754 = vmatprep.subr.bf16.mxu0 0
    %755 = vmatpush2.bf16.msra.mxu0 0
    %756 = vmatprep.subr.bf16.mxu0 0
    %757 = vmatpush2.bf16.msra.mxu0 0
    %758 = vmatprep.subr.bf16.mxu0 0
    %759 = vmatpush2.bf16.msra.mxu0 0
    %760 = vmatprep.subr.bf16.mxu0 0
    %761 = vmatpush2.bf16.msra.mxu0 0
    %762 = vmatprep.subr.bf16.mxu0 0
    %763 = vmatpush2.bf16.msra.mxu0 0
    %764 = vmatprep.subr.bf16.mxu0 0
    %765 = vmatpush2.bf16.msra.mxu0 0
    %766 = vmatprep.subr.bf16.mxu0 0
    %767 = vmatpush2.bf16.msra.mxu0 0
    %768 = vmatprep.mubr.bf16.mxu0 0
    %769 = vmatmul.mubr.bf16.gmra.mxu0 %v393
    %v770 = vpop.f32.mrf.mxu0
    %v771 = vadd.f32 %v731, %v770
    %v772 = vpop.f32.mrf.mxu0
    %v773 = vpop.f32.mrf.mxu0
    %v774 = vpop.f32.mrf.mxu0
    %775 = vdwg.mxu0
    %v776 = vld [vmem:[#allocation2 + $0x10] sm:$0x2]
    %v778 = vunpack.c.l.b16 %v776
    %v779 = vpack.c.b16 %v778, %v778
    %v780 = vrot.slane %v779, 1
    %782 = vmatprep.subr.bf16.mxu0 0
    %783 = vmatpush1.bf16.msra.mxu0 %v462
    %784 = vmatprep.subr.bf16.mxu0 0
    %785 = vmatpush1.bf16.msra.mxu0 %v461
    %786 = vmatprep.subr.bf16.mxu0 0
    %787 = vmatpush1.bf16.msra.mxu0 %v460
    %788 = vmatprep.subr.bf16.mxu0 0
    %789 = vmatpush1.bf16.msra.mxu0 %v459
    %790 = vmatprep.subr.bf16.mxu0 0
    %791 = vmatpush1.bf16.msra.mxu0 %v458
    %792 = vmatprep.subr.bf16.mxu0 0
    %793 = vmatpush1.bf16.msra.mxu0 %v457
    %794 = vmatprep.subr.bf16.mxu0 0
    %795 = vmatpush1.bf16.msra.mxu0 %v456
    %796 = vmatprep.subr.bf16.mxu0 0
    %797 = vmatpush1.bf16.msra.mxu0 %v455
    %798 = vmatprep.subr.bf16.mxu0 0
    %799 = vmatpush2.bf16.msra.mxu0 0
    %800 = vmatprep.subr.bf16.mxu0 0
    %801 = vmatpush2.bf16.msra.mxu0 0
    %802 = vmatprep.subr.bf16.mxu0 0
    %803 = vmatpush2.bf16.msra.mxu0 0
    %804 = vmatprep.subr.bf16.mxu0 0
    %805 = vmatpush2.bf16.msra.mxu0 0
    %806 = vmatprep.subr.bf16.mxu0 0
    %807 = vmatpush2.bf16.msra.mxu0 0
    %808 = vmatprep.subr.bf16.mxu0 0
    %809 = vmatpush2.bf16.msra.mxu0 0
    %810 = vmatprep.subr.bf16.mxu0 0
    %811 = vmatpush2.bf16.msra.mxu0 0
    %812 = vmatprep.subr.bf16.mxu0 0
    %813 = vmatpush2.bf16.msra.mxu0 0
    %814 = vmatprep.mubr.bf16.mxu0 0
    %815 = vmatmul.mubr.bf16.gmra.mxu0 %v780
    %v816 = vpop.f32.mrf.mxu0
    %v817 = vadd.f32 0.0, %v816
    %v818 = vpop.f32.mrf.mxu0
    %v819 = vpop.f32.mrf.mxu0
    %v820 = vpop.f32.mrf.mxu0
    %821 = vdwg.mxu0
    %822 = vmatprep.subr.bf16.mxu0 0
    %823 = vmatpush1.bf16.msra.mxu0 %v550
    %824 = vmatprep.subr.bf16.mxu0 0
    %825 = vmatpush1.bf16.msra.mxu0 %v549
    %826 = vmatprep.subr.bf16.mxu0 0
    %827 = vmatpush1.bf16.msra.mxu0 %v548
    %828 = vmatprep.subr.bf16.mxu0 0
    %829 = vmatpush1.bf16.msra.mxu0 %v547
    %830 = vmatprep.subr.bf16.mxu0 0
    %831 = vmatpush1.bf16.msra.mxu0 %v546
    %832 = vmatprep.subr.bf16.mxu0 0
    %833 = vmatpush1.bf16.msra.mxu0 %v545
    %834 = vmatprep.subr.bf16.mxu0 0
    %835 = vmatpush1.bf16.msra.mxu0 %v544
    %836 = vmatprep.subr.bf16.mxu0 0
    %837 = vmatpush1.bf16.msra.mxu0 %v543
    %838 = vmatprep.subr.bf16.mxu0 0
    %839 = vmatpush2.bf16.msra.mxu0 0
    %840 = vmatprep.subr.bf16.mxu0 0
    %841 = vmatpush2.bf16.msra.mxu0 0
    %842 = vmatprep.subr.bf16.mxu0 0
    %843 = vmatpush2.bf16.msra.mxu0 0
    %844 = vmatprep.subr.bf16.mxu0 0
    %845 = vmatpush2.bf16.msra.mxu0 0
    %846 = vmatprep.subr.bf16.mxu0 0
    %847 = vmatpush2.bf16.msra.mxu0 0
    %848 = vmatprep.subr.bf16.mxu0 0
    %849 = vmatpush2.bf16.msra.mxu0 0
    %850 = vmatprep.subr.bf16.mxu0 0
    %851 = vmatpush2.bf16.msra.mxu0 0
    %852 = vmatprep.subr.bf16.mxu0 0
    %853 = vmatpush2.bf16.msra.mxu0 0
    %854 = vmatprep.mubr.bf16.mxu0 0
    %855 = vmatmul.mubr.bf16.gmra.mxu0 %v394
    %v856 = vpop.f32.mrf.mxu0
    %v857 = vadd.f32 %v817, %v856
    %v858 = vpop.f32.mrf.mxu0
    %v859 = vpop.f32.mrf.mxu0
    %v860 = vpop.f32.mrf.mxu0
    %861 = vdwg.mxu0
    %v862 = vld [vmem:[#allocation2 + $0x10] sm:$0x8]
    %v864 = vunpack.c.l.b16 %v862
    %v865 = vpack.c.b16 %v864, %v864
    %v866 = vrot.slane %v865, 3
    %868 = vmatprep.subr.bf16.mxu0 0
    %869 = vmatpush1.bf16.msra.mxu0 %v462
    %870 = vmatprep.subr.bf16.mxu0 0
    %871 = vmatpush1.bf16.msra.mxu0 %v461
    %872 = vmatprep.subr.bf16.mxu0 0
    %873 = vmatpush1.bf16.msra.mxu0 %v460
    %874 = vmatprep.subr.bf16.mxu0 0
    %875 = vmatpush1.bf16.msra.mxu0 %v459
    %876 = vmatprep.subr.bf16.mxu0 0
    %877 = vmatpush1.bf16.msra.mxu0 %v458
    %878 = vmatprep.subr.bf16.mxu0 0
    %879 = vmatpush1.bf16.msra.mxu0 %v457
    %880 = vmatprep.subr.bf16.mxu0 0
    %881 = vmatpush1.bf16.msra.mxu0 %v456
    %882 = vmatprep.subr.bf16.mxu0 0
    %883 = vmatpush1.bf16.msra.mxu0 %v455
    %884 = vmatprep.subr.bf16.mxu0 0
    %885 = vmatpush2.bf16.msra.mxu0 0
    %886 = vmatprep.subr.bf16.mxu0 0
    %887 = vmatpush2.bf16.msra.mxu0 0
    %888 = vmatprep.subr.bf16.mxu0 0
    %889 = vmatpush2.bf16.msra.mxu0 0
    %890 = vmatprep.subr.bf16.mxu0 0
    %891 = vmatpush2.bf16.msra.mxu0 0
    %892 = vmatprep.subr.bf16.mxu0 0
    %893 = vmatpush2.bf16.msra.mxu0 0
    %894 = vmatprep.subr.bf16.mxu0 0
    %895 = vmatpush2.bf16.msra.mxu0 0
    %896 = vmatprep.subr.bf16.mxu0 0
    %897 = vmatpush2.bf16.msra.mxu0 0
    %898 = vmatprep.subr.bf16.mxu0 0
    %899 = vmatpush2.bf16.msra.mxu0 0
    %900 = vmatprep.mubr.bf16.mxu0 0
    %901 = vmatmul.mubr.bf16.gmra.mxu0 %v866
    %v902 = vpop.f32.mrf.mxu0
    %v903 = vadd.f32 0.0, %v902
    %v904 = vpop.f32.mrf.mxu0
    %v905 = vpop.f32.mrf.mxu0
    %v906 = vpop.f32.mrf.mxu0
    %907 = vdwg.mxu0
    %v909 = vunpack.c.l.b16 %v395
    %v910 = vpack.c.b16 %v909, %v909
    %v911 = vrot.slane %v910, 2
    %913 = vmatprep.subr.bf16.mxu0 0
    %914 = vmatpush1.bf16.msra.mxu0 %v550
    %915 = vmatprep.subr.bf16.mxu0 0
    %916 = vmatpush1.bf16.msra.mxu0 %v549
    %917 = vmatprep.subr.bf16.mxu0 0
    %918 = vmatpush1.bf16.msra.mxu0 %v548
    %919 = vmatprep.subr.bf16.mxu0 0
    %920 = vmatpush1.bf16.msra.mxu0 %v547
    %921 = vmatprep.subr.bf16.mxu0 0
    %922 = vmatpush1.bf16.msra.mxu0 %v546
    %923 = vmatprep.subr.bf16.mxu0 0
    %924 = vmatpush1.bf16.msra.mxu0 %v545
    %925 = vmatprep.subr.bf16.mxu0 0
    %926 = vmatpush1.bf16.msra.mxu0 %v544
    %927 = vmatprep.subr.bf16.mxu0 0
    %928 = vmatpush1.bf16.msra.mxu0 %v543
    %929 = vmatprep.subr.bf16.mxu0 0
    %930 = vmatpush2.bf16.msra.mxu0 0
    %931 = vmatprep.subr.bf16.mxu0 0
    %932 = vmatpush2.bf16.msra.mxu0 0
    %933 = vmatprep.subr.bf16.mxu0 0
    %934 = vmatpush2.bf16.msra.mxu0 0
    %935 = vmatprep.subr.bf16.mxu0 0
    %936 = vmatpush2.bf16.msra.mxu0 0
    %937 = vmatprep.subr.bf16.mxu0 0
    %938 = vmatpush2.bf16.msra.mxu0 0
    %939 = vmatprep.subr.bf16.mxu0 0
    %940 = vmatpush2.bf16.msra.mxu0 0
    %941 = vmatprep.subr.bf16.mxu0 0
    %942 = vmatpush2.bf16.msra.mxu0 0
    %943 = vmatprep.subr.bf16.mxu0 0
    %944 = vmatpush2.bf16.msra.mxu0 0
    %945 = vmatprep.mubr.bf16.mxu0 0
    %946 = vmatmul.mubr.bf16.gmra.mxu0 %v911
    %v947 = vpop.f32.mrf.mxu0
    %v948 = vadd.f32 %v903, %v947
    %v949 = vpop.f32.mrf.mxu0
    %v950 = vpop.f32.mrf.mxu0
    %v951 = vpop.f32.mrf.mxu0
    %952 = vdwg.mxu0
    %v953 = vld [vmem:[#allocation2 + $0x14] sm:$0x2]
    %v955 = vunpack.c.l.b16 %v953
    %v956 = vpack.c.b16 %v955, %v955
    %v957 = vrot.slane %v956, 1
    %959 = vmatprep.subr.bf16.mxu0 0
    %960 = vmatpush1.bf16.msra.mxu0 %v462
    %961 = vmatprep.subr.bf16.mxu0 0
    %962 = vmatpush1.bf16.msra.mxu0 %v461
    %963 = vmatprep.subr.bf16.mxu0 0
    %964 = vmatpush1.bf16.msra.mxu0 %v460
    %965 = vmatprep.subr.bf16.mxu0 0
    %966 = vmatpush1.bf16.msra.mxu0 %v459
    %967 = vmatprep.subr.bf16.mxu0 0
    %968 = vmatpush1.bf16.msra.mxu0 %v458
    %969 = vmatprep.subr.bf16.mxu0 0
    %970 = vmatpush1.bf16.msra.mxu0 %v457
    %971 = vmatprep.subr.bf16.mxu0 0
    %972 = vmatpush1.bf16.msra.mxu0 %v456
    %973 = vmatprep.subr.bf16.mxu0 0
    %974 = vmatpush1.bf16.msra.mxu0 %v455
    %975 = vmatprep.subr.bf16.mxu0 0
    %976 = vmatpush2.bf16.msra.mxu0 0
    %977 = vmatprep.subr.bf16.mxu0 0
    %978 = vmatpush2.bf16.msra.mxu0 0
    %979 = vmatprep.subr.bf16.mxu0 0
    %980 = vmatpush2.bf16.msra.mxu0 0
    %981 = vmatprep.subr.bf16.mxu0 0
    %982 = vmatpush2.bf16.msra.mxu0 0
    %983 = vmatprep.subr.bf16.mxu0 0
    %984 = vmatpush2.bf16.msra.mxu0 0
    %985 = vmatprep.subr.bf16.mxu0 0
    %986 = vmatpush2.bf16.msra.mxu0 0
    %987 = vmatprep.subr.bf16.mxu0 0
    %988 = vmatpush2.bf16.msra.mxu0 0
    %989 = vmatprep.subr.bf16.mxu0 0
    %990 = vmatpush2.bf16.msra.mxu0 0
    %991 = vmatprep.mubr.bf16.mxu0 0
    %992 = vmatmul.mubr.bf16.gmra.mxu0 %v957
    %v993 = vpop.f32.mrf.mxu0
    %v994 = vadd.f32 0.0, %v993
    %v995 = vpop.f32.mrf.mxu0
    %v996 = vpop.f32.mrf.mxu0
    %v997 = vpop.f32.mrf.mxu0
    %998 = vdwg.mxu0
    %999 = vmatprep.subr.bf16.mxu0 0
    %1000 = vmatpush1.bf16.msra.mxu0 %v550
    %1001 = vmatprep.subr.bf16.mxu0 0
    %1002 = vmatpush1.bf16.msra.mxu0 %v549
    %1003 = vmatprep.subr.bf16.mxu0 0
    %1004 = vmatpush1.bf16.msra.mxu0 %v548
    %1005 = vmatprep.subr.bf16.mxu0 0
    %1006 = vmatpush1.bf16.msra.mxu0 %v547
    %1007 = vmatprep.subr.bf16.mxu0 0
    %1008 = vmatpush1.bf16.msra.mxu0 %v546
    %1009 = vmatprep.subr.bf16.mxu0 0
    %1010 = vmatpush1.bf16.msra.mxu0 %v545
    %1011 = vmatprep.subr.bf16.mxu0 0
    %1012 = vmatpush1.bf16.msra.mxu0 %v544
    %1013 = vmatprep.subr.bf16.mxu0 0
    %1014 = vmatpush1.bf16.msra.mxu0 %v543
    %1015 = vmatprep.subr.bf16.mxu0 0
    %1016 = vmatpush2.bf16.msra.mxu0 0
    %1017 = vmatprep.subr.bf16.mxu0 0
    %1018 = vmatpush2.bf16.msra.mxu0 0
    %1019 = vmatprep.subr.bf16.mxu0 0
    %1020 = vmatpush2.bf16.msra.mxu0 0
    %1021 = vmatprep.subr.bf16.mxu0 0
    %1022 = vmatpush2.bf16.msra.mxu0 0
    %1023 = vmatprep.subr.bf16.mxu0 0
    %1024 = vmatpush2.bf16.msra.mxu0 0
    %1025 = vmatprep.subr.bf16.mxu0 0
    %1026 = vmatpush2.bf16.msra.mxu0 0
    %1027 = vmatprep.subr.bf16.mxu0 0
    %1028 = vmatpush2.bf16.msra.mxu0 0
    %1029 = vmatprep.subr.bf16.mxu0 0
    %1030 = vmatpush2.bf16.msra.mxu0 0
    %1031 = vmatprep.mubr.bf16.mxu0 0
    %1032 = vmatmul.mubr.bf16.gmra.mxu0 %v396
    %v1033 = vpop.f32.mrf.mxu0
    %v1034 = vadd.f32 %v994, %v1033
    %v1035 = vpop.f32.mrf.mxu0
    %v1036 = vpop.f32.mrf.mxu0
    %v1037 = vpop.f32.mrf.mxu0
    %1038 = vdwg.mxu0
    %v1039 = vld [vmem:[#allocation2 + $0x20] sm:$0x2]
    %v1041 = vunpack.c.l.b16 %v1039
    %v1042 = vpack.c.b16 %v1041, %v1041
    %v1043 = vrot.slane %v1042, 1
    %1045 = vmatprep.subr.bf16.mxu0 0
    %1046 = vmatpush1.bf16.msra.mxu0 %v462
    %1047 = vmatprep.subr.bf16.mxu0 0
    %1048 = vmatpush1.bf16.msra.mxu0 %v461
    %1049 = vmatprep.subr.bf16.mxu0 0
    %1050 = vmatpush1.bf16.msra.mxu0 %v460
    %1051 = vmatprep.subr.bf16.mxu0 0
    %1052 = vmatpush1.bf16.msra.mxu0 %v459
    %1053 = vmatprep.subr.bf16.mxu0 0
    %1054 = vmatpush1.bf16.msra.mxu0 %v458
    %1055 = vmatprep.subr.bf16.mxu0 0
    %1056 = vmatpush1.bf16.msra.mxu0 %v457
    %1057 = vmatprep.subr.bf16.mxu0 0
    %1058 = vmatpush1.bf16.msra.mxu0 %v456
    %1059 = vmatprep.subr.bf16.mxu0 0
    %1060 = vmatpush1.bf16.msra.mxu0 %v455
    %1061 = vmatprep.subr.bf16.mxu0 0
    %1062 = vmatpush2.bf16.msra.mxu0 0
    %1063 = vmatprep.subr.bf16.mxu0 0
    %1064 = vmatpush2.bf16.msra.mxu0 0
    %1065 = vmatprep.subr.bf16.mxu0 0
    %1066 = vmatpush2.bf16.msra.mxu0 0
    %1067 = vmatprep.subr.bf16.mxu0 0
    %1068 = vmatpush2.bf16.msra.mxu0 0
    %1069 = vmatprep.subr.bf16.mxu0 0
    %1070 = vmatpush2.bf16.msra.mxu0 0
    %1071 = vmatprep.subr.bf16.mxu0 0
    %1072 = vmatpush2.bf16.msra.mxu0 0
    %1073 = vmatprep.subr.bf16.mxu0 0
    %1074 = vmatpush2.bf16.msra.mxu0 0
    %1075 = vmatprep.subr.bf16.mxu0 0
    %1076 = vmatpush2.bf16.msra.mxu0 0
    %1077 = vmatprep.mubr.bf16.mxu0 0
    %1078 = vmatmul.mubr.bf16.gmra.mxu0 %v1043
    %v1079 = vpop.f32.mrf.mxu0
    %v1080 = vadd.f32 0.0, %v1079
    %v1081 = vpop.f32.mrf.mxu0
    %v1082 = vpop.f32.mrf.mxu0
    %v1083 = vpop.f32.mrf.mxu0
    %1084 = vdwg.mxu0
    %1085 = vmatprep.subr.bf16.mxu0 0
    %1086 = vmatpush1.bf16.msra.mxu0 %v550
    %1087 = vmatprep.subr.bf16.mxu0 0
    %1088 = vmatpush1.bf16.msra.mxu0 %v549
    %1089 = vmatprep.subr.bf16.mxu0 0
    %1090 = vmatpush1.bf16.msra.mxu0 %v548
    %1091 = vmatprep.subr.bf16.mxu0 0
    %1092 = vmatpush1.bf16.msra.mxu0 %v547
    %1093 = vmatprep.subr.bf16.mxu0 0
    %1094 = vmatpush1.bf16.msra.mxu0 %v546
    %1095 = vmatprep.subr.bf16.mxu0 0
    %1096 = vmatpush1.bf16.msra.mxu0 %v545
    %1097 = vmatprep.subr.bf16.mxu0 0
    %1098 = vmatpush1.bf16.msra.mxu0 %v544
    %1099 = vmatprep.subr.bf16.mxu0 0
    %1100 = vmatpush1.bf16.msra.mxu0 %v543
    %1101 = vmatprep.subr.bf16.mxu0 0
    %1102 = vmatpush2.bf16.msra.mxu0 0
    %1103 = vmatprep.subr.bf16.mxu0 0
    %1104 = vmatpush2.bf16.msra.mxu0 0
    %1105 = vmatprep.subr.bf16.mxu0 0
    %1106 = vmatpush2.bf16.msra.mxu0 0
    %1107 = vmatprep.subr.bf16.mxu0 0
    %1108 = vmatpush2.bf16.msra.mxu0 0
    %1109 = vmatprep.subr.bf16.mxu0 0
    %1110 = vmatpush2.bf16.msra.mxu0 0
    %1111 = vmatprep.subr.bf16.mxu0 0
    %1112 = vmatpush2.bf16.msra.mxu0 0
    %1113 = vmatprep.subr.bf16.mxu0 0
    %1114 = vmatpush2.bf16.msra.mxu0 0
    %1115 = vmatprep.subr.bf16.mxu0 0
    %1116 = vmatpush2.bf16.msra.mxu0 0
    %1117 = vmatprep.mubr.bf16.mxu0 0
    %1118 = vmatmul.mubr.bf16.gmra.mxu0 %v397
    %v1119 = vpop.f32.mrf.mxu0
    %v1120 = vadd.f32 %v1080, %v1119
    %v1121 = vpop.f32.mrf.mxu0
    %v1122 = vpop.f32.mrf.mxu0
    %v1123 = vpop.f32.mrf.mxu0
    %1124 = vdwg.mxu0
    %v1125 = vld [vmem:[#allocation2 + $0x20] sm:$0x8]
    %v1127 = vunpack.c.l.b16 %v1125
    %v1128 = vpack.c.b16 %v1127, %v1127
    %v1129 = vrot.slane %v1128, 3
    %1131 = vmatprep.subr.bf16.mxu0 0
    %1132 = vmatpush1.bf16.msra.mxu0 %v462
    %1133 = vmatprep.subr.bf16.mxu0 0
    %1134 = vmatpush1.bf16.msra.mxu0 %v461
    %1135 = vmatprep.subr.bf16.mxu0 0
    %1136 = vmatpush1.bf16.msra.mxu0 %v460
    %1137 = vmatprep.subr.bf16.mxu0 0
    %1138 = vmatpush1.bf16.msra.mxu0 %v459
    %1139 = vmatprep.subr.bf16.mxu0 0
    %1140 = vmatpush1.bf16.msra.mxu0 %v458
    %1141 = vmatprep.subr.bf16.mxu0 0
    %1142 = vmatpush1.bf16.msra.mxu0 %v457
    %1143 = vmatprep.subr.bf16.mxu0 0
    %1144 = vmatpush1.bf16.msra.mxu0 %v456
    %1145 = vmatprep.subr.bf16.mxu0 0
    %1146 = vmatpush1.bf16.msra.mxu0 %v455
    %1147 = vmatprep.subr.bf16.mxu0 0
    %1148 = vmatpush2.bf16.msra.mxu0 0
    %1149 = vmatprep.subr.bf16.mxu0 0
    %1150 = vmatpush2.bf16.msra.mxu0 0
    %1151 = vmatprep.subr.bf16.mxu0 0
    %1152 = vmatpush2.bf16.msra.mxu0 0
    %1153 = vmatprep.subr.bf16.mxu0 0
    %1154 = vmatpush2.bf16.msra.mxu0 0
    %1155 = vmatprep.subr.bf16.mxu0 0
    %1156 = vmatpush2.bf16.msra.mxu0 0
    %1157 = vmatprep.subr.bf16.mxu0 0
    %1158 = vmatpush2.bf16.msra.mxu0 0
    %1159 = vmatprep.subr.bf16.mxu0 0
    %1160 = vmatpush2.bf16.msra.mxu0 0
    %1161 = vmatprep.subr.bf16.mxu0 0
    %1162 = vmatpush2.bf16.msra.mxu0 0
    %1163 = vmatprep.mubr.bf16.mxu0 0
    %1164 = vmatmul.mubr.bf16.gmra.mxu0 %v1129
    %v1165 = vpop.f32.mrf.mxu0
    %v1166 = vadd.f32 0.0, %v1165
    %v1167 = vpop.f32.mrf.mxu0
    %v1168 = vpop.f32.mrf.mxu0
    %v1169 = vpop.f32.mrf.mxu0
    %1170 = vdwg.mxu0
    %v1172 = vunpack.c.l.b16 %v398
    %v1173 = vpack.c.b16 %v1172, %v1172
    %v1174 = vrot.slane %v1173, 2
    %1176 = vmatprep.subr.bf16.mxu0 0
    %1177 = vmatpush1.bf16.msra.mxu0 %v550
    %1178 = vmatprep.subr.bf16.mxu0 0
    %1179 = vmatpush1.bf16.msra.mxu0 %v549
    %1180 = vmatprep.subr.bf16.mxu0 0
    %1181 = vmatpush1.bf16.msra.mxu0 %v548
    %1182 = vmatprep.subr.bf16.mxu0 0
    %1183 = vmatpush1.bf16.msra.mxu0 %v547
    %1184 = vmatprep.subr.bf16.mxu0 0
    %1185 = vmatpush1.bf16.msra.mxu0 %v546
    %1186 = vmatprep.subr.bf16.mxu0 0
    %1187 = vmatpush1.bf16.msra.mxu0 %v545
    %1188 = vmatprep.subr.bf16.mxu0 0
    %1189 = vmatpush1.bf16.msra.mxu0 %v544
    %1190 = vmatprep.subr.bf16.mxu0 0
    %1191 = vmatpush1.bf16.msra.mxu0 %v543
    %1192 = vmatprep.subr.bf16.mxu0 0
    %1193 = vmatpush2.bf16.msra.mxu0 0
    %1194 = vmatprep.subr.bf16.mxu0 0
    %1195 = vmatpush2.bf16.msra.mxu0 0
    %1196 = vmatprep.subr.bf16.mxu0 0
    %1197 = vmatpush2.bf16.msra.mxu0 0
    %1198 = vmatprep.subr.bf16.mxu0 0
    %1199 = vmatpush2.bf16.msra.mxu0 0
    %1200 = vmatprep.subr.bf16.mxu0 0
    %1201 = vmatpush2.bf16.msra.mxu0 0
    %1202 = vmatprep.subr.bf16.mxu0 0
    %1203 = vmatpush2.bf16.msra.mxu0 0
    %1204 = vmatprep.subr.bf16.mxu0 0
    %1205 = vmatpush2.bf16.msra.mxu0 0
    %1206 = vmatprep.subr.bf16.mxu0 0
    %1207 = vmatpush2.bf16.msra.mxu0 0
    %1208 = vmatprep.mubr.bf16.mxu0 0
    %1209 = vmatmul.mubr.bf16.gmra.mxu0 %v1174
    %v1210 = vpop.f32.mrf.mxu0
    %v1211 = vadd.f32 %v1166, %v1210
    %v1212 = vpop.f32.mrf.mxu0
    %v1213 = vpop.f32.mrf.mxu0
    %v1214 = vpop.f32.mrf.mxu0
    %1215 = vdwg.mxu0
    %v1216 = vld [vmem:[#allocation2 + $0x24] sm:$0x2]
    %v1218 = vunpack.c.l.b16 %v1216
    %v1219 = vpack.c.b16 %v1218, %v1218
    %v1220 = vrot.slane %v1219, 1
    %1222 = vmatprep.subr.bf16.mxu0 0
    %1223 = vmatpush1.bf16.msra.mxu0 %v462
    %1224 = vmatprep.subr.bf16.mxu0 0
    %1225 = vmatpush1.bf16.msra.mxu0 %v461
    %1226 = vmatprep.subr.bf16.mxu0 0
    %1227 = vmatpush1.bf16.msra.mxu0 %v460
    %1228 = vmatprep.subr.bf16.mxu0 0
    %1229 = vmatpush1.bf16.msra.mxu0 %v459
    %1230 = vmatprep.subr.bf16.mxu0 0
    %1231 = vmatpush1.bf16.msra.mxu0 %v458
    %1232 = vmatprep.subr.bf16.mxu0 0
    %1233 = vmatpush1.bf16.msra.mxu0 %v457
    %1234 = vmatprep.subr.bf16.mxu0 0
    %1235 = vmatpush1.bf16.msra.mxu0 %v456
    %1236 = vmatprep.subr.bf16.mxu0 0
    %1237 = vmatpush1.bf16.msra.mxu0 %v455
    %1238 = vmatprep.subr.bf16.mxu0 0
    %1239 = vmatpush2.bf16.msra.mxu0 0
    %1240 = vmatprep.subr.bf16.mxu0 0
    %1241 = vmatpush2.bf16.msra.mxu0 0
    %1242 = vmatprep.subr.bf16.mxu0 0
    %1243 = vmatpush2.bf16.msra.mxu0 0
    %1244 = vmatprep.subr.bf16.mxu0 0
    %1245 = vmatpush2.bf16.msra.mxu0 0
    %1246 = vmatprep.subr.bf16.mxu0 0
    %1247 = vmatpush2.bf16.msra.mxu0 0
    %1248 = vmatprep.subr.bf16.mxu0 0
    %1249 = vmatpush2.bf16.msra.mxu0 0
    %1250 = vmatprep.subr.bf16.mxu0 0
    %1251 = vmatpush2.bf16.msra.mxu0 0
    %1252 = vmatprep.subr.bf16.mxu0 0
    %1253 = vmatpush2.bf16.msra.mxu0 0
    %1254 = vmatprep.mubr.bf16.mxu0 0
    %1255 = vmatmul.mubr.bf16.gmra.mxu0 %v1220
    %v1256 = vpop.f32.mrf.mxu0
    %v1257 = vadd.f32 0.0, %v1256
    %v1258 = vpop.f32.mrf.mxu0
    %v1259 = vpop.f32.mrf.mxu0
    %v1260 = vpop.f32.mrf.mxu0
    %1261 = vdwg.mxu0
    %1262 = vmatprep.subr.bf16.mxu0 0
    %1263 = vmatpush1.bf16.msra.mxu0 %v550
    %1264 = vmatprep.subr.bf16.mxu0 0
    %1265 = vmatpush1.bf16.msra.mxu0 %v549
    %1266 = vmatprep.subr.bf16.mxu0 0
    %1267 = vmatpush1.bf16.msra.mxu0 %v548
    %1268 = vmatprep.subr.bf16.mxu0 0
    %1269 = vmatpush1.bf16.msra.mxu0 %v547
    %1270 = vmatprep.subr.bf16.mxu0 0
    %1271 = vmatpush1.bf16.msra.mxu0 %v546
    %1272 = vmatprep.subr.bf16.mxu0 0
    %1273 = vmatpush1.bf16.msra.mxu0 %v545
    %1274 = vmatprep.subr.bf16.mxu0 0
    %1275 = vmatpush1.bf16.msra.mxu0 %v544
    %1276 = vmatprep.subr.bf16.mxu0 0
    %1277 = vmatpush1.bf16.msra.mxu0 %v543
    %1278 = vmatprep.subr.bf16.mxu0 0
    %1279 = vmatpush2.bf16.msra.mxu0 0
    %1280 = vmatprep.subr.bf16.mxu0 0
    %1281 = vmatpush2.bf16.msra.mxu0 0
    %1282 = vmatprep.subr.bf16.mxu0 0
    %1283 = vmatpush2.bf16.msra.mxu0 0
    %1284 = vmatprep.subr.bf16.mxu0 0
    %1285 = vmatpush2.bf16.msra.mxu0 0
    %1286 = vmatprep.subr.bf16.mxu0 0
    %1287 = vmatpush2.bf16.msra.mxu0 0
    %1288 = vmatprep.subr.bf16.mxu0 0
    %1289 = vmatpush2.bf16.msra.mxu0 0
    %1290 = vmatprep.subr.bf16.mxu0 0
    %1291 = vmatpush2.bf16.msra.mxu0 0
    %1292 = vmatprep.subr.bf16.mxu0 0
    %1293 = vmatpush2.bf16.msra.mxu0 0
    %1294 = vmatprep.mubr.bf16.mxu0 0
    %1295 = vmatmul.mubr.bf16.gmra.mxu0 %v399
    %v1296 = vpop.f32.mrf.mxu0
    %v1297 = vadd.f32 %v1257, %v1296
    %v1298 = vpop.f32.mrf.mxu0
    %v1299 = vpop.f32.mrf.mxu0
    %v1300 = vpop.f32.mrf.mxu0
    %1301 = vdwg.mxu0
    %s1302 = scalar_lea.vmem %s3, 128
    %v1303 = vld [vmem:[%s1302] sm:$0xf]
    %v1304 = vld [vmem:[%s1302 + $0x4] sm:$0xf]
    %v1305 = vld [vmem:[%s1302 + $0x8] sm:$0xf]
    %v1306 = vld [vmem:[%s1302 + $0xc] sm:$0xf]
    %v1307 = vld [vmem:[%s1302 + $0x10] sm:$0xf]
    %v1308 = vld [vmem:[%s1302 + $0x14] sm:$0xf]
    %v1309 = vld [vmem:[%s1302 + $0x18] sm:$0xf]
    %v1310 = vld [vmem:[%s1302 + $0x1c] sm:$0xf]
    %v1311 = vld [vmem:[%s1302 + $0x20] sm:$0xf]
    %v1312 = vld [vmem:[%s1302 + $0x24] sm:$0xf]
    %v1313 = vld [vmem:[%s1302 + $0x28] sm:$0xf]
    %v1314 = vld [vmem:[%s1302 + $0x2c] sm:$0xf]
    %v1315 = vld [vmem:[%s1302 + $0x30] sm:$0xf]
    %v1316 = vld [vmem:[%s1302 + $0x34] sm:$0xf]
    %v1317 = vld [vmem:[%s1302 + $0x38] sm:$0xf]
    %v1318 = vld [vmem:[%s1302 + $0x3c] sm:$0xf]
    %v1335 = vunpack.c.l.b16 %v1303
    %v1336 = vunpack.c.l.b16 %v1304
    %v1337 = vunpack.c.l.b16 %v1305
    %v1338 = vunpack.c.l.b16 %v1306
    %v1339 = vunpack.c.l.b16 %v1307
    %v1340 = vunpack.c.l.b16 %v1308
    %v1341 = vunpack.c.l.b16 %v1309
    %v1342 = vunpack.c.l.b16 %v1310
    %v1343 = vunpack.c.l.b16 %v1311
    %v1344 = vunpack.c.l.b16 %v1312
    %v1345 = vunpack.c.l.b16 %v1313
    %v1346 = vunpack.c.l.b16 %v1314
    %v1347 = vunpack.c.l.b16 %v1315
    %v1348 = vunpack.c.l.b16 %v1316
    %v1349 = vunpack.c.l.b16 %v1317
    %v1350 = vunpack.c.l.b16 %v1318
    %v1351 = vpack.c.b16 %v1336, %v1335
    %v1352 = vpack.c.b16 %v1338, %v1337
    %v1353 = vpack.c.b16 %v1340, %v1339
    %v1354 = vpack.c.b16 %v1342, %v1341
    %v1355 = vpack.c.b16 %v1344, %v1343
    %v1356 = vpack.c.b16 %v1346, %v1345
    %v1357 = vpack.c.b16 %v1348, %v1347
    %v1358 = vpack.c.b16 %v1350, %v1349
    %1367 = vmatprep.subr.bf16.mxu0 0
    %1368 = vmatpush1.bf16.msra.mxu0 %v1358
    %1369 = vmatprep.subr.bf16.mxu0 0
    %1370 = vmatpush1.bf16.msra.mxu0 %v1357
    %1371 = vmatprep.subr.bf16.mxu0 0
    %1372 = vmatpush1.bf16.msra.mxu0 %v1356
    %1373 = vmatprep.subr.bf16.mxu0 0
    %1374 = vmatpush1.bf16.msra.mxu0 %v1355
    %1375 = vmatprep.subr.bf16.mxu0 0
    %1376 = vmatpush1.bf16.msra.mxu0 %v1354
    %1377 = vmatprep.subr.bf16.mxu0 0
    %1378 = vmatpush1.bf16.msra.mxu0 %v1353
    %1379 = vmatprep.subr.bf16.mxu0 0
    %1380 = vmatpush1.bf16.msra.mxu0 %v1352
    %1381 = vmatprep.subr.bf16.mxu0 0
    %1382 = vmatpush1.bf16.msra.mxu0 %v1351
    %1383 = vmatprep.subr.bf16.mxu0 0
    %1384 = vmatpush2.bf16.msra.mxu0 0
    %1385 = vmatprep.subr.bf16.mxu0 0
    %1386 = vmatpush2.bf16.msra.mxu0 0
    %1387 = vmatprep.subr.bf16.mxu0 0
    %1388 = vmatpush2.bf16.msra.mxu0 0
    %1389 = vmatprep.subr.bf16.mxu0 0
    %1390 = vmatpush2.bf16.msra.mxu0 0
    %1391 = vmatprep.subr.bf16.mxu0 0
    %1392 = vmatpush2.bf16.msra.mxu0 0
    %1393 = vmatprep.subr.bf16.mxu0 0
    %1394 = vmatpush2.bf16.msra.mxu0 0
    %1395 = vmatprep.subr.bf16.mxu0 0
    %1396 = vmatpush2.bf16.msra.mxu0 0
    %1397 = vmatprep.subr.bf16.mxu0 0
    %1398 = vmatpush2.bf16.msra.mxu0 0
    %1399 = vmatprep.mubr.bf16.mxu0 0
    %1400 = vmatmul.mubr.bf16.gmra.mxu0 %v648
    %v1401 = vpop.f32.mrf.mxu0
    %v1402 = vadd.f32 0.0, %v1401
    %v1403 = vpop.f32.mrf.mxu0
    %v1404 = vpop.f32.mrf.mxu0
    %v1405 = vpop.f32.mrf.mxu0
    %1406 = vdwg.mxu0
    %v1407 = vadd.f32 %v594, %v1402
    %1408 = vmatprep.subr.bf16.mxu0 0
    %1409 = vmatpush1.bf16.msra.mxu0 %v1358
    %1410 = vmatprep.subr.bf16.mxu0 0
    %1411 = vmatpush1.bf16.msra.mxu0 %v1357
    %1412 = vmatprep.subr.bf16.mxu0 0
    %1413 = vmatpush1.bf16.msra.mxu0 %v1356
    %1414 = vmatprep.subr.bf16.mxu0 0
    %1415 = vmatpush1.bf16.msra.mxu0 %v1355
    %1416 = vmatprep.subr.bf16.mxu0 0
    %1417 = vmatpush1.bf16.msra.mxu0 %v1354
    %1418 = vmatprep.subr.bf16.mxu0 0
    %1419 = vmatpush1.bf16.msra.mxu0 %v1353
    %1420 = vmatprep.subr.bf16.mxu0 0
    %1421 = vmatpush1.bf16.msra.mxu0 %v1352
    %1422 = vmatprep.subr.bf16.mxu0 0
    %1423 = vmatpush1.bf16.msra.mxu0 %v1351
    %1424 = vmatprep.subr.bf16.mxu0 0
    %1425 = vmatpush2.bf16.msra.mxu0 0
    %1426 = vmatprep.subr.bf16.mxu0 0
    %1427 = vmatpush2.bf16.msra.mxu0 0
    %1428 = vmatprep.subr.bf16.mxu0 0
    %1429 = vmatpush2.bf16.msra.mxu0 0
    %1430 = vmatprep.subr.bf16.mxu0 0
    %1431 = vmatpush2.bf16.msra.mxu0 0
    %1432 = vmatprep.subr.bf16.mxu0 0
    %1433 = vmatpush2.bf16.msra.mxu0 0
    %1434 = vmatprep.subr.bf16.mxu0 0
    %1435 = vmatpush2.bf16.msra.mxu0 0
    %1436 = vmatprep.subr.bf16.mxu0 0
    %1437 = vmatpush2.bf16.msra.mxu0 0
    %1438 = vmatprep.subr.bf16.mxu0 0
    %1439 = vmatpush2.bf16.msra.mxu0 0
    %1440 = vmatprep.mubr.bf16.mxu0 0
    %1441 = vmatmul.mubr.bf16.gmra.mxu0 %v393
    %v1442 = vpop.f32.mrf.mxu0
    %v1443 = vadd.f32 0.0, %v1442
    %v1444 = vpop.f32.mrf.mxu0
    %v1445 = vpop.f32.mrf.mxu0
    %v1446 = vpop.f32.mrf.mxu0
    %1447 = vdwg.mxu0
    %v1448 = vadd.f32 %v685, %v1443
    %v1449 = vld [vmem:[#allocation2 + $0x4] sm:$0x4]
    %v1451 = vunpack.c.l.b16 %v1449
    %v1452 = vpack.c.b16 %v1451, %v1451
    %v1453 = vrot.slane %v1452, 2
    %1455 = vmatprep.subr.bf16.mxu0 0
    %1456 = vmatpush1.bf16.msra.mxu0 %v1358
    %1457 = vmatprep.subr.bf16.mxu0 0
    %1458 = vmatpush1.bf16.msra.mxu0 %v1357
    %1459 = vmatprep.subr.bf16.mxu0 0
    %1460 = vmatpush1.bf16.msra.mxu0 %v1356
    %1461 = vmatprep.subr.bf16.mxu0 0
    %1462 = vmatpush1.bf16.msra.mxu0 %v1355
    %1463 = vmatprep.subr.bf16.mxu0 0
    %1464 = vmatpush1.bf16.msra.mxu0 %v1354
    %1465 = vmatprep.subr.bf16.mxu0 0
    %1466 = vmatpush1.bf16.msra.mxu0 %v1353
    %1467 = vmatprep.subr.bf16.mxu0 0
    %1468 = vmatpush1.bf16.msra.mxu0 %v1352
    %1469 = vmatprep.subr.bf16.mxu0 0
    %1470 = vmatpush1.bf16.msra.mxu0 %v1351
    %1471 = vmatprep.subr.bf16.mxu0 0
    %1472 = vmatpush2.bf16.msra.mxu0 0
    %1473 = vmatprep.subr.bf16.mxu0 0
    %1474 = vmatpush2.bf16.msra.mxu0 0
    %1475 = vmatprep.subr.bf16.mxu0 0
    %1476 = vmatpush2.bf16.msra.mxu0 0
    %1477 = vmatprep.subr.bf16.mxu0 0
    %1478 = vmatpush2.bf16.msra.mxu0 0
    %1479 = vmatprep.subr.bf16.mxu0 0
    %1480 = vmatpush2.bf16.msra.mxu0 0
    %1481 = vmatprep.subr.bf16.mxu0 0
    %1482 = vmatpush2.bf16.msra.mxu0 0
    %1483 = vmatprep.subr.bf16.mxu0 0
    %1484 = vmatpush2.bf16.msra.mxu0 0
    %1485 = vmatprep.subr.bf16.mxu0 0
    %1486 = vmatpush2.bf16.msra.mxu0 0
    %1487 = vmatprep.mubr.bf16.mxu0 0
    %1488 = vmatmul.mubr.bf16.gmra.mxu0 %v1453
    %v1489 = vpop.f32.mrf.mxu0
    %v1490 = vadd.f32 0.0, %v1489
    %v1491 = vpop.f32.mrf.mxu0
    %v1492 = vpop.f32.mrf.mxu0
    %v1493 = vpop.f32.mrf.mxu0
    %1494 = vdwg.mxu0
    %v1495 = vadd.f32 %v771, %v1490
    %1496 = vmatprep.subr.bf16.mxu0 0
    %1497 = vmatpush1.bf16.msra.mxu0 %v1358
    %1498 = vmatprep.subr.bf16.mxu0 0
    %1499 = vmatpush1.bf16.msra.mxu0 %v1357
    %1500 = vmatprep.subr.bf16.mxu0 0
    %1501 = vmatpush1.bf16.msra.mxu0 %v1356
    %1502 = vmatprep.subr.bf16.mxu0 0
    %1503 = vmatpush1.bf16.msra.mxu0 %v1355
    %1504 = vmatprep.subr.bf16.mxu0 0
    %1505 = vmatpush1.bf16.msra.mxu0 %v1354
    %1506 = vmatprep.subr.bf16.mxu0 0
    %1507 = vmatpush1.bf16.msra.mxu0 %v1353
    %1508 = vmatprep.subr.bf16.mxu0 0
    %1509 = vmatpush1.bf16.msra.mxu0 %v1352
    %1510 = vmatprep.subr.bf16.mxu0 0
    %1511 = vmatpush1.bf16.msra.mxu0 %v1351
    %1512 = vmatprep.subr.bf16.mxu0 0
    %1513 = vmatpush2.bf16.msra.mxu0 0
    %1514 = vmatprep.subr.bf16.mxu0 0
    %1515 = vmatpush2.bf16.msra.mxu0 0
    %1516 = vmatprep.subr.bf16.mxu0 0
    %1517 = vmatpush2.bf16.msra.mxu0 0
    %1518 = vmatprep.subr.bf16.mxu0 0
    %1519 = vmatpush2.bf16.msra.mxu0 0
    %1520 = vmatprep.subr.bf16.mxu0 0
    %1521 = vmatpush2.bf16.msra.mxu0 0
    %1522 = vmatprep.subr.bf16.mxu0 0
    %1523 = vmatpush2.bf16.msra.mxu0 0
    %1524 = vmatprep.subr.bf16.mxu0 0
    %1525 = vmatpush2.bf16.msra.mxu0 0
    %1526 = vmatprep.subr.bf16.mxu0 0
    %1527 = vmatpush2.bf16.msra.mxu0 0
    %1528 = vmatprep.mubr.bf16.mxu0 0
    %1529 = vmatmul.mubr.bf16.gmra.mxu0 %v911
    %v1530 = vpop.f32.mrf.mxu0
    %v1531 = vadd.f32 0.0, %v1530
    %v1532 = vpop.f32.mrf.mxu0
    %v1533 = vpop.f32.mrf.mxu0
    %v1534 = vpop.f32.mrf.mxu0
    %1535 = vdwg.mxu0
    %v1536 = vadd.f32 %v857, %v1531
    %1537 = vmatprep.subr.bf16.mxu0 0
    %1538 = vmatpush1.bf16.msra.mxu0 %v1358
    %1539 = vmatprep.subr.bf16.mxu0 0
    %1540 = vmatpush1.bf16.msra.mxu0 %v1357
    %1541 = vmatprep.subr.bf16.mxu0 0
    %1542 = vmatpush1.bf16.msra.mxu0 %v1356
    %1543 = vmatprep.subr.bf16.mxu0 0
    %1544 = vmatpush1.bf16.msra.mxu0 %v1355
    %1545 = vmatprep.subr.bf16.mxu0 0
    %1546 = vmatpush1.bf16.msra.mxu0 %v1354
    %1547 = vmatprep.subr.bf16.mxu0 0
    %1548 = vmatpush1.bf16.msra.mxu0 %v1353
    %1549 = vmatprep.subr.bf16.mxu0 0
    %1550 = vmatpush1.bf16.msra.mxu0 %v1352
    %1551 = vmatprep.subr.bf16.mxu0 0
    %1552 = vmatpush1.bf16.msra.mxu0 %v1351
    %1553 = vmatprep.subr.bf16.mxu0 0
    %1554 = vmatpush2.bf16.msra.mxu0 0
    %1555 = vmatprep.subr.bf16.mxu0 0
    %1556 = vmatpush2.bf16.msra.mxu0 0
    %1557 = vmatprep.subr.bf16.mxu0 0
    %1558 = vmatpush2.bf16.msra.mxu0 0
    %1559 = vmatprep.subr.bf16.mxu0 0
    %1560 = vmatpush2.bf16.msra.mxu0 0
    %1561 = vmatprep.subr.bf16.mxu0 0
    %1562 = vmatpush2.bf16.msra.mxu0 0
    %1563 = vmatprep.subr.bf16.mxu0 0
    %1564 = vmatpush2.bf16.msra.mxu0 0
    %1565 = vmatprep.subr.bf16.mxu0 0
    %1566 = vmatpush2.bf16.msra.mxu0 0
    %1567 = vmatprep.subr.bf16.mxu0 0
    %1568 = vmatpush2.bf16.msra.mxu0 0
    %1569 = vmatprep.mubr.bf16.mxu0 0
    %1570 = vmatmul.mubr.bf16.gmra.mxu0 %v396
    %v1571 = vpop.f32.mrf.mxu0
    %v1572 = vadd.f32 0.0, %v1571
    %v1573 = vpop.f32.mrf.mxu0
    %v1574 = vpop.f32.mrf.mxu0
    %v1575 = vpop.f32.mrf.mxu0
    %1576 = vdwg.mxu0
    %v1577 = vadd.f32 %v948, %v1572
    %v1578 = vld [vmem:[#allocation2 + $0x14] sm:$0x4]
    %v1580 = vunpack.c.l.b16 %v1578
    %v1581 = vpack.c.b16 %v1580, %v1580
    %v1582 = vrot.slane %v1581, 2
    %1584 = vmatprep.subr.bf16.mxu0 0
    %1585 = vmatpush1.bf16.msra.mxu0 %v1358
    %1586 = vmatprep.subr.bf16.mxu0 0
    %1587 = vmatpush1.bf16.msra.mxu0 %v1357
    %1588 = vmatprep.subr.bf16.mxu0 0
    %1589 = vmatpush1.bf16.msra.mxu0 %v1356
    %1590 = vmatprep.subr.bf16.mxu0 0
    %1591 = vmatpush1.bf16.msra.mxu0 %v1355
    %1592 = vmatprep.subr.bf16.mxu0 0
    %1593 = vmatpush1.bf16.msra.mxu0 %v1354
    %1594 = vmatprep.subr.bf16.mxu0 0
    %1595 = vmatpush1.bf16.msra.mxu0 %v1353
    %1596 = vmatprep.subr.bf16.mxu0 0
    %1597 = vmatpush1.bf16.msra.mxu0 %v1352
    %1598 = vmatprep.subr.bf16.mxu0 0
    %1599 = vmatpush1.bf16.msra.mxu0 %v1351
    %1600 = vmatprep.subr.bf16.mxu0 0
    %1601 = vmatpush2.bf16.msra.mxu0 0
    %1602 = vmatprep.subr.bf16.mxu0 0
    %1603 = vmatpush2.bf16.msra.mxu0 0
    %1604 = vmatprep.subr.bf16.mxu0 0
    %1605 = vmatpush2.bf16.msra.mxu0 0
    %1606 = vmatprep.subr.bf16.mxu0 0
    %1607 = vmatpush2.bf16.msra.mxu0 0
    %1608 = vmatprep.subr.bf16.mxu0 0
    %1609 = vmatpush2.bf16.msra.mxu0 0
    %1610 = vmatprep.subr.bf16.mxu0 0
    %1611 = vmatpush2.bf16.msra.mxu0 0
    %1612 = vmatprep.subr.bf16.mxu0 0
    %1613 = vmatpush2.bf16.msra.mxu0 0
    %1614 = vmatprep.subr.bf16.mxu0 0
    %1615 = vmatpush2.bf16.msra.mxu0 0
    %1616 = vmatprep.mubr.bf16.mxu0 0
    %1617 = vmatmul.mubr.bf16.gmra.mxu0 %v1582
    %v1618 = vpop.f32.mrf.mxu0
    %v1619 = vadd.f32 0.0, %v1618
    %v1620 = vpop.f32.mrf.mxu0
    %v1621 = vpop.f32.mrf.mxu0
    %v1622 = vpop.f32.mrf.mxu0
    %1623 = vdwg.mxu0
    %v1624 = vadd.f32 %v1034, %v1619
    %1625 = vmatprep.subr.bf16.mxu0 0
    %1626 = vmatpush1.bf16.msra.mxu0 %v1358
    %1627 = vmatprep.subr.bf16.mxu0 0
    %1628 = vmatpush1.bf16.msra.mxu0 %v1357
    %1629 = vmatprep.subr.bf16.mxu0 0
    %1630 = vmatpush1.bf16.msra.mxu0 %v1356
    %1631 = vmatprep.subr.bf16.mxu0 0
    %1632 = vmatpush1.bf16.msra.mxu0 %v1355
    %1633 = vmatprep.subr.bf16.mxu0 0
    %1634 = vmatpush1.bf16.msra.mxu0 %v1354
    %1635 = vmatprep.subr.bf16.mxu0 0
    %1636 = vmatpush1.bf16.msra.mxu0 %v1353
    %1637 = vmatprep.subr.bf16.mxu0 0
    %1638 = vmatpush1.bf16.msra.mxu0 %v1352
    %1639 = vmatprep.subr.bf16.mxu0 0
    %1640 = vmatpush1.bf16.msra.mxu0 %v1351
    %1641 = vmatprep.subr.bf16.mxu0 0
    %1642 = vmatpush2.bf16.msra.mxu0 0
    %1643 = vmatprep.subr.bf16.mxu0 0
    %1644 = vmatpush2.bf16.msra.mxu0 0
    %1645 = vmatprep.subr.bf16.mxu0 0
    %1646 = vmatpush2.bf16.msra.mxu0 0
    %1647 = vmatprep.subr.bf16.mxu0 0
    %1648 = vmatpush2.bf16.msra.mxu0 0
    %1649 = vmatprep.subr.bf16.mxu0 0
    %1650 = vmatpush2.bf16.msra.mxu0 0
    %1651 = vmatprep.subr.bf16.mxu0 0
    %1652 = vmatpush2.bf16.msra.mxu0 0
    %1653 = vmatprep.subr.bf16.mxu0 0
    %1654 = vmatpush2.bf16.msra.mxu0 0
    %1655 = vmatprep.subr.bf16.mxu0 0
    %1656 = vmatpush2.bf16.msra.mxu0 0
    %1657 = vmatprep.mubr.bf16.mxu0 0
    %1658 = vmatmul.mubr.bf16.gmra.mxu0 %v1174
    %v1659 = vpop.f32.mrf.mxu0
    %v1660 = vadd.f32 0.0, %v1659
    %v1661 = vpop.f32.mrf.mxu0
    %v1662 = vpop.f32.mrf.mxu0
    %v1663 = vpop.f32.mrf.mxu0
    %1664 = vdwg.mxu0
    %v1665 = vadd.f32 %v1120, %v1660
    %1666 = vmatprep.subr.bf16.mxu0 0
    %1667 = vmatpush1.bf16.msra.mxu0 %v1358
    %1668 = vmatprep.subr.bf16.mxu0 0
    %1669 = vmatpush1.bf16.msra.mxu0 %v1357
    %1670 = vmatprep.subr.bf16.mxu0 0
    %1671 = vmatpush1.bf16.msra.mxu0 %v1356
    %1672 = vmatprep.subr.bf16.mxu0 0
    %1673 = vmatpush1.bf16.msra.mxu0 %v1355
    %1674 = vmatprep.subr.bf16.mxu0 0
    %1675 = vmatpush1.bf16.msra.mxu0 %v1354
    %1676 = vmatprep.subr.bf16.mxu0 0
    %1677 = vmatpush1.bf16.msra.mxu0 %v1353
    %1678 = vmatprep.subr.bf16.mxu0 0
    %1679 = vmatpush1.bf16.msra.mxu0 %v1352
    %1680 = vmatprep.subr.bf16.mxu0 0
    %1681 = vmatpush1.bf16.msra.mxu0 %v1351
    %1682 = vmatprep.subr.bf16.mxu0 0
    %1683 = vmatpush2.bf16.msra.mxu0 0
    %1684 = vmatprep.subr.bf16.mxu0 0
    %1685 = vmatpush2.bf16.msra.mxu0 0
    %1686 = vmatprep.subr.bf16.mxu0 0
    %1687 = vmatpush2.bf16.msra.mxu0 0
    %1688 = vmatprep.subr.bf16.mxu0 0
    %1689 = vmatpush2.bf16.msra.mxu0 0
    %1690 = vmatprep.subr.bf16.mxu0 0
    %1691 = vmatpush2.bf16.msra.mxu0 0
    %1692 = vmatprep.subr.bf16.mxu0 0
    %1693 = vmatpush2.bf16.msra.mxu0 0
    %1694 = vmatprep.subr.bf16.mxu0 0
    %1695 = vmatpush2.bf16.msra.mxu0 0
    %1696 = vmatprep.subr.bf16.mxu0 0
    %1697 = vmatpush2.bf16.msra.mxu0 0
    %1698 = vmatprep.mubr.bf16.mxu0 0
    %1699 = vmatmul.mubr.bf16.gmra.mxu0 %v399
    %v1700 = vpop.f32.mrf.mxu0
    %v1701 = vadd.f32 0.0, %v1700
    %v1702 = vpop.f32.mrf.mxu0
    %v1703 = vpop.f32.mrf.mxu0
    %v1704 = vpop.f32.mrf.mxu0
    %1705 = vdwg.mxu0
    %v1706 = vadd.f32 %v1211, %v1701
    %v1707 = vld [vmem:[#allocation2 + $0x24] sm:$0x4]
    %v1709 = vunpack.c.l.b16 %v1707
    %v1710 = vpack.c.b16 %v1709, %v1709
    %v1711 = vrot.slane %v1710, 2
    %1713 = vmatprep.subr.bf16.mxu0 0
    %1714 = vmatpush1.bf16.msra.mxu0 %v1358
    %1715 = vmatprep.subr.bf16.mxu0 0
    %1716 = vmatpush1.bf16.msra.mxu0 %v1357
    %1717 = vmatprep.subr.bf16.mxu0 0
    %1718 = vmatpush1.bf16.msra.mxu0 %v1356
    %1719 = vmatprep.subr.bf16.mxu0 0
    %1720 = vmatpush1.bf16.msra.mxu0 %v1355
    %1721 = vmatprep.subr.bf16.mxu0 0
    %1722 = vmatpush1.bf16.msra.mxu0 %v1354
    %1723 = vmatprep.subr.bf16.mxu0 0
    %1724 = vmatpush1.bf16.msra.mxu0 %v1353
    %1725 = vmatprep.subr.bf16.mxu0 0
    %1726 = vmatpush1.bf16.msra.mxu0 %v1352
    %1727 = vmatprep.subr.bf16.mxu0 0
    %1728 = vmatpush1.bf16.msra.mxu0 %v1351
    %1729 = vmatprep.subr.bf16.mxu0 0
    %1730 = vmatpush2.bf16.msra.mxu0 0
    %1731 = vmatprep.subr.bf16.mxu0 0
    %1732 = vmatpush2.bf16.msra.mxu0 0
    %1733 = vmatprep.subr.bf16.mxu0 0
    %1734 = vmatpush2.bf16.msra.mxu0 0
    %1735 = vmatprep.subr.bf16.mxu0 0
    %1736 = vmatpush2.bf16.msra.mxu0 0
    %1737 = vmatprep.subr.bf16.mxu0 0
    %1738 = vmatpush2.bf16.msra.mxu0 0
    %1739 = vmatprep.subr.bf16.mxu0 0
    %1740 = vmatpush2.bf16.msra.mxu0 0
    %1741 = vmatprep.subr.bf16.mxu0 0
    %1742 = vmatpush2.bf16.msra.mxu0 0
    %1743 = vmatprep.subr.bf16.mxu0 0
    %1744 = vmatpush2.bf16.msra.mxu0 0
    %1745 = vmatprep.mubr.bf16.mxu0 0
    %1746 = vmatmul.mubr.bf16.gmra.mxu0 %v1711
    %v1747 = vpop.f32.mrf.mxu0
    %v1748 = vadd.f32 0.0, %v1747
    %v1749 = vpop.f32.mrf.mxu0
    %v1750 = vpop.f32.mrf.mxu0
    %v1751 = vpop.f32.mrf.mxu0
    %1752 = vdwg.mxu0
    %v1753 = vadd.f32 %v1297, %v1748
    %s1754 = scalar_lea.vmem %s3, 192
    %v1755 = vld [vmem:[%s1754] sm:$0xf]
    %v1756 = vld [vmem:[%s1754 + $0x4] sm:$0xf]
    %v1757 = vld [vmem:[%s1754 + $0x8] sm:$0xf]
    %v1758 = vld [vmem:[%s1754 + $0xc] sm:$0xf]
    %v1759 = vld [vmem:[%s1754 + $0x10] sm:$0xf]
    %v1760 = vld [vmem:[%s1754 + $0x14] sm:$0xf]
    %v1761 = vld [vmem:[%s1754 + $0x18] sm:$0xf]
    %v1762 = vld [vmem:[%s1754 + $0x1c] sm:$0xf]
    %v1763 = vld [vmem:[%s1754 + $0x20] sm:$0xf]
    %v1764 = vld [vmem:[%s1754 + $0x24] sm:$0xf]
    %v1765 = vld [vmem:[%s1754 + $0x28] sm:$0xf]
    %v1766 = vld [vmem:[%s1754 + $0x2c] sm:$0xf]
    %v1767 = vld [vmem:[%s1754 + $0x30] sm:$0xf]
    %v1768 = vld [vmem:[%s1754 + $0x34] sm:$0xf]
    %v1769 = vld [vmem:[%s1754 + $0x38] sm:$0xf]
    %v1770 = vld [vmem:[%s1754 + $0x3c] sm:$0xf]
    %v1787 = vunpack.c.l.b16 %v1755
    %v1788 = vunpack.c.l.b16 %v1756
    %v1789 = vunpack.c.l.b16 %v1757
    %v1790 = vunpack.c.l.b16 %v1758
    %v1791 = vunpack.c.l.b16 %v1759
    %v1792 = vunpack.c.l.b16 %v1760
    %v1793 = vunpack.c.l.b16 %v1761
    %v1794 = vunpack.c.l.b16 %v1762
    %v1795 = vunpack.c.l.b16 %v1763
    %v1796 = vunpack.c.l.b16 %v1764
    %v1797 = vunpack.c.l.b16 %v1765
    %v1798 = vunpack.c.l.b16 %v1766
    %v1799 = vunpack.c.l.b16 %v1767
    %v1800 = vunpack.c.l.b16 %v1768
    %v1801 = vunpack.c.l.b16 %v1769
    %v1802 = vunpack.c.l.b16 %v1770
    %v1803 = vpack.c.b16 %v1788, %v1787
    %v1804 = vpack.c.b16 %v1790, %v1789
    %v1805 = vpack.c.b16 %v1792, %v1791
    %v1806 = vpack.c.b16 %v1794, %v1793
    %v1807 = vpack.c.b16 %v1796, %v1795
    %v1808 = vpack.c.b16 %v1798, %v1797
    %v1809 = vpack.c.b16 %v1800, %v1799
    %v1810 = vpack.c.b16 %v1802, %v1801
    %1819 = vmatprep.subr.bf16.mxu0 0
    %1820 = vmatpush1.bf16.msra.mxu0 %v1810
    %1821 = vmatprep.subr.bf16.mxu0 0
    %1822 = vmatpush1.bf16.msra.mxu0 %v1809
    %1823 = vmatprep.subr.bf16.mxu0 0
    %1824 = vmatpush1.bf16.msra.mxu0 %v1808
    %1825 = vmatprep.subr.bf16.mxu0 0
    %1826 = vmatpush1.bf16.msra.mxu0 %v1807
    %1827 = vmatprep.subr.bf16.mxu0 0
    %1828 = vmatpush1.bf16.msra.mxu0 %v1806
    %1829 = vmatprep.subr.bf16.mxu0 0
    %1830 = vmatpush1.bf16.msra.mxu0 %v1805
    %1831 = vmatprep.subr.bf16.mxu0 0
    %1832 = vmatpush1.bf16.msra.mxu0 %v1804
    %1833 = vmatprep.subr.bf16.mxu0 0
    %1834 = vmatpush1.bf16.msra.mxu0 %v1803
    %1835 = vmatprep.subr.bf16.mxu0 0
    %1836 = vmatpush2.bf16.msra.mxu0 0
    %1837 = vmatprep.subr.bf16.mxu0 0
    %1838 = vmatpush2.bf16.msra.mxu0 0
    %1839 = vmatprep.subr.bf16.mxu0 0
    %1840 = vmatpush2.bf16.msra.mxu0 0
    %1841 = vmatprep.subr.bf16.mxu0 0
    %1842 = vmatpush2.bf16.msra.mxu0 0
    %1843 = vmatprep.subr.bf16.mxu0 0
    %1844 = vmatpush2.bf16.msra.mxu0 0
    %1845 = vmatprep.subr.bf16.mxu0 0
    %1846 = vmatpush2.bf16.msra.mxu0 0
    %1847 = vmatprep.subr.bf16.mxu0 0
    %1848 = vmatpush2.bf16.msra.mxu0 0
    %1849 = vmatprep.subr.bf16.mxu0 0
    %1850 = vmatpush2.bf16.msra.mxu0 0
    %1851 = vmatprep.mubr.bf16.mxu0 0
    %1852 = vmatmul.mubr.bf16.gmra.mxu0 %v603
    %v1853 = vpop.f32.mrf.mxu0
    %v1854 = vadd.f32 0.0, %v1853
    %v1855 = vpop.f32.mrf.mxu0
    %v1856 = vpop.f32.mrf.mxu0
    %v1857 = vpop.f32.mrf.mxu0
    %1858 = vdwg.mxu0
    %v1859 = vadd.f32 %v1407, %v1854
    %1860 = vmatprep.subr.bf16.mxu0 0
    %1861 = vmatpush1.bf16.msra.mxu0 %v1810
    %1862 = vmatprep.subr.bf16.mxu0 0
    %1863 = vmatpush1.bf16.msra.mxu0 %v1809
    %1864 = vmatprep.subr.bf16.mxu0 0
    %1865 = vmatpush1.bf16.msra.mxu0 %v1808
    %1866 = vmatprep.subr.bf16.mxu0 0
    %1867 = vmatpush1.bf16.msra.mxu0 %v1807
    %1868 = vmatprep.subr.bf16.mxu0 0
    %1869 = vmatpush1.bf16.msra.mxu0 %v1806
    %1870 = vmatprep.subr.bf16.mxu0 0
    %1871 = vmatpush1.bf16.msra.mxu0 %v1805
    %1872 = vmatprep.subr.bf16.mxu0 0
    %1873 = vmatpush1.bf16.msra.mxu0 %v1804
    %1874 = vmatprep.subr.bf16.mxu0 0
    %1875 = vmatpush1.bf16.msra.mxu0 %v1803
    %1876 = vmatprep.subr.bf16.mxu0 0
    %1877 = vmatpush2.bf16.msra.mxu0 0
    %1878 = vmatprep.subr.bf16.mxu0 0
    %1879 = vmatpush2.bf16.msra.mxu0 0
    %1880 = vmatprep.subr.bf16.mxu0 0
    %1881 = vmatpush2.bf16.msra.mxu0 0
    %1882 = vmatprep.subr.bf16.mxu0 0
    %1883 = vmatpush2.bf16.msra.mxu0 0
    %1884 = vmatprep.subr.bf16.mxu0 0
    %1885 = vmatpush2.bf16.msra.mxu0 0
    %1886 = vmatprep.subr.bf16.mxu0 0
    %1887 = vmatpush2.bf16.msra.mxu0 0
    %1888 = vmatprep.subr.bf16.mxu0 0
    %1889 = vmatpush2.bf16.msra.mxu0 0
    %1890 = vmatprep.subr.bf16.mxu0 0
    %1891 = vmatpush2.bf16.msra.mxu0 0
    %1892 = vmatprep.mubr.bf16.mxu0 0
    %1893 = vmatmul.mubr.bf16.gmra.mxu0 %v694
    %v1894 = vpop.f32.mrf.mxu0
    %v1895 = vadd.f32 0.0, %v1894
    %v1896 = vpop.f32.mrf.mxu0
    %v1897 = vpop.f32.mrf.mxu0
    %v1898 = vpop.f32.mrf.mxu0
    %1899 = vdwg.mxu0
    %v1900 = vadd.f32 %v1448, %v1895
    %v1901 = vld [vmem:[#allocation2 + $0x4] sm:$0x8]
    %v1903 = vunpack.c.l.b16 %v1901
    %v1904 = vpack.c.b16 %v1903, %v1903
    %v1905 = vrot.slane %v1904, 3
    %1907 = vmatprep.subr.bf16.mxu0 0
    %1908 = vmatpush1.bf16.msra.mxu0 %v1810
    %1909 = vmatprep.subr.bf16.mxu0 0
    %1910 = vmatpush1.bf16.msra.mxu0 %v1809
    %1911 = vmatprep.subr.bf16.mxu0 0
    %1912 = vmatpush1.bf16.msra.mxu0 %v1808
    %1913 = vmatprep.subr.bf16.mxu0 0
    %1914 = vmatpush1.bf16.msra.mxu0 %v1807
    %1915 = vmatprep.subr.bf16.mxu0 0
    %1916 = vmatpush1.bf16.msra.mxu0 %v1806
    %1917 = vmatprep.subr.bf16.mxu0 0
    %1918 = vmatpush1.bf16.msra.mxu0 %v1805
    %1919 = vmatprep.subr.bf16.mxu0 0
    %1920 = vmatpush1.bf16.msra.mxu0 %v1804
    %1921 = vmatprep.subr.bf16.mxu0 0
    %1922 = vmatpush1.bf16.msra.mxu0 %v1803
    %1923 = vmatprep.subr.bf16.mxu0 0
    %1924 = vmatpush2.bf16.msra.mxu0 0
    %1925 = vmatprep.subr.bf16.mxu0 0
    %1926 = vmatpush2.bf16.msra.mxu0 0
    %1927 = vmatprep.subr.bf16.mxu0 0
    %1928 = vmatpush2.bf16.msra.mxu0 0
    %1929 = vmatprep.subr.bf16.mxu0 0
    %1930 = vmatpush2.bf16.msra.mxu0 0
    %1931 = vmatprep.subr.bf16.mxu0 0
    %1932 = vmatpush2.bf16.msra.mxu0 0
    %1933 = vmatprep.subr.bf16.mxu0 0
    %1934 = vmatpush2.bf16.msra.mxu0 0
    %1935 = vmatprep.subr.bf16.mxu0 0
    %1936 = vmatpush2.bf16.msra.mxu0 0
    %1937 = vmatprep.subr.bf16.mxu0 0
    %1938 = vmatpush2.bf16.msra.mxu0 0
    %1939 = vmatprep.mubr.bf16.mxu0 0
    %1940 = vmatmul.mubr.bf16.gmra.mxu0 %v1905
    %v1941 = vpop.f32.mrf.mxu0
    %v1942 = vadd.f32 0.0, %v1941
    %v1943 = vpop.f32.mrf.mxu0
    %v1944 = vpop.f32.mrf.mxu0
    %v1945 = vpop.f32.mrf.mxu0
    %1946 = vdwg.mxu0
    %v1947 = vadd.f32 %v1495, %v1942
    %1948 = vmatprep.subr.bf16.mxu0 0
    %1949 = vmatpush1.bf16.msra.mxu0 %v1810
    %1950 = vmatprep.subr.bf16.mxu0 0
    %1951 = vmatpush1.bf16.msra.mxu0 %v1809
    %1952 = vmatprep.subr.bf16.mxu0 0
    %1953 = vmatpush1.bf16.msra.mxu0 %v1808
    %1954 = vmatprep.subr.bf16.mxu0 0
    %1955 = vmatpush1.bf16.msra.mxu0 %v1807
    %1956 = vmatprep.subr.bf16.mxu0 0
    %1957 = vmatpush1.bf16.msra.mxu0 %v1806
    %1958 = vmatprep.subr.bf16.mxu0 0
    %1959 = vmatpush1.bf16.msra.mxu0 %v1805
    %1960 = vmatprep.subr.bf16.mxu0 0
    %1961 = vmatpush1.bf16.msra.mxu0 %v1804
    %1962 = vmatprep.subr.bf16.mxu0 0
    %1963 = vmatpush1.bf16.msra.mxu0 %v1803
    %1964 = vmatprep.subr.bf16.mxu0 0
    %1965 = vmatpush2.bf16.msra.mxu0 0
    %1966 = vmatprep.subr.bf16.mxu0 0
    %1967 = vmatpush2.bf16.msra.mxu0 0
    %1968 = vmatprep.subr.bf16.mxu0 0
    %1969 = vmatpush2.bf16.msra.mxu0 0
    %1970 = vmatprep.subr.bf16.mxu0 0
    %1971 = vmatpush2.bf16.msra.mxu0 0
    %1972 = vmatprep.subr.bf16.mxu0 0
    %1973 = vmatpush2.bf16.msra.mxu0 0
    %1974 = vmatprep.subr.bf16.mxu0 0
    %1975 = vmatpush2.bf16.msra.mxu0 0
    %1976 = vmatprep.subr.bf16.mxu0 0
    %1977 = vmatpush2.bf16.msra.mxu0 0
    %1978 = vmatprep.subr.bf16.mxu0 0
    %1979 = vmatpush2.bf16.msra.mxu0 0
    %1980 = vmatprep.mubr.bf16.mxu0 0
    %1981 = vmatmul.mubr.bf16.gmra.mxu0 %v866
    %v1982 = vpop.f32.mrf.mxu0
    %v1983 = vadd.f32 0.0, %v1982
    %v1984 = vpop.f32.mrf.mxu0
    %v1985 = vpop.f32.mrf.mxu0
    %v1986 = vpop.f32.mrf.mxu0
    %1987 = vdwg.mxu0
    %v1988 = vadd.f32 %v1536, %v1983
    %1989 = vmatprep.subr.bf16.mxu0 0
    %1990 = vmatpush1.bf16.msra.mxu0 %v1810
    %1991 = vmatprep.subr.bf16.mxu0 0
    %1992 = vmatpush1.bf16.msra.mxu0 %v1809
    %1993 = vmatprep.subr.bf16.mxu0 0
    %1994 = vmatpush1.bf16.msra.mxu0 %v1808
    %1995 = vmatprep.subr.bf16.mxu0 0
    %1996 = vmatpush1.bf16.msra.mxu0 %v1807
    %1997 = vmatprep.subr.bf16.mxu0 0
    %1998 = vmatpush1.bf16.msra.mxu0 %v1806
    %1999 = vmatprep.subr.bf16.mxu0 0
    %2000 = vmatpush1.bf16.msra.mxu0 %v1805
    %2001 = vmatprep.subr.bf16.mxu0 0
    %2002 = vmatpush1.bf16.msra.mxu0 %v1804
    %2003 = vmatprep.subr.bf16.mxu0 0
    %2004 = vmatpush1.bf16.msra.mxu0 %v1803
    %2005 = vmatprep.subr.bf16.mxu0 0
    %2006 = vmatpush2.bf16.msra.mxu0 0
    %2007 = vmatprep.subr.bf16.mxu0 0
    %2008 = vmatpush2.bf16.msra.mxu0 0
    %2009 = vmatprep.subr.bf16.mxu0 0
    %2010 = vmatpush2.bf16.msra.mxu0 0
    %2011 = vmatprep.subr.bf16.mxu0 0
    %2012 = vmatpush2.bf16.msra.mxu0 0
    %2013 = vmatprep.subr.bf16.mxu0 0
    %2014 = vmatpush2.bf16.msra.mxu0 0
    %2015 = vmatprep.subr.bf16.mxu0 0
    %2016 = vmatpush2.bf16.msra.mxu0 0
    %2017 = vmatprep.subr.bf16.mxu0 0
    %2018 = vmatpush2.bf16.msra.mxu0 0
    %2019 = vmatprep.subr.bf16.mxu0 0
    %2020 = vmatpush2.bf16.msra.mxu0 0
    %2021 = vmatprep.mubr.bf16.mxu0 0
    %2022 = vmatmul.mubr.bf16.gmra.mxu0 %v957
    %v2023 = vpop.f32.mrf.mxu0
    %v2024 = vadd.f32 0.0, %v2023
    %v2025 = vpop.f32.mrf.mxu0
    %v2026 = vpop.f32.mrf.mxu0
    %v2027 = vpop.f32.mrf.mxu0
    %2028 = vdwg.mxu0
    %v2029 = vadd.f32 %v1577, %v2024
    %v2030 = vld [vmem:[#allocation2 + $0x14] sm:$0x8]
    %v2032 = vunpack.c.l.b16 %v2030
    %v2033 = vpack.c.b16 %v2032, %v2032
    %v2034 = vrot.slane %v2033, 3
    %2036 = vmatprep.subr.bf16.mxu0 0
    %2037 = vmatpush1.bf16.msra.mxu0 %v1810
    %2038 = vmatprep.subr.bf16.mxu0 0
    %2039 = vmatpush1.bf16.msra.mxu0 %v1809
    %2040 = vmatprep.subr.bf16.mxu0 0
    %2041 = vmatpush1.bf16.msra.mxu0 %v1808
    %2042 = vmatprep.subr.bf16.mxu0 0
    %2043 = vmatpush1.bf16.msra.mxu0 %v1807
    %2044 = vmatprep.subr.bf16.mxu0 0
    %2045 = vmatpush1.bf16.msra.mxu0 %v1806
    %2046 = vmatprep.subr.bf16.mxu0 0
    %2047 = vmatpush1.bf16.msra.mxu0 %v1805
    %2048 = vmatprep.subr.bf16.mxu0 0
    %2049 = vmatpush1.bf16.msra.mxu0 %v1804
    %2050 = vmatprep.subr.bf16.mxu0 0
    %2051 = vmatpush1.bf16.msra.mxu0 %v1803
    %2052 = vmatprep.subr.bf16.mxu0 0
    %2053 = vmatpush2.bf16.msra.mxu0 0
    %2054 = vmatprep.subr.bf16.mxu0 0
    %2055 = vmatpush2.bf16.msra.mxu0 0
    %2056 = vmatprep.subr.bf16.mxu0 0
    %2057 = vmatpush2.bf16.msra.mxu0 0
    %2058 = vmatprep.subr.bf16.mxu0 0
    %2059 = vmatpush2.bf16.msra.mxu0 0
    %2060 = vmatprep.subr.bf16.mxu0 0
    %2061 = vmatpush2.bf16.msra.mxu0 0
    %2062 = vmatprep.subr.bf16.mxu0 0
    %2063 = vmatpush2.bf16.msra.mxu0 0
    %2064 = vmatprep.subr.bf16.mxu0 0
    %2065 = vmatpush2.bf16.msra.mxu0 0
    %2066 = vmatprep.subr.bf16.mxu0 0
    %2067 = vmatpush2.bf16.msra.mxu0 0
    %2068 = vmatprep.mubr.bf16.mxu0 0
    %2069 = vmatmul.mubr.bf16.gmra.mxu0 %v2034
    %v2070 = vpop.f32.mrf.mxu0
    %v2071 = vadd.f32 0.0, %v2070
    %v2072 = vpop.f32.mrf.mxu0
    %v2073 = vpop.f32.mrf.mxu0
    %v2074 = vpop.f32.mrf.mxu0
    %2075 = vdwg.mxu0
    %v2076 = vadd.f32 %v1624, %v2071
    %2077 = vmatprep.subr.bf16.mxu0 0
    %2078 = vmatpush1.bf16.msra.mxu0 %v1810
    %2079 = vmatprep.subr.bf16.mxu0 0
    %2080 = vmatpush1.bf16.msra.mxu0 %v1809
    %2081 = vmatprep.subr.bf16.mxu0 0
    %2082 = vmatpush1.bf16.msra.mxu0 %v1808
    %2083 = vmatprep.subr.bf16.mxu0 0
    %2084 = vmatpush1.bf16.msra.mxu0 %v1807
    %2085 = vmatprep.subr.bf16.mxu0 0
    %2086 = vmatpush1.bf16.msra.mxu0 %v1806
    %2087 = vmatprep.subr.bf16.mxu0 0
    %2088 = vmatpush1.bf16.msra.mxu0 %v1805
    %2089 = vmatprep.subr.bf16.mxu0 0
    %2090 = vmatpush1.bf16.msra.mxu0 %v1804
    %2091 = vmatprep.subr.bf16.mxu0 0
    %2092 = vmatpush1.bf16.msra.mxu0 %v1803
    %2093 = vmatprep.subr.bf16.mxu0 0
    %2094 = vmatpush2.bf16.msra.mxu0 0
    %2095 = vmatprep.subr.bf16.mxu0 0
    %2096 = vmatpush2.bf16.msra.mxu0 0
    %2097 = vmatprep.subr.bf16.mxu0 0
    %2098 = vmatpush2.bf16.msra.mxu0 0
    %2099 = vmatprep.subr.bf16.mxu0 0
    %2100 = vmatpush2.bf16.msra.mxu0 0
    %2101 = vmatprep.subr.bf16.mxu0 0
    %2102 = vmatpush2.bf16.msra.mxu0 0
    %2103 = vmatprep.subr.bf16.mxu0 0
    %2104 = vmatpush2.bf16.msra.mxu0 0
    %2105 = vmatprep.subr.bf16.mxu0 0
    %2106 = vmatpush2.bf16.msra.mxu0 0
    %2107 = vmatprep.subr.bf16.mxu0 0
    %2108 = vmatpush2.bf16.msra.mxu0 0
    %2109 = vmatprep.mubr.bf16.mxu0 0
    %2110 = vmatmul.mubr.bf16.gmra.mxu0 %v1129
    %v2111 = vpop.f32.mrf.mxu0
    %v2112 = vadd.f32 0.0, %v2111
    %v2113 = vpop.f32.mrf.mxu0
    %v2114 = vpop.f32.mrf.mxu0
    %v2115 = vpop.f32.mrf.mxu0
    %2116 = vdwg.mxu0
    %v2117 = vadd.f32 %v1665, %v2112
    %2118 = vmatprep.subr.bf16.mxu0 0
    %2119 = vmatpush1.bf16.msra.mxu0 %v1810
    %2120 = vmatprep.subr.bf16.mxu0 0
    %2121 = vmatpush1.bf16.msra.mxu0 %v1809
    %2122 = vmatprep.subr.bf16.mxu0 0
    %2123 = vmatpush1.bf16.msra.mxu0 %v1808
    %2124 = vmatprep.subr.bf16.mxu0 0
    %2125 = vmatpush1.bf16.msra.mxu0 %v1807
    %2126 = vmatprep.subr.bf16.mxu0 0
    %2127 = vmatpush1.bf16.msra.mxu0 %v1806
    %2128 = vmatprep.subr.bf16.mxu0 0
    %2129 = vmatpush1.bf16.msra.mxu0 %v1805
    %2130 = vmatprep.subr.bf16.mxu0 0
    %2131 = vmatpush1.bf16.msra.mxu0 %v1804
    %2132 = vmatprep.subr.bf16.mxu0 0
    %2133 = vmatpush1.bf16.msra.mxu0 %v1803
    %2134 = vmatprep.subr.bf16.mxu0 0
    %2135 = vmatpush2.bf16.msra.mxu0 0
    %2136 = vmatprep.subr.bf16.mxu0 0
    %2137 = vmatpush2.bf16.msra.mxu0 0
    %2138 = vmatprep.subr.bf16.mxu0 0
    %2139 = vmatpush2.bf16.msra.mxu0 0
    %2140 = vmatprep.subr.bf16.mxu0 0
    %2141 = vmatpush2.bf16.msra.mxu0 0
    %2142 = vmatprep.subr.bf16.mxu0 0
    %2143 = vmatpush2.bf16.msra.mxu0 0
    %2144 = vmatprep.subr.bf16.mxu0 0
    %2145 = vmatpush2.bf16.msra.mxu0 0
    %2146 = vmatprep.subr.bf16.mxu0 0
    %2147 = vmatpush2.bf16.msra.mxu0 0
    %2148 = vmatprep.subr.bf16.mxu0 0
    %2149 = vmatpush2.bf16.msra.mxu0 0
    %2150 = vmatprep.mubr.bf16.mxu0 0
    %2151 = vmatmul.mubr.bf16.gmra.mxu0 %v1220
    %v2152 = vpop.f32.mrf.mxu0
    %v2153 = vadd.f32 0.0, %v2152
    %v2154 = vpop.f32.mrf.mxu0
    %v2155 = vpop.f32.mrf.mxu0
    %v2156 = vpop.f32.mrf.mxu0
    %2157 = vdwg.mxu0
    %v2158 = vadd.f32 %v1706, %v2153
    %v2159 = vld [vmem:[#allocation2 + $0x24] sm:$0x8]
    %v2161 = vunpack.c.l.b16 %v2159
    %v2162 = vpack.c.b16 %v2161, %v2161
    %v2163 = vrot.slane %v2162, 3
    %2165 = vmatprep.subr.bf16.mxu0 0
    %2166 = vmatpush1.bf16.msra.mxu0 %v1810
    %2167 = vmatprep.subr.bf16.mxu0 0
    %2168 = vmatpush1.bf16.msra.mxu0 %v1809
    %2169 = vmatprep.subr.bf16.mxu0 0
    %2170 = vmatpush1.bf16.msra.mxu0 %v1808
    %2171 = vmatprep.subr.bf16.mxu0 0
    %2172 = vmatpush1.bf16.msra.mxu0 %v1807
    %2173 = vmatprep.subr.bf16.mxu0 0
    %2174 = vmatpush1.bf16.msra.mxu0 %v1806
    %2175 = vmatprep.subr.bf16.mxu0 0
    %2176 = vmatpush1.bf16.msra.mxu0 %v1805
    %2177 = vmatprep.subr.bf16.mxu0 0
    %2178 = vmatpush1.bf16.msra.mxu0 %v1804
    %2179 = vmatprep.subr.bf16.mxu0 0
    %2180 = vmatpush1.bf16.msra.mxu0 %v1803
    %2181 = vmatprep.subr.bf16.mxu0 0
    %2182 = vmatpush2.bf16.msra.mxu0 0
    %2183 = vmatprep.subr.bf16.mxu0 0
    %2184 = vmatpush2.bf16.msra.mxu0 0
    %2185 = vmatprep.subr.bf16.mxu0 0
    %2186 = vmatpush2.bf16.msra.mxu0 0
    %2187 = vmatprep.subr.bf16.mxu0 0
    %2188 = vmatpush2.bf16.msra.mxu0 0
    %2189 = vmatprep.subr.bf16.mxu0 0
    %2190 = vmatpush2.bf16.msra.mxu0 0
    %2191 = vmatprep.subr.bf16.mxu0 0
    %2192 = vmatpush2.bf16.msra.mxu0 0
    %2193 = vmatprep.subr.bf16.mxu0 0
    %2194 = vmatpush2.bf16.msra.mxu0 0
    %2195 = vmatprep.subr.bf16.mxu0 0
    %2196 = vmatpush2.bf16.msra.mxu0 0
    %2197 = vmatprep.mubr.bf16.mxu0 0
    %2198 = vmatmul.mubr.bf16.gmra.mxu0 %v2163
    %v2199 = vpop.f32.mrf.mxu0
    %v2200 = vadd.f32 0.0, %v2199
    %v2201 = vpop.f32.mrf.mxu0
    %v2202 = vpop.f32.mrf.mxu0
    %v2203 = vpop.f32.mrf.mxu0
    %2204 = vdwg.mxu0
    %v2205 = vadd.f32 %v1753, %v2200
    %s2206 = scalar_lea.vmem %s3, 256
    %v2207 = vld [vmem:[%s2206] sm:$0xf]
    %v2208 = vld [vmem:[%s2206 + $0x4] sm:$0xf]
    %v2209 = vld [vmem:[%s2206 + $0x8] sm:$0xf]
    %v2210 = vld [vmem:[%s2206 + $0xc] sm:$0xf]
    %v2211 = vld [vmem:[%s2206 + $0x10] sm:$0xf]
    %v2212 = vld [vmem:[%s2206 + $0x14] sm:$0xf]
    %v2213 = vld [vmem:[%s2206 + $0x18] sm:$0xf]
    %v2214 = vld [vmem:[%s2206 + $0x1c] sm:$0xf]
    %v2215 = vld [vmem:[%s2206 + $0x20] sm:$0xf]
    %v2216 = vld [vmem:[%s2206 + $0x24] sm:$0xf]
    %v2217 = vld [vmem:[%s2206 + $0x28] sm:$0xf]
    %v2218 = vld [vmem:[%s2206 + $0x2c] sm:$0xf]
    %v2219 = vld [vmem:[%s2206 + $0x30] sm:$0xf]
    %v2220 = vld [vmem:[%s2206 + $0x34] sm:$0xf]
    %v2221 = vld [vmem:[%s2206 + $0x38] sm:$0xf]
    %v2222 = vld [vmem:[%s2206 + $0x3c] sm:$0xf]
    %v2223 = vld [vmem:[#allocation2 + $0x8] sm:$0x1]
    %v2240 = vunpack.c.l.b16 %v2207
    %v2241 = vunpack.c.l.b16 %v2208
    %v2242 = vunpack.c.l.b16 %v2209
    %v2243 = vunpack.c.l.b16 %v2210
    %v2244 = vunpack.c.l.b16 %v2211
    %v2245 = vunpack.c.l.b16 %v2212
    %v2246 = vunpack.c.l.b16 %v2213
    %v2247 = vunpack.c.l.b16 %v2214
    %v2248 = vunpack.c.l.b16 %v2215
    %v2249 = vunpack.c.l.b16 %v2216
    %v2250 = vunpack.c.l.b16 %v2217
    %v2251 = vunpack.c.l.b16 %v2218
    %v2252 = vunpack.c.l.b16 %v2219
    %v2253 = vunpack.c.l.b16 %v2220
    %v2254 = vunpack.c.l.b16 %v2221
    %v2255 = vunpack.c.l.b16 %v2222
    %v2256 = vpack.c.b16 %v2241, %v2240
    %v2257 = vpack.c.b16 %v2243, %v2242
    %v2258 = vpack.c.b16 %v2245, %v2244
    %v2259 = vpack.c.b16 %v2247, %v2246
    %v2260 = vpack.c.b16 %v2249, %v2248
    %v2261 = vpack.c.b16 %v2251, %v2250
    %v2262 = vpack.c.b16 %v2253, %v2252
    %v2263 = vpack.c.b16 %v2255, %v2254
    %2272 = vmatprep.subr.bf16.mxu0 0
    %2273 = vmatpush1.bf16.msra.mxu0 %v2263
    %2274 = vmatprep.subr.bf16.mxu0 0
    %2275 = vmatpush1.bf16.msra.mxu0 %v2262
    %2276 = vmatprep.subr.bf16.mxu0 0
    %2277 = vmatpush1.bf16.msra.mxu0 %v2261
    %2278 = vmatprep.subr.bf16.mxu0 0
    %2279 = vmatpush1.bf16.msra.mxu0 %v2260
    %2280 = vmatprep.subr.bf16.mxu0 0
    %2281 = vmatpush1.bf16.msra.mxu0 %v2259
    %2282 = vmatprep.subr.bf16.mxu0 0
    %2283 = vmatpush1.bf16.msra.mxu0 %v2258
    %2284 = vmatprep.subr.bf16.mxu0 0
    %2285 = vmatpush1.bf16.msra.mxu0 %v2257
    %2286 = vmatprep.subr.bf16.mxu0 0
    %2287 = vmatpush1.bf16.msra.mxu0 %v2256
    %2288 = vmatprep.subr.bf16.mxu0 0
    %2289 = vmatpush2.bf16.msra.mxu0 0
    %2290 = vmatprep.subr.bf16.mxu0 0
    %2291 = vmatpush2.bf16.msra.mxu0 0
    %2292 = vmatprep.subr.bf16.mxu0 0
    %2293 = vmatpush2.bf16.msra.mxu0 0
    %2294 = vmatprep.subr.bf16.mxu0 0
    %2295 = vmatpush2.bf16.msra.mxu0 0
    %2296 = vmatprep.subr.bf16.mxu0 0
    %2297 = vmatpush2.bf16.msra.mxu0 0
    %2298 = vmatprep.subr.bf16.mxu0 0
    %2299 = vmatpush2.bf16.msra.mxu0 0
    %2300 = vmatprep.subr.bf16.mxu0 0
    %2301 = vmatpush2.bf16.msra.mxu0 0
    %2302 = vmatprep.subr.bf16.mxu0 0
    %2303 = vmatpush2.bf16.msra.mxu0 0
    %2304 = vmatprep.mubr.bf16.mxu0 0
    %2305 = vmatmul.mubr.bf16.gmra.mxu0 %v2223
    %v2306 = vpop.f32.mrf.mxu0
    %v2307 = vadd.f32 0.0, %v2306
    %v2308 = vpop.f32.mrf.mxu0
    %v2309 = vpop.f32.mrf.mxu0
    %v2310 = vpop.f32.mrf.mxu0
    %2311 = vdwg.mxu0
    %v2312 = vadd.f32 %v1859, %v2307
    %v2313 = vld [vmem:[#allocation2 + $0x8] sm:$0x4]
    %v2315 = vunpack.c.l.b16 %v2313
    %v2316 = vpack.c.b16 %v2315, %v2315
    %v2317 = vrot.slane %v2316, 2
    %2319 = vmatprep.subr.bf16.mxu0 0
    %2320 = vmatpush1.bf16.msra.mxu0 %v2263
    %2321 = vmatprep.subr.bf16.mxu0 0
    %2322 = vmatpush1.bf16.msra.mxu0 %v2262
    %2323 = vmatprep.subr.bf16.mxu0 0
    %2324 = vmatpush1.bf16.msra.mxu0 %v2261
    %2325 = vmatprep.subr.bf16.mxu0 0
    %2326 = vmatpush1.bf16.msra.mxu0 %v2260
    %2327 = vmatprep.subr.bf16.mxu0 0
    %2328 = vmatpush1.bf16.msra.mxu0 %v2259
    %2329 = vmatprep.subr.bf16.mxu0 0
    %2330 = vmatpush1.bf16.msra.mxu0 %v2258
    %2331 = vmatprep.subr.bf16.mxu0 0
    %2332 = vmatpush1.bf16.msra.mxu0 %v2257
    %2333 = vmatprep.subr.bf16.mxu0 0
    %2334 = vmatpush1.bf16.msra.mxu0 %v2256
    %2335 = vmatprep.subr.bf16.mxu0 0
    %2336 = vmatpush2.bf16.msra.mxu0 0
    %2337 = vmatprep.subr.bf16.mxu0 0
    %2338 = vmatpush2.bf16.msra.mxu0 0
    %2339 = vmatprep.subr.bf16.mxu0 0
    %2340 = vmatpush2.bf16.msra.mxu0 0
    %2341 = vmatprep.subr.bf16.mxu0 0
    %2342 = vmatpush2.bf16.msra.mxu0 0
    %2343 = vmatprep.subr.bf16.mxu0 0
    %2344 = vmatpush2.bf16.msra.mxu0 0
    %2345 = vmatprep.subr.bf16.mxu0 0
    %2346 = vmatpush2.bf16.msra.mxu0 0
    %2347 = vmatprep.subr.bf16.mxu0 0
    %2348 = vmatpush2.bf16.msra.mxu0 0
    %2349 = vmatprep.subr.bf16.mxu0 0
    %2350 = vmatpush2.bf16.msra.mxu0 0
    %2351 = vmatprep.mubr.bf16.mxu0 0
    %2352 = vmatmul.mubr.bf16.gmra.mxu0 %v2317
    %v2353 = vpop.f32.mrf.mxu0
    %v2354 = vadd.f32 0.0, %v2353
    %v2355 = vpop.f32.mrf.mxu0
    %v2356 = vpop.f32.mrf.mxu0
    %v2357 = vpop.f32.mrf.mxu0
    %2358 = vdwg.mxu0
    %v2359 = vadd.f32 %v1900, %v2354
    %v2360 = vld [vmem:[#allocation2 + $0xc] sm:$0x1]
    %2361 = vmatprep.subr.bf16.mxu0 0
    %2362 = vmatpush1.bf16.msra.mxu0 %v2263
    %2363 = vmatprep.subr.bf16.mxu0 0
    %2364 = vmatpush1.bf16.msra.mxu0 %v2262
    %2365 = vmatprep.subr.bf16.mxu0 0
    %2366 = vmatpush1.bf16.msra.mxu0 %v2261
    %2367 = vmatprep.subr.bf16.mxu0 0
    %2368 = vmatpush1.bf16.msra.mxu0 %v2260
    %2369 = vmatprep.subr.bf16.mxu0 0
    %2370 = vmatpush1.bf16.msra.mxu0 %v2259
    %2371 = vmatprep.subr.bf16.mxu0 0
    %2372 = vmatpush1.bf16.msra.mxu0 %v2258
    %2373 = vmatprep.subr.bf16.mxu0 0
    %2374 = vmatpush1.bf16.msra.mxu0 %v2257
    %2375 = vmatprep.subr.bf16.mxu0 0
    %2376 = vmatpush1.bf16.msra.mxu0 %v2256
    %2377 = vmatprep.subr.bf16.mxu0 0
    %2378 = vmatpush2.bf16.msra.mxu0 0
    %2379 = vmatprep.subr.bf16.mxu0 0
    %2380 = vmatpush2.bf16.msra.mxu0 0
    %2381 = vmatprep.subr.bf16.mxu0 0
    %2382 = vmatpush2.bf16.msra.mxu0 0
    %2383 = vmatprep.subr.bf16.mxu0 0
    %2384 = vmatpush2.bf16.msra.mxu0 0
    %2385 = vmatprep.subr.bf16.mxu0 0
    %2386 = vmatpush2.bf16.msra.mxu0 0
    %2387 = vmatprep.subr.bf16.mxu0 0
    %2388 = vmatpush2.bf16.msra.mxu0 0
    %2389 = vmatprep.subr.bf16.mxu0 0
    %2390 = vmatpush2.bf16.msra.mxu0 0
    %2391 = vmatprep.subr.bf16.mxu0 0
    %2392 = vmatpush2.bf16.msra.mxu0 0
    %2393 = vmatprep.mubr.bf16.mxu0 0
    %2394 = vmatmul.mubr.bf16.gmra.mxu0 %v2360
    %v2395 = vpop.f32.mrf.mxu0
    %v2396 = vadd.f32 0.0, %v2395
    %v2397 = vpop.f32.mrf.mxu0
    %v2398 = vpop.f32.mrf.mxu0
    %v2399 = vpop.f32.mrf.mxu0
    %2400 = vdwg.mxu0
    %v2401 = vadd.f32 %v1947, %v2396
    %v2402 = vld [vmem:[#allocation2 + $0x18] sm:$0x1]
    %2403 = vmatprep.subr.bf16.mxu0 0
    %2404 = vmatpush1.bf16.msra.mxu0 %v2263
    %2405 = vmatprep.subr.bf16.mxu0 0
    %2406 = vmatpush1.bf16.msra.mxu0 %v2262
    %2407 = vmatprep.subr.bf16.mxu0 0
    %2408 = vmatpush1.bf16.msra.mxu0 %v2261
    %2409 = vmatprep.subr.bf16.mxu0 0
    %2410 = vmatpush1.bf16.msra.mxu0 %v2260
    %2411 = vmatprep.subr.bf16.mxu0 0
    %2412 = vmatpush1.bf16.msra.mxu0 %v2259
    %2413 = vmatprep.subr.bf16.mxu0 0
    %2414 = vmatpush1.bf16.msra.mxu0 %v2258
    %2415 = vmatprep.subr.bf16.mxu0 0
    %2416 = vmatpush1.bf16.msra.mxu0 %v2257
    %2417 = vmatprep.subr.bf16.mxu0 0
    %2418 = vmatpush1.bf16.msra.mxu0 %v2256
    %2419 = vmatprep.subr.bf16.mxu0 0
    %2420 = vmatpush2.bf16.msra.mxu0 0
    %2421 = vmatprep.subr.bf16.mxu0 0
    %2422 = vmatpush2.bf16.msra.mxu0 0
    %2423 = vmatprep.subr.bf16.mxu0 0
    %2424 = vmatpush2.bf16.msra.mxu0 0
    %2425 = vmatprep.subr.bf16.mxu0 0
    %2426 = vmatpush2.bf16.msra.mxu0 0
    %2427 = vmatprep.subr.bf16.mxu0 0
    %2428 = vmatpush2.bf16.msra.mxu0 0
    %2429 = vmatprep.subr.bf16.mxu0 0
    %2430 = vmatpush2.bf16.msra.mxu0 0
    %2431 = vmatprep.subr.bf16.mxu0 0
    %2432 = vmatpush2.bf16.msra.mxu0 0
    %2433 = vmatprep.subr.bf16.mxu0 0
    %2434 = vmatpush2.bf16.msra.mxu0 0
    %2435 = vmatprep.mubr.bf16.mxu0 0
    %2436 = vmatmul.mubr.bf16.gmra.mxu0 %v2402
    %v2437 = vpop.f32.mrf.mxu0
    %v2438 = vadd.f32 0.0, %v2437
    %v2439 = vpop.f32.mrf.mxu0
    %v2440 = vpop.f32.mrf.mxu0
    %v2441 = vpop.f32.mrf.mxu0
    %2442 = vdwg.mxu0
    %v2443 = vadd.f32 %v1988, %v2438
    %v2444 = vld [vmem:[#allocation2 + $0x18] sm:$0x4]
    %v2446 = vunpack.c.l.b16 %v2444
    %v2447 = vpack.c.b16 %v2446, %v2446
    %v2448 = vrot.slane %v2447, 2
    %2450 = vmatprep.subr.bf16.mxu0 0
    %2451 = vmatpush1.bf16.msra.mxu0 %v2263
    %2452 = vmatprep.subr.bf16.mxu0 0
    %2453 = vmatpush1.bf16.msra.mxu0 %v2262
    %2454 = vmatprep.subr.bf16.mxu0 0
    %2455 = vmatpush1.bf16.msra.mxu0 %v2261
    %2456 = vmatprep.subr.bf16.mxu0 0
    %2457 = vmatpush1.bf16.msra.mxu0 %v2260
    %2458 = vmatprep.subr.bf16.mxu0 0
    %2459 = vmatpush1.bf16.msra.mxu0 %v2259
    %2460 = vmatprep.subr.bf16.mxu0 0
    %2461 = vmatpush1.bf16.msra.mxu0 %v2258
    %2462 = vmatprep.subr.bf16.mxu0 0
    %2463 = vmatpush1.bf16.msra.mxu0 %v2257
    %2464 = vmatprep.subr.bf16.mxu0 0
    %2465 = vmatpush1.bf16.msra.mxu0 %v2256
    %2466 = vmatprep.subr.bf16.mxu0 0
    %2467 = vmatpush2.bf16.msra.mxu0 0
    %2468 = vmatprep.subr.bf16.mxu0 0
    %2469 = vmatpush2.bf16.msra.mxu0 0
    %2470 = vmatprep.subr.bf16.mxu0 0
    %2471 = vmatpush2.bf16.msra.mxu0 0
    %2472 = vmatprep.subr.bf16.mxu0 0
    %2473 = vmatpush2.bf16.msra.mxu0 0
    %2474 = vmatprep.subr.bf16.mxu0 0
    %2475 = vmatpush2.bf16.msra.mxu0 0
    %2476 = vmatprep.subr.bf16.mxu0 0
    %2477 = vmatpush2.bf16.msra.mxu0 0
    %2478 = vmatprep.subr.bf16.mxu0 0
    %2479 = vmatpush2.bf16.msra.mxu0 0
    %2480 = vmatprep.subr.bf16.mxu0 0
    %2481 = vmatpush2.bf16.msra.mxu0 0
    %2482 = vmatprep.mubr.bf16.mxu0 0
    %2483 = vmatmul.mubr.bf16.gmra.mxu0 %v2448
    %v2484 = vpop.f32.mrf.mxu0
    %v2485 = vadd.f32 0.0, %v2484
    %v2486 = vpop.f32.mrf.mxu0
    %v2487 = vpop.f32.mrf.mxu0
    %v2488 = vpop.f32.mrf.mxu0
    %2489 = vdwg.mxu0
    %v2490 = vadd.f32 %v2029, %v2485
    %v2491 = vld [vmem:[#allocation2 + $0x1c] sm:$0x1]
    %2492 = vmatprep.subr.bf16.mxu0 0
    %2493 = vmatpush1.bf16.msra.mxu0 %v2263
    %2494 = vmatprep.subr.bf16.mxu0 0
    %2495 = vmatpush1.bf16.msra.mxu0 %v2262
    %2496 = vmatprep.subr.bf16.mxu0 0
    %2497 = vmatpush1.bf16.msra.mxu0 %v2261
    %2498 = vmatprep.subr.bf16.mxu0 0
    %2499 = vmatpush1.bf16.msra.mxu0 %v2260
    %2500 = vmatprep.subr.bf16.mxu0 0
    %2501 = vmatpush1.bf16.msra.mxu0 %v2259
    %2502 = vmatprep.subr.bf16.mxu0 0
    %2503 = vmatpush1.bf16.msra.mxu0 %v2258
    %2504 = vmatprep.subr.bf16.mxu0 0
    %2505 = vmatpush1.bf16.msra.mxu0 %v2257
    %2506 = vmatprep.subr.bf16.mxu0 0
    %2507 = vmatpush1.bf16.msra.mxu0 %v2256
    %2508 = vmatprep.subr.bf16.mxu0 0
    %2509 = vmatpush2.bf16.msra.mxu0 0
    %2510 = vmatprep.subr.bf16.mxu0 0
    %2511 = vmatpush2.bf16.msra.mxu0 0
    %2512 = vmatprep.subr.bf16.mxu0 0
    %2513 = vmatpush2.bf16.msra.mxu0 0
    %2514 = vmatprep.subr.bf16.mxu0 0
    %2515 = vmatpush2.bf16.msra.mxu0 0
    %2516 = vmatprep.subr.bf16.mxu0 0
    %2517 = vmatpush2.bf16.msra.mxu0 0
    %2518 = vmatprep.subr.bf16.mxu0 0
    %2519 = vmatpush2.bf16.msra.mxu0 0
    %2520 = vmatprep.subr.bf16.mxu0 0
    %2521 = vmatpush2.bf16.msra.mxu0 0
    %2522 = vmatprep.subr.bf16.mxu0 0
    %2523 = vmatpush2.bf16.msra.mxu0 0
    %2524 = vmatprep.mubr.bf16.mxu0 0
    %2525 = vmatmul.mubr.bf16.gmra.mxu0 %v2491
    %v2526 = vpop.f32.mrf.mxu0
    %v2527 = vadd.f32 0.0, %v2526
    %v2528 = vpop.f32.mrf.mxu0
    %v2529 = vpop.f32.mrf.mxu0
    %v2530 = vpop.f32.mrf.mxu0
    %2531 = vdwg.mxu0
    %v2532 = vadd.f32 %v2076, %v2527
    %v2533 = vld [vmem:[#allocation2 + $0x28] sm:$0x1]
    %2534 = vmatprep.subr.bf16.mxu0 0
    %2535 = vmatpush1.bf16.msra.mxu0 %v2263
    %2536 = vmatprep.subr.bf16.mxu0 0
    %2537 = vmatpush1.bf16.msra.mxu0 %v2262
    %2538 = vmatprep.subr.bf16.mxu0 0
    %2539 = vmatpush1.bf16.msra.mxu0 %v2261
    %2540 = vmatprep.subr.bf16.mxu0 0
    %2541 = vmatpush1.bf16.msra.mxu0 %v2260
    %2542 = vmatprep.subr.bf16.mxu0 0
    %2543 = vmatpush1.bf16.msra.mxu0 %v2259
    %2544 = vmatprep.subr.bf16.mxu0 0
    %2545 = vmatpush1.bf16.msra.mxu0 %v2258
    %2546 = vmatprep.subr.bf16.mxu0 0
    %2547 = vmatpush1.bf16.msra.mxu0 %v2257
    %2548 = vmatprep.subr.bf16.mxu0 0
    %2549 = vmatpush1.bf16.msra.mxu0 %v2256
    %2550 = vmatprep.subr.bf16.mxu0 0
    %2551 = vmatpush2.bf16.msra.mxu0 0
    %2552 = vmatprep.subr.bf16.mxu0 0
    %2553 = vmatpush2.bf16.msra.mxu0 0
    %2554 = vmatprep.subr.bf16.mxu0 0
    %2555 = vmatpush2.bf16.msra.mxu0 0
    %2556 = vmatprep.subr.bf16.mxu0 0
    %2557 = vmatpush2.bf16.msra.mxu0 0
    %2558 = vmatprep.subr.bf16.mxu0 0
    %2559 = vmatpush2.bf16.msra.mxu0 0
    %2560 = vmatprep.subr.bf16.mxu0 0
    %2561 = vmatpush2.bf16.msra.mxu0 0
    %2562 = vmatprep.subr.bf16.mxu0 0
    %2563 = vmatpush2.bf16.msra.mxu0 0
    %2564 = vmatprep.subr.bf16.mxu0 0
    %2565 = vmatpush2.bf16.msra.mxu0 0
    %2566 = vmatprep.mubr.bf16.mxu0 0
    %2567 = vmatmul.mubr.bf16.gmra.mxu0 %v2533
    %v2568 = vpop.f32.mrf.mxu0
    %v2569 = vadd.f32 0.0, %v2568
    %v2570 = vpop.f32.mrf.mxu0
    %v2571 = vpop.f32.mrf.mxu0
    %v2572 = vpop.f32.mrf.mxu0
    %2573 = vdwg.mxu0
    %v2574 = vadd.f32 %v2117, %v2569
    %v2575 = vld [vmem:[#allocation2 + $0x28] sm:$0x4]
    %v2577 = vunpack.c.l.b16 %v2575
    %v2578 = vpack.c.b16 %v2577, %v2577
    %v2579 = vrot.slane %v2578, 2
    %2581 = vmatprep.subr.bf16.mxu0 0
    %2582 = vmatpush1.bf16.msra.mxu0 %v2263
    %2583 = vmatprep.subr.bf16.mxu0 0
    %2584 = vmatpush1.bf16.msra.mxu0 %v2262
    %2585 = vmatprep.subr.bf16.mxu0 0
    %2586 = vmatpush1.bf16.msra.mxu0 %v2261
    %2587 = vmatprep.subr.bf16.mxu0 0
    %2588 = vmatpush1.bf16.msra.mxu0 %v2260
    %2589 = vmatprep.subr.bf16.mxu0 0
    %2590 = vmatpush1.bf16.msra.mxu0 %v2259
    %2591 = vmatprep.subr.bf16.mxu0 0
    %2592 = vmatpush1.bf16.msra.mxu0 %v2258
    %2593 = vmatprep.subr.bf16.mxu0 0
    %2594 = vmatpush1.bf16.msra.mxu0 %v2257
    %2595 = vmatprep.subr.bf16.mxu0 0
    %2596 = vmatpush1.bf16.msra.mxu0 %v2256
    %2597 = vmatprep.subr.bf16.mxu0 0
    %2598 = vmatpush2.bf16.msra.mxu0 0
    %2599 = vmatprep.subr.bf16.mxu0 0
    %2600 = vmatpush2.bf16.msra.mxu0 0
    %2601 = vmatprep.subr.bf16.mxu0 0
    %2602 = vmatpush2.bf16.msra.mxu0 0
    %2603 = vmatprep.subr.bf16.mxu0 0
    %2604 = vmatpush2.bf16.msra.mxu0 0
    %2605 = vmatprep.subr.bf16.mxu0 0
    %2606 = vmatpush2.bf16.msra.mxu0 0
    %2607 = vmatprep.subr.bf16.mxu0 0
    %2608 = vmatpush2.bf16.msra.mxu0 0
    %2609 = vmatprep.subr.bf16.mxu0 0
    %2610 = vmatpush2.bf16.msra.mxu0 0
    %2611 = vmatprep.subr.bf16.mxu0 0
    %2612 = vmatpush2.bf16.msra.mxu0 0
    %2613 = vmatprep.mubr.bf16.mxu0 0
    %2614 = vmatmul.mubr.bf16.gmra.mxu0 %v2579
    %v2615 = vpop.f32.mrf.mxu0
    %v2616 = vadd.f32 0.0, %v2615
    %v2617 = vpop.f32.mrf.mxu0
    %v2618 = vpop.f32.mrf.mxu0
    %v2619 = vpop.f32.mrf.mxu0
    %2620 = vdwg.mxu0
    %v2621 = vadd.f32 %v2158, %v2616
    %v2622 = vld [vmem:[#allocation2 + $0x2c] sm:$0x1]
    %2623 = vmatprep.subr.bf16.mxu0 0
    %2624 = vmatpush1.bf16.msra.mxu0 %v2263
    %2625 = vmatprep.subr.bf16.mxu0 0
    %2626 = vmatpush1.bf16.msra.mxu0 %v2262
    %2627 = vmatprep.subr.bf16.mxu0 0
    %2628 = vmatpush1.bf16.msra.mxu0 %v2261
    %2629 = vmatprep.subr.bf16.mxu0 0
    %2630 = vmatpush1.bf16.msra.mxu0 %v2260
    %2631 = vmatprep.subr.bf16.mxu0 0
    %2632 = vmatpush1.bf16.msra.mxu0 %v2259
    %2633 = vmatprep.subr.bf16.mxu0 0
    %2634 = vmatpush1.bf16.msra.mxu0 %v2258
    %2635 = vmatprep.subr.bf16.mxu0 0
    %2636 = vmatpush1.bf16.msra.mxu0 %v2257
    %2637 = vmatprep.subr.bf16.mxu0 0
    %2638 = vmatpush1.bf16.msra.mxu0 %v2256
    %2639 = vmatprep.subr.bf16.mxu0 0
    %2640 = vmatpush2.bf16.msra.mxu0 0
    %2641 = vmatprep.subr.bf16.mxu0 0
    %2642 = vmatpush2.bf16.msra.mxu0 0
    %2643 = vmatprep.subr.bf16.mxu0 0
    %2644 = vmatpush2.bf16.msra.mxu0 0
    %2645 = vmatprep.subr.bf16.mxu0 0
    %2646 = vmatpush2.bf16.msra.mxu0 0
    %2647 = vmatprep.subr.bf16.mxu0 0
    %2648 = vmatpush2.bf16.msra.mxu0 0
    %2649 = vmatprep.subr.bf16.mxu0 0
    %2650 = vmatpush2.bf16.msra.mxu0 0
    %2651 = vmatprep.subr.bf16.mxu0 0
    %2652 = vmatpush2.bf16.msra.mxu0 0
    %2653 = vmatprep.subr.bf16.mxu0 0
    %2654 = vmatpush2.bf16.msra.mxu0 0
    %2655 = vmatprep.mubr.bf16.mxu0 0
    %2656 = vmatmul.mubr.bf16.gmra.mxu0 %v2622
    %v2657 = vpop.f32.mrf.mxu0
    %v2658 = vadd.f32 0.0, %v2657
    %v2659 = vpop.f32.mrf.mxu0
    %v2660 = vpop.f32.mrf.mxu0
    %v2661 = vpop.f32.mrf.mxu0
    %2662 = vdwg.mxu0
    %v2663 = vadd.f32 %v2205, %v2658
    %s2664 = scalar_lea.vmem %s3, 320
    %v2665 = vld [vmem:[%s2664] sm:$0xf]
    %v2666 = vld [vmem:[%s2664 + $0x4] sm:$0xf]
    %v2667 = vld [vmem:[%s2664 + $0x8] sm:$0xf]
    %v2668 = vld [vmem:[%s2664 + $0xc] sm:$0xf]
    %v2669 = vld [vmem:[%s2664 + $0x10] sm:$0xf]
    %v2670 = vld [vmem:[%s2664 + $0x14] sm:$0xf]
    %v2671 = vld [vmem:[%s2664 + $0x18] sm:$0xf]
    %v2672 = vld [vmem:[%s2664 + $0x1c] sm:$0xf]
    %v2673 = vld [vmem:[%s2664 + $0x20] sm:$0xf]
    %v2674 = vld [vmem:[%s2664 + $0x24] sm:$0xf]
    %v2675 = vld [vmem:[%s2664 + $0x28] sm:$0xf]
    %v2676 = vld [vmem:[%s2664 + $0x2c] sm:$0xf]
    %v2677 = vld [vmem:[%s2664 + $0x30] sm:$0xf]
    %v2678 = vld [vmem:[%s2664 + $0x34] sm:$0xf]
    %v2679 = vld [vmem:[%s2664 + $0x38] sm:$0xf]
    %v2680 = vld [vmem:[%s2664 + $0x3c] sm:$0xf]
    %v2681 = vld [vmem:[#allocation2 + $0x8] sm:$0x2]
    %v2683 = vunpack.c.l.b16 %v2681
    %v2684 = vpack.c.b16 %v2683, %v2683
    %v2685 = vrot.slane %v2684, 1
    %v2703 = vunpack.c.l.b16 %v2665
    %v2704 = vunpack.c.l.b16 %v2666
    %v2705 = vunpack.c.l.b16 %v2667
    %v2706 = vunpack.c.l.b16 %v2668
    %v2707 = vunpack.c.l.b16 %v2669
    %v2708 = vunpack.c.l.b16 %v2670
    %v2709 = vunpack.c.l.b16 %v2671
    %v2710 = vunpack.c.l.b16 %v2672
    %v2711 = vunpack.c.l.b16 %v2673
    %v2712 = vunpack.c.l.b16 %v2674
    %v2713 = vunpack.c.l.b16 %v2675
    %v2714 = vunpack.c.l.b16 %v2676
    %v2715 = vunpack.c.l.b16 %v2677
    %v2716 = vunpack.c.l.b16 %v2678
    %v2717 = vunpack.c.l.b16 %v2679
    %v2718 = vunpack.c.l.b16 %v2680
    %v2719 = vpack.c.b16 %v2704, %v2703
    %v2720 = vpack.c.b16 %v2706, %v2705
    %v2721 = vpack.c.b16 %v2708, %v2707
    %v2722 = vpack.c.b16 %v2710, %v2709
    %v2723 = vpack.c.b16 %v2712, %v2711
    %v2724 = vpack.c.b16 %v2714, %v2713
    %v2725 = vpack.c.b16 %v2716, %v2715
    %v2726 = vpack.c.b16 %v2718, %v2717
    %2735 = vmatprep.subr.bf16.mxu0 0
    %2736 = vmatpush1.bf16.msra.mxu0 %v2726
    %2737 = vmatprep.subr.bf16.mxu0 0
    %2738 = vmatpush1.bf16.msra.mxu0 %v2725
    %2739 = vmatprep.subr.bf16.mxu0 0
    %2740 = vmatpush1.bf16.msra.mxu0 %v2724
    %2741 = vmatprep.subr.bf16.mxu0 0
    %2742 = vmatpush1.bf16.msra.mxu0 %v2723
    %2743 = vmatprep.subr.bf16.mxu0 0
    %2744 = vmatpush1.bf16.msra.mxu0 %v2722
    %2745 = vmatprep.subr.bf16.mxu0 0
    %2746 = vmatpush1.bf16.msra.mxu0 %v2721
    %2747 = vmatprep.subr.bf16.mxu0 0
    %2748 = vmatpush1.bf16.msra.mxu0 %v2720
    %2749 = vmatprep.subr.bf16.mxu0 0
    %2750 = vmatpush1.bf16.msra.mxu0 %v2719
    %2751 = vmatprep.subr.bf16.mxu0 0
    %2752 = vmatpush2.bf16.msra.mxu0 0
    %2753 = vmatprep.subr.bf16.mxu0 0
    %2754 = vmatpush2.bf16.msra.mxu0 0
    %2755 = vmatprep.subr.bf16.mxu0 0
    %2756 = vmatpush2.bf16.msra.mxu0 0
    %2757 = vmatprep.subr.bf16.mxu0 0
    %2758 = vmatpush2.bf16.msra.mxu0 0
    %2759 = vmatprep.subr.bf16.mxu0 0
    %2760 = vmatpush2.bf16.msra.mxu0 0
    %2761 = vmatprep.subr.bf16.mxu0 0
    %2762 = vmatpush2.bf16.msra.mxu0 0
    %2763 = vmatprep.subr.bf16.mxu0 0
    %2764 = vmatpush2.bf16.msra.mxu0 0
    %2765 = vmatprep.subr.bf16.mxu0 0
    %2766 = vmatpush2.bf16.msra.mxu0 0
    %2767 = vmatprep.mubr.bf16.mxu0 0
    %2768 = vmatmul.mubr.bf16.gmra.mxu0 %v2685
    %v2769 = vpop.f32.mrf.mxu0
    %v2770 = vadd.f32 0.0, %v2769
    %v2771 = vpop.f32.mrf.mxu0
    %v2772 = vpop.f32.mrf.mxu0
    %v2773 = vpop.f32.mrf.mxu0
    %2774 = vdwg.mxu0
    %v2775 = vadd.f32 %v2312, %v2770
    %v2776 = vld [vmem:[#allocation2 + $0x8] sm:$0x8]
    %v2778 = vunpack.c.l.b16 %v2776
    %v2779 = vpack.c.b16 %v2778, %v2778
    %v2780 = vrot.slane %v2779, 3
    %2782 = vmatprep.subr.bf16.mxu0 0
    %2783 = vmatpush1.bf16.msra.mxu0 %v2726
    %2784 = vmatprep.subr.bf16.mxu0 0
    %2785 = vmatpush1.bf16.msra.mxu0 %v2725
    %2786 = vmatprep.subr.bf16.mxu0 0
    %2787 = vmatpush1.bf16.msra.mxu0 %v2724
    %2788 = vmatprep.subr.bf16.mxu0 0
    %2789 = vmatpush1.bf16.msra.mxu0 %v2723
    %2790 = vmatprep.subr.bf16.mxu0 0
    %2791 = vmatpush1.bf16.msra.mxu0 %v2722
    %2792 = vmatprep.subr.bf16.mxu0 0
    %2793 = vmatpush1.bf16.msra.mxu0 %v2721
    %2794 = vmatprep.subr.bf16.mxu0 0
    %2795 = vmatpush1.bf16.msra.mxu0 %v2720
    %2796 = vmatprep.subr.bf16.mxu0 0
    %2797 = vmatpush1.bf16.msra.mxu0 %v2719
    %2798 = vmatprep.subr.bf16.mxu0 0
    %2799 = vmatpush2.bf16.msra.mxu0 0
    %2800 = vmatprep.subr.bf16.mxu0 0
    %2801 = vmatpush2.bf16.msra.mxu0 0
    %2802 = vmatprep.subr.bf16.mxu0 0
    %2803 = vmatpush2.bf16.msra.mxu0 0
    %2804 = vmatprep.subr.bf16.mxu0 0
    %2805 = vmatpush2.bf16.msra.mxu0 0
    %2806 = vmatprep.subr.bf16.mxu0 0
    %2807 = vmatpush2.bf16.msra.mxu0 0
    %2808 = vmatprep.subr.bf16.mxu0 0
    %2809 = vmatpush2.bf16.msra.mxu0 0
    %2810 = vmatprep.subr.bf16.mxu0 0
    %2811 = vmatpush2.bf16.msra.mxu0 0
    %2812 = vmatprep.subr.bf16.mxu0 0
    %2813 = vmatpush2.bf16.msra.mxu0 0
    %2814 = vmatprep.mubr.bf16.mxu0 0
    %2815 = vmatmul.mubr.bf16.gmra.mxu0 %v2780
    %v2816 = vpop.f32.mrf.mxu0
    %v2817 = vadd.f32 0.0, %v2816
    %v2818 = vpop.f32.mrf.mxu0
    %v2819 = vpop.f32.mrf.mxu0
    %v2820 = vpop.f32.mrf.mxu0
    %2821 = vdwg.mxu0
    %v2822 = vadd.f32 %v2359, %v2817
    %v2823 = vld [vmem:[#allocation2 + $0xc] sm:$0x2]
    %v2825 = vunpack.c.l.b16 %v2823
    %v2826 = vpack.c.b16 %v2825, %v2825
    %v2827 = vrot.slane %v2826, 1
    %2829 = vmatprep.subr.bf16.mxu0 0
    %2830 = vmatpush1.bf16.msra.mxu0 %v2726
    %2831 = vmatprep.subr.bf16.mxu0 0
    %2832 = vmatpush1.bf16.msra.mxu0 %v2725
    %2833 = vmatprep.subr.bf16.mxu0 0
    %2834 = vmatpush1.bf16.msra.mxu0 %v2724
    %2835 = vmatprep.subr.bf16.mxu0 0
    %2836 = vmatpush1.bf16.msra.mxu0 %v2723
    %2837 = vmatprep.subr.bf16.mxu0 0
    %2838 = vmatpush1.bf16.msra.mxu0 %v2722
    %2839 = vmatprep.subr.bf16.mxu0 0
    %2840 = vmatpush1.bf16.msra.mxu0 %v2721
    %2841 = vmatprep.subr.bf16.mxu0 0
    %2842 = vmatpush1.bf16.msra.mxu0 %v2720
    %2843 = vmatprep.subr.bf16.mxu0 0
    %2844 = vmatpush1.bf16.msra.mxu0 %v2719
    %2845 = vmatprep.subr.bf16.mxu0 0
    %2846 = vmatpush2.bf16.msra.mxu0 0
    %2847 = vmatprep.subr.bf16.mxu0 0
    %2848 = vmatpush2.bf16.msra.mxu0 0
    %2849 = vmatprep.subr.bf16.mxu0 0
    %2850 = vmatpush2.bf16.msra.mxu0 0
    %2851 = vmatprep.subr.bf16.mxu0 0
    %2852 = vmatpush2.bf16.msra.mxu0 0
    %2853 = vmatprep.subr.bf16.mxu0 0
    %2854 = vmatpush2.bf16.msra.mxu0 0
    %2855 = vmatprep.subr.bf16.mxu0 0
    %2856 = vmatpush2.bf16.msra.mxu0 0
    %2857 = vmatprep.subr.bf16.mxu0 0
    %2858 = vmatpush2.bf16.msra.mxu0 0
    %2859 = vmatprep.subr.bf16.mxu0 0
    %2860 = vmatpush2.bf16.msra.mxu0 0
    %2861 = vmatprep.mubr.bf16.mxu0 0
    %2862 = vmatmul.mubr.bf16.gmra.mxu0 %v2827
    %v2863 = vpop.f32.mrf.mxu0
    %v2864 = vadd.f32 0.0, %v2863
    %v2865 = vpop.f32.mrf.mxu0
    %v2866 = vpop.f32.mrf.mxu0
    %v2867 = vpop.f32.mrf.mxu0
    %2868 = vdwg.mxu0
    %v2869 = vadd.f32 %v2401, %v2864
    %v2870 = vld [vmem:[#allocation2 + $0x18] sm:$0x2]
    %v2872 = vunpack.c.l.b16 %v2870
    %v2873 = vpack.c.b16 %v2872, %v2872
    %v2874 = vrot.slane %v2873, 1
    %2876 = vmatprep.subr.bf16.mxu0 0
    %2877 = vmatpush1.bf16.msra.mxu0 %v2726
    %2878 = vmatprep.subr.bf16.mxu0 0
    %2879 = vmatpush1.bf16.msra.mxu0 %v2725
    %2880 = vmatprep.subr.bf16.mxu0 0
    %2881 = vmatpush1.bf16.msra.mxu0 %v2724
    %2882 = vmatprep.subr.bf16.mxu0 0
    %2883 = vmatpush1.bf16.msra.mxu0 %v2723
    %2884 = vmatprep.subr.bf16.mxu0 0
    %2885 = vmatpush1.bf16.msra.mxu0 %v2722
    %2886 = vmatprep.subr.bf16.mxu0 0
    %2887 = vmatpush1.bf16.msra.mxu0 %v2721
    %2888 = vmatprep.subr.bf16.mxu0 0
    %2889 = vmatpush1.bf16.msra.mxu0 %v2720
    %2890 = vmatprep.subr.bf16.mxu0 0
    %2891 = vmatpush1.bf16.msra.mxu0 %v2719
    %2892 = vmatprep.subr.bf16.mxu0 0
    %2893 = vmatpush2.bf16.msra.mxu0 0
    %2894 = vmatprep.subr.bf16.mxu0 0
    %2895 = vmatpush2.bf16.msra.mxu0 0
    %2896 = vmatprep.subr.bf16.mxu0 0
    %2897 = vmatpush2.bf16.msra.mxu0 0
    %2898 = vmatprep.subr.bf16.mxu0 0
    %2899 = vmatpush2.bf16.msra.mxu0 0
    %2900 = vmatprep.subr.bf16.mxu0 0
    %2901 = vmatpush2.bf16.msra.mxu0 0
    %2902 = vmatprep.subr.bf16.mxu0 0
    %2903 = vmatpush2.bf16.msra.mxu0 0
    %2904 = vmatprep.subr.bf16.mxu0 0
    %2905 = vmatpush2.bf16.msra.mxu0 0
    %2906 = vmatprep.subr.bf16.mxu0 0
    %2907 = vmatpush2.bf16.msra.mxu0 0
    %2908 = vmatprep.mubr.bf16.mxu0 0
    %2909 = vmatmul.mubr.bf16.gmra.mxu0 %v2874
    %v2910 = vpop.f32.mrf.mxu0
    %v2911 = vadd.f32 0.0, %v2910
    %v2912 = vpop.f32.mrf.mxu0
    %v2913 = vpop.f32.mrf.mxu0
    %v2914 = vpop.f32.mrf.mxu0
    %2915 = vdwg.mxu0
    %v2916 = vadd.f32 %v2443, %v2911
    %v2917 = vld [vmem:[#allocation2 + $0x18] sm:$0x8]
    %v2919 = vunpack.c.l.b16 %v2917
    %v2920 = vpack.c.b16 %v2919, %v2919
    %v2921 = vrot.slane %v2920, 3
    %2923 = vmatprep.subr.bf16.mxu0 0
    %2924 = vmatpush1.bf16.msra.mxu0 %v2726
    %2925 = vmatprep.subr.bf16.mxu0 0
    %2926 = vmatpush1.bf16.msra.mxu0 %v2725
    %2927 = vmatprep.subr.bf16.mxu0 0
    %2928 = vmatpush1.bf16.msra.mxu0 %v2724
    %2929 = vmatprep.subr.bf16.mxu0 0
    %2930 = vmatpush1.bf16.msra.mxu0 %v2723
    %2931 = vmatprep.subr.bf16.mxu0 0
    %2932 = vmatpush1.bf16.msra.mxu0 %v2722
    %2933 = vmatprep.subr.bf16.mxu0 0
    %2934 = vmatpush1.bf16.msra.mxu0 %v2721
    %2935 = vmatprep.subr.bf16.mxu0 0
    %2936 = vmatpush1.bf16.msra.mxu0 %v2720
    %2937 = vmatprep.subr.bf16.mxu0 0
    %2938 = vmatpush1.bf16.msra.mxu0 %v2719
    %2939 = vmatprep.subr.bf16.mxu0 0
    %2940 = vmatpush2.bf16.msra.mxu0 0
    %2941 = vmatprep.subr.bf16.mxu0 0
    %2942 = vmatpush2.bf16.msra.mxu0 0
    %2943 = vmatprep.subr.bf16.mxu0 0
    %2944 = vmatpush2.bf16.msra.mxu0 0
    %2945 = vmatprep.subr.bf16.mxu0 0
    %2946 = vmatpush2.bf16.msra.mxu0 0
    %2947 = vmatprep.subr.bf16.mxu0 0
    %2948 = vmatpush2.bf16.msra.mxu0 0
    %2949 = vmatprep.subr.bf16.mxu0 0
    %2950 = vmatpush2.bf16.msra.mxu0 0
    %2951 = vmatprep.subr.bf16.mxu0 0
    %2952 = vmatpush2.bf16.msra.mxu0 0
    %2953 = vmatprep.subr.bf16.mxu0 0
    %2954 = vmatpush2.bf16.msra.mxu0 0
    %2955 = vmatprep.mubr.bf16.mxu0 0
    %2956 = vmatmul.mubr.bf16.gmra.mxu0 %v2921
    %v2957 = vpop.f32.mrf.mxu0
    %v2958 = vadd.f32 0.0, %v2957
    %v2959 = vpop.f32.mrf.mxu0
    %v2960 = vpop.f32.mrf.mxu0
    %v2961 = vpop.f32.mrf.mxu0
    %2962 = vdwg.mxu0
    %v2963 = vadd.f32 %v2490, %v2958
    %v2964 = vld [vmem:[#allocation2 + $0x1c] sm:$0x2]
    %v2966 = vunpack.c.l.b16 %v2964
    %v2967 = vpack.c.b16 %v2966, %v2966
    %v2968 = vrot.slane %v2967, 1
    %2970 = vmatprep.subr.bf16.mxu0 0
    %2971 = vmatpush1.bf16.msra.mxu0 %v2726
    %2972 = vmatprep.subr.bf16.mxu0 0
    %2973 = vmatpush1.bf16.msra.mxu0 %v2725
    %2974 = vmatprep.subr.bf16.mxu0 0
    %2975 = vmatpush1.bf16.msra.mxu0 %v2724
    %2976 = vmatprep.subr.bf16.mxu0 0
    %2977 = vmatpush1.bf16.msra.mxu0 %v2723
    %2978 = vmatprep.subr.bf16.mxu0 0
    %2979 = vmatpush1.bf16.msra.mxu0 %v2722
    %2980 = vmatprep.subr.bf16.mxu0 0
    %2981 = vmatpush1.bf16.msra.mxu0 %v2721
    %2982 = vmatprep.subr.bf16.mxu0 0
    %2983 = vmatpush1.bf16.msra.mxu0 %v2720
    %2984 = vmatprep.subr.bf16.mxu0 0
    %2985 = vmatpush1.bf16.msra.mxu0 %v2719
    %2986 = vmatprep.subr.bf16.mxu0 0
    %2987 = vmatpush2.bf16.msra.mxu0 0
    %2988 = vmatprep.subr.bf16.mxu0 0
    %2989 = vmatpush2.bf16.msra.mxu0 0
    %2990 = vmatprep.subr.bf16.mxu0 0
    %2991 = vmatpush2.bf16.msra.mxu0 0
    %2992 = vmatprep.subr.bf16.mxu0 0
    %2993 = vmatpush2.bf16.msra.mxu0 0
    %2994 = vmatprep.subr.bf16.mxu0 0
    %2995 = vmatpush2.bf16.msra.mxu0 0
    %2996 = vmatprep.subr.bf16.mxu0 0
    %2997 = vmatpush2.bf16.msra.mxu0 0
    %2998 = vmatprep.subr.bf16.mxu0 0
    %2999 = vmatpush2.bf16.msra.mxu0 0
    %3000 = vmatprep.subr.bf16.mxu0 0
    %3001 = vmatpush2.bf16.msra.mxu0 0
    %3002 = vmatprep.mubr.bf16.mxu0 0
    %3003 = vmatmul.mubr.bf16.gmra.mxu0 %v2968
    %v3004 = vpop.f32.mrf.mxu0
    %v3005 = vadd.f32 0.0, %v3004
    %v3006 = vpop.f32.mrf.mxu0
    %v3007 = vpop.f32.mrf.mxu0
    %v3008 = vpop.f32.mrf.mxu0
    %3009 = vdwg.mxu0
    %v3010 = vadd.f32 %v2532, %v3005
    %v3011 = vld [vmem:[#allocation2 + $0x28] sm:$0x2]
    %v3013 = vunpack.c.l.b16 %v3011
    %v3014 = vpack.c.b16 %v3013, %v3013
    %v3015 = vrot.slane %v3014, 1
    %3017 = vmatprep.subr.bf16.mxu0 0
    %3018 = vmatpush1.bf16.msra.mxu0 %v2726
    %3019 = vmatprep.subr.bf16.mxu0 0
    %3020 = vmatpush1.bf16.msra.mxu0 %v2725
    %3021 = vmatprep.subr.bf16.mxu0 0
    %3022 = vmatpush1.bf16.msra.mxu0 %v2724
    %3023 = vmatprep.subr.bf16.mxu0 0
    %3024 = vmatpush1.bf16.msra.mxu0 %v2723
    %3025 = vmatprep.subr.bf16.mxu0 0
    %3026 = vmatpush1.bf16.msra.mxu0 %v2722
    %3027 = vmatprep.subr.bf16.mxu0 0
    %3028 = vmatpush1.bf16.msra.mxu0 %v2721
    %3029 = vmatprep.subr.bf16.mxu0 0
    %3030 = vmatpush1.bf16.msra.mxu0 %v2720
    %3031 = vmatprep.subr.bf16.mxu0 0
    %3032 = vmatpush1.bf16.msra.mxu0 %v2719
    %3033 = vmatprep.subr.bf16.mxu0 0
    %3034 = vmatpush2.bf16.msra.mxu0 0
    %3035 = vmatprep.subr.bf16.mxu0 0
    %3036 = vmatpush2.bf16.msra.mxu0 0
    %3037 = vmatprep.subr.bf16.mxu0 0
    %3038 = vmatpush2.bf16.msra.mxu0 0
    %3039 = vmatprep.subr.bf16.mxu0 0
    %3040 = vmatpush2.bf16.msra.mxu0 0
    %3041 = vmatprep.subr.bf16.mxu0 0
    %3042 = vmatpush2.bf16.msra.mxu0 0
    %3043 = vmatprep.subr.bf16.mxu0 0
    %3044 = vmatpush2.bf16.msra.mxu0 0
    %3045 = vmatprep.subr.bf16.mxu0 0
    %3046 = vmatpush2.bf16.msra.mxu0 0
    %3047 = vmatprep.subr.bf16.mxu0 0
    %3048 = vmatpush2.bf16.msra.mxu0 0
    %3049 = vmatprep.mubr.bf16.mxu0 0
    %3050 = vmatmul.mubr.bf16.gmra.mxu0 %v3015
    %v3051 = vpop.f32.mrf.mxu0
    %v3052 = vadd.f32 0.0, %v3051
    %v3053 = vpop.f32.mrf.mxu0
    %v3054 = vpop.f32.mrf.mxu0
    %v3055 = vpop.f32.mrf.mxu0
    %3056 = vdwg.mxu0
    %v3057 = vadd.f32 %v2574, %v3052
    %v3058 = vld [vmem:[#allocation2 + $0x28] sm:$0x8]
    %v3060 = vunpack.c.l.b16 %v3058
    %v3061 = vpack.c.b16 %v3060, %v3060
    %v3062 = vrot.slane %v3061, 3
    %3064 = vmatprep.subr.bf16.mxu0 0
    %3065 = vmatpush1.bf16.msra.mxu0 %v2726
    %3066 = vmatprep.subr.bf16.mxu0 0
    %3067 = vmatpush1.bf16.msra.mxu0 %v2725
    %3068 = vmatprep.subr.bf16.mxu0 0
    %3069 = vmatpush1.bf16.msra.mxu0 %v2724
    %3070 = vmatprep.subr.bf16.mxu0 0
    %3071 = vmatpush1.bf16.msra.mxu0 %v2723
    %3072 = vmatprep.subr.bf16.mxu0 0
    %3073 = vmatpush1.bf16.msra.mxu0 %v2722
    %3074 = vmatprep.subr.bf16.mxu0 0
    %3075 = vmatpush1.bf16.msra.mxu0 %v2721
    %3076 = vmatprep.subr.bf16.mxu0 0
    %3077 = vmatpush1.bf16.msra.mxu0 %v2720
    %3078 = vmatprep.subr.bf16.mxu0 0
    %3079 = vmatpush1.bf16.msra.mxu0 %v2719
    %3080 = vmatprep.subr.bf16.mxu0 0
    %3081 = vmatpush2.bf16.msra.mxu0 0
    %3082 = vmatprep.subr.bf16.mxu0 0
    %3083 = vmatpush2.bf16.msra.mxu0 0
    %3084 = vmatprep.subr.bf16.mxu0 0
    %3085 = vmatpush2.bf16.msra.mxu0 0
    %3086 = vmatprep.subr.bf16.mxu0 0
    %3087 = vmatpush2.bf16.msra.mxu0 0
    %3088 = vmatprep.subr.bf16.mxu0 0
    %3089 = vmatpush2.bf16.msra.mxu0 0
    %3090 = vmatprep.subr.bf16.mxu0 0
    %3091 = vmatpush2.bf16.msra.mxu0 0
    %3092 = vmatprep.subr.bf16.mxu0 0
    %3093 = vmatpush2.bf16.msra.mxu0 0
    %3094 = vmatprep.subr.bf16.mxu0 0
    %3095 = vmatpush2.bf16.msra.mxu0 0
    %3096 = vmatprep.mubr.bf16.mxu0 0
    %3097 = vmatmul.mubr.bf16.gmra.mxu0 %v3062
    %v3098 = vpop.f32.mrf.mxu0
    %v3099 = vadd.f32 0.0, %v3098
    %v3100 = vpop.f32.mrf.mxu0
    %v3101 = vpop.f32.mrf.mxu0
    %v3102 = vpop.f32.mrf.mxu0
    %3103 = vdwg.mxu0
    %v3104 = vadd.f32 %v2621, %v3099
    %v3105 = vld [vmem:[#allocation2 + $0x2c] sm:$0x2]
    %v3107 = vunpack.c.l.b16 %v3105
    %v3108 = vpack.c.b16 %v3107, %v3107
    %v3109 = vrot.slane %v3108, 1
    %3111 = vmatprep.subr.bf16.mxu0 0
    %3112 = vmatpush1.bf16.msra.mxu0 %v2726
    %3113 = vmatprep.subr.bf16.mxu0 0
    %3114 = vmatpush1.bf16.msra.mxu0 %v2725
    %3115 = vmatprep.subr.bf16.mxu0 0
    %3116 = vmatpush1.bf16.msra.mxu0 %v2724
    %3117 = vmatprep.subr.bf16.mxu0 0
    %3118 = vmatpush1.bf16.msra.mxu0 %v2723
    %3119 = vmatprep.subr.bf16.mxu0 0
    %3120 = vmatpush1.bf16.msra.mxu0 %v2722
    %3121 = vmatprep.subr.bf16.mxu0 0
    %3122 = vmatpush1.bf16.msra.mxu0 %v2721
    %3123 = vmatprep.subr.bf16.mxu0 0
    %3124 = vmatpush1.bf16.msra.mxu0 %v2720
    %3125 = vmatprep.subr.bf16.mxu0 0
    %3126 = vmatpush1.bf16.msra.mxu0 %v2719
    %3127 = vmatprep.subr.bf16.mxu0 0
    %3128 = vmatpush2.bf16.msra.mxu0 0
    %3129 = vmatprep.subr.bf16.mxu0 0
    %3130 = vmatpush2.bf16.msra.mxu0 0
    %3131 = vmatprep.subr.bf16.mxu0 0
    %3132 = vmatpush2.bf16.msra.mxu0 0
    %3133 = vmatprep.subr.bf16.mxu0 0
    %3134 = vmatpush2.bf16.msra.mxu0 0
    %3135 = vmatprep.subr.bf16.mxu0 0
    %3136 = vmatpush2.bf16.msra.mxu0 0
    %3137 = vmatprep.subr.bf16.mxu0 0
    %3138 = vmatpush2.bf16.msra.mxu0 0
    %3139 = vmatprep.subr.bf16.mxu0 0
    %3140 = vmatpush2.bf16.msra.mxu0 0
    %3141 = vmatprep.subr.bf16.mxu0 0
    %3142 = vmatpush2.bf16.msra.mxu0 0
    %3143 = vmatprep.mubr.bf16.mxu0 0
    %3144 = vmatmul.mubr.bf16.gmra.mxu0 %v3109
    %v3145 = vpop.f32.mrf.mxu0
    %v3146 = vadd.f32 0.0, %v3145
    %v3147 = vpop.f32.mrf.mxu0
    %v3148 = vpop.f32.mrf.mxu0
    %v3149 = vpop.f32.mrf.mxu0
    %3150 = vdwg.mxu0
    %v3151 = vadd.f32 %v2663, %v3146
    %s3152 = scalar_lea.vmem %s3, 384
    %v3153 = vld [vmem:[%s3152] sm:$0xf]
    %v3154 = vld [vmem:[%s3152 + $0x4] sm:$0xf]
    %v3155 = vld [vmem:[%s3152 + $0x8] sm:$0xf]
    %v3156 = vld [vmem:[%s3152 + $0xc] sm:$0xf]
    %v3157 = vld [vmem:[%s3152 + $0x10] sm:$0xf]
    %v3158 = vld [vmem:[%s3152 + $0x14] sm:$0xf]
    %v3159 = vld [vmem:[%s3152 + $0x18] sm:$0xf]
    %v3160 = vld [vmem:[%s3152 + $0x1c] sm:$0xf]
    %v3161 = vld [vmem:[%s3152 + $0x20] sm:$0xf]
    %v3162 = vld [vmem:[%s3152 + $0x24] sm:$0xf]
    %v3163 = vld [vmem:[%s3152 + $0x28] sm:$0xf]
    %v3164 = vld [vmem:[%s3152 + $0x2c] sm:$0xf]
    %v3165 = vld [vmem:[%s3152 + $0x30] sm:$0xf]
    %v3166 = vld [vmem:[%s3152 + $0x34] sm:$0xf]
    %v3167 = vld [vmem:[%s3152 + $0x38] sm:$0xf]
    %v3168 = vld [vmem:[%s3152 + $0x3c] sm:$0xf]
    %v3185 = vunpack.c.l.b16 %v3153
    %v3186 = vunpack.c.l.b16 %v3154
    %v3187 = vunpack.c.l.b16 %v3155
    %v3188 = vunpack.c.l.b16 %v3156
    %v3189 = vunpack.c.l.b16 %v3157
    %v3190 = vunpack.c.l.b16 %v3158
    %v3191 = vunpack.c.l.b16 %v3159
    %v3192 = vunpack.c.l.b16 %v3160
    %v3193 = vunpack.c.l.b16 %v3161
    %v3194 = vunpack.c.l.b16 %v3162
    %v3195 = vunpack.c.l.b16 %v3163
    %v3196 = vunpack.c.l.b16 %v3164
    %v3197 = vunpack.c.l.b16 %v3165
    %v3198 = vunpack.c.l.b16 %v3166
    %v3199 = vunpack.c.l.b16 %v3167
    %v3200 = vunpack.c.l.b16 %v3168
    %v3201 = vpack.c.b16 %v3186, %v3185
    %v3202 = vpack.c.b16 %v3188, %v3187
    %v3203 = vpack.c.b16 %v3190, %v3189
    %v3204 = vpack.c.b16 %v3192, %v3191
    %v3205 = vpack.c.b16 %v3194, %v3193
    %v3206 = vpack.c.b16 %v3196, %v3195
    %v3207 = vpack.c.b16 %v3198, %v3197
    %v3208 = vpack.c.b16 %v3200, %v3199
    %3217 = vmatprep.subr.bf16.mxu0 0
    %3218 = vmatpush1.bf16.msra.mxu0 %v3208
    %3219 = vmatprep.subr.bf16.mxu0 0
    %3220 = vmatpush1.bf16.msra.mxu0 %v3207
    %3221 = vmatprep.subr.bf16.mxu0 0
    %3222 = vmatpush1.bf16.msra.mxu0 %v3206
    %3223 = vmatprep.subr.bf16.mxu0 0
    %3224 = vmatpush1.bf16.msra.mxu0 %v3205
    %3225 = vmatprep.subr.bf16.mxu0 0
    %3226 = vmatpush1.bf16.msra.mxu0 %v3204
    %3227 = vmatprep.subr.bf16.mxu0 0
    %3228 = vmatpush1.bf16.msra.mxu0 %v3203
    %3229 = vmatprep.subr.bf16.mxu0 0
    %3230 = vmatpush1.bf16.msra.mxu0 %v3202
    %3231 = vmatprep.subr.bf16.mxu0 0
    %3232 = vmatpush1.bf16.msra.mxu0 %v3201
    %3233 = vmatprep.subr.bf16.mxu0 0
    %3234 = vmatpush2.bf16.msra.mxu0 0
    %3235 = vmatprep.subr.bf16.mxu0 0
    %3236 = vmatpush2.bf16.msra.mxu0 0
    %3237 = vmatprep.subr.bf16.mxu0 0
    %3238 = vmatpush2.bf16.msra.mxu0 0
    %3239 = vmatprep.subr.bf16.mxu0 0
    %3240 = vmatpush2.bf16.msra.mxu0 0
    %3241 = vmatprep.subr.bf16.mxu0 0
    %3242 = vmatpush2.bf16.msra.mxu0 0
    %3243 = vmatprep.subr.bf16.mxu0 0
    %3244 = vmatpush2.bf16.msra.mxu0 0
    %3245 = vmatprep.subr.bf16.mxu0 0
    %3246 = vmatpush2.bf16.msra.mxu0 0
    %3247 = vmatprep.subr.bf16.mxu0 0
    %3248 = vmatpush2.bf16.msra.mxu0 0
    %3249 = vmatprep.mubr.bf16.mxu0 0
    %3250 = vmatmul.mubr.bf16.gmra.mxu0 %v2317
    %v3251 = vpop.f32.mrf.mxu0
    %v3252 = vadd.f32 0.0, %v3251
    %v3253 = vpop.f32.mrf.mxu0
    %v3254 = vpop.f32.mrf.mxu0
    %v3255 = vpop.f32.mrf.mxu0
    %3256 = vdwg.mxu0
    %v3257 = vadd.f32 %v2775, %v3252
    %3258 = vmatprep.subr.bf16.mxu0 0
    %3259 = vmatpush1.bf16.msra.mxu0 %v3208
    %3260 = vmatprep.subr.bf16.mxu0 0
    %3261 = vmatpush1.bf16.msra.mxu0 %v3207
    %3262 = vmatprep.subr.bf16.mxu0 0
    %3263 = vmatpush1.bf16.msra.mxu0 %v3206
    %3264 = vmatprep.subr.bf16.mxu0 0
    %3265 = vmatpush1.bf16.msra.mxu0 %v3205
    %3266 = vmatprep.subr.bf16.mxu0 0
    %3267 = vmatpush1.bf16.msra.mxu0 %v3204
    %3268 = vmatprep.subr.bf16.mxu0 0
    %3269 = vmatpush1.bf16.msra.mxu0 %v3203
    %3270 = vmatprep.subr.bf16.mxu0 0
    %3271 = vmatpush1.bf16.msra.mxu0 %v3202
    %3272 = vmatprep.subr.bf16.mxu0 0
    %3273 = vmatpush1.bf16.msra.mxu0 %v3201
    %3274 = vmatprep.subr.bf16.mxu0 0
    %3275 = vmatpush2.bf16.msra.mxu0 0
    %3276 = vmatprep.subr.bf16.mxu0 0
    %3277 = vmatpush2.bf16.msra.mxu0 0
    %3278 = vmatprep.subr.bf16.mxu0 0
    %3279 = vmatpush2.bf16.msra.mxu0 0
    %3280 = vmatprep.subr.bf16.mxu0 0
    %3281 = vmatpush2.bf16.msra.mxu0 0
    %3282 = vmatprep.subr.bf16.mxu0 0
    %3283 = vmatpush2.bf16.msra.mxu0 0
    %3284 = vmatprep.subr.bf16.mxu0 0
    %3285 = vmatpush2.bf16.msra.mxu0 0
    %3286 = vmatprep.subr.bf16.mxu0 0
    %3287 = vmatpush2.bf16.msra.mxu0 0
    %3288 = vmatprep.subr.bf16.mxu0 0
    %3289 = vmatpush2.bf16.msra.mxu0 0
    %3290 = vmatprep.mubr.bf16.mxu0 0
    %3291 = vmatmul.mubr.bf16.gmra.mxu0 %v2360
    %v3292 = vpop.f32.mrf.mxu0
    %v3293 = vadd.f32 0.0, %v3292
    %v3294 = vpop.f32.mrf.mxu0
    %v3295 = vpop.f32.mrf.mxu0
    %v3296 = vpop.f32.mrf.mxu0
    %3297 = vdwg.mxu0
    %v3298 = vadd.f32 %v2822, %v3293
    %v3299 = vld [vmem:[#allocation2 + $0xc] sm:$0x4]
    %v3301 = vunpack.c.l.b16 %v3299
    %v3302 = vpack.c.b16 %v3301, %v3301
    %v3303 = vrot.slane %v3302, 2
    %3305 = vmatprep.subr.bf16.mxu0 0
    %3306 = vmatpush1.bf16.msra.mxu0 %v3208
    %3307 = vmatprep.subr.bf16.mxu0 0
    %3308 = vmatpush1.bf16.msra.mxu0 %v3207
    %3309 = vmatprep.subr.bf16.mxu0 0
    %3310 = vmatpush1.bf16.msra.mxu0 %v3206
    %3311 = vmatprep.subr.bf16.mxu0 0
    %3312 = vmatpush1.bf16.msra.mxu0 %v3205
    %3313 = vmatprep.subr.bf16.mxu0 0
    %3314 = vmatpush1.bf16.msra.mxu0 %v3204
    %3315 = vmatprep.subr.bf16.mxu0 0
    %3316 = vmatpush1.bf16.msra.mxu0 %v3203
    %3317 = vmatprep.subr.bf16.mxu0 0
    %3318 = vmatpush1.bf16.msra.mxu0 %v3202
    %3319 = vmatprep.subr.bf16.mxu0 0
    %3320 = vmatpush1.bf16.msra.mxu0 %v3201
    %3321 = vmatprep.subr.bf16.mxu0 0
    %3322 = vmatpush2.bf16.msra.mxu0 0
    %3323 = vmatprep.subr.bf16.mxu0 0
    %3324 = vmatpush2.bf16.msra.mxu0 0
    %3325 = vmatprep.subr.bf16.mxu0 0
    %3326 = vmatpush2.bf16.msra.mxu0 0
    %3327 = vmatprep.subr.bf16.mxu0 0
    %3328 = vmatpush2.bf16.msra.mxu0 0
    %3329 = vmatprep.subr.bf16.mxu0 0
    %3330 = vmatpush2.bf16.msra.mxu0 0
    %3331 = vmatprep.subr.bf16.mxu0 0
    %3332 = vmatpush2.bf16.msra.mxu0 0
    %3333 = vmatprep.subr.bf16.mxu0 0
    %3334 = vmatpush2.bf16.msra.mxu0 0
    %3335 = vmatprep.subr.bf16.mxu0 0
    %3336 = vmatpush2.bf16.msra.mxu0 0
    %3337 = vmatprep.mubr.bf16.mxu0 0
    %3338 = vmatmul.mubr.bf16.gmra.mxu0 %v3303
    %v3339 = vpop.f32.mrf.mxu0
    %v3340 = vadd.f32 0.0, %v3339
    %v3341 = vpop.f32.mrf.mxu0
    %v3342 = vpop.f32.mrf.mxu0
    %v3343 = vpop.f32.mrf.mxu0
    %3344 = vdwg.mxu0
    %v3345 = vadd.f32 %v2869, %v3340
    %3346 = vmatprep.subr.bf16.mxu0 0
    %3347 = vmatpush1.bf16.msra.mxu0 %v3208
    %3348 = vmatprep.subr.bf16.mxu0 0
    %3349 = vmatpush1.bf16.msra.mxu0 %v3207
    %3350 = vmatprep.subr.bf16.mxu0 0
    %3351 = vmatpush1.bf16.msra.mxu0 %v3206
    %3352 = vmatprep.subr.bf16.mxu0 0
    %3353 = vmatpush1.bf16.msra.mxu0 %v3205
    %3354 = vmatprep.subr.bf16.mxu0 0
    %3355 = vmatpush1.bf16.msra.mxu0 %v3204
    %3356 = vmatprep.subr.bf16.mxu0 0
    %3357 = vmatpush1.bf16.msra.mxu0 %v3203
    %3358 = vmatprep.subr.bf16.mxu0 0
    %3359 = vmatpush1.bf16.msra.mxu0 %v3202
    %3360 = vmatprep.subr.bf16.mxu0 0
    %3361 = vmatpush1.bf16.msra.mxu0 %v3201
    %3362 = vmatprep.subr.bf16.mxu0 0
    %3363 = vmatpush2.bf16.msra.mxu0 0
    %3364 = vmatprep.subr.bf16.mxu0 0
    %3365 = vmatpush2.bf16.msra.mxu0 0
    %3366 = vmatprep.subr.bf16.mxu0 0
    %3367 = vmatpush2.bf16.msra.mxu0 0
    %3368 = vmatprep.subr.bf16.mxu0 0
    %3369 = vmatpush2.bf16.msra.mxu0 0
    %3370 = vmatprep.subr.bf16.mxu0 0
    %3371 = vmatpush2.bf16.msra.mxu0 0
    %3372 = vmatprep.subr.bf16.mxu0 0
    %3373 = vmatpush2.bf16.msra.mxu0 0
    %3374 = vmatprep.subr.bf16.mxu0 0
    %3375 = vmatpush2.bf16.msra.mxu0 0
    %3376 = vmatprep.subr.bf16.mxu0 0
    %3377 = vmatpush2.bf16.msra.mxu0 0
    %3378 = vmatprep.mubr.bf16.mxu0 0
    %3379 = vmatmul.mubr.bf16.gmra.mxu0 %v2448
    %v3380 = vpop.f32.mrf.mxu0
    %v3381 = vadd.f32 0.0, %v3380
    %v3382 = vpop.f32.mrf.mxu0
    %v3383 = vpop.f32.mrf.mxu0
    %v3384 = vpop.f32.mrf.mxu0
    %3385 = vdwg.mxu0
    %v3386 = vadd.f32 %v2916, %v3381
    %3387 = vmatprep.subr.bf16.mxu0 0
    %3388 = vmatpush1.bf16.msra.mxu0 %v3208
    %3389 = vmatprep.subr.bf16.mxu0 0
    %3390 = vmatpush1.bf16.msra.mxu0 %v3207
    %3391 = vmatprep.subr.bf16.mxu0 0
    %3392 = vmatpush1.bf16.msra.mxu0 %v3206
    %3393 = vmatprep.subr.bf16.mxu0 0
    %3394 = vmatpush1.bf16.msra.mxu0 %v3205
    %3395 = vmatprep.subr.bf16.mxu0 0
    %3396 = vmatpush1.bf16.msra.mxu0 %v3204
    %3397 = vmatprep.subr.bf16.mxu0 0
    %3398 = vmatpush1.bf16.msra.mxu0 %v3203
    %3399 = vmatprep.subr.bf16.mxu0 0
    %3400 = vmatpush1.bf16.msra.mxu0 %v3202
    %3401 = vmatprep.subr.bf16.mxu0 0
    %3402 = vmatpush1.bf16.msra.mxu0 %v3201
    %3403 = vmatprep.subr.bf16.mxu0 0
    %3404 = vmatpush2.bf16.msra.mxu0 0
    %3405 = vmatprep.subr.bf16.mxu0 0
    %3406 = vmatpush2.bf16.msra.mxu0 0
    %3407 = vmatprep.subr.bf16.mxu0 0
    %3408 = vmatpush2.bf16.msra.mxu0 0
    %3409 = vmatprep.subr.bf16.mxu0 0
    %3410 = vmatpush2.bf16.msra.mxu0 0
    %3411 = vmatprep.subr.bf16.mxu0 0
    %3412 = vmatpush2.bf16.msra.mxu0 0
    %3413 = vmatprep.subr.bf16.mxu0 0
    %3414 = vmatpush2.bf16.msra.mxu0 0
    %3415 = vmatprep.subr.bf16.mxu0 0
    %3416 = vmatpush2.bf16.msra.mxu0 0
    %3417 = vmatprep.subr.bf16.mxu0 0
    %3418 = vmatpush2.bf16.msra.mxu0 0
    %3419 = vmatprep.mubr.bf16.mxu0 0
    %3420 = vmatmul.mubr.bf16.gmra.mxu0 %v2491
    %v3421 = vpop.f32.mrf.mxu0
    %v3422 = vadd.f32 0.0, %v3421
    %v3423 = vpop.f32.mrf.mxu0
    %v3424 = vpop.f32.mrf.mxu0
    %v3425 = vpop.f32.mrf.mxu0
    %3426 = vdwg.mxu0
    %v3427 = vadd.f32 %v2963, %v3422
    %v3428 = vld [vmem:[#allocation2 + $0x1c] sm:$0x4]
    %v3430 = vunpack.c.l.b16 %v3428
    %v3431 = vpack.c.b16 %v3430, %v3430
    %v3432 = vrot.slane %v3431, 2
    %3434 = vmatprep.subr.bf16.mxu0 0
    %3435 = vmatpush1.bf16.msra.mxu0 %v3208
    %3436 = vmatprep.subr.bf16.mxu0 0
    %3437 = vmatpush1.bf16.msra.mxu0 %v3207
    %3438 = vmatprep.subr.bf16.mxu0 0
    %3439 = vmatpush1.bf16.msra.mxu0 %v3206
    %3440 = vmatprep.subr.bf16.mxu0 0
    %3441 = vmatpush1.bf16.msra.mxu0 %v3205
    %3442 = vmatprep.subr.bf16.mxu0 0
    %3443 = vmatpush1.bf16.msra.mxu0 %v3204
    %3444 = vmatprep.subr.bf16.mxu0 0
    %3445 = vmatpush1.bf16.msra.mxu0 %v3203
    %3446 = vmatprep.subr.bf16.mxu0 0
    %3447 = vmatpush1.bf16.msra.mxu0 %v3202
    %3448 = vmatprep.subr.bf16.mxu0 0
    %3449 = vmatpush1.bf16.msra.mxu0 %v3201
    %3450 = vmatprep.subr.bf16.mxu0 0
    %3451 = vmatpush2.bf16.msra.mxu0 0
    %3452 = vmatprep.subr.bf16.mxu0 0
    %3453 = vmatpush2.bf16.msra.mxu0 0
    %3454 = vmatprep.subr.bf16.mxu0 0
    %3455 = vmatpush2.bf16.msra.mxu0 0
    %3456 = vmatprep.subr.bf16.mxu0 0
    %3457 = vmatpush2.bf16.msra.mxu0 0
    %3458 = vmatprep.subr.bf16.mxu0 0
    %3459 = vmatpush2.bf16.msra.mxu0 0
    %3460 = vmatprep.subr.bf16.mxu0 0
    %3461 = vmatpush2.bf16.msra.mxu0 0
    %3462 = vmatprep.subr.bf16.mxu0 0
    %3463 = vmatpush2.bf16.msra.mxu0 0
    %3464 = vmatprep.subr.bf16.mxu0 0
    %3465 = vmatpush2.bf16.msra.mxu0 0
    %3466 = vmatprep.mubr.bf16.mxu0 0
    %3467 = vmatmul.mubr.bf16.gmra.mxu0 %v3432
    %v3468 = vpop.f32.mrf.mxu0
    %v3469 = vadd.f32 0.0, %v3468
    %v3470 = vpop.f32.mrf.mxu0
    %v3471 = vpop.f32.mrf.mxu0
    %v3472 = vpop.f32.mrf.mxu0
    %3473 = vdwg.mxu0
    %v3474 = vadd.f32 %v3010, %v3469
    %3475 = vmatprep.subr.bf16.mxu0 0
    %3476 = vmatpush1.bf16.msra.mxu0 %v3208
    %3477 = vmatprep.subr.bf16.mxu0 0
    %3478 = vmatpush1.bf16.msra.mxu0 %v3207
    %3479 = vmatprep.subr.bf16.mxu0 0
    %3480 = vmatpush1.bf16.msra.mxu0 %v3206
    %3481 = vmatprep.subr.bf16.mxu0 0
    %3482 = vmatpush1.bf16.msra.mxu0 %v3205
    %3483 = vmatprep.subr.bf16.mxu0 0
    %3484 = vmatpush1.bf16.msra.mxu0 %v3204
    %3485 = vmatprep.subr.bf16.mxu0 0
    %3486 = vmatpush1.bf16.msra.mxu0 %v3203
    %3487 = vmatprep.subr.bf16.mxu0 0
    %3488 = vmatpush1.bf16.msra.mxu0 %v3202
    %3489 = vmatprep.subr.bf16.mxu0 0
    %3490 = vmatpush1.bf16.msra.mxu0 %v3201
    %3491 = vmatprep.subr.bf16.mxu0 0
    %3492 = vmatpush2.bf16.msra.mxu0 0
    %3493 = vmatprep.subr.bf16.mxu0 0
    %3494 = vmatpush2.bf16.msra.mxu0 0
    %3495 = vmatprep.subr.bf16.mxu0 0
    %3496 = vmatpush2.bf16.msra.mxu0 0
    %3497 = vmatprep.subr.bf16.mxu0 0
    %3498 = vmatpush2.bf16.msra.mxu0 0
    %3499 = vmatprep.subr.bf16.mxu0 0
    %3500 = vmatpush2.bf16.msra.mxu0 0
    %3501 = vmatprep.subr.bf16.mxu0 0
    %3502 = vmatpush2.bf16.msra.mxu0 0
    %3503 = vmatprep.subr.bf16.mxu0 0
    %3504 = vmatpush2.bf16.msra.mxu0 0
    %3505 = vmatprep.subr.bf16.mxu0 0
    %3506 = vmatpush2.bf16.msra.mxu0 0
    %3507 = vmatprep.mubr.bf16.mxu0 0
    %3508 = vmatmul.mubr.bf16.gmra.mxu0 %v2579
    %v3509 = vpop.f32.mrf.mxu0
    %v3510 = vadd.f32 0.0, %v3509
    %v3511 = vpop.f32.mrf.mxu0
    %v3512 = vpop.f32.mrf.mxu0
    %v3513 = vpop.f32.mrf.mxu0
    %3514 = vdwg.mxu0
    %v3515 = vadd.f32 %v3057, %v3510
    %3516 = vmatprep.subr.bf16.mxu0 0
    %3517 = vmatpush1.bf16.msra.mxu0 %v3208
    %3518 = vmatprep.subr.bf16.mxu0 0
    %3519 = vmatpush1.bf16.msra.mxu0 %v3207
    %3520 = vmatprep.subr.bf16.mxu0 0
    %3521 = vmatpush1.bf16.msra.mxu0 %v3206
    %3522 = vmatprep.subr.bf16.mxu0 0
    %3523 = vmatpush1.bf16.msra.mxu0 %v3205
    %3524 = vmatprep.subr.bf16.mxu0 0
    %3525 = vmatpush1.bf16.msra.mxu0 %v3204
    %3526 = vmatprep.subr.bf16.mxu0 0
    %3527 = vmatpush1.bf16.msra.mxu0 %v3203
    %3528 = vmatprep.subr.bf16.mxu0 0
    %3529 = vmatpush1.bf16.msra.mxu0 %v3202
    %3530 = vmatprep.subr.bf16.mxu0 0
    %3531 = vmatpush1.bf16.msra.mxu0 %v3201
    %3532 = vmatprep.subr.bf16.mxu0 0
    %3533 = vmatpush2.bf16.msra.mxu0 0
    %3534 = vmatprep.subr.bf16.mxu0 0
    %3535 = vmatpush2.bf16.msra.mxu0 0
    %3536 = vmatprep.subr.bf16.mxu0 0
    %3537 = vmatpush2.bf16.msra.mxu0 0
    %3538 = vmatprep.subr.bf16.mxu0 0
    %3539 = vmatpush2.bf16.msra.mxu0 0
    %3540 = vmatprep.subr.bf16.mxu0 0
    %3541 = vmatpush2.bf16.msra.mxu0 0
    %3542 = vmatprep.subr.bf16.mxu0 0
    %3543 = vmatpush2.bf16.msra.mxu0 0
    %3544 = vmatprep.subr.bf16.mxu0 0
    %3545 = vmatpush2.bf16.msra.mxu0 0
    %3546 = vmatprep.subr.bf16.mxu0 0
    %3547 = vmatpush2.bf16.msra.mxu0 0
    %3548 = vmatprep.mubr.bf16.mxu0 0
    %3549 = vmatmul.mubr.bf16.gmra.mxu0 %v2622
    %v3550 = vpop.f32.mrf.mxu0
    %v3551 = vadd.f32 0.0, %v3550
    %v3552 = vpop.f32.mrf.mxu0
    %v3553 = vpop.f32.mrf.mxu0
    %v3554 = vpop.f32.mrf.mxu0
    %3555 = vdwg.mxu0
    %v3556 = vadd.f32 %v3104, %v3551
    %v3557 = vld [vmem:[#allocation2 + $0x2c] sm:$0x4]
    %v3559 = vunpack.c.l.b16 %v3557
    %v3560 = vpack.c.b16 %v3559, %v3559
    %v3561 = vrot.slane %v3560, 2
    %3563 = vmatprep.subr.bf16.mxu0 0
    %3564 = vmatpush1.bf16.msra.mxu0 %v3208
    %3565 = vmatprep.subr.bf16.mxu0 0
    %3566 = vmatpush1.bf16.msra.mxu0 %v3207
    %3567 = vmatprep.subr.bf16.mxu0 0
    %3568 = vmatpush1.bf16.msra.mxu0 %v3206
    %3569 = vmatprep.subr.bf16.mxu0 0
    %3570 = vmatpush1.bf16.msra.mxu0 %v3205
    %3571 = vmatprep.subr.bf16.mxu0 0
    %3572 = vmatpush1.bf16.msra.mxu0 %v3204
    %3573 = vmatprep.subr.bf16.mxu0 0
    %3574 = vmatpush1.bf16.msra.mxu0 %v3203
    %3575 = vmatprep.subr.bf16.mxu0 0
    %3576 = vmatpush1.bf16.msra.mxu0 %v3202
    %3577 = vmatprep.subr.bf16.mxu0 0
    %3578 = vmatpush1.bf16.msra.mxu0 %v3201
    %3579 = vmatprep.subr.bf16.mxu0 0
    %3580 = vmatpush2.bf16.msra.mxu0 0
    %3581 = vmatprep.subr.bf16.mxu0 0
    %3582 = vmatpush2.bf16.msra.mxu0 0
    %3583 = vmatprep.subr.bf16.mxu0 0
    %3584 = vmatpush2.bf16.msra.mxu0 0
    %3585 = vmatprep.subr.bf16.mxu0 0
    %3586 = vmatpush2.bf16.msra.mxu0 0
    %3587 = vmatprep.subr.bf16.mxu0 0
    %3588 = vmatpush2.bf16.msra.mxu0 0
    %3589 = vmatprep.subr.bf16.mxu0 0
    %3590 = vmatpush2.bf16.msra.mxu0 0
    %3591 = vmatprep.subr.bf16.mxu0 0
    %3592 = vmatpush2.bf16.msra.mxu0 0
    %3593 = vmatprep.subr.bf16.mxu0 0
    %3594 = vmatpush2.bf16.msra.mxu0 0
    %3595 = vmatprep.mubr.bf16.mxu0 0
    %3596 = vmatmul.mubr.bf16.gmra.mxu0 %v3561
    %v3597 = vpop.f32.mrf.mxu0
    %v3598 = vadd.f32 0.0, %v3597
    %v3599 = vpop.f32.mrf.mxu0
    %v3600 = vpop.f32.mrf.mxu0
    %v3601 = vpop.f32.mrf.mxu0
    %3602 = vdwg.mxu0
    %v3603 = vadd.f32 %v3151, %v3598
    %s3604 = scalar_lea.vmem %s3, 448
    %v3605 = vld [vmem:[%s3604] sm:$0xf]
    %v3606 = vld [vmem:[%s3604 + $0x4] sm:$0xf]
    %v3607 = vld [vmem:[%s3604 + $0x8] sm:$0xf]
    %v3608 = vld [vmem:[%s3604 + $0xc] sm:$0xf]
    %v3609 = vld [vmem:[%s3604 + $0x10] sm:$0xf]
    %v3610 = vld [vmem:[%s3604 + $0x14] sm:$0xf]
    %v3611 = vld [vmem:[%s3604 + $0x18] sm:$0xf]
    %v3612 = vld [vmem:[%s3604 + $0x1c] sm:$0xf]
    %v3613 = vld [vmem:[%s3604 + $0x20] sm:$0xf]
    %v3614 = vld [vmem:[%s3604 + $0x24] sm:$0xf]
    %v3615 = vld [vmem:[%s3604 + $0x28] sm:$0xf]
    %v3616 = vld [vmem:[%s3604 + $0x2c] sm:$0xf]
    %v3617 = vld [vmem:[%s3604 + $0x30] sm:$0xf]
    %v3618 = vld [vmem:[%s3604 + $0x34] sm:$0xf]
    %v3619 = vld [vmem:[%s3604 + $0x38] sm:$0xf]
    %v3620 = vld [vmem:[%s3604 + $0x3c] sm:$0xf]
    %v3637 = vunpack.c.l.b16 %v3605
    %v3638 = vunpack.c.l.b16 %v3606
    %v3639 = vunpack.c.l.b16 %v3607
    %v3640 = vunpack.c.l.b16 %v3608
    %v3641 = vunpack.c.l.b16 %v3609
    %v3642 = vunpack.c.l.b16 %v3610
    %v3643 = vunpack.c.l.b16 %v3611
    %v3644 = vunpack.c.l.b16 %v3612
    %v3645 = vunpack.c.l.b16 %v3613
    %v3646 = vunpack.c.l.b16 %v3614
    %v3647 = vunpack.c.l.b16 %v3615
    %v3648 = vunpack.c.l.b16 %v3616
    %v3649 = vunpack.c.l.b16 %v3617
    %v3650 = vunpack.c.l.b16 %v3618
    %v3651 = vunpack.c.l.b16 %v3619
    %v3652 = vunpack.c.l.b16 %v3620
    %v3653 = vpack.c.b16 %v3638, %v3637
    %v3654 = vpack.c.b16 %v3640, %v3639
    %v3655 = vpack.c.b16 %v3642, %v3641
    %v3656 = vpack.c.b16 %v3644, %v3643
    %v3657 = vpack.c.b16 %v3646, %v3645
    %v3658 = vpack.c.b16 %v3648, %v3647
    %v3659 = vpack.c.b16 %v3650, %v3649
    %v3660 = vpack.c.b16 %v3652, %v3651
    %3669 = vmatprep.subr.bf16.mxu0 0
    %3670 = vmatpush1.bf16.msra.mxu0 %v3660
    %3671 = vmatprep.subr.bf16.mxu0 0
    %3672 = vmatpush1.bf16.msra.mxu0 %v3659
    %3673 = vmatprep.subr.bf16.mxu0 0
    %3674 = vmatpush1.bf16.msra.mxu0 %v3658
    %3675 = vmatprep.subr.bf16.mxu0 0
    %3676 = vmatpush1.bf16.msra.mxu0 %v3657
    %3677 = vmatprep.subr.bf16.mxu0 0
    %3678 = vmatpush1.bf16.msra.mxu0 %v3656
    %3679 = vmatprep.subr.bf16.mxu0 0
    %3680 = vmatpush1.bf16.msra.mxu0 %v3655
    %3681 = vmatprep.subr.bf16.mxu0 0
    %3682 = vmatpush1.bf16.msra.mxu0 %v3654
    %3683 = vmatprep.subr.bf16.mxu0 0
    %3684 = vmatpush1.bf16.msra.mxu0 %v3653
    %3685 = vmatprep.subr.bf16.mxu0 0
    %3686 = vmatpush2.bf16.msra.mxu0 0
    %3687 = vmatprep.subr.bf16.mxu0 0
    %3688 = vmatpush2.bf16.msra.mxu0 0
    %3689 = vmatprep.subr.bf16.mxu0 0
    %3690 = vmatpush2.bf16.msra.mxu0 0
    %3691 = vmatprep.subr.bf16.mxu0 0
    %3692 = vmatpush2.bf16.msra.mxu0 0
    %3693 = vmatprep.subr.bf16.mxu0 0
    %3694 = vmatpush2.bf16.msra.mxu0 0
    %3695 = vmatprep.subr.bf16.mxu0 0
    %3696 = vmatpush2.bf16.msra.mxu0 0
    %3697 = vmatprep.subr.bf16.mxu0 0
    %3698 = vmatpush2.bf16.msra.mxu0 0
    %3699 = vmatprep.subr.bf16.mxu0 0
    %3700 = vmatpush2.bf16.msra.mxu0 0
    %3701 = vmatprep.mubr.bf16.mxu0 0
    %3702 = vmatmul.mubr.bf16.gmra.mxu0 %v2780
    %v3703 = vpop.f32.mrf.mxu0
    %v3704 = vadd.f32 0.0, %v3703
    %v3705 = vpop.f32.mrf.mxu0
    %v3706 = vpop.f32.mrf.mxu0
    %v3707 = vpop.f32.mrf.mxu0
    %3708 = vdwg.mxu0
    %v3709 = vadd.f32 %v3257, %v3704
    %3710 = vmatprep.subr.bf16.mxu0 0
    %3711 = vmatpush1.bf16.msra.mxu0 %v3660
    %3712 = vmatprep.subr.bf16.mxu0 0
    %3713 = vmatpush1.bf16.msra.mxu0 %v3659
    %3714 = vmatprep.subr.bf16.mxu0 0
    %3715 = vmatpush1.bf16.msra.mxu0 %v3658
    %3716 = vmatprep.subr.bf16.mxu0 0
    %3717 = vmatpush1.bf16.msra.mxu0 %v3657
    %3718 = vmatprep.subr.bf16.mxu0 0
    %3719 = vmatpush1.bf16.msra.mxu0 %v3656
    %3720 = vmatprep.subr.bf16.mxu0 0
    %3721 = vmatpush1.bf16.msra.mxu0 %v3655
    %3722 = vmatprep.subr.bf16.mxu0 0
    %3723 = vmatpush1.bf16.msra.mxu0 %v3654
    %3724 = vmatprep.subr.bf16.mxu0 0
    %3725 = vmatpush1.bf16.msra.mxu0 %v3653
    %3726 = vmatprep.subr.bf16.mxu0 0
    %3727 = vmatpush2.bf16.msra.mxu0 0
    %3728 = vmatprep.subr.bf16.mxu0 0
    %3729 = vmatpush2.bf16.msra.mxu0 0
    %3730 = vmatprep.subr.bf16.mxu0 0
    %3731 = vmatpush2.bf16.msra.mxu0 0
    %3732 = vmatprep.subr.bf16.mxu0 0
    %3733 = vmatpush2.bf16.msra.mxu0 0
    %3734 = vmatprep.subr.bf16.mxu0 0
    %3735 = vmatpush2.bf16.msra.mxu0 0
    %3736 = vmatprep.subr.bf16.mxu0 0
    %3737 = vmatpush2.bf16.msra.mxu0 0
    %3738 = vmatprep.subr.bf16.mxu0 0
    %3739 = vmatpush2.bf16.msra.mxu0 0
    %3740 = vmatprep.subr.bf16.mxu0 0
    %3741 = vmatpush2.bf16.msra.mxu0 0
    %3742 = vmatprep.mubr.bf16.mxu0 0
    %3743 = vmatmul.mubr.bf16.gmra.mxu0 %v2827
    %v3744 = vpop.f32.mrf.mxu0
    %v3745 = vadd.f32 0.0, %v3744
    %v3746 = vpop.f32.mrf.mxu0
    %v3747 = vpop.f32.mrf.mxu0
    %v3748 = vpop.f32.mrf.mxu0
    %3749 = vdwg.mxu0
    %v3750 = vadd.f32 %v3298, %v3745
    %v3751 = vld [vmem:[#allocation2 + $0xc] sm:$0x8]
    %v3753 = vunpack.c.l.b16 %v3751
    %v3754 = vpack.c.b16 %v3753, %v3753
    %v3755 = vrot.slane %v3754, 3
    %3757 = vmatprep.subr.bf16.mxu0 0
    %3758 = vmatpush1.bf16.msra.mxu0 %v3660
    %3759 = vmatprep.subr.bf16.mxu0 0
    %3760 = vmatpush1.bf16.msra.mxu0 %v3659
    %3761 = vmatprep.subr.bf16.mxu0 0
    %3762 = vmatpush1.bf16.msra.mxu0 %v3658
    %3763 = vmatprep.subr.bf16.mxu0 0
    %3764 = vmatpush1.bf16.msra.mxu0 %v3657
    %3765 = vmatprep.subr.bf16.mxu0 0
    %3766 = vmatpush1.bf16.msra.mxu0 %v3656
    %3767 = vmatprep.subr.bf16.mxu0 0
    %3768 = vmatpush1.bf16.msra.mxu0 %v3655
    %3769 = vmatprep.subr.bf16.mxu0 0
    %3770 = vmatpush1.bf16.msra.mxu0 %v3654
    %3771 = vmatprep.subr.bf16.mxu0 0
    %3772 = vmatpush1.bf16.msra.mxu0 %v3653
    %3773 = vmatprep.subr.bf16.mxu0 0
    %3774 = vmatpush2.bf16.msra.mxu0 0
    %3775 = vmatprep.subr.bf16.mxu0 0
    %3776 = vmatpush2.bf16.msra.mxu0 0
    %3777 = vmatprep.subr.bf16.mxu0 0
    %3778 = vmatpush2.bf16.msra.mxu0 0
    %3779 = vmatprep.subr.bf16.mxu0 0
    %3780 = vmatpush2.bf16.msra.mxu0 0
    %3781 = vmatprep.subr.bf16.mxu0 0
    %3782 = vmatpush2.bf16.msra.mxu0 0
    %3783 = vmatprep.subr.bf16.mxu0 0
    %3784 = vmatpush2.bf16.msra.mxu0 0
    %3785 = vmatprep.subr.bf16.mxu0 0
    %3786 = vmatpush2.bf16.msra.mxu0 0
    %3787 = vmatprep.subr.bf16.mxu0 0
    %3788 = vmatpush2.bf16.msra.mxu0 0
    %3789 = vmatprep.mubr.bf16.mxu0 0
    %3790 = vmatmul.mubr.bf16.gmra.mxu0 %v3755
    %v3791 = vpop.f32.mrf.mxu0
    %v3792 = vadd.f32 0.0, %v3791
    %v3793 = vpop.f32.mrf.mxu0
    %v3794 = vpop.f32.mrf.mxu0
    %v3795 = vpop.f32.mrf.mxu0
    %3796 = vdwg.mxu0
    %v3797 = vadd.f32 %v3345, %v3792
    %3798 = vmatprep.subr.bf16.mxu0 0
    %3799 = vmatpush1.bf16.msra.mxu0 %v3660
    %3800 = vmatprep.subr.bf16.mxu0 0
    %3801 = vmatpush1.bf16.msra.mxu0 %v3659
    %3802 = vmatprep.subr.bf16.mxu0 0
    %3803 = vmatpush1.bf16.msra.mxu0 %v3658
    %3804 = vmatprep.subr.bf16.mxu0 0
    %3805 = vmatpush1.bf16.msra.mxu0 %v3657
    %3806 = vmatprep.subr.bf16.mxu0 0
    %3807 = vmatpush1.bf16.msra.mxu0 %v3656
    %3808 = vmatprep.subr.bf16.mxu0 0
    %3809 = vmatpush1.bf16.msra.mxu0 %v3655
    %3810 = vmatprep.subr.bf16.mxu0 0
    %3811 = vmatpush1.bf16.msra.mxu0 %v3654
    %3812 = vmatprep.subr.bf16.mxu0 0
    %3813 = vmatpush1.bf16.msra.mxu0 %v3653
    %3814 = vmatprep.subr.bf16.mxu0 0
    %3815 = vmatpush2.bf16.msra.mxu0 0
    %3816 = vmatprep.subr.bf16.mxu0 0
    %3817 = vmatpush2.bf16.msra.mxu0 0
    %3818 = vmatprep.subr.bf16.mxu0 0
    %3819 = vmatpush2.bf16.msra.mxu0 0
    %3820 = vmatprep.subr.bf16.mxu0 0
    %3821 = vmatpush2.bf16.msra.mxu0 0
    %3822 = vmatprep.subr.bf16.mxu0 0
    %3823 = vmatpush2.bf16.msra.mxu0 0
    %3824 = vmatprep.subr.bf16.mxu0 0
    %3825 = vmatpush2.bf16.msra.mxu0 0
    %3826 = vmatprep.subr.bf16.mxu0 0
    %3827 = vmatpush2.bf16.msra.mxu0 0
    %3828 = vmatprep.subr.bf16.mxu0 0
    %3829 = vmatpush2.bf16.msra.mxu0 0
    %3830 = vmatprep.mubr.bf16.mxu0 0
    %3831 = vmatmul.mubr.bf16.gmra.mxu0 %v2921
    %v3832 = vpop.f32.mrf.mxu0
    %v3833 = vadd.f32 0.0, %v3832
    %v3834 = vpop.f32.mrf.mxu0
    %v3835 = vpop.f32.mrf.mxu0
    %v3836 = vpop.f32.mrf.mxu0
    %3837 = vdwg.mxu0
    %v3838 = vadd.f32 %v3386, %v3833
    %3839 = vmatprep.subr.bf16.mxu0 0
    %3840 = vmatpush1.bf16.msra.mxu0 %v3660
    %3841 = vmatprep.subr.bf16.mxu0 0
    %3842 = vmatpush1.bf16.msra.mxu0 %v3659
    %3843 = vmatprep.subr.bf16.mxu0 0
    %3844 = vmatpush1.bf16.msra.mxu0 %v3658
    %3845 = vmatprep.subr.bf16.mxu0 0
    %3846 = vmatpush1.bf16.msra.mxu0 %v3657
    %3847 = vmatprep.subr.bf16.mxu0 0
    %3848 = vmatpush1.bf16.msra.mxu0 %v3656
    %3849 = vmatprep.subr.bf16.mxu0 0
    %3850 = vmatpush1.bf16.msra.mxu0 %v3655
    %3851 = vmatprep.subr.bf16.mxu0 0
    %3852 = vmatpush1.bf16.msra.mxu0 %v3654
    %3853 = vmatprep.subr.bf16.mxu0 0
    %3854 = vmatpush1.bf16.msra.mxu0 %v3653
    %3855 = vmatprep.subr.bf16.mxu0 0
    %3856 = vmatpush2.bf16.msra.mxu0 0
    %3857 = vmatprep.subr.bf16.mxu0 0
    %3858 = vmatpush2.bf16.msra.mxu0 0
    %3859 = vmatprep.subr.bf16.mxu0 0
    %3860 = vmatpush2.bf16.msra.mxu0 0
    %3861 = vmatprep.subr.bf16.mxu0 0
    %3862 = vmatpush2.bf16.msra.mxu0 0
    %3863 = vmatprep.subr.bf16.mxu0 0
    %3864 = vmatpush2.bf16.msra.mxu0 0
    %3865 = vmatprep.subr.bf16.mxu0 0
    %3866 = vmatpush2.bf16.msra.mxu0 0
    %3867 = vmatprep.subr.bf16.mxu0 0
    %3868 = vmatpush2.bf16.msra.mxu0 0
    %3869 = vmatprep.subr.bf16.mxu0 0
    %3870 = vmatpush2.bf16.msra.mxu0 0
    %3871 = vmatprep.mubr.bf16.mxu0 0
    %3872 = vmatmul.mubr.bf16.gmra.mxu0 %v2968
    %v3873 = vpop.f32.mrf.mxu0
    %v3874 = vadd.f32 0.0, %v3873
    %v3875 = vpop.f32.mrf.mxu0
    %v3876 = vpop.f32.mrf.mxu0
    %v3877 = vpop.f32.mrf.mxu0
    %3878 = vdwg.mxu0
    %v3879 = vadd.f32 %v3427, %v3874
    %v3880 = vld [vmem:[#allocation2 + $0x1c] sm:$0x8]
    %v3882 = vunpack.c.l.b16 %v3880
    %v3883 = vpack.c.b16 %v3882, %v3882
    %v3884 = vrot.slane %v3883, 3
    %3886 = vmatprep.subr.bf16.mxu0 0
    %3887 = vmatpush1.bf16.msra.mxu0 %v3660
    %3888 = vmatprep.subr.bf16.mxu0 0
    %3889 = vmatpush1.bf16.msra.mxu0 %v3659
    %3890 = vmatprep.subr.bf16.mxu0 0
    %3891 = vmatpush1.bf16.msra.mxu0 %v3658
    %3892 = vmatprep.subr.bf16.mxu0 0
    %3893 = vmatpush1.bf16.msra.mxu0 %v3657
    %3894 = vmatprep.subr.bf16.mxu0 0
    %3895 = vmatpush1.bf16.msra.mxu0 %v3656
    %3896 = vmatprep.subr.bf16.mxu0 0
    %3897 = vmatpush1.bf16.msra.mxu0 %v3655
    %3898 = vmatprep.subr.bf16.mxu0 0
    %3899 = vmatpush1.bf16.msra.mxu0 %v3654
    %3900 = vmatprep.subr.bf16.mxu0 0
    %3901 = vmatpush1.bf16.msra.mxu0 %v3653
    %3902 = vmatprep.subr.bf16.mxu0 0
    %3903 = vmatpush2.bf16.msra.mxu0 0
    %3904 = vmatprep.subr.bf16.mxu0 0
    %3905 = vmatpush2.bf16.msra.mxu0 0
    %3906 = vmatprep.subr.bf16.mxu0 0
    %3907 = vmatpush2.bf16.msra.mxu0 0
    %3908 = vmatprep.subr.bf16.mxu0 0
    %3909 = vmatpush2.bf16.msra.mxu0 0
    %3910 = vmatprep.subr.bf16.mxu0 0
    %3911 = vmatpush2.bf16.msra.mxu0 0
    %3912 = vmatprep.subr.bf16.mxu0 0
    %3913 = vmatpush2.bf16.msra.mxu0 0
    %3914 = vmatprep.subr.bf16.mxu0 0
    %3915 = vmatpush2.bf16.msra.mxu0 0
    %3916 = vmatprep.subr.bf16.mxu0 0
    %3917 = vmatpush2.bf16.msra.mxu0 0
    %3918 = vmatprep.mubr.bf16.mxu0 0
    %3919 = vmatmul.mubr.bf16.gmra.mxu0 %v3884
    %v3920 = vpop.f32.mrf.mxu0
    %v3921 = vadd.f32 0.0, %v3920
    %v3922 = vpop.f32.mrf.mxu0
    %v3923 = vpop.f32.mrf.mxu0
    %v3924 = vpop.f32.mrf.mxu0
    %3925 = vdwg.mxu0
    %v3926 = vadd.f32 %v3474, %v3921
    %3927 = vmatprep.subr.bf16.mxu0 0
    %3928 = vmatpush1.bf16.msra.mxu0 %v3660
    %3929 = vmatprep.subr.bf16.mxu0 0
    %3930 = vmatpush1.bf16.msra.mxu0 %v3659
    %3931 = vmatprep.subr.bf16.mxu0 0
    %3932 = vmatpush1.bf16.msra.mxu0 %v3658
    %3933 = vmatprep.subr.bf16.mxu0 0
    %3934 = vmatpush1.bf16.msra.mxu0 %v3657
    %3935 = vmatprep.subr.bf16.mxu0 0
    %3936 = vmatpush1.bf16.msra.mxu0 %v3656
    %3937 = vmatprep.subr.bf16.mxu0 0
    %3938 = vmatpush1.bf16.msra.mxu0 %v3655
    %3939 = vmatprep.subr.bf16.mxu0 0
    %3940 = vmatpush1.bf16.msra.mxu0 %v3654
    %3941 = vmatprep.subr.bf16.mxu0 0
    %3942 = vmatpush1.bf16.msra.mxu0 %v3653
    %3943 = vmatprep.subr.bf16.mxu0 0
    %3944 = vmatpush2.bf16.msra.mxu0 0
    %3945 = vmatprep.subr.bf16.mxu0 0
    %3946 = vmatpush2.bf16.msra.mxu0 0
    %3947 = vmatprep.subr.bf16.mxu0 0
    %3948 = vmatpush2.bf16.msra.mxu0 0
    %3949 = vmatprep.subr.bf16.mxu0 0
    %3950 = vmatpush2.bf16.msra.mxu0 0
    %3951 = vmatprep.subr.bf16.mxu0 0
    %3952 = vmatpush2.bf16.msra.mxu0 0
    %3953 = vmatprep.subr.bf16.mxu0 0
    %3954 = vmatpush2.bf16.msra.mxu0 0
    %3955 = vmatprep.subr.bf16.mxu0 0
    %3956 = vmatpush2.bf16.msra.mxu0 0
    %3957 = vmatprep.subr.bf16.mxu0 0
    %3958 = vmatpush2.bf16.msra.mxu0 0
    %3959 = vmatprep.mubr.bf16.mxu0 0
    %3960 = vmatmul.mubr.bf16.gmra.mxu0 %v3062
    %v3961 = vpop.f32.mrf.mxu0
    %v3962 = vadd.f32 0.0, %v3961
    %v3963 = vpop.f32.mrf.mxu0
    %v3964 = vpop.f32.mrf.mxu0
    %v3965 = vpop.f32.mrf.mxu0
    %3966 = vdwg.mxu0
    %v3967 = vadd.f32 %v3515, %v3962
    %3968 = vmatprep.subr.bf16.mxu0 0
    %3969 = vmatpush1.bf16.msra.mxu0 %v3660
    %3970 = vmatprep.subr.bf16.mxu0 0
    %3971 = vmatpush1.bf16.msra.mxu0 %v3659
    %3972 = vmatprep.subr.bf16.mxu0 0
    %3973 = vmatpush1.bf16.msra.mxu0 %v3658
    %3974 = vmatprep.subr.bf16.mxu0 0
    %3975 = vmatpush1.bf16.msra.mxu0 %v3657
    %3976 = vmatprep.subr.bf16.mxu0 0
    %3977 = vmatpush1.bf16.msra.mxu0 %v3656
    %3978 = vmatprep.subr.bf16.mxu0 0
    %3979 = vmatpush1.bf16.msra.mxu0 %v3655
    %3980 = vmatprep.subr.bf16.mxu0 0
    %3981 = vmatpush1.bf16.msra.mxu0 %v3654
    %3982 = vmatprep.subr.bf16.mxu0 0
    %3983 = vmatpush1.bf16.msra.mxu0 %v3653
    %3984 = vmatprep.subr.bf16.mxu0 0
    %3985 = vmatpush2.bf16.msra.mxu0 0
    %3986 = vmatprep.subr.bf16.mxu0 0
    %3987 = vmatpush2.bf16.msra.mxu0 0
    %3988 = vmatprep.subr.bf16.mxu0 0
    %3989 = vmatpush2.bf16.msra.mxu0 0
    %3990 = vmatprep.subr.bf16.mxu0 0
    %3991 = vmatpush2.bf16.msra.mxu0 0
    %3992 = vmatprep.subr.bf16.mxu0 0
    %3993 = vmatpush2.bf16.msra.mxu0 0
    %3994 = vmatprep.subr.bf16.mxu0 0
    %3995 = vmatpush2.bf16.msra.mxu0 0
    %3996 = vmatprep.subr.bf16.mxu0 0
    %3997 = vmatpush2.bf16.msra.mxu0 0
    %3998 = vmatprep.subr.bf16.mxu0 0
    %3999 = vmatpush2.bf16.msra.mxu0 0
    %4000 = vmatprep.mubr.bf16.mxu0 0
    %4001 = vmatmul.mubr.bf16.gmra.mxu0 %v3109
    %v4002 = vpop.f32.mrf.mxu0
    %v4003 = vadd.f32 0.0, %v4002
    %v4004 = vpop.f32.mrf.mxu0
    %v4005 = vpop.f32.mrf.mxu0
    %v4006 = vpop.f32.mrf.mxu0
    %4007 = vdwg.mxu0
    %v4008 = vadd.f32 %v3556, %v4003
    %v4009 = vld [vmem:[#allocation2 + $0x2c] sm:$0x8]
    %v4011 = vunpack.c.l.b16 %v4009
    %v4012 = vpack.c.b16 %v4011, %v4011
    %v4013 = vrot.slane %v4012, 3
    %4015 = vmatprep.subr.bf16.mxu0 0
    %4016 = vmatpush1.bf16.msra.mxu0 %v3660
    %4017 = vmatprep.subr.bf16.mxu0 0
    %4018 = vmatpush1.bf16.msra.mxu0 %v3659
    %4019 = vmatprep.subr.bf16.mxu0 0
    %4020 = vmatpush1.bf16.msra.mxu0 %v3658
    %4021 = vmatprep.subr.bf16.mxu0 0
    %4022 = vmatpush1.bf16.msra.mxu0 %v3657
    %4023 = vmatprep.subr.bf16.mxu0 0
    %4024 = vmatpush1.bf16.msra.mxu0 %v3656
    %4025 = vmatprep.subr.bf16.mxu0 0
    %4026 = vmatpush1.bf16.msra.mxu0 %v3655
    %4027 = vmatprep.subr.bf16.mxu0 0
    %4028 = vmatpush1.bf16.msra.mxu0 %v3654
    %4029 = vmatprep.subr.bf16.mxu0 0
    %4030 = vmatpush1.bf16.msra.mxu0 %v3653
    %4031 = vmatprep.subr.bf16.mxu0 0
    %4032 = vmatpush2.bf16.msra.mxu0 0
    %4033 = vmatprep.subr.bf16.mxu0 0
    %4034 = vmatpush2.bf16.msra.mxu0 0
    %4035 = vmatprep.subr.bf16.mxu0 0
    %4036 = vmatpush2.bf16.msra.mxu0 0
    %4037 = vmatprep.subr.bf16.mxu0 0
    %4038 = vmatpush2.bf16.msra.mxu0 0
    %4039 = vmatprep.subr.bf16.mxu0 0
    %4040 = vmatpush2.bf16.msra.mxu0 0
    %4041 = vmatprep.subr.bf16.mxu0 0
    %4042 = vmatpush2.bf16.msra.mxu0 0
    %4043 = vmatprep.subr.bf16.mxu0 0
    %4044 = vmatpush2.bf16.msra.mxu0 0
    %4045 = vmatprep.subr.bf16.mxu0 0
    %4046 = vmatpush2.bf16.msra.mxu0 0
    %4047 = vmatprep.mubr.bf16.mxu0 0
    %4048 = vmatmul.mubr.bf16.gmra.mxu0 %v4013
    %v4049 = vpop.f32.mrf.mxu0
    %v4050 = vadd.f32 0.0, %v4049
    %v4051 = vpop.f32.mrf.mxu0
    %v4052 = vpop.f32.mrf.mxu0
    %v4053 = vpop.f32.mrf.mxu0
    %4054 = vdwg.mxu0
    %v4055 = vadd.f32 %v3603, %v4050
    %s4056 = scalar_lea.vmem %s3, 512
    %v4057 = vld [vmem:[%s4056] sm:$0xf]
    %v4058 = vld [vmem:[%s4056 + $0x4] sm:$0xf]
    %v4059 = vld [vmem:[%s4056 + $0x8] sm:$0xf]
    %v4060 = vld [vmem:[%s4056 + $0xc] sm:$0xf]
    %v4061 = vld [vmem:[%s4056 + $0x10] sm:$0xf]
    %v4062 = vld [vmem:[%s4056 + $0x14] sm:$0xf]
    %v4063 = vld [vmem:[%s4056 + $0x18] sm:$0xf]
    %v4064 = vld [vmem:[%s4056 + $0x1c] sm:$0xf]
    %v4065 = vld [vmem:[%s4056 + $0x20] sm:$0xf]
    %v4066 = vld [vmem:[%s4056 + $0x24] sm:$0xf]
    %v4067 = vld [vmem:[%s4056 + $0x28] sm:$0xf]
    %v4068 = vld [vmem:[%s4056 + $0x2c] sm:$0xf]
    %v4069 = vld [vmem:[%s4056 + $0x30] sm:$0xf]
    %v4070 = vld [vmem:[%s4056 + $0x34] sm:$0xf]
    %v4071 = vld [vmem:[%s4056 + $0x38] sm:$0xf]
    %v4072 = vld [vmem:[%s4056 + $0x3c] sm:$0xf]
    %v4089 = vunpack.c.l.b16 %v4057
    %v4090 = vunpack.c.l.b16 %v4058
    %v4091 = vunpack.c.l.b16 %v4059
    %v4092 = vunpack.c.l.b16 %v4060
    %v4093 = vunpack.c.l.b16 %v4061
    %v4094 = vunpack.c.l.b16 %v4062
    %v4095 = vunpack.c.l.b16 %v4063
    %v4096 = vunpack.c.l.b16 %v4064
    %v4097 = vunpack.c.l.b16 %v4065
    %v4098 = vunpack.c.l.b16 %v4066
    %v4099 = vunpack.c.l.b16 %v4067
    %v4100 = vunpack.c.l.b16 %v4068
    %v4101 = vunpack.c.l.b16 %v4069
    %v4102 = vunpack.c.l.b16 %v4070
    %v4103 = vunpack.c.l.b16 %v4071
    %v4104 = vunpack.c.l.b16 %v4072
    %v4105 = vpack.c.b16 %v4090, %v4089
    %v4106 = vpack.c.b16 %v4092, %v4091
    %v4107 = vpack.c.b16 %v4094, %v4093
    %v4108 = vpack.c.b16 %v4096, %v4095
    %v4109 = vpack.c.b16 %v4098, %v4097
    %v4110 = vpack.c.b16 %v4100, %v4099
    %v4111 = vpack.c.b16 %v4102, %v4101
    %v4112 = vpack.c.b16 %v4104, %v4103
    %4121 = vmatprep.subr.bf16.mxu0 0
    %4122 = vmatpush1.bf16.msra.mxu0 %v4112
    %4123 = vmatprep.subr.bf16.mxu0 0
    %4124 = vmatpush1.bf16.msra.mxu0 %v4111
    %4125 = vmatprep.subr.bf16.mxu0 0
    %4126 = vmatpush1.bf16.msra.mxu0 %v4110
    %4127 = vmatprep.subr.bf16.mxu0 0
    %4128 = vmatpush1.bf16.msra.mxu0 %v4109
    %4129 = vmatprep.subr.bf16.mxu0 0
    %4130 = vmatpush1.bf16.msra.mxu0 %v4108
    %4131 = vmatprep.subr.bf16.mxu0 0
    %4132 = vmatpush1.bf16.msra.mxu0 %v4107
    %4133 = vmatprep.subr.bf16.mxu0 0
    %4134 = vmatpush1.bf16.msra.mxu0 %v4106
    %4135 = vmatprep.subr.bf16.mxu0 0
    %4136 = vmatpush1.bf16.msra.mxu0 %v4105
    %4137 = vmatprep.subr.bf16.mxu0 0
    %4138 = vmatpush2.bf16.msra.mxu0 0
    %4139 = vmatprep.subr.bf16.mxu0 0
    %4140 = vmatpush2.bf16.msra.mxu0 0
    %4141 = vmatprep.subr.bf16.mxu0 0
    %4142 = vmatpush2.bf16.msra.mxu0 0
    %4143 = vmatprep.subr.bf16.mxu0 0
    %4144 = vmatpush2.bf16.msra.mxu0 0
    %4145 = vmatprep.subr.bf16.mxu0 0
    %4146 = vmatpush2.bf16.msra.mxu0 0
    %4147 = vmatprep.subr.bf16.mxu0 0
    %4148 = vmatpush2.bf16.msra.mxu0 0
    %4149 = vmatprep.subr.bf16.mxu0 0
    %4150 = vmatpush2.bf16.msra.mxu0 0
    %4151 = vmatprep.subr.bf16.mxu0 0
    %4152 = vmatpush2.bf16.msra.mxu0 0
    %4153 = vmatprep.mubr.bf16.mxu0 0
    %4154 = vmatmul.mubr.bf16.gmra.mxu0 %v394
    %v4155 = vpop.f32.mrf.mxu0
    %v4156 = vadd.f32 0.0, %v4155
    %v4157 = vpop.f32.mrf.mxu0
    %v4158 = vpop.f32.mrf.mxu0
    %v4159 = vpop.f32.mrf.mxu0
    %4160 = vdwg.mxu0
    %v4161 = vadd.f32 %v3709, %v4156
    %4162 = vmatprep.subr.bf16.mxu0 0
    %4163 = vmatpush1.bf16.msra.mxu0 %v4112
    %4164 = vmatprep.subr.bf16.mxu0 0
    %4165 = vmatpush1.bf16.msra.mxu0 %v4111
    %4166 = vmatprep.subr.bf16.mxu0 0
    %4167 = vmatpush1.bf16.msra.mxu0 %v4110
    %4168 = vmatprep.subr.bf16.mxu0 0
    %4169 = vmatpush1.bf16.msra.mxu0 %v4109
    %4170 = vmatprep.subr.bf16.mxu0 0
    %4171 = vmatpush1.bf16.msra.mxu0 %v4108
    %4172 = vmatprep.subr.bf16.mxu0 0
    %4173 = vmatpush1.bf16.msra.mxu0 %v4107
    %4174 = vmatprep.subr.bf16.mxu0 0
    %4175 = vmatpush1.bf16.msra.mxu0 %v4106
    %4176 = vmatprep.subr.bf16.mxu0 0
    %4177 = vmatpush1.bf16.msra.mxu0 %v4105
    %4178 = vmatprep.subr.bf16.mxu0 0
    %4179 = vmatpush2.bf16.msra.mxu0 0
    %4180 = vmatprep.subr.bf16.mxu0 0
    %4181 = vmatpush2.bf16.msra.mxu0 0
    %4182 = vmatprep.subr.bf16.mxu0 0
    %4183 = vmatpush2.bf16.msra.mxu0 0
    %4184 = vmatprep.subr.bf16.mxu0 0
    %4185 = vmatpush2.bf16.msra.mxu0 0
    %4186 = vmatprep.subr.bf16.mxu0 0
    %4187 = vmatpush2.bf16.msra.mxu0 0
    %4188 = vmatprep.subr.bf16.mxu0 0
    %4189 = vmatpush2.bf16.msra.mxu0 0
    %4190 = vmatprep.subr.bf16.mxu0 0
    %4191 = vmatpush2.bf16.msra.mxu0 0
    %4192 = vmatprep.subr.bf16.mxu0 0
    %4193 = vmatpush2.bf16.msra.mxu0 0
    %4194 = vmatprep.mubr.bf16.mxu0 0
    %4195 = vmatmul.mubr.bf16.gmra.mxu0 %v911
    %v4196 = vpop.f32.mrf.mxu0
    %v4197 = vadd.f32 0.0, %v4196
    %v4198 = vpop.f32.mrf.mxu0
    %v4199 = vpop.f32.mrf.mxu0
    %v4200 = vpop.f32.mrf.mxu0
    %4201 = vdwg.mxu0
    %v4202 = vadd.f32 %v3750, %v4197
    %4203 = vmatprep.subr.bf16.mxu0 0
    %4204 = vmatpush1.bf16.msra.mxu0 %v4112
    %4205 = vmatprep.subr.bf16.mxu0 0
    %4206 = vmatpush1.bf16.msra.mxu0 %v4111
    %4207 = vmatprep.subr.bf16.mxu0 0
    %4208 = vmatpush1.bf16.msra.mxu0 %v4110
    %4209 = vmatprep.subr.bf16.mxu0 0
    %4210 = vmatpush1.bf16.msra.mxu0 %v4109
    %4211 = vmatprep.subr.bf16.mxu0 0
    %4212 = vmatpush1.bf16.msra.mxu0 %v4108
    %4213 = vmatprep.subr.bf16.mxu0 0
    %4214 = vmatpush1.bf16.msra.mxu0 %v4107
    %4215 = vmatprep.subr.bf16.mxu0 0
    %4216 = vmatpush1.bf16.msra.mxu0 %v4106
    %4217 = vmatprep.subr.bf16.mxu0 0
    %4218 = vmatpush1.bf16.msra.mxu0 %v4105
    %4219 = vmatprep.subr.bf16.mxu0 0
    %4220 = vmatpush2.bf16.msra.mxu0 0
    %4221 = vmatprep.subr.bf16.mxu0 0
    %4222 = vmatpush2.bf16.msra.mxu0 0
    %4223 = vmatprep.subr.bf16.mxu0 0
    %4224 = vmatpush2.bf16.msra.mxu0 0
    %4225 = vmatprep.subr.bf16.mxu0 0
    %4226 = vmatpush2.bf16.msra.mxu0 0
    %4227 = vmatprep.subr.bf16.mxu0 0
    %4228 = vmatpush2.bf16.msra.mxu0 0
    %4229 = vmatprep.subr.bf16.mxu0 0
    %4230 = vmatpush2.bf16.msra.mxu0 0
    %4231 = vmatprep.subr.bf16.mxu0 0
    %4232 = vmatpush2.bf16.msra.mxu0 0
    %4233 = vmatprep.subr.bf16.mxu0 0
    %4234 = vmatpush2.bf16.msra.mxu0 0
    %4235 = vmatprep.mubr.bf16.mxu0 0
    %4236 = vmatmul.mubr.bf16.gmra.mxu0 %v396
    %v4237 = vpop.f32.mrf.mxu0
    %v4238 = vadd.f32 0.0, %v4237
    %v4239 = vpop.f32.mrf.mxu0
    %v4240 = vpop.f32.mrf.mxu0
    %v4241 = vpop.f32.mrf.mxu0
    %4242 = vdwg.mxu0
    %v4243 = vadd.f32 %v3797, %v4238
    %4244 = vmatprep.subr.bf16.mxu0 0
    %4245 = vmatpush1.bf16.msra.mxu0 %v4112
    %4246 = vmatprep.subr.bf16.mxu0 0
    %4247 = vmatpush1.bf16.msra.mxu0 %v4111
    %4248 = vmatprep.subr.bf16.mxu0 0
    %4249 = vmatpush1.bf16.msra.mxu0 %v4110
    %4250 = vmatprep.subr.bf16.mxu0 0
    %4251 = vmatpush1.bf16.msra.mxu0 %v4109
    %4252 = vmatprep.subr.bf16.mxu0 0
    %4253 = vmatpush1.bf16.msra.mxu0 %v4108
    %4254 = vmatprep.subr.bf16.mxu0 0
    %4255 = vmatpush1.bf16.msra.mxu0 %v4107
    %4256 = vmatprep.subr.bf16.mxu0 0
    %4257 = vmatpush1.bf16.msra.mxu0 %v4106
    %4258 = vmatprep.subr.bf16.mxu0 0
    %4259 = vmatpush1.bf16.msra.mxu0 %v4105
    %4260 = vmatprep.subr.bf16.mxu0 0
    %4261 = vmatpush2.bf16.msra.mxu0 0
    %4262 = vmatprep.subr.bf16.mxu0 0
    %4263 = vmatpush2.bf16.msra.mxu0 0
    %4264 = vmatprep.subr.bf16.mxu0 0
    %4265 = vmatpush2.bf16.msra.mxu0 0
    %4266 = vmatprep.subr.bf16.mxu0 0
    %4267 = vmatpush2.bf16.msra.mxu0 0
    %4268 = vmatprep.subr.bf16.mxu0 0
    %4269 = vmatpush2.bf16.msra.mxu0 0
    %4270 = vmatprep.subr.bf16.mxu0 0
    %4271 = vmatpush2.bf16.msra.mxu0 0
    %4272 = vmatprep.subr.bf16.mxu0 0
    %4273 = vmatpush2.bf16.msra.mxu0 0
    %4274 = vmatprep.subr.bf16.mxu0 0
    %4275 = vmatpush2.bf16.msra.mxu0 0
    %4276 = vmatprep.mubr.bf16.mxu0 0
    %4277 = vmatmul.mubr.bf16.gmra.mxu0 %v397
    %v4278 = vpop.f32.mrf.mxu0
    %v4279 = vadd.f32 0.0, %v4278
    %v4280 = vpop.f32.mrf.mxu0
    %v4281 = vpop.f32.mrf.mxu0
    %v4282 = vpop.f32.mrf.mxu0
    %4283 = vdwg.mxu0
    %v4284 = vadd.f32 %v3838, %v4279
    %4285 = vmatprep.subr.bf16.mxu0 0
    %4286 = vmatpush1.bf16.msra.mxu0 %v4112
    %4287 = vmatprep.subr.bf16.mxu0 0
    %4288 = vmatpush1.bf16.msra.mxu0 %v4111
    %4289 = vmatprep.subr.bf16.mxu0 0
    %4290 = vmatpush1.bf16.msra.mxu0 %v4110
    %4291 = vmatprep.subr.bf16.mxu0 0
    %4292 = vmatpush1.bf16.msra.mxu0 %v4109
    %4293 = vmatprep.subr.bf16.mxu0 0
    %4294 = vmatpush1.bf16.msra.mxu0 %v4108
    %4295 = vmatprep.subr.bf16.mxu0 0
    %4296 = vmatpush1.bf16.msra.mxu0 %v4107
    %4297 = vmatprep.subr.bf16.mxu0 0
    %4298 = vmatpush1.bf16.msra.mxu0 %v4106
    %4299 = vmatprep.subr.bf16.mxu0 0
    %4300 = vmatpush1.bf16.msra.mxu0 %v4105
    %4301 = vmatprep.subr.bf16.mxu0 0
    %4302 = vmatpush2.bf16.msra.mxu0 0
    %4303 = vmatprep.subr.bf16.mxu0 0
    %4304 = vmatpush2.bf16.msra.mxu0 0
    %4305 = vmatprep.subr.bf16.mxu0 0
    %4306 = vmatpush2.bf16.msra.mxu0 0
    %4307 = vmatprep.subr.bf16.mxu0 0
    %4308 = vmatpush2.bf16.msra.mxu0 0
    %4309 = vmatprep.subr.bf16.mxu0 0
    %4310 = vmatpush2.bf16.msra.mxu0 0
    %4311 = vmatprep.subr.bf16.mxu0 0
    %4312 = vmatpush2.bf16.msra.mxu0 0
    %4313 = vmatprep.subr.bf16.mxu0 0
    %4314 = vmatpush2.bf16.msra.mxu0 0
    %4315 = vmatprep.subr.bf16.mxu0 0
    %4316 = vmatpush2.bf16.msra.mxu0 0
    %4317 = vmatprep.mubr.bf16.mxu0 0
    %4318 = vmatmul.mubr.bf16.gmra.mxu0 %v1174
    %v4319 = vpop.f32.mrf.mxu0
    %v4320 = vadd.f32 0.0, %v4319
    %v4321 = vpop.f32.mrf.mxu0
    %v4322 = vpop.f32.mrf.mxu0
    %v4323 = vpop.f32.mrf.mxu0
    %4324 = vdwg.mxu0
    %v4325 = vadd.f32 %v3879, %v4320
    %4326 = vmatprep.subr.bf16.mxu0 0
    %4327 = vmatpush1.bf16.msra.mxu0 %v4112
    %4328 = vmatprep.subr.bf16.mxu0 0
    %4329 = vmatpush1.bf16.msra.mxu0 %v4111
    %4330 = vmatprep.subr.bf16.mxu0 0
    %4331 = vmatpush1.bf16.msra.mxu0 %v4110
    %4332 = vmatprep.subr.bf16.mxu0 0
    %4333 = vmatpush1.bf16.msra.mxu0 %v4109
    %4334 = vmatprep.subr.bf16.mxu0 0
    %4335 = vmatpush1.bf16.msra.mxu0 %v4108
    %4336 = vmatprep.subr.bf16.mxu0 0
    %4337 = vmatpush1.bf16.msra.mxu0 %v4107
    %4338 = vmatprep.subr.bf16.mxu0 0
    %4339 = vmatpush1.bf16.msra.mxu0 %v4106
    %4340 = vmatprep.subr.bf16.mxu0 0
    %4341 = vmatpush1.bf16.msra.mxu0 %v4105
    %4342 = vmatprep.subr.bf16.mxu0 0
    %4343 = vmatpush2.bf16.msra.mxu0 0
    %4344 = vmatprep.subr.bf16.mxu0 0
    %4345 = vmatpush2.bf16.msra.mxu0 0
    %4346 = vmatprep.subr.bf16.mxu0 0
    %4347 = vmatpush2.bf16.msra.mxu0 0
    %4348 = vmatprep.subr.bf16.mxu0 0
    %4349 = vmatpush2.bf16.msra.mxu0 0
    %4350 = vmatprep.subr.bf16.mxu0 0
    %4351 = vmatpush2.bf16.msra.mxu0 0
    %4352 = vmatprep.subr.bf16.mxu0 0
    %4353 = vmatpush2.bf16.msra.mxu0 0
    %4354 = vmatprep.subr.bf16.mxu0 0
    %4355 = vmatpush2.bf16.msra.mxu0 0
    %4356 = vmatprep.subr.bf16.mxu0 0
    %4357 = vmatpush2.bf16.msra.mxu0 0
    %4358 = vmatprep.mubr.bf16.mxu0 0
    %4359 = vmatmul.mubr.bf16.gmra.mxu0 %v399
    %v4360 = vpop.f32.mrf.mxu0
    %v4361 = vadd.f32 0.0, %v4360
    %v4362 = vpop.f32.mrf.mxu0
    %v4363 = vpop.f32.mrf.mxu0
    %v4364 = vpop.f32.mrf.mxu0
    %4365 = vdwg.mxu0
    %v4366 = vadd.f32 %v3926, %v4361
    %v4367 = vld [vmem:[#allocation2 + $0x30] sm:$0x1]
    %4368 = vmatprep.subr.bf16.mxu0 0
    %4369 = vmatpush1.bf16.msra.mxu0 %v4112
    %4370 = vmatprep.subr.bf16.mxu0 0
    %4371 = vmatpush1.bf16.msra.mxu0 %v4111
    %4372 = vmatprep.subr.bf16.mxu0 0
    %4373 = vmatpush1.bf16.msra.mxu0 %v4110
    %4374 = vmatprep.subr.bf16.mxu0 0
    %4375 = vmatpush1.bf16.msra.mxu0 %v4109
    %4376 = vmatprep.subr.bf16.mxu0 0
    %4377 = vmatpush1.bf16.msra.mxu0 %v4108
    %4378 = vmatprep.subr.bf16.mxu0 0
    %4379 = vmatpush1.bf16.msra.mxu0 %v4107
    %4380 = vmatprep.subr.bf16.mxu0 0
    %4381 = vmatpush1.bf16.msra.mxu0 %v4106
    %4382 = vmatprep.subr.bf16.mxu0 0
    %4383 = vmatpush1.bf16.msra.mxu0 %v4105
    %4384 = vmatprep.subr.bf16.mxu0 0
    %4385 = vmatpush2.bf16.msra.mxu0 0
    %4386 = vmatprep.subr.bf16.mxu0 0
    %4387 = vmatpush2.bf16.msra.mxu0 0
    %4388 = vmatprep.subr.bf16.mxu0 0
    %4389 = vmatpush2.bf16.msra.mxu0 0
    %4390 = vmatprep.subr.bf16.mxu0 0
    %4391 = vmatpush2.bf16.msra.mxu0 0
    %4392 = vmatprep.subr.bf16.mxu0 0
    %4393 = vmatpush2.bf16.msra.mxu0 0
    %4394 = vmatprep.subr.bf16.mxu0 0
    %4395 = vmatpush2.bf16.msra.mxu0 0
    %4396 = vmatprep.subr.bf16.mxu0 0
    %4397 = vmatpush2.bf16.msra.mxu0 0
    %4398 = vmatprep.subr.bf16.mxu0 0
    %4399 = vmatpush2.bf16.msra.mxu0 0
    %4400 = vmatprep.mubr.bf16.mxu0 0
    %4401 = vmatmul.mubr.bf16.gmra.mxu0 %v4367
    %v4402 = vpop.f32.mrf.mxu0
    %v4403 = vadd.f32 0.0, %v4402
    %v4404 = vpop.f32.mrf.mxu0
    %v4405 = vpop.f32.mrf.mxu0
    %v4406 = vpop.f32.mrf.mxu0
    %4407 = vdwg.mxu0
    %v4408 = vadd.f32 %v3967, %v4403
    %v4409 = vld [vmem:[#allocation2 + $0x30] sm:$0x4]
    %v4411 = vunpack.c.l.b16 %v4409
    %v4412 = vpack.c.b16 %v4411, %v4411
    %v4413 = vrot.slane %v4412, 2
    %4415 = vmatprep.subr.bf16.mxu0 0
    %4416 = vmatpush1.bf16.msra.mxu0 %v4112
    %4417 = vmatprep.subr.bf16.mxu0 0
    %4418 = vmatpush1.bf16.msra.mxu0 %v4111
    %4419 = vmatprep.subr.bf16.mxu0 0
    %4420 = vmatpush1.bf16.msra.mxu0 %v4110
    %4421 = vmatprep.subr.bf16.mxu0 0
    %4422 = vmatpush1.bf16.msra.mxu0 %v4109
    %4423 = vmatprep.subr.bf16.mxu0 0
    %4424 = vmatpush1.bf16.msra.mxu0 %v4108
    %4425 = vmatprep.subr.bf16.mxu0 0
    %4426 = vmatpush1.bf16.msra.mxu0 %v4107
    %4427 = vmatprep.subr.bf16.mxu0 0
    %4428 = vmatpush1.bf16.msra.mxu0 %v4106
    %4429 = vmatprep.subr.bf16.mxu0 0
    %4430 = vmatpush1.bf16.msra.mxu0 %v4105
    %4431 = vmatprep.subr.bf16.mxu0 0
    %4432 = vmatpush2.bf16.msra.mxu0 0
    %4433 = vmatprep.subr.bf16.mxu0 0
    %4434 = vmatpush2.bf16.msra.mxu0 0
    %4435 = vmatprep.subr.bf16.mxu0 0
    %4436 = vmatpush2.bf16.msra.mxu0 0
    %4437 = vmatprep.subr.bf16.mxu0 0
    %4438 = vmatpush2.bf16.msra.mxu0 0
    %4439 = vmatprep.subr.bf16.mxu0 0
    %4440 = vmatpush2.bf16.msra.mxu0 0
    %4441 = vmatprep.subr.bf16.mxu0 0
    %4442 = vmatpush2.bf16.msra.mxu0 0
    %4443 = vmatprep.subr.bf16.mxu0 0
    %4444 = vmatpush2.bf16.msra.mxu0 0
    %4445 = vmatprep.subr.bf16.mxu0 0
    %4446 = vmatpush2.bf16.msra.mxu0 0
    %4447 = vmatprep.mubr.bf16.mxu0 0
    %4448 = vmatmul.mubr.bf16.gmra.mxu0 %v4413
    %v4449 = vpop.f32.mrf.mxu0
    %v4450 = vadd.f32 0.0, %v4449
    %v4451 = vpop.f32.mrf.mxu0
    %v4452 = vpop.f32.mrf.mxu0
    %v4453 = vpop.f32.mrf.mxu0
    %4454 = vdwg.mxu0
    %v4455 = vadd.f32 %v4008, %v4450
    %v4456 = vld [vmem:[#allocation2 + $0x34] sm:$0x1]
    %4457 = vmatprep.subr.bf16.mxu0 0
    %4458 = vmatpush1.bf16.msra.mxu0 %v4112
    %4459 = vmatprep.subr.bf16.mxu0 0
    %4460 = vmatpush1.bf16.msra.mxu0 %v4111
    %4461 = vmatprep.subr.bf16.mxu0 0
    %4462 = vmatpush1.bf16.msra.mxu0 %v4110
    %4463 = vmatprep.subr.bf16.mxu0 0
    %4464 = vmatpush1.bf16.msra.mxu0 %v4109
    %4465 = vmatprep.subr.bf16.mxu0 0
    %4466 = vmatpush1.bf16.msra.mxu0 %v4108
    %4467 = vmatprep.subr.bf16.mxu0 0
    %4468 = vmatpush1.bf16.msra.mxu0 %v4107
    %4469 = vmatprep.subr.bf16.mxu0 0
    %4470 = vmatpush1.bf16.msra.mxu0 %v4106
    %4471 = vmatprep.subr.bf16.mxu0 0
    %4472 = vmatpush1.bf16.msra.mxu0 %v4105
    %4473 = vmatprep.subr.bf16.mxu0 0
    %4474 = vmatpush2.bf16.msra.mxu0 0
    %4475 = vmatprep.subr.bf16.mxu0 0
    %4476 = vmatpush2.bf16.msra.mxu0 0
    %4477 = vmatprep.subr.bf16.mxu0 0
    %4478 = vmatpush2.bf16.msra.mxu0 0
    %4479 = vmatprep.subr.bf16.mxu0 0
    %4480 = vmatpush2.bf16.msra.mxu0 0
    %4481 = vmatprep.subr.bf16.mxu0 0
    %4482 = vmatpush2.bf16.msra.mxu0 0
    %4483 = vmatprep.subr.bf16.mxu0 0
    %4484 = vmatpush2.bf16.msra.mxu0 0
    %4485 = vmatprep.subr.bf16.mxu0 0
    %4486 = vmatpush2.bf16.msra.mxu0 0
    %4487 = vmatprep.subr.bf16.mxu0 0
    %4488 = vmatpush2.bf16.msra.mxu0 0
    %4489 = vmatprep.mubr.bf16.mxu0 0
    %4490 = vmatmul.mubr.bf16.gmra.mxu0 %v4456
    %v4491 = vpop.f32.mrf.mxu0
    %v4492 = vadd.f32 0.0, %v4491
    %v4493 = vpop.f32.mrf.mxu0
    %v4494 = vpop.f32.mrf.mxu0
    %v4495 = vpop.f32.mrf.mxu0
    %4496 = vdwg.mxu0
    %v4497 = vadd.f32 %v4055, %v4492
    %s4498 = scalar_lea.vmem %s3, 576
    %v4499 = vld [vmem:[%s4498] sm:$0xf]
    %v4500 = vld [vmem:[%s4498 + $0x4] sm:$0xf]
    %v4501 = vld [vmem:[%s4498 + $0x8] sm:$0xf]
    %v4502 = vld [vmem:[%s4498 + $0xc] sm:$0xf]
    %v4503 = vld [vmem:[%s4498 + $0x10] sm:$0xf]
    %v4504 = vld [vmem:[%s4498 + $0x14] sm:$0xf]
    %v4505 = vld [vmem:[%s4498 + $0x18] sm:$0xf]
    %v4506 = vld [vmem:[%s4498 + $0x1c] sm:$0xf]
    %v4507 = vld [vmem:[%s4498 + $0x20] sm:$0xf]
    %v4508 = vld [vmem:[%s4498 + $0x24] sm:$0xf]
    %v4509 = vld [vmem:[%s4498 + $0x28] sm:$0xf]
    %v4510 = vld [vmem:[%s4498 + $0x2c] sm:$0xf]
    %v4511 = vld [vmem:[%s4498 + $0x30] sm:$0xf]
    %v4512 = vld [vmem:[%s4498 + $0x34] sm:$0xf]
    %v4513 = vld [vmem:[%s4498 + $0x38] sm:$0xf]
    %v4514 = vld [vmem:[%s4498 + $0x3c] sm:$0xf]
    %v4531 = vunpack.c.l.b16 %v4499
    %v4532 = vunpack.c.l.b16 %v4500
    %v4533 = vunpack.c.l.b16 %v4501
    %v4534 = vunpack.c.l.b16 %v4502
    %v4535 = vunpack.c.l.b16 %v4503
    %v4536 = vunpack.c.l.b16 %v4504
    %v4537 = vunpack.c.l.b16 %v4505
    %v4538 = vunpack.c.l.b16 %v4506
    %v4539 = vunpack.c.l.b16 %v4507
    %v4540 = vunpack.c.l.b16 %v4508
    %v4541 = vunpack.c.l.b16 %v4509
    %v4542 = vunpack.c.l.b16 %v4510
    %v4543 = vunpack.c.l.b16 %v4511
    %v4544 = vunpack.c.l.b16 %v4512
    %v4545 = vunpack.c.l.b16 %v4513
    %v4546 = vunpack.c.l.b16 %v4514
    %v4547 = vpack.c.b16 %v4532, %v4531
    %v4548 = vpack.c.b16 %v4534, %v4533
    %v4549 = vpack.c.b16 %v4536, %v4535
    %v4550 = vpack.c.b16 %v4538, %v4537
    %v4551 = vpack.c.b16 %v4540, %v4539
    %v4552 = vpack.c.b16 %v4542, %v4541
    %v4553 = vpack.c.b16 %v4544, %v4543
    %v4554 = vpack.c.b16 %v4546, %v4545
    %4563 = vmatprep.subr.bf16.mxu0 0
    %4564 = vmatpush1.bf16.msra.mxu0 %v4554
    %4565 = vmatprep.subr.bf16.mxu0 0
    %4566 = vmatpush1.bf16.msra.mxu0 %v4553
    %4567 = vmatprep.subr.bf16.mxu0 0
    %4568 = vmatpush1.bf16.msra.mxu0 %v4552
    %4569 = vmatprep.subr.bf16.mxu0 0
    %4570 = vmatpush1.bf16.msra.mxu0 %v4551
    %4571 = vmatprep.subr.bf16.mxu0 0
    %4572 = vmatpush1.bf16.msra.mxu0 %v4550
    %4573 = vmatprep.subr.bf16.mxu0 0
    %4574 = vmatpush1.bf16.msra.mxu0 %v4549
    %4575 = vmatprep.subr.bf16.mxu0 0
    %4576 = vmatpush1.bf16.msra.mxu0 %v4548
    %4577 = vmatprep.subr.bf16.mxu0 0
    %4578 = vmatpush1.bf16.msra.mxu0 %v4547
    %4579 = vmatprep.subr.bf16.mxu0 0
    %4580 = vmatpush2.bf16.msra.mxu0 0
    %4581 = vmatprep.subr.bf16.mxu0 0
    %4582 = vmatpush2.bf16.msra.mxu0 0
    %4583 = vmatprep.subr.bf16.mxu0 0
    %4584 = vmatpush2.bf16.msra.mxu0 0
    %4585 = vmatprep.subr.bf16.mxu0 0
    %4586 = vmatpush2.bf16.msra.mxu0 0
    %4587 = vmatprep.subr.bf16.mxu0 0
    %4588 = vmatpush2.bf16.msra.mxu0 0
    %4589 = vmatprep.subr.bf16.mxu0 0
    %4590 = vmatpush2.bf16.msra.mxu0 0
    %4591 = vmatprep.subr.bf16.mxu0 0
    %4592 = vmatpush2.bf16.msra.mxu0 0
    %4593 = vmatprep.subr.bf16.mxu0 0
    %4594 = vmatpush2.bf16.msra.mxu0 0
    %4595 = vmatprep.mubr.bf16.mxu0 0
    %4596 = vmatmul.mubr.bf16.gmra.mxu0 %v780
    %v4597 = vpop.f32.mrf.mxu0
    %v4598 = vadd.f32 0.0, %v4597
    %v4599 = vpop.f32.mrf.mxu0
    %v4600 = vpop.f32.mrf.mxu0
    %v4601 = vpop.f32.mrf.mxu0
    %4602 = vdwg.mxu0
    %v4603 = vadd.f32 %v4161, %v4598
    %4604 = vmatprep.subr.bf16.mxu0 0
    %4605 = vmatpush1.bf16.msra.mxu0 %v4554
    %4606 = vmatprep.subr.bf16.mxu0 0
    %4607 = vmatpush1.bf16.msra.mxu0 %v4553
    %4608 = vmatprep.subr.bf16.mxu0 0
    %4609 = vmatpush1.bf16.msra.mxu0 %v4552
    %4610 = vmatprep.subr.bf16.mxu0 0
    %4611 = vmatpush1.bf16.msra.mxu0 %v4551
    %4612 = vmatprep.subr.bf16.mxu0 0
    %4613 = vmatpush1.bf16.msra.mxu0 %v4550
    %4614 = vmatprep.subr.bf16.mxu0 0
    %4615 = vmatpush1.bf16.msra.mxu0 %v4549
    %4616 = vmatprep.subr.bf16.mxu0 0
    %4617 = vmatpush1.bf16.msra.mxu0 %v4548
    %4618 = vmatprep.subr.bf16.mxu0 0
    %4619 = vmatpush1.bf16.msra.mxu0 %v4547
    %4620 = vmatprep.subr.bf16.mxu0 0
    %4621 = vmatpush2.bf16.msra.mxu0 0
    %4622 = vmatprep.subr.bf16.mxu0 0
    %4623 = vmatpush2.bf16.msra.mxu0 0
    %4624 = vmatprep.subr.bf16.mxu0 0
    %4625 = vmatpush2.bf16.msra.mxu0 0
    %4626 = vmatprep.subr.bf16.mxu0 0
    %4627 = vmatpush2.bf16.msra.mxu0 0
    %4628 = vmatprep.subr.bf16.mxu0 0
    %4629 = vmatpush2.bf16.msra.mxu0 0
    %4630 = vmatprep.subr.bf16.mxu0 0
    %4631 = vmatpush2.bf16.msra.mxu0 0
    %4632 = vmatprep.subr.bf16.mxu0 0
    %4633 = vmatpush2.bf16.msra.mxu0 0
    %4634 = vmatprep.subr.bf16.mxu0 0
    %4635 = vmatpush2.bf16.msra.mxu0 0
    %4636 = vmatprep.mubr.bf16.mxu0 0
    %4637 = vmatmul.mubr.bf16.gmra.mxu0 %v866
    %v4638 = vpop.f32.mrf.mxu0
    %v4639 = vadd.f32 0.0, %v4638
    %v4640 = vpop.f32.mrf.mxu0
    %v4641 = vpop.f32.mrf.mxu0
    %v4642 = vpop.f32.mrf.mxu0
    %4643 = vdwg.mxu0
    %v4644 = vadd.f32 %v4202, %v4639
    %4645 = vmatprep.subr.bf16.mxu0 0
    %4646 = vmatpush1.bf16.msra.mxu0 %v4554
    %4647 = vmatprep.subr.bf16.mxu0 0
    %4648 = vmatpush1.bf16.msra.mxu0 %v4553
    %4649 = vmatprep.subr.bf16.mxu0 0
    %4650 = vmatpush1.bf16.msra.mxu0 %v4552
    %4651 = vmatprep.subr.bf16.mxu0 0
    %4652 = vmatpush1.bf16.msra.mxu0 %v4551
    %4653 = vmatprep.subr.bf16.mxu0 0
    %4654 = vmatpush1.bf16.msra.mxu0 %v4550
    %4655 = vmatprep.subr.bf16.mxu0 0
    %4656 = vmatpush1.bf16.msra.mxu0 %v4549
    %4657 = vmatprep.subr.bf16.mxu0 0
    %4658 = vmatpush1.bf16.msra.mxu0 %v4548
    %4659 = vmatprep.subr.bf16.mxu0 0
    %4660 = vmatpush1.bf16.msra.mxu0 %v4547
    %4661 = vmatprep.subr.bf16.mxu0 0
    %4662 = vmatpush2.bf16.msra.mxu0 0
    %4663 = vmatprep.subr.bf16.mxu0 0
    %4664 = vmatpush2.bf16.msra.mxu0 0
    %4665 = vmatprep.subr.bf16.mxu0 0
    %4666 = vmatpush2.bf16.msra.mxu0 0
    %4667 = vmatprep.subr.bf16.mxu0 0
    %4668 = vmatpush2.bf16.msra.mxu0 0
    %4669 = vmatprep.subr.bf16.mxu0 0
    %4670 = vmatpush2.bf16.msra.mxu0 0
    %4671 = vmatprep.subr.bf16.mxu0 0
    %4672 = vmatpush2.bf16.msra.mxu0 0
    %4673 = vmatprep.subr.bf16.mxu0 0
    %4674 = vmatpush2.bf16.msra.mxu0 0
    %4675 = vmatprep.subr.bf16.mxu0 0
    %4676 = vmatpush2.bf16.msra.mxu0 0
    %4677 = vmatprep.mubr.bf16.mxu0 0
    %4678 = vmatmul.mubr.bf16.gmra.mxu0 %v957
    %v4679 = vpop.f32.mrf.mxu0
    %v4680 = vadd.f32 0.0, %v4679
    %v4681 = vpop.f32.mrf.mxu0
    %v4682 = vpop.f32.mrf.mxu0
    %v4683 = vpop.f32.mrf.mxu0
    %4684 = vdwg.mxu0
    %v4685 = vadd.f32 %v4243, %v4680
    %4686 = vmatprep.subr.bf16.mxu0 0
    %4687 = vmatpush1.bf16.msra.mxu0 %v4554
    %4688 = vmatprep.subr.bf16.mxu0 0
    %4689 = vmatpush1.bf16.msra.mxu0 %v4553
    %4690 = vmatprep.subr.bf16.mxu0 0
    %4691 = vmatpush1.bf16.msra.mxu0 %v4552
    %4692 = vmatprep.subr.bf16.mxu0 0
    %4693 = vmatpush1.bf16.msra.mxu0 %v4551
    %4694 = vmatprep.subr.bf16.mxu0 0
    %4695 = vmatpush1.bf16.msra.mxu0 %v4550
    %4696 = vmatprep.subr.bf16.mxu0 0
    %4697 = vmatpush1.bf16.msra.mxu0 %v4549
    %4698 = vmatprep.subr.bf16.mxu0 0
    %4699 = vmatpush1.bf16.msra.mxu0 %v4548
    %4700 = vmatprep.subr.bf16.mxu0 0
    %4701 = vmatpush1.bf16.msra.mxu0 %v4547
    %4702 = vmatprep.subr.bf16.mxu0 0
    %4703 = vmatpush2.bf16.msra.mxu0 0
    %4704 = vmatprep.subr.bf16.mxu0 0
    %4705 = vmatpush2.bf16.msra.mxu0 0
    %4706 = vmatprep.subr.bf16.mxu0 0
    %4707 = vmatpush2.bf16.msra.mxu0 0
    %4708 = vmatprep.subr.bf16.mxu0 0
    %4709 = vmatpush2.bf16.msra.mxu0 0
    %4710 = vmatprep.subr.bf16.mxu0 0
    %4711 = vmatpush2.bf16.msra.mxu0 0
    %4712 = vmatprep.subr.bf16.mxu0 0
    %4713 = vmatpush2.bf16.msra.mxu0 0
    %4714 = vmatprep.subr.bf16.mxu0 0
    %4715 = vmatpush2.bf16.msra.mxu0 0
    %4716 = vmatprep.subr.bf16.mxu0 0
    %4717 = vmatpush2.bf16.msra.mxu0 0
    %4718 = vmatprep.mubr.bf16.mxu0 0
    %4719 = vmatmul.mubr.bf16.gmra.mxu0 %v1043
    %v4720 = vpop.f32.mrf.mxu0
    %v4721 = vadd.f32 0.0, %v4720
    %v4722 = vpop.f32.mrf.mxu0
    %v4723 = vpop.f32.mrf.mxu0
    %v4724 = vpop.f32.mrf.mxu0
    %4725 = vdwg.mxu0
    %v4726 = vadd.f32 %v4284, %v4721
    %4727 = vmatprep.subr.bf16.mxu0 0
    %4728 = vmatpush1.bf16.msra.mxu0 %v4554
    %4729 = vmatprep.subr.bf16.mxu0 0
    %4730 = vmatpush1.bf16.msra.mxu0 %v4553
    %4731 = vmatprep.subr.bf16.mxu0 0
    %4732 = vmatpush1.bf16.msra.mxu0 %v4552
    %4733 = vmatprep.subr.bf16.mxu0 0
    %4734 = vmatpush1.bf16.msra.mxu0 %v4551
    %4735 = vmatprep.subr.bf16.mxu0 0
    %4736 = vmatpush1.bf16.msra.mxu0 %v4550
    %4737 = vmatprep.subr.bf16.mxu0 0
    %4738 = vmatpush1.bf16.msra.mxu0 %v4549
    %4739 = vmatprep.subr.bf16.mxu0 0
    %4740 = vmatpush1.bf16.msra.mxu0 %v4548
    %4741 = vmatprep.subr.bf16.mxu0 0
    %4742 = vmatpush1.bf16.msra.mxu0 %v4547
    %4743 = vmatprep.subr.bf16.mxu0 0
    %4744 = vmatpush2.bf16.msra.mxu0 0
    %4745 = vmatprep.subr.bf16.mxu0 0
    %4746 = vmatpush2.bf16.msra.mxu0 0
    %4747 = vmatprep.subr.bf16.mxu0 0
    %4748 = vmatpush2.bf16.msra.mxu0 0
    %4749 = vmatprep.subr.bf16.mxu0 0
    %4750 = vmatpush2.bf16.msra.mxu0 0
    %4751 = vmatprep.subr.bf16.mxu0 0
    %4752 = vmatpush2.bf16.msra.mxu0 0
    %4753 = vmatprep.subr.bf16.mxu0 0
    %4754 = vmatpush2.bf16.msra.mxu0 0
    %4755 = vmatprep.subr.bf16.mxu0 0
    %4756 = vmatpush2.bf16.msra.mxu0 0
    %4757 = vmatprep.subr.bf16.mxu0 0
    %4758 = vmatpush2.bf16.msra.mxu0 0
    %4759 = vmatprep.mubr.bf16.mxu0 0
    %4760 = vmatmul.mubr.bf16.gmra.mxu0 %v1129
    %v4761 = vpop.f32.mrf.mxu0
    %v4762 = vadd.f32 0.0, %v4761
    %v4763 = vpop.f32.mrf.mxu0
    %v4764 = vpop.f32.mrf.mxu0
    %v4765 = vpop.f32.mrf.mxu0
    %4766 = vdwg.mxu0
    %v4767 = vadd.f32 %v4325, %v4762
    %4768 = vmatprep.subr.bf16.mxu0 0
    %4769 = vmatpush1.bf16.msra.mxu0 %v4554
    %4770 = vmatprep.subr.bf16.mxu0 0
    %4771 = vmatpush1.bf16.msra.mxu0 %v4553
    %4772 = vmatprep.subr.bf16.mxu0 0
    %4773 = vmatpush1.bf16.msra.mxu0 %v4552
    %4774 = vmatprep.subr.bf16.mxu0 0
    %4775 = vmatpush1.bf16.msra.mxu0 %v4551
    %4776 = vmatprep.subr.bf16.mxu0 0
    %4777 = vmatpush1.bf16.msra.mxu0 %v4550
    %4778 = vmatprep.subr.bf16.mxu0 0
    %4779 = vmatpush1.bf16.msra.mxu0 %v4549
    %4780 = vmatprep.subr.bf16.mxu0 0
    %4781 = vmatpush1.bf16.msra.mxu0 %v4548
    %4782 = vmatprep.subr.bf16.mxu0 0
    %4783 = vmatpush1.bf16.msra.mxu0 %v4547
    %4784 = vmatprep.subr.bf16.mxu0 0
    %4785 = vmatpush2.bf16.msra.mxu0 0
    %4786 = vmatprep.subr.bf16.mxu0 0
    %4787 = vmatpush2.bf16.msra.mxu0 0
    %4788 = vmatprep.subr.bf16.mxu0 0
    %4789 = vmatpush2.bf16.msra.mxu0 0
    %4790 = vmatprep.subr.bf16.mxu0 0
    %4791 = vmatpush2.bf16.msra.mxu0 0
    %4792 = vmatprep.subr.bf16.mxu0 0
    %4793 = vmatpush2.bf16.msra.mxu0 0
    %4794 = vmatprep.subr.bf16.mxu0 0
    %4795 = vmatpush2.bf16.msra.mxu0 0
    %4796 = vmatprep.subr.bf16.mxu0 0
    %4797 = vmatpush2.bf16.msra.mxu0 0
    %4798 = vmatprep.subr.bf16.mxu0 0
    %4799 = vmatpush2.bf16.msra.mxu0 0
    %4800 = vmatprep.mubr.bf16.mxu0 0
    %4801 = vmatmul.mubr.bf16.gmra.mxu0 %v1220
    %v4802 = vpop.f32.mrf.mxu0
    %v4803 = vadd.f32 0.0, %v4802
    %v4804 = vpop.f32.mrf.mxu0
    %v4805 = vpop.f32.mrf.mxu0
    %v4806 = vpop.f32.mrf.mxu0
    %4807 = vdwg.mxu0
    %v4808 = vadd.f32 %v4366, %v4803
    %v4809 = vld [vmem:[#allocation2 + $0x30] sm:$0x2]
    %v4811 = vunpack.c.l.b16 %v4809
    %v4812 = vpack.c.b16 %v4811, %v4811
    %v4813 = vrot.slane %v4812, 1
    %4815 = vmatprep.subr.bf16.mxu0 0
    %4816 = vmatpush1.bf16.msra.mxu0 %v4554
    %4817 = vmatprep.subr.bf16.mxu0 0
    %4818 = vmatpush1.bf16.msra.mxu0 %v4553
    %4819 = vmatprep.subr.bf16.mxu0 0
    %4820 = vmatpush1.bf16.msra.mxu0 %v4552
    %4821 = vmatprep.subr.bf16.mxu0 0
    %4822 = vmatpush1.bf16.msra.mxu0 %v4551
    %4823 = vmatprep.subr.bf16.mxu0 0
    %4824 = vmatpush1.bf16.msra.mxu0 %v4550
    %4825 = vmatprep.subr.bf16.mxu0 0
    %4826 = vmatpush1.bf16.msra.mxu0 %v4549
    %4827 = vmatprep.subr.bf16.mxu0 0
    %4828 = vmatpush1.bf16.msra.mxu0 %v4548
    %4829 = vmatprep.subr.bf16.mxu0 0
    %4830 = vmatpush1.bf16.msra.mxu0 %v4547
    %4831 = vmatprep.subr.bf16.mxu0 0
    %4832 = vmatpush2.bf16.msra.mxu0 0
    %4833 = vmatprep.subr.bf16.mxu0 0
    %4834 = vmatpush2.bf16.msra.mxu0 0
    %4835 = vmatprep.subr.bf16.mxu0 0
    %4836 = vmatpush2.bf16.msra.mxu0 0
    %4837 = vmatprep.subr.bf16.mxu0 0
    %4838 = vmatpush2.bf16.msra.mxu0 0
    %4839 = vmatprep.subr.bf16.mxu0 0
    %4840 = vmatpush2.bf16.msra.mxu0 0
    %4841 = vmatprep.subr.bf16.mxu0 0
    %4842 = vmatpush2.bf16.msra.mxu0 0
    %4843 = vmatprep.subr.bf16.mxu0 0
    %4844 = vmatpush2.bf16.msra.mxu0 0
    %4845 = vmatprep.subr.bf16.mxu0 0
    %4846 = vmatpush2.bf16.msra.mxu0 0
    %4847 = vmatprep.mubr.bf16.mxu0 0
    %4848 = vmatmul.mubr.bf16.gmra.mxu0 %v4813
    %v4849 = vpop.f32.mrf.mxu0
    %v4850 = vadd.f32 0.0, %v4849
    %v4851 = vpop.f32.mrf.mxu0
    %v4852 = vpop.f32.mrf.mxu0
    %v4853 = vpop.f32.mrf.mxu0
    %4854 = vdwg.mxu0
    %v4855 = vadd.f32 %v4408, %v4850
    %v4856 = vld [vmem:[#allocation2 + $0x30] sm:$0x8]
    %v4858 = vunpack.c.l.b16 %v4856
    %v4859 = vpack.c.b16 %v4858, %v4858
    %v4860 = vrot.slane %v4859, 3
    %4862 = vmatprep.subr.bf16.mxu0 0
    %4863 = vmatpush1.bf16.msra.mxu0 %v4554
    %4864 = vmatprep.subr.bf16.mxu0 0
    %4865 = vmatpush1.bf16.msra.mxu0 %v4553
    %4866 = vmatprep.subr.bf16.mxu0 0
    %4867 = vmatpush1.bf16.msra.mxu0 %v4552
    %4868 = vmatprep.subr.bf16.mxu0 0
    %4869 = vmatpush1.bf16.msra.mxu0 %v4551
    %4870 = vmatprep.subr.bf16.mxu0 0
    %4871 = vmatpush1.bf16.msra.mxu0 %v4550
    %4872 = vmatprep.subr.bf16.mxu0 0
    %4873 = vmatpush1.bf16.msra.mxu0 %v4549
    %4874 = vmatprep.subr.bf16.mxu0 0
    %4875 = vmatpush1.bf16.msra.mxu0 %v4548
    %4876 = vmatprep.subr.bf16.mxu0 0
    %4877 = vmatpush1.bf16.msra.mxu0 %v4547
    %4878 = vmatprep.subr.bf16.mxu0 0
    %4879 = vmatpush2.bf16.msra.mxu0 0
    %4880 = vmatprep.subr.bf16.mxu0 0
    %4881 = vmatpush2.bf16.msra.mxu0 0
    %4882 = vmatprep.subr.bf16.mxu0 0
    %4883 = vmatpush2.bf16.msra.mxu0 0
    %4884 = vmatprep.subr.bf16.mxu0 0
    %4885 = vmatpush2.bf16.msra.mxu0 0
    %4886 = vmatprep.subr.bf16.mxu0 0
    %4887 = vmatpush2.bf16.msra.mxu0 0
    %4888 = vmatprep.subr.bf16.mxu0 0
    %4889 = vmatpush2.bf16.msra.mxu0 0
    %4890 = vmatprep.subr.bf16.mxu0 0
    %4891 = vmatpush2.bf16.msra.mxu0 0
    %4892 = vmatprep.subr.bf16.mxu0 0
    %4893 = vmatpush2.bf16.msra.mxu0 0
    %4894 = vmatprep.mubr.bf16.mxu0 0
    %4895 = vmatmul.mubr.bf16.gmra.mxu0 %v4860
    %v4896 = vpop.f32.mrf.mxu0
    %v4897 = vadd.f32 0.0, %v4896
    %v4898 = vpop.f32.mrf.mxu0
    %v4899 = vpop.f32.mrf.mxu0
    %v4900 = vpop.f32.mrf.mxu0
    %4901 = vdwg.mxu0
    %v4902 = vadd.f32 %v4455, %v4897
    %v4903 = vld [vmem:[#allocation2 + $0x34] sm:$0x2]
    %v4905 = vunpack.c.l.b16 %v4903
    %v4906 = vpack.c.b16 %v4905, %v4905
    %v4907 = vrot.slane %v4906, 1
    %4909 = vmatprep.subr.bf16.mxu0 0
    %4910 = vmatpush1.bf16.msra.mxu0 %v4554
    %4911 = vmatprep.subr.bf16.mxu0 0
    %4912 = vmatpush1.bf16.msra.mxu0 %v4553
    %4913 = vmatprep.subr.bf16.mxu0 0
    %4914 = vmatpush1.bf16.msra.mxu0 %v4552
    %4915 = vmatprep.subr.bf16.mxu0 0
    %4916 = vmatpush1.bf16.msra.mxu0 %v4551
    %4917 = vmatprep.subr.bf16.mxu0 0
    %4918 = vmatpush1.bf16.msra.mxu0 %v4550
    %4919 = vmatprep.subr.bf16.mxu0 0
    %4920 = vmatpush1.bf16.msra.mxu0 %v4549
    %4921 = vmatprep.subr.bf16.mxu0 0
    %4922 = vmatpush1.bf16.msra.mxu0 %v4548
    %4923 = vmatprep.subr.bf16.mxu0 0
    %4924 = vmatpush1.bf16.msra.mxu0 %v4547
    %4925 = vmatprep.subr.bf16.mxu0 0
    %4926 = vmatpush2.bf16.msra.mxu0 0
    %4927 = vmatprep.subr.bf16.mxu0 0
    %4928 = vmatpush2.bf16.msra.mxu0 0
    %4929 = vmatprep.subr.bf16.mxu0 0
    %4930 = vmatpush2.bf16.msra.mxu0 0
    %4931 = vmatprep.subr.bf16.mxu0 0
    %4932 = vmatpush2.bf16.msra.mxu0 0
    %4933 = vmatprep.subr.bf16.mxu0 0
    %4934 = vmatpush2.bf16.msra.mxu0 0
    %4935 = vmatprep.subr.bf16.mxu0 0
    %4936 = vmatpush2.bf16.msra.mxu0 0
    %4937 = vmatprep.subr.bf16.mxu0 0
    %4938 = vmatpush2.bf16.msra.mxu0 0
    %4939 = vmatprep.subr.bf16.mxu0 0
    %4940 = vmatpush2.bf16.msra.mxu0 0
    %4941 = vmatprep.mubr.bf16.mxu0 0
    %4942 = vmatmul.mubr.bf16.gmra.mxu0 %v4907
    %v4943 = vpop.f32.mrf.mxu0
    %v4944 = vadd.f32 0.0, %v4943
    %v4945 = vpop.f32.mrf.mxu0
    %v4946 = vpop.f32.mrf.mxu0
    %v4947 = vpop.f32.mrf.mxu0
    %4948 = vdwg.mxu0
    %v4949 = vadd.f32 %v4497, %v4944
    %s4950 = scalar_lea.vmem %s3, 640
    %v4951 = vld [vmem:[%s4950] sm:$0xf]
    %v4952 = vld [vmem:[%s4950 + $0x4] sm:$0xf]
    %v4953 = vld [vmem:[%s4950 + $0x8] sm:$0xf]
    %v4954 = vld [vmem:[%s4950 + $0xc] sm:$0xf]
    %v4955 = vld [vmem:[%s4950 + $0x10] sm:$0xf]
    %v4956 = vld [vmem:[%s4950 + $0x14] sm:$0xf]
    %v4957 = vld [vmem:[%s4950 + $0x18] sm:$0xf]
    %v4958 = vld [vmem:[%s4950 + $0x1c] sm:$0xf]
    %v4959 = vld [vmem:[%s4950 + $0x20] sm:$0xf]
    %v4960 = vld [vmem:[%s4950 + $0x24] sm:$0xf]
    %v4961 = vld [vmem:[%s4950 + $0x28] sm:$0xf]
    %v4962 = vld [vmem:[%s4950 + $0x2c] sm:$0xf]
    %v4963 = vld [vmem:[%s4950 + $0x30] sm:$0xf]
    %v4964 = vld [vmem:[%s4950 + $0x34] sm:$0xf]
    %v4965 = vld [vmem:[%s4950 + $0x38] sm:$0xf]
    %v4966 = vld [vmem:[%s4950 + $0x3c] sm:$0xf]
    %v4983 = vunpack.c.l.b16 %v4951
    %v4984 = vunpack.c.l.b16 %v4952
    %v4985 = vunpack.c.l.b16 %v4953
    %v4986 = vunpack.c.l.b16 %v4954
    %v4987 = vunpack.c.l.b16 %v4955
    %v4988 = vunpack.c.l.b16 %v4956
    %v4989 = vunpack.c.l.b16 %v4957
    %v4990 = vunpack.c.l.b16 %v4958
    %v4991 = vunpack.c.l.b16 %v4959
    %v4992 = vunpack.c.l.b16 %v4960
    %v4993 = vunpack.c.l.b16 %v4961
    %v4994 = vunpack.c.l.b16 %v4962
    %v4995 = vunpack.c.l.b16 %v4963
    %v4996 = vunpack.c.l.b16 %v4964
    %v4997 = vunpack.c.l.b16 %v4965
    %v4998 = vunpack.c.l.b16 %v4966
    %v4999 = vpack.c.b16 %v4984, %v4983
    %v5000 = vpack.c.b16 %v4986, %v4985
    %v5001 = vpack.c.b16 %v4988, %v4987
    %v5002 = vpack.c.b16 %v4990, %v4989
    %v5003 = vpack.c.b16 %v4992, %v4991
    %v5004 = vpack.c.b16 %v4994, %v4993
    %v5005 = vpack.c.b16 %v4996, %v4995
    %v5006 = vpack.c.b16 %v4998, %v4997
    %5015 = vmatprep.subr.bf16.mxu0 0
    %5016 = vmatpush1.bf16.msra.mxu0 %v5006
    %5017 = vmatprep.subr.bf16.mxu0 0
    %5018 = vmatpush1.bf16.msra.mxu0 %v5005
    %5019 = vmatprep.subr.bf16.mxu0 0
    %5020 = vmatpush1.bf16.msra.mxu0 %v5004
    %5021 = vmatprep.subr.bf16.mxu0 0
    %5022 = vmatpush1.bf16.msra.mxu0 %v5003
    %5023 = vmatprep.subr.bf16.mxu0 0
    %5024 = vmatpush1.bf16.msra.mxu0 %v5002
    %5025 = vmatprep.subr.bf16.mxu0 0
    %5026 = vmatpush1.bf16.msra.mxu0 %v5001
    %5027 = vmatprep.subr.bf16.mxu0 0
    %5028 = vmatpush1.bf16.msra.mxu0 %v5000
    %5029 = vmatprep.subr.bf16.mxu0 0
    %5030 = vmatpush1.bf16.msra.mxu0 %v4999
    %5031 = vmatprep.subr.bf16.mxu0 0
    %5032 = vmatpush2.bf16.msra.mxu0 0
    %5033 = vmatprep.subr.bf16.mxu0 0
    %5034 = vmatpush2.bf16.msra.mxu0 0
    %5035 = vmatprep.subr.bf16.mxu0 0
    %5036 = vmatpush2.bf16.msra.mxu0 0
    %5037 = vmatprep.subr.bf16.mxu0 0
    %5038 = vmatpush2.bf16.msra.mxu0 0
    %5039 = vmatprep.subr.bf16.mxu0 0
    %5040 = vmatpush2.bf16.msra.mxu0 0
    %5041 = vmatprep.subr.bf16.mxu0 0
    %5042 = vmatpush2.bf16.msra.mxu0 0
    %5043 = vmatprep.subr.bf16.mxu0 0
    %5044 = vmatpush2.bf16.msra.mxu0 0
    %5045 = vmatprep.subr.bf16.mxu0 0
    %5046 = vmatpush2.bf16.msra.mxu0 0
    %5047 = vmatprep.mubr.bf16.mxu0 0
    %5048 = vmatmul.mubr.bf16.gmra.mxu0 %v911
    %v5049 = vpop.f32.mrf.mxu0
    %v5050 = vadd.f32 0.0, %v5049
    %v5051 = vpop.f32.mrf.mxu0
    %v5052 = vpop.f32.mrf.mxu0
    %v5053 = vpop.f32.mrf.mxu0
    %5054 = vdwg.mxu0
    %v5055 = vadd.f32 %v4603, %v5050
    %5056 = vmatprep.subr.bf16.mxu0 0
    %5057 = vmatpush1.bf16.msra.mxu0 %v5006
    %5058 = vmatprep.subr.bf16.mxu0 0
    %5059 = vmatpush1.bf16.msra.mxu0 %v5005
    %5060 = vmatprep.subr.bf16.mxu0 0
    %5061 = vmatpush1.bf16.msra.mxu0 %v5004
    %5062 = vmatprep.subr.bf16.mxu0 0
    %5063 = vmatpush1.bf16.msra.mxu0 %v5003
    %5064 = vmatprep.subr.bf16.mxu0 0
    %5065 = vmatpush1.bf16.msra.mxu0 %v5002
    %5066 = vmatprep.subr.bf16.mxu0 0
    %5067 = vmatpush1.bf16.msra.mxu0 %v5001
    %5068 = vmatprep.subr.bf16.mxu0 0
    %5069 = vmatpush1.bf16.msra.mxu0 %v5000
    %5070 = vmatprep.subr.bf16.mxu0 0
    %5071 = vmatpush1.bf16.msra.mxu0 %v4999
    %5072 = vmatprep.subr.bf16.mxu0 0
    %5073 = vmatpush2.bf16.msra.mxu0 0
    %5074 = vmatprep.subr.bf16.mxu0 0
    %5075 = vmatpush2.bf16.msra.mxu0 0
    %5076 = vmatprep.subr.bf16.mxu0 0
    %5077 = vmatpush2.bf16.msra.mxu0 0
    %5078 = vmatprep.subr.bf16.mxu0 0
    %5079 = vmatpush2.bf16.msra.mxu0 0
    %5080 = vmatprep.subr.bf16.mxu0 0
    %5081 = vmatpush2.bf16.msra.mxu0 0
    %5082 = vmatprep.subr.bf16.mxu0 0
    %5083 = vmatpush2.bf16.msra.mxu0 0
    %5084 = vmatprep.subr.bf16.mxu0 0
    %5085 = vmatpush2.bf16.msra.mxu0 0
    %5086 = vmatprep.subr.bf16.mxu0 0
    %5087 = vmatpush2.bf16.msra.mxu0 0
    %5088 = vmatprep.mubr.bf16.mxu0 0
    %5089 = vmatmul.mubr.bf16.gmra.mxu0 %v396
    %v5090 = vpop.f32.mrf.mxu0
    %v5091 = vadd.f32 0.0, %v5090
    %v5092 = vpop.f32.mrf.mxu0
    %v5093 = vpop.f32.mrf.mxu0
    %v5094 = vpop.f32.mrf.mxu0
    %5095 = vdwg.mxu0
    %v5096 = vadd.f32 %v4644, %v5091
    %5097 = vmatprep.subr.bf16.mxu0 0
    %5098 = vmatpush1.bf16.msra.mxu0 %v5006
    %5099 = vmatprep.subr.bf16.mxu0 0
    %5100 = vmatpush1.bf16.msra.mxu0 %v5005
    %5101 = vmatprep.subr.bf16.mxu0 0
    %5102 = vmatpush1.bf16.msra.mxu0 %v5004
    %5103 = vmatprep.subr.bf16.mxu0 0
    %5104 = vmatpush1.bf16.msra.mxu0 %v5003
    %5105 = vmatprep.subr.bf16.mxu0 0
    %5106 = vmatpush1.bf16.msra.mxu0 %v5002
    %5107 = vmatprep.subr.bf16.mxu0 0
    %5108 = vmatpush1.bf16.msra.mxu0 %v5001
    %5109 = vmatprep.subr.bf16.mxu0 0
    %5110 = vmatpush1.bf16.msra.mxu0 %v5000
    %5111 = vmatprep.subr.bf16.mxu0 0
    %5112 = vmatpush1.bf16.msra.mxu0 %v4999
    %5113 = vmatprep.subr.bf16.mxu0 0
    %5114 = vmatpush2.bf16.msra.mxu0 0
    %5115 = vmatprep.subr.bf16.mxu0 0
    %5116 = vmatpush2.bf16.msra.mxu0 0
    %5117 = vmatprep.subr.bf16.mxu0 0
    %5118 = vmatpush2.bf16.msra.mxu0 0
    %5119 = vmatprep.subr.bf16.mxu0 0
    %5120 = vmatpush2.bf16.msra.mxu0 0
    %5121 = vmatprep.subr.bf16.mxu0 0
    %5122 = vmatpush2.bf16.msra.mxu0 0
    %5123 = vmatprep.subr.bf16.mxu0 0
    %5124 = vmatpush2.bf16.msra.mxu0 0
    %5125 = vmatprep.subr.bf16.mxu0 0
    %5126 = vmatpush2.bf16.msra.mxu0 0
    %5127 = vmatprep.subr.bf16.mxu0 0
    %5128 = vmatpush2.bf16.msra.mxu0 0
    %5129 = vmatprep.mubr.bf16.mxu0 0
    %5130 = vmatmul.mubr.bf16.gmra.mxu0 %v1582
    %v5131 = vpop.f32.mrf.mxu0
    %v5132 = vadd.f32 0.0, %v5131
    %v5133 = vpop.f32.mrf.mxu0
    %v5134 = vpop.f32.mrf.mxu0
    %v5135 = vpop.f32.mrf.mxu0
    %5136 = vdwg.mxu0
    %v5137 = vadd.f32 %v4685, %v5132
    %5138 = vmatprep.subr.bf16.mxu0 0
    %5139 = vmatpush1.bf16.msra.mxu0 %v5006
    %5140 = vmatprep.subr.bf16.mxu0 0
    %5141 = vmatpush1.bf16.msra.mxu0 %v5005
    %5142 = vmatprep.subr.bf16.mxu0 0
    %5143 = vmatpush1.bf16.msra.mxu0 %v5004
    %5144 = vmatprep.subr.bf16.mxu0 0
    %5145 = vmatpush1.bf16.msra.mxu0 %v5003
    %5146 = vmatprep.subr.bf16.mxu0 0
    %5147 = vmatpush1.bf16.msra.mxu0 %v5002
    %5148 = vmatprep.subr.bf16.mxu0 0
    %5149 = vmatpush1.bf16.msra.mxu0 %v5001
    %5150 = vmatprep.subr.bf16.mxu0 0
    %5151 = vmatpush1.bf16.msra.mxu0 %v5000
    %5152 = vmatprep.subr.bf16.mxu0 0
    %5153 = vmatpush1.bf16.msra.mxu0 %v4999
    %5154 = vmatprep.subr.bf16.mxu0 0
    %5155 = vmatpush2.bf16.msra.mxu0 0
    %5156 = vmatprep.subr.bf16.mxu0 0
    %5157 = vmatpush2.bf16.msra.mxu0 0
    %5158 = vmatprep.subr.bf16.mxu0 0
    %5159 = vmatpush2.bf16.msra.mxu0 0
    %5160 = vmatprep.subr.bf16.mxu0 0
    %5161 = vmatpush2.bf16.msra.mxu0 0
    %5162 = vmatprep.subr.bf16.mxu0 0
    %5163 = vmatpush2.bf16.msra.mxu0 0
    %5164 = vmatprep.subr.bf16.mxu0 0
    %5165 = vmatpush2.bf16.msra.mxu0 0
    %5166 = vmatprep.subr.bf16.mxu0 0
    %5167 = vmatpush2.bf16.msra.mxu0 0
    %5168 = vmatprep.subr.bf16.mxu0 0
    %5169 = vmatpush2.bf16.msra.mxu0 0
    %5170 = vmatprep.mubr.bf16.mxu0 0
    %5171 = vmatmul.mubr.bf16.gmra.mxu0 %v1174
    %v5172 = vpop.f32.mrf.mxu0
    %v5173 = vadd.f32 0.0, %v5172
    %v5174 = vpop.f32.mrf.mxu0
    %v5175 = vpop.f32.mrf.mxu0
    %v5176 = vpop.f32.mrf.mxu0
    %5177 = vdwg.mxu0
    %v5178 = vadd.f32 %v4726, %v5173
    %5179 = vmatprep.subr.bf16.mxu0 0
    %5180 = vmatpush1.bf16.msra.mxu0 %v5006
    %5181 = vmatprep.subr.bf16.mxu0 0
    %5182 = vmatpush1.bf16.msra.mxu0 %v5005
    %5183 = vmatprep.subr.bf16.mxu0 0
    %5184 = vmatpush1.bf16.msra.mxu0 %v5004
    %5185 = vmatprep.subr.bf16.mxu0 0
    %5186 = vmatpush1.bf16.msra.mxu0 %v5003
    %5187 = vmatprep.subr.bf16.mxu0 0
    %5188 = vmatpush1.bf16.msra.mxu0 %v5002
    %5189 = vmatprep.subr.bf16.mxu0 0
    %5190 = vmatpush1.bf16.msra.mxu0 %v5001
    %5191 = vmatprep.subr.bf16.mxu0 0
    %5192 = vmatpush1.bf16.msra.mxu0 %v5000
    %5193 = vmatprep.subr.bf16.mxu0 0
    %5194 = vmatpush1.bf16.msra.mxu0 %v4999
    %5195 = vmatprep.subr.bf16.mxu0 0
    %5196 = vmatpush2.bf16.msra.mxu0 0
    %5197 = vmatprep.subr.bf16.mxu0 0
    %5198 = vmatpush2.bf16.msra.mxu0 0
    %5199 = vmatprep.subr.bf16.mxu0 0
    %5200 = vmatpush2.bf16.msra.mxu0 0
    %5201 = vmatprep.subr.bf16.mxu0 0
    %5202 = vmatpush2.bf16.msra.mxu0 0
    %5203 = vmatprep.subr.bf16.mxu0 0
    %5204 = vmatpush2.bf16.msra.mxu0 0
    %5205 = vmatprep.subr.bf16.mxu0 0
    %5206 = vmatpush2.bf16.msra.mxu0 0
    %5207 = vmatprep.subr.bf16.mxu0 0
    %5208 = vmatpush2.bf16.msra.mxu0 0
    %5209 = vmatprep.subr.bf16.mxu0 0
    %5210 = vmatpush2.bf16.msra.mxu0 0
    %5211 = vmatprep.mubr.bf16.mxu0 0
    %5212 = vmatmul.mubr.bf16.gmra.mxu0 %v399
    %v5213 = vpop.f32.mrf.mxu0
    %v5214 = vadd.f32 0.0, %v5213
    %v5215 = vpop.f32.mrf.mxu0
    %v5216 = vpop.f32.mrf.mxu0
    %v5217 = vpop.f32.mrf.mxu0
    %5218 = vdwg.mxu0
    %v5219 = vadd.f32 %v4767, %v5214
    %5220 = vmatprep.subr.bf16.mxu0 0
    %5221 = vmatpush1.bf16.msra.mxu0 %v5006
    %5222 = vmatprep.subr.bf16.mxu0 0
    %5223 = vmatpush1.bf16.msra.mxu0 %v5005
    %5224 = vmatprep.subr.bf16.mxu0 0
    %5225 = vmatpush1.bf16.msra.mxu0 %v5004
    %5226 = vmatprep.subr.bf16.mxu0 0
    %5227 = vmatpush1.bf16.msra.mxu0 %v5003
    %5228 = vmatprep.subr.bf16.mxu0 0
    %5229 = vmatpush1.bf16.msra.mxu0 %v5002
    %5230 = vmatprep.subr.bf16.mxu0 0
    %5231 = vmatpush1.bf16.msra.mxu0 %v5001
    %5232 = vmatprep.subr.bf16.mxu0 0
    %5233 = vmatpush1.bf16.msra.mxu0 %v5000
    %5234 = vmatprep.subr.bf16.mxu0 0
    %5235 = vmatpush1.bf16.msra.mxu0 %v4999
    %5236 = vmatprep.subr.bf16.mxu0 0
    %5237 = vmatpush2.bf16.msra.mxu0 0
    %5238 = vmatprep.subr.bf16.mxu0 0
    %5239 = vmatpush2.bf16.msra.mxu0 0
    %5240 = vmatprep.subr.bf16.mxu0 0
    %5241 = vmatpush2.bf16.msra.mxu0 0
    %5242 = vmatprep.subr.bf16.mxu0 0
    %5243 = vmatpush2.bf16.msra.mxu0 0
    %5244 = vmatprep.subr.bf16.mxu0 0
    %5245 = vmatpush2.bf16.msra.mxu0 0
    %5246 = vmatprep.subr.bf16.mxu0 0
    %5247 = vmatpush2.bf16.msra.mxu0 0
    %5248 = vmatprep.subr.bf16.mxu0 0
    %5249 = vmatpush2.bf16.msra.mxu0 0
    %5250 = vmatprep.subr.bf16.mxu0 0
    %5251 = vmatpush2.bf16.msra.mxu0 0
    %5252 = vmatprep.mubr.bf16.mxu0 0
    %5253 = vmatmul.mubr.bf16.gmra.mxu0 %v1711
    %v5254 = vpop.f32.mrf.mxu0
    %v5255 = vadd.f32 0.0, %v5254
    %v5256 = vpop.f32.mrf.mxu0
    %v5257 = vpop.f32.mrf.mxu0
    %v5258 = vpop.f32.mrf.mxu0
    %5259 = vdwg.mxu0
    %v5260 = vadd.f32 %v4808, %v5255
    %5261 = vmatprep.subr.bf16.mxu0 0
    %5262 = vmatpush1.bf16.msra.mxu0 %v5006
    %5263 = vmatprep.subr.bf16.mxu0 0
    %5264 = vmatpush1.bf16.msra.mxu0 %v5005
    %5265 = vmatprep.subr.bf16.mxu0 0
    %5266 = vmatpush1.bf16.msra.mxu0 %v5004
    %5267 = vmatprep.subr.bf16.mxu0 0
    %5268 = vmatpush1.bf16.msra.mxu0 %v5003
    %5269 = vmatprep.subr.bf16.mxu0 0
    %5270 = vmatpush1.bf16.msra.mxu0 %v5002
    %5271 = vmatprep.subr.bf16.mxu0 0
    %5272 = vmatpush1.bf16.msra.mxu0 %v5001
    %5273 = vmatprep.subr.bf16.mxu0 0
    %5274 = vmatpush1.bf16.msra.mxu0 %v5000
    %5275 = vmatprep.subr.bf16.mxu0 0
    %5276 = vmatpush1.bf16.msra.mxu0 %v4999
    %5277 = vmatprep.subr.bf16.mxu0 0
    %5278 = vmatpush2.bf16.msra.mxu0 0
    %5279 = vmatprep.subr.bf16.mxu0 0
    %5280 = vmatpush2.bf16.msra.mxu0 0
    %5281 = vmatprep.subr.bf16.mxu0 0
    %5282 = vmatpush2.bf16.msra.mxu0 0
    %5283 = vmatprep.subr.bf16.mxu0 0
    %5284 = vmatpush2.bf16.msra.mxu0 0
    %5285 = vmatprep.subr.bf16.mxu0 0
    %5286 = vmatpush2.bf16.msra.mxu0 0
    %5287 = vmatprep.subr.bf16.mxu0 0
    %5288 = vmatpush2.bf16.msra.mxu0 0
    %5289 = vmatprep.subr.bf16.mxu0 0
    %5290 = vmatpush2.bf16.msra.mxu0 0
    %5291 = vmatprep.subr.bf16.mxu0 0
    %5292 = vmatpush2.bf16.msra.mxu0 0
    %5293 = vmatprep.mubr.bf16.mxu0 0
    %5294 = vmatmul.mubr.bf16.gmra.mxu0 %v4413
    %v5295 = vpop.f32.mrf.mxu0
    %v5296 = vadd.f32 0.0, %v5295
    %v5297 = vpop.f32.mrf.mxu0
    %v5298 = vpop.f32.mrf.mxu0
    %v5299 = vpop.f32.mrf.mxu0
    %5300 = vdwg.mxu0
    %v5301 = vadd.f32 %v4855, %v5296
    %5302 = vmatprep.subr.bf16.mxu0 0
    %5303 = vmatpush1.bf16.msra.mxu0 %v5006
    %5304 = vmatprep.subr.bf16.mxu0 0
    %5305 = vmatpush1.bf16.msra.mxu0 %v5005
    %5306 = vmatprep.subr.bf16.mxu0 0
    %5307 = vmatpush1.bf16.msra.mxu0 %v5004
    %5308 = vmatprep.subr.bf16.mxu0 0
    %5309 = vmatpush1.bf16.msra.mxu0 %v5003
    %5310 = vmatprep.subr.bf16.mxu0 0
    %5311 = vmatpush1.bf16.msra.mxu0 %v5002
    %5312 = vmatprep.subr.bf16.mxu0 0
    %5313 = vmatpush1.bf16.msra.mxu0 %v5001
    %5314 = vmatprep.subr.bf16.mxu0 0
    %5315 = vmatpush1.bf16.msra.mxu0 %v5000
    %5316 = vmatprep.subr.bf16.mxu0 0
    %5317 = vmatpush1.bf16.msra.mxu0 %v4999
    %5318 = vmatprep.subr.bf16.mxu0 0
    %5319 = vmatpush2.bf16.msra.mxu0 0
    %5320 = vmatprep.subr.bf16.mxu0 0
    %5321 = vmatpush2.bf16.msra.mxu0 0
    %5322 = vmatprep.subr.bf16.mxu0 0
    %5323 = vmatpush2.bf16.msra.mxu0 0
    %5324 = vmatprep.subr.bf16.mxu0 0
    %5325 = vmatpush2.bf16.msra.mxu0 0
    %5326 = vmatprep.subr.bf16.mxu0 0
    %5327 = vmatpush2.bf16.msra.mxu0 0
    %5328 = vmatprep.subr.bf16.mxu0 0
    %5329 = vmatpush2.bf16.msra.mxu0 0
    %5330 = vmatprep.subr.bf16.mxu0 0
    %5331 = vmatpush2.bf16.msra.mxu0 0
    %5332 = vmatprep.subr.bf16.mxu0 0
    %5333 = vmatpush2.bf16.msra.mxu0 0
    %5334 = vmatprep.mubr.bf16.mxu0 0
    %5335 = vmatmul.mubr.bf16.gmra.mxu0 %v4456
    %v5336 = vpop.f32.mrf.mxu0
    %v5337 = vadd.f32 0.0, %v5336
    %v5338 = vpop.f32.mrf.mxu0
    %v5339 = vpop.f32.mrf.mxu0
    %v5340 = vpop.f32.mrf.mxu0
    %5341 = vdwg.mxu0
    %v5342 = vadd.f32 %v4902, %v5337
    %v5343 = vld [vmem:[#allocation2 + $0x34] sm:$0x4]
    %v5345 = vunpack.c.l.b16 %v5343
    %v5346 = vpack.c.b16 %v5345, %v5345
    %v5347 = vrot.slane %v5346, 2
    %5349 = vmatprep.subr.bf16.mxu0 0
    %5350 = vmatpush1.bf16.msra.mxu0 %v5006
    %5351 = vmatprep.subr.bf16.mxu0 0
    %5352 = vmatpush1.bf16.msra.mxu0 %v5005
    %5353 = vmatprep.subr.bf16.mxu0 0
    %5354 = vmatpush1.bf16.msra.mxu0 %v5004
    %5355 = vmatprep.subr.bf16.mxu0 0
    %5356 = vmatpush1.bf16.msra.mxu0 %v5003
    %5357 = vmatprep.subr.bf16.mxu0 0
    %5358 = vmatpush1.bf16.msra.mxu0 %v5002
    %5359 = vmatprep.subr.bf16.mxu0 0
    %5360 = vmatpush1.bf16.msra.mxu0 %v5001
    %5361 = vmatprep.subr.bf16.mxu0 0
    %5362 = vmatpush1.bf16.msra.mxu0 %v5000
    %5363 = vmatprep.subr.bf16.mxu0 0
    %5364 = vmatpush1.bf16.msra.mxu0 %v4999
    %5365 = vmatprep.subr.bf16.mxu0 0
    %5366 = vmatpush2.bf16.msra.mxu0 0
    %5367 = vmatprep.subr.bf16.mxu0 0
    %5368 = vmatpush2.bf16.msra.mxu0 0
    %5369 = vmatprep.subr.bf16.mxu0 0
    %5370 = vmatpush2.bf16.msra.mxu0 0
    %5371 = vmatprep.subr.bf16.mxu0 0
    %5372 = vmatpush2.bf16.msra.mxu0 0
    %5373 = vmatprep.subr.bf16.mxu0 0
    %5374 = vmatpush2.bf16.msra.mxu0 0
    %5375 = vmatprep.subr.bf16.mxu0 0
    %5376 = vmatpush2.bf16.msra.mxu0 0
    %5377 = vmatprep.subr.bf16.mxu0 0
    %5378 = vmatpush2.bf16.msra.mxu0 0
    %5379 = vmatprep.subr.bf16.mxu0 0
    %5380 = vmatpush2.bf16.msra.mxu0 0
    %5381 = vmatprep.mubr.bf16.mxu0 0
    %5382 = vmatmul.mubr.bf16.gmra.mxu0 %v5347
    %v5383 = vpop.f32.mrf.mxu0
    %v5384 = vadd.f32 0.0, %v5383
    %v5385 = vpop.f32.mrf.mxu0
    %v5386 = vpop.f32.mrf.mxu0
    %v5387 = vpop.f32.mrf.mxu0
    %5388 = vdwg.mxu0
    %v5389 = vadd.f32 %v4949, %v5384
    %s5390 = scalar_lea.vmem %s3, 704
    %v5391 = vld [vmem:[%s5390] sm:$0xf]
    %v5392 = vld [vmem:[%s5390 + $0x4] sm:$0xf]
    %v5393 = vld [vmem:[%s5390 + $0x8] sm:$0xf]
    %v5394 = vld [vmem:[%s5390 + $0xc] sm:$0xf]
    %v5395 = vld [vmem:[%s5390 + $0x10] sm:$0xf]
    %v5396 = vld [vmem:[%s5390 + $0x14] sm:$0xf]
    %v5397 = vld [vmem:[%s5390 + $0x18] sm:$0xf]
    %v5398 = vld [vmem:[%s5390 + $0x1c] sm:$0xf]
    %v5399 = vld [vmem:[%s5390 + $0x20] sm:$0xf]
    %v5400 = vld [vmem:[%s5390 + $0x24] sm:$0xf]
    %v5401 = vld [vmem:[%s5390 + $0x28] sm:$0xf]
    %v5402 = vld [vmem:[%s5390 + $0x2c] sm:$0xf]
    %v5403 = vld [vmem:[%s5390 + $0x30] sm:$0xf]
    %v5404 = vld [vmem:[%s5390 + $0x34] sm:$0xf]
    %v5405 = vld [vmem:[%s5390 + $0x38] sm:$0xf]
    %v5406 = vld [vmem:[%s5390 + $0x3c] sm:$0xf]
    %v5423 = vunpack.c.l.b16 %v5391
    %v5424 = vunpack.c.l.b16 %v5392
    %v5425 = vunpack.c.l.b16 %v5393
    %v5426 = vunpack.c.l.b16 %v5394
    %v5427 = vunpack.c.l.b16 %v5395
    %v5428 = vunpack.c.l.b16 %v5396
    %v5429 = vunpack.c.l.b16 %v5397
    %v5430 = vunpack.c.l.b16 %v5398
    %v5431 = vunpack.c.l.b16 %v5399
    %v5432 = vunpack.c.l.b16 %v5400
    %v5433 = vunpack.c.l.b16 %v5401
    %v5434 = vunpack.c.l.b16 %v5402
    %v5435 = vunpack.c.l.b16 %v5403
    %v5436 = vunpack.c.l.b16 %v5404
    %v5437 = vunpack.c.l.b16 %v5405
    %v5438 = vunpack.c.l.b16 %v5406
    %v5439 = vpack.c.b16 %v5424, %v5423
    %v5440 = vpack.c.b16 %v5426, %v5425
    %v5441 = vpack.c.b16 %v5428, %v5427
    %v5442 = vpack.c.b16 %v5430, %v5429
    %v5443 = vpack.c.b16 %v5432, %v5431
    %v5444 = vpack.c.b16 %v5434, %v5433
    %v5445 = vpack.c.b16 %v5436, %v5435
    %v5446 = vpack.c.b16 %v5438, %v5437
    %5455 = vmatprep.subr.bf16.mxu0 0
    %5456 = vmatpush1.bf16.msra.mxu0 %v5446
    %5457 = vmatprep.subr.bf16.mxu0 0
    %5458 = vmatpush1.bf16.msra.mxu0 %v5445
    %5459 = vmatprep.subr.bf16.mxu0 0
    %5460 = vmatpush1.bf16.msra.mxu0 %v5444
    %5461 = vmatprep.subr.bf16.mxu0 0
    %5462 = vmatpush1.bf16.msra.mxu0 %v5443
    %5463 = vmatprep.subr.bf16.mxu0 0
    %5464 = vmatpush1.bf16.msra.mxu0 %v5442
    %5465 = vmatprep.subr.bf16.mxu0 0
    %5466 = vmatpush1.bf16.msra.mxu0 %v5441
    %5467 = vmatprep.subr.bf16.mxu0 0
    %5468 = vmatpush1.bf16.msra.mxu0 %v5440
    %5469 = vmatprep.subr.bf16.mxu0 0
    %5470 = vmatpush1.bf16.msra.mxu0 %v5439
    %5471 = vmatprep.subr.bf16.mxu0 0
    %5472 = vmatpush2.bf16.msra.mxu0 0
    %5473 = vmatprep.subr.bf16.mxu0 0
    %5474 = vmatpush2.bf16.msra.mxu0 0
    %5475 = vmatprep.subr.bf16.mxu0 0
    %5476 = vmatpush2.bf16.msra.mxu0 0
    %5477 = vmatprep.subr.bf16.mxu0 0
    %5478 = vmatpush2.bf16.msra.mxu0 0
    %5479 = vmatprep.subr.bf16.mxu0 0
    %5480 = vmatpush2.bf16.msra.mxu0 0
    %5481 = vmatprep.subr.bf16.mxu0 0
    %5482 = vmatpush2.bf16.msra.mxu0 0
    %5483 = vmatprep.subr.bf16.mxu0 0
    %5484 = vmatpush2.bf16.msra.mxu0 0
    %5485 = vmatprep.subr.bf16.mxu0 0
    %5486 = vmatpush2.bf16.msra.mxu0 0
    %5487 = vmatprep.mubr.bf16.mxu0 0
    %5488 = vmatmul.mubr.bf16.gmra.mxu0 %v866
    %v5489 = vpop.f32.mrf.mxu0
    %v5490 = vadd.f32 0.0, %v5489
    %v5491 = vpop.f32.mrf.mxu0
    %v5492 = vpop.f32.mrf.mxu0
    %v5493 = vpop.f32.mrf.mxu0
    %5494 = vdwg.mxu0
    %v5495 = vadd.f32 %v5055, %v5490
    %5496 = vmatprep.subr.bf16.mxu0 0
    %5497 = vmatpush1.bf16.msra.mxu0 %v5446
    %5498 = vmatprep.subr.bf16.mxu0 0
    %5499 = vmatpush1.bf16.msra.mxu0 %v5445
    %5500 = vmatprep.subr.bf16.mxu0 0
    %5501 = vmatpush1.bf16.msra.mxu0 %v5444
    %5502 = vmatprep.subr.bf16.mxu0 0
    %5503 = vmatpush1.bf16.msra.mxu0 %v5443
    %5504 = vmatprep.subr.bf16.mxu0 0
    %5505 = vmatpush1.bf16.msra.mxu0 %v5442
    %5506 = vmatprep.subr.bf16.mxu0 0
    %5507 = vmatpush1.bf16.msra.mxu0 %v5441
    %5508 = vmatprep.subr.bf16.mxu0 0
    %5509 = vmatpush1.bf16.msra.mxu0 %v5440
    %5510 = vmatprep.subr.bf16.mxu0 0
    %5511 = vmatpush1.bf16.msra.mxu0 %v5439
    %5512 = vmatprep.subr.bf16.mxu0 0
    %5513 = vmatpush2.bf16.msra.mxu0 0
    %5514 = vmatprep.subr.bf16.mxu0 0
    %5515 = vmatpush2.bf16.msra.mxu0 0
    %5516 = vmatprep.subr.bf16.mxu0 0
    %5517 = vmatpush2.bf16.msra.mxu0 0
    %5518 = vmatprep.subr.bf16.mxu0 0
    %5519 = vmatpush2.bf16.msra.mxu0 0
    %5520 = vmatprep.subr.bf16.mxu0 0
    %5521 = vmatpush2.bf16.msra.mxu0 0
    %5522 = vmatprep.subr.bf16.mxu0 0
    %5523 = vmatpush2.bf16.msra.mxu0 0
    %5524 = vmatprep.subr.bf16.mxu0 0
    %5525 = vmatpush2.bf16.msra.mxu0 0
    %5526 = vmatprep.subr.bf16.mxu0 0
    %5527 = vmatpush2.bf16.msra.mxu0 0
    %5528 = vmatprep.mubr.bf16.mxu0 0
    %5529 = vmatmul.mubr.bf16.gmra.mxu0 %v957
    %v5530 = vpop.f32.mrf.mxu0
    %v5531 = vadd.f32 0.0, %v5530
    %v5532 = vpop.f32.mrf.mxu0
    %v5533 = vpop.f32.mrf.mxu0
    %v5534 = vpop.f32.mrf.mxu0
    %5535 = vdwg.mxu0
    %v5536 = vadd.f32 %v5096, %v5531
    %5537 = vmatprep.subr.bf16.mxu0 0
    %5538 = vmatpush1.bf16.msra.mxu0 %v5446
    %5539 = vmatprep.subr.bf16.mxu0 0
    %5540 = vmatpush1.bf16.msra.mxu0 %v5445
    %5541 = vmatprep.subr.bf16.mxu0 0
    %5542 = vmatpush1.bf16.msra.mxu0 %v5444
    %5543 = vmatprep.subr.bf16.mxu0 0
    %5544 = vmatpush1.bf16.msra.mxu0 %v5443
    %5545 = vmatprep.subr.bf16.mxu0 0
    %5546 = vmatpush1.bf16.msra.mxu0 %v5442
    %5547 = vmatprep.subr.bf16.mxu0 0
    %5548 = vmatpush1.bf16.msra.mxu0 %v5441
    %5549 = vmatprep.subr.bf16.mxu0 0
    %5550 = vmatpush1.bf16.msra.mxu0 %v5440
    %5551 = vmatprep.subr.bf16.mxu0 0
    %5552 = vmatpush1.bf16.msra.mxu0 %v5439
    %5553 = vmatprep.subr.bf16.mxu0 0
    %5554 = vmatpush2.bf16.msra.mxu0 0
    %5555 = vmatprep.subr.bf16.mxu0 0
    %5556 = vmatpush2.bf16.msra.mxu0 0
    %5557 = vmatprep.subr.bf16.mxu0 0
    %5558 = vmatpush2.bf16.msra.mxu0 0
    %5559 = vmatprep.subr.bf16.mxu0 0
    %5560 = vmatpush2.bf16.msra.mxu0 0
    %5561 = vmatprep.subr.bf16.mxu0 0
    %5562 = vmatpush2.bf16.msra.mxu0 0
    %5563 = vmatprep.subr.bf16.mxu0 0
    %5564 = vmatpush2.bf16.msra.mxu0 0
    %5565 = vmatprep.subr.bf16.mxu0 0
    %5566 = vmatpush2.bf16.msra.mxu0 0
    %5567 = vmatprep.subr.bf16.mxu0 0
    %5568 = vmatpush2.bf16.msra.mxu0 0
    %5569 = vmatprep.mubr.bf16.mxu0 0
    %5570 = vmatmul.mubr.bf16.gmra.mxu0 %v2034
    %v5571 = vpop.f32.mrf.mxu0
    %v5572 = vadd.f32 0.0, %v5571
    %v5573 = vpop.f32.mrf.mxu0
    %v5574 = vpop.f32.mrf.mxu0
    %v5575 = vpop.f32.mrf.mxu0
    %5576 = vdwg.mxu0
    %v5577 = vadd.f32 %v5137, %v5572
    %5578 = vmatprep.subr.bf16.mxu0 0
    %5579 = vmatpush1.bf16.msra.mxu0 %v5446
    %5580 = vmatprep.subr.bf16.mxu0 0
    %5581 = vmatpush1.bf16.msra.mxu0 %v5445
    %5582 = vmatprep.subr.bf16.mxu0 0
    %5583 = vmatpush1.bf16.msra.mxu0 %v5444
    %5584 = vmatprep.subr.bf16.mxu0 0
    %5585 = vmatpush1.bf16.msra.mxu0 %v5443
    %5586 = vmatprep.subr.bf16.mxu0 0
    %5587 = vmatpush1.bf16.msra.mxu0 %v5442
    %5588 = vmatprep.subr.bf16.mxu0 0
    %5589 = vmatpush1.bf16.msra.mxu0 %v5441
    %5590 = vmatprep.subr.bf16.mxu0 0
    %5591 = vmatpush1.bf16.msra.mxu0 %v5440
    %5592 = vmatprep.subr.bf16.mxu0 0
    %5593 = vmatpush1.bf16.msra.mxu0 %v5439
    %5594 = vmatprep.subr.bf16.mxu0 0
    %5595 = vmatpush2.bf16.msra.mxu0 0
    %5596 = vmatprep.subr.bf16.mxu0 0
    %5597 = vmatpush2.bf16.msra.mxu0 0
    %5598 = vmatprep.subr.bf16.mxu0 0
    %5599 = vmatpush2.bf16.msra.mxu0 0
    %5600 = vmatprep.subr.bf16.mxu0 0
    %5601 = vmatpush2.bf16.msra.mxu0 0
    %5602 = vmatprep.subr.bf16.mxu0 0
    %5603 = vmatpush2.bf16.msra.mxu0 0
    %5604 = vmatprep.subr.bf16.mxu0 0
    %5605 = vmatpush2.bf16.msra.mxu0 0
    %5606 = vmatprep.subr.bf16.mxu0 0
    %5607 = vmatpush2.bf16.msra.mxu0 0
    %5608 = vmatprep.subr.bf16.mxu0 0
    %5609 = vmatpush2.bf16.msra.mxu0 0
    %5610 = vmatprep.mubr.bf16.mxu0 0
    %5611 = vmatmul.mubr.bf16.gmra.mxu0 %v1129
    %v5612 = vpop.f32.mrf.mxu0
    %v5613 = vadd.f32 0.0, %v5612
    %v5614 = vpop.f32.mrf.mxu0
    %v5615 = vpop.f32.mrf.mxu0
    %v5616 = vpop.f32.mrf.mxu0
    %5617 = vdwg.mxu0
    %v5618 = vadd.f32 %v5178, %v5613
    %5619 = vmatprep.subr.bf16.mxu0 0
    %5620 = vmatpush1.bf16.msra.mxu0 %v5446
    %5621 = vmatprep.subr.bf16.mxu0 0
    %5622 = vmatpush1.bf16.msra.mxu0 %v5445
    %5623 = vmatprep.subr.bf16.mxu0 0
    %5624 = vmatpush1.bf16.msra.mxu0 %v5444
    %5625 = vmatprep.subr.bf16.mxu0 0
    %5626 = vmatpush1.bf16.msra.mxu0 %v5443
    %5627 = vmatprep.subr.bf16.mxu0 0
    %5628 = vmatpush1.bf16.msra.mxu0 %v5442
    %5629 = vmatprep.subr.bf16.mxu0 0
    %5630 = vmatpush1.bf16.msra.mxu0 %v5441
    %5631 = vmatprep.subr.bf16.mxu0 0
    %5632 = vmatpush1.bf16.msra.mxu0 %v5440
    %5633 = vmatprep.subr.bf16.mxu0 0
    %5634 = vmatpush1.bf16.msra.mxu0 %v5439
    %5635 = vmatprep.subr.bf16.mxu0 0
    %5636 = vmatpush2.bf16.msra.mxu0 0
    %5637 = vmatprep.subr.bf16.mxu0 0
    %5638 = vmatpush2.bf16.msra.mxu0 0
    %5639 = vmatprep.subr.bf16.mxu0 0
    %5640 = vmatpush2.bf16.msra.mxu0 0
    %5641 = vmatprep.subr.bf16.mxu0 0
    %5642 = vmatpush2.bf16.msra.mxu0 0
    %5643 = vmatprep.subr.bf16.mxu0 0
    %5644 = vmatpush2.bf16.msra.mxu0 0
    %5645 = vmatprep.subr.bf16.mxu0 0
    %5646 = vmatpush2.bf16.msra.mxu0 0
    %5647 = vmatprep.subr.bf16.mxu0 0
    %5648 = vmatpush2.bf16.msra.mxu0 0
    %5649 = vmatprep.subr.bf16.mxu0 0
    %5650 = vmatpush2.bf16.msra.mxu0 0
    %5651 = vmatprep.mubr.bf16.mxu0 0
    %5652 = vmatmul.mubr.bf16.gmra.mxu0 %v1220
    %v5653 = vpop.f32.mrf.mxu0
    %v5654 = vadd.f32 0.0, %v5653
    %v5655 = vpop.f32.mrf.mxu0
    %v5656 = vpop.f32.mrf.mxu0
    %v5657 = vpop.f32.mrf.mxu0
    %5658 = vdwg.mxu0
    %v5659 = vadd.f32 %v5219, %v5654
    %5660 = vmatprep.subr.bf16.mxu0 0
    %5661 = vmatpush1.bf16.msra.mxu0 %v5446
    %5662 = vmatprep.subr.bf16.mxu0 0
    %5663 = vmatpush1.bf16.msra.mxu0 %v5445
    %5664 = vmatprep.subr.bf16.mxu0 0
    %5665 = vmatpush1.bf16.msra.mxu0 %v5444
    %5666 = vmatprep.subr.bf16.mxu0 0
    %5667 = vmatpush1.bf16.msra.mxu0 %v5443
    %5668 = vmatprep.subr.bf16.mxu0 0
    %5669 = vmatpush1.bf16.msra.mxu0 %v5442
    %5670 = vmatprep.subr.bf16.mxu0 0
    %5671 = vmatpush1.bf16.msra.mxu0 %v5441
    %5672 = vmatprep.subr.bf16.mxu0 0
    %5673 = vmatpush1.bf16.msra.mxu0 %v5440
    %5674 = vmatprep.subr.bf16.mxu0 0
    %5675 = vmatpush1.bf16.msra.mxu0 %v5439
    %5676 = vmatprep.subr.bf16.mxu0 0
    %5677 = vmatpush2.bf16.msra.mxu0 0
    %5678 = vmatprep.subr.bf16.mxu0 0
    %5679 = vmatpush2.bf16.msra.mxu0 0
    %5680 = vmatprep.subr.bf16.mxu0 0
    %5681 = vmatpush2.bf16.msra.mxu0 0
    %5682 = vmatprep.subr.bf16.mxu0 0
    %5683 = vmatpush2.bf16.msra.mxu0 0
    %5684 = vmatprep.subr.bf16.mxu0 0
    %5685 = vmatpush2.bf16.msra.mxu0 0
    %5686 = vmatprep.subr.bf16.mxu0 0
    %5687 = vmatpush2.bf16.msra.mxu0 0
    %5688 = vmatprep.subr.bf16.mxu0 0
    %5689 = vmatpush2.bf16.msra.mxu0 0
    %5690 = vmatprep.subr.bf16.mxu0 0
    %5691 = vmatpush2.bf16.msra.mxu0 0
    %5692 = vmatprep.mubr.bf16.mxu0 0
    %5693 = vmatmul.mubr.bf16.gmra.mxu0 %v2163
    %v5694 = vpop.f32.mrf.mxu0
    %v5695 = vadd.f32 0.0, %v5694
    %v5696 = vpop.f32.mrf.mxu0
    %v5697 = vpop.f32.mrf.mxu0
    %v5698 = vpop.f32.mrf.mxu0
    %5699 = vdwg.mxu0
    %v5700 = vadd.f32 %v5260, %v5695
    %5701 = vmatprep.subr.bf16.mxu0 0
    %5702 = vmatpush1.bf16.msra.mxu0 %v5446
    %5703 = vmatprep.subr.bf16.mxu0 0
    %5704 = vmatpush1.bf16.msra.mxu0 %v5445
    %5705 = vmatprep.subr.bf16.mxu0 0
    %5706 = vmatpush1.bf16.msra.mxu0 %v5444
    %5707 = vmatprep.subr.bf16.mxu0 0
    %5708 = vmatpush1.bf16.msra.mxu0 %v5443
    %5709 = vmatprep.subr.bf16.mxu0 0
    %5710 = vmatpush1.bf16.msra.mxu0 %v5442
    %5711 = vmatprep.subr.bf16.mxu0 0
    %5712 = vmatpush1.bf16.msra.mxu0 %v5441
    %5713 = vmatprep.subr.bf16.mxu0 0
    %5714 = vmatpush1.bf16.msra.mxu0 %v5440
    %5715 = vmatprep.subr.bf16.mxu0 0
    %5716 = vmatpush1.bf16.msra.mxu0 %v5439
    %5717 = vmatprep.subr.bf16.mxu0 0
    %5718 = vmatpush2.bf16.msra.mxu0 0
    %5719 = vmatprep.subr.bf16.mxu0 0
    %5720 = vmatpush2.bf16.msra.mxu0 0
    %5721 = vmatprep.subr.bf16.mxu0 0
    %5722 = vmatpush2.bf16.msra.mxu0 0
    %5723 = vmatprep.subr.bf16.mxu0 0
    %5724 = vmatpush2.bf16.msra.mxu0 0
    %5725 = vmatprep.subr.bf16.mxu0 0
    %5726 = vmatpush2.bf16.msra.mxu0 0
    %5727 = vmatprep.subr.bf16.mxu0 0
    %5728 = vmatpush2.bf16.msra.mxu0 0
    %5729 = vmatprep.subr.bf16.mxu0 0
    %5730 = vmatpush2.bf16.msra.mxu0 0
    %5731 = vmatprep.subr.bf16.mxu0 0
    %5732 = vmatpush2.bf16.msra.mxu0 0
    %5733 = vmatprep.mubr.bf16.mxu0 0
    %5734 = vmatmul.mubr.bf16.gmra.mxu0 %v4860
    %v5735 = vpop.f32.mrf.mxu0
    %v5736 = vadd.f32 0.0, %v5735
    %v5737 = vpop.f32.mrf.mxu0
    %v5738 = vpop.f32.mrf.mxu0
    %v5739 = vpop.f32.mrf.mxu0
    %5740 = vdwg.mxu0
    %v5741 = vadd.f32 %v5301, %v5736
    %5742 = vmatprep.subr.bf16.mxu0 0
    %5743 = vmatpush1.bf16.msra.mxu0 %v5446
    %5744 = vmatprep.subr.bf16.mxu0 0
    %5745 = vmatpush1.bf16.msra.mxu0 %v5445
    %5746 = vmatprep.subr.bf16.mxu0 0
    %5747 = vmatpush1.bf16.msra.mxu0 %v5444
    %5748 = vmatprep.subr.bf16.mxu0 0
    %5749 = vmatpush1.bf16.msra.mxu0 %v5443
    %5750 = vmatprep.subr.bf16.mxu0 0
    %5751 = vmatpush1.bf16.msra.mxu0 %v5442
    %5752 = vmatprep.subr.bf16.mxu0 0
    %5753 = vmatpush1.bf16.msra.mxu0 %v5441
    %5754 = vmatprep.subr.bf16.mxu0 0
    %5755 = vmatpush1.bf16.msra.mxu0 %v5440
    %5756 = vmatprep.subr.bf16.mxu0 0
    %5757 = vmatpush1.bf16.msra.mxu0 %v5439
    %5758 = vmatprep.subr.bf16.mxu0 0
    %5759 = vmatpush2.bf16.msra.mxu0 0
    %5760 = vmatprep.subr.bf16.mxu0 0
    %5761 = vmatpush2.bf16.msra.mxu0 0
    %5762 = vmatprep.subr.bf16.mxu0 0
    %5763 = vmatpush2.bf16.msra.mxu0 0
    %5764 = vmatprep.subr.bf16.mxu0 0
    %5765 = vmatpush2.bf16.msra.mxu0 0
    %5766 = vmatprep.subr.bf16.mxu0 0
    %5767 = vmatpush2.bf16.msra.mxu0 0
    %5768 = vmatprep.subr.bf16.mxu0 0
    %5769 = vmatpush2.bf16.msra.mxu0 0
    %5770 = vmatprep.subr.bf16.mxu0 0
    %5771 = vmatpush2.bf16.msra.mxu0 0
    %5772 = vmatprep.subr.bf16.mxu0 0
    %5773 = vmatpush2.bf16.msra.mxu0 0
    %5774 = vmatprep.mubr.bf16.mxu0 0
    %5775 = vmatmul.mubr.bf16.gmra.mxu0 %v4907
    %v5776 = vpop.f32.mrf.mxu0
    %v5777 = vadd.f32 0.0, %v5776
    %v5778 = vpop.f32.mrf.mxu0
    %v5779 = vpop.f32.mrf.mxu0
    %v5780 = vpop.f32.mrf.mxu0
    %5781 = vdwg.mxu0
    %v5782 = vadd.f32 %v5342, %v5777
    %v5783 = vld [vmem:[#allocation2 + $0x34] sm:$0x8]
    %v5785 = vunpack.c.l.b16 %v5783
    %v5786 = vpack.c.b16 %v5785, %v5785
    %v5787 = vrot.slane %v5786, 3
    %5789 = vmatprep.subr.bf16.mxu0 0
    %5790 = vmatpush1.bf16.msra.mxu0 %v5446
    %5791 = vmatprep.subr.bf16.mxu0 0
    %5792 = vmatpush1.bf16.msra.mxu0 %v5445
    %5793 = vmatprep.subr.bf16.mxu0 0
    %5794 = vmatpush1.bf16.msra.mxu0 %v5444
    %5795 = vmatprep.subr.bf16.mxu0 0
    %5796 = vmatpush1.bf16.msra.mxu0 %v5443
    %5797 = vmatprep.subr.bf16.mxu0 0
    %5798 = vmatpush1.bf16.msra.mxu0 %v5442
    %5799 = vmatprep.subr.bf16.mxu0 0
    %5800 = vmatpush1.bf16.msra.mxu0 %v5441
    %5801 = vmatprep.subr.bf16.mxu0 0
    %5802 = vmatpush1.bf16.msra.mxu0 %v5440
    %5803 = vmatprep.subr.bf16.mxu0 0
    %5804 = vmatpush1.bf16.msra.mxu0 %v5439
    %5805 = vmatprep.subr.bf16.mxu0 0
    %5806 = vmatpush2.bf16.msra.mxu0 0
    %5807 = vmatprep.subr.bf16.mxu0 0
    %5808 = vmatpush2.bf16.msra.mxu0 0
    %5809 = vmatprep.subr.bf16.mxu0 0
    %5810 = vmatpush2.bf16.msra.mxu0 0
    %5811 = vmatprep.subr.bf16.mxu0 0
    %5812 = vmatpush2.bf16.msra.mxu0 0
    %5813 = vmatprep.subr.bf16.mxu0 0
    %5814 = vmatpush2.bf16.msra.mxu0 0
    %5815 = vmatprep.subr.bf16.mxu0 0
    %5816 = vmatpush2.bf16.msra.mxu0 0
    %5817 = vmatprep.subr.bf16.mxu0 0
    %5818 = vmatpush2.bf16.msra.mxu0 0
    %5819 = vmatprep.subr.bf16.mxu0 0
    %5820 = vmatpush2.bf16.msra.mxu0 0
    %5821 = vmatprep.mubr.bf16.mxu0 0
    %5822 = vmatmul.mubr.bf16.gmra.mxu0 %v5787
    %v5823 = vpop.f32.mrf.mxu0
    %v5824 = vadd.f32 0.0, %v5823
    %v5825 = vpop.f32.mrf.mxu0
    %v5826 = vpop.f32.mrf.mxu0
    %v5827 = vpop.f32.mrf.mxu0
    %5828 = vdwg.mxu0
    %v5829 = vadd.f32 %v5389, %v5824
    %s5830 = scalar_lea.vmem %s3, 768
    %v5831 = vld [vmem:[%s5830] sm:$0xf]
    %v5832 = vld [vmem:[%s5830 + $0x4] sm:$0xf]
    %v5833 = vld [vmem:[%s5830 + $0x8] sm:$0xf]
    %v5834 = vld [vmem:[%s5830 + $0xc] sm:$0xf]
    %v5835 = vld [vmem:[%s5830 + $0x10] sm:$0xf]
    %v5836 = vld [vmem:[%s5830 + $0x14] sm:$0xf]
    %v5837 = vld [vmem:[%s5830 + $0x18] sm:$0xf]
    %v5838 = vld [vmem:[%s5830 + $0x1c] sm:$0xf]
    %v5839 = vld [vmem:[%s5830 + $0x20] sm:$0xf]
    %v5840 = vld [vmem:[%s5830 + $0x24] sm:$0xf]
    %v5841 = vld [vmem:[%s5830 + $0x28] sm:$0xf]
    %v5842 = vld [vmem:[%s5830 + $0x2c] sm:$0xf]
    %v5843 = vld [vmem:[%s5830 + $0x30] sm:$0xf]
    %v5844 = vld [vmem:[%s5830 + $0x34] sm:$0xf]
    %v5845 = vld [vmem:[%s5830 + $0x38] sm:$0xf]
    %v5846 = vld [vmem:[%s5830 + $0x3c] sm:$0xf]
    %v5863 = vunpack.c.l.b16 %v5831
    %v5864 = vunpack.c.l.b16 %v5832
    %v5865 = vunpack.c.l.b16 %v5833
    %v5866 = vunpack.c.l.b16 %v5834
    %v5867 = vunpack.c.l.b16 %v5835
    %v5868 = vunpack.c.l.b16 %v5836
    %v5869 = vunpack.c.l.b16 %v5837
    %v5870 = vunpack.c.l.b16 %v5838
    %v5871 = vunpack.c.l.b16 %v5839
    %v5872 = vunpack.c.l.b16 %v5840
    %v5873 = vunpack.c.l.b16 %v5841
    %v5874 = vunpack.c.l.b16 %v5842
    %v5875 = vunpack.c.l.b16 %v5843
    %v5876 = vunpack.c.l.b16 %v5844
    %v5877 = vunpack.c.l.b16 %v5845
    %v5878 = vunpack.c.l.b16 %v5846
    %v5879 = vpack.c.b16 %v5864, %v5863
    %v5880 = vpack.c.b16 %v5866, %v5865
    %v5881 = vpack.c.b16 %v5868, %v5867
    %v5882 = vpack.c.b16 %v5870, %v5869
    %v5883 = vpack.c.b16 %v5872, %v5871
    %v5884 = vpack.c.b16 %v5874, %v5873
    %v5885 = vpack.c.b16 %v5876, %v5875
    %v5886 = vpack.c.b16 %v5878, %v5877
    %5895 = vmatprep.subr.bf16.mxu0 0
    %5896 = vmatpush1.bf16.msra.mxu0 %v5886
    %5897 = vmatprep.subr.bf16.mxu0 0
    %5898 = vmatpush1.bf16.msra.mxu0 %v5885
    %5899 = vmatprep.subr.bf16.mxu0 0
    %5900 = vmatpush1.bf16.msra.mxu0 %v5884
    %5901 = vmatprep.subr.bf16.mxu0 0
    %5902 = vmatpush1.bf16.msra.mxu0 %v5883
    %5903 = vmatprep.subr.bf16.mxu0 0
    %5904 = vmatpush1.bf16.msra.mxu0 %v5882
    %5905 = vmatprep.subr.bf16.mxu0 0
    %5906 = vmatpush1.bf16.msra.mxu0 %v5881
    %5907 = vmatprep.subr.bf16.mxu0 0
    %5908 = vmatpush1.bf16.msra.mxu0 %v5880
    %5909 = vmatprep.subr.bf16.mxu0 0
    %5910 = vmatpush1.bf16.msra.mxu0 %v5879
    %5911 = vmatprep.subr.bf16.mxu0 0
    %5912 = vmatpush2.bf16.msra.mxu0 0
    %5913 = vmatprep.subr.bf16.mxu0 0
    %5914 = vmatpush2.bf16.msra.mxu0 0
    %5915 = vmatprep.subr.bf16.mxu0 0
    %5916 = vmatpush2.bf16.msra.mxu0 0
    %5917 = vmatprep.subr.bf16.mxu0 0
    %5918 = vmatpush2.bf16.msra.mxu0 0
    %5919 = vmatprep.subr.bf16.mxu0 0
    %5920 = vmatpush2.bf16.msra.mxu0 0
    %5921 = vmatprep.subr.bf16.mxu0 0
    %5922 = vmatpush2.bf16.msra.mxu0 0
    %5923 = vmatprep.subr.bf16.mxu0 0
    %5924 = vmatpush2.bf16.msra.mxu0 0
    %5925 = vmatprep.subr.bf16.mxu0 0
    %5926 = vmatpush2.bf16.msra.mxu0 0
    %5927 = vmatprep.mubr.bf16.mxu0 0
    %5928 = vmatmul.mubr.bf16.gmra.mxu0 %v2402
    %v5929 = vpop.f32.mrf.mxu0
    %v5930 = vadd.f32 0.0, %v5929
    %v5931 = vpop.f32.mrf.mxu0
    %v5932 = vpop.f32.mrf.mxu0
    %v5933 = vpop.f32.mrf.mxu0
    %5934 = vdwg.mxu0
    %v5935 = vadd.f32 %v5495, %v5930
    %5936 = vmatprep.subr.bf16.mxu0 0
    %5937 = vmatpush1.bf16.msra.mxu0 %v5886
    %5938 = vmatprep.subr.bf16.mxu0 0
    %5939 = vmatpush1.bf16.msra.mxu0 %v5885
    %5940 = vmatprep.subr.bf16.mxu0 0
    %5941 = vmatpush1.bf16.msra.mxu0 %v5884
    %5942 = vmatprep.subr.bf16.mxu0 0
    %5943 = vmatpush1.bf16.msra.mxu0 %v5883
    %5944 = vmatprep.subr.bf16.mxu0 0
    %5945 = vmatpush1.bf16.msra.mxu0 %v5882
    %5946 = vmatprep.subr.bf16.mxu0 0
    %5947 = vmatpush1.bf16.msra.mxu0 %v5881
    %5948 = vmatprep.subr.bf16.mxu0 0
    %5949 = vmatpush1.bf16.msra.mxu0 %v5880
    %5950 = vmatprep.subr.bf16.mxu0 0
    %5951 = vmatpush1.bf16.msra.mxu0 %v5879
    %5952 = vmatprep.subr.bf16.mxu0 0
    %5953 = vmatpush2.bf16.msra.mxu0 0
    %5954 = vmatprep.subr.bf16.mxu0 0
    %5955 = vmatpush2.bf16.msra.mxu0 0
    %5956 = vmatprep.subr.bf16.mxu0 0
    %5957 = vmatpush2.bf16.msra.mxu0 0
    %5958 = vmatprep.subr.bf16.mxu0 0
    %5959 = vmatpush2.bf16.msra.mxu0 0
    %5960 = vmatprep.subr.bf16.mxu0 0
    %5961 = vmatpush2.bf16.msra.mxu0 0
    %5962 = vmatprep.subr.bf16.mxu0 0
    %5963 = vmatpush2.bf16.msra.mxu0 0
    %5964 = vmatprep.subr.bf16.mxu0 0
    %5965 = vmatpush2.bf16.msra.mxu0 0
    %5966 = vmatprep.subr.bf16.mxu0 0
    %5967 = vmatpush2.bf16.msra.mxu0 0
    %5968 = vmatprep.mubr.bf16.mxu0 0
    %5969 = vmatmul.mubr.bf16.gmra.mxu0 %v2448
    %v5970 = vpop.f32.mrf.mxu0
    %v5971 = vadd.f32 0.0, %v5970
    %v5972 = vpop.f32.mrf.mxu0
    %v5973 = vpop.f32.mrf.mxu0
    %v5974 = vpop.f32.mrf.mxu0
    %5975 = vdwg.mxu0
    %v5976 = vadd.f32 %v5536, %v5971
    %5977 = vmatprep.subr.bf16.mxu0 0
    %5978 = vmatpush1.bf16.msra.mxu0 %v5886
    %5979 = vmatprep.subr.bf16.mxu0 0
    %5980 = vmatpush1.bf16.msra.mxu0 %v5885
    %5981 = vmatprep.subr.bf16.mxu0 0
    %5982 = vmatpush1.bf16.msra.mxu0 %v5884
    %5983 = vmatprep.subr.bf16.mxu0 0
    %5984 = vmatpush1.bf16.msra.mxu0 %v5883
    %5985 = vmatprep.subr.bf16.mxu0 0
    %5986 = vmatpush1.bf16.msra.mxu0 %v5882
    %5987 = vmatprep.subr.bf16.mxu0 0
    %5988 = vmatpush1.bf16.msra.mxu0 %v5881
    %5989 = vmatprep.subr.bf16.mxu0 0
    %5990 = vmatpush1.bf16.msra.mxu0 %v5880
    %5991 = vmatprep.subr.bf16.mxu0 0
    %5992 = vmatpush1.bf16.msra.mxu0 %v5879
    %5993 = vmatprep.subr.bf16.mxu0 0
    %5994 = vmatpush2.bf16.msra.mxu0 0
    %5995 = vmatprep.subr.bf16.mxu0 0
    %5996 = vmatpush2.bf16.msra.mxu0 0
    %5997 = vmatprep.subr.bf16.mxu0 0
    %5998 = vmatpush2.bf16.msra.mxu0 0
    %5999 = vmatprep.subr.bf16.mxu0 0
    %6000 = vmatpush2.bf16.msra.mxu0 0
    %6001 = vmatprep.subr.bf16.mxu0 0
    %6002 = vmatpush2.bf16.msra.mxu0 0
    %6003 = vmatprep.subr.bf16.mxu0 0
    %6004 = vmatpush2.bf16.msra.mxu0 0
    %6005 = vmatprep.subr.bf16.mxu0 0
    %6006 = vmatpush2.bf16.msra.mxu0 0
    %6007 = vmatprep.subr.bf16.mxu0 0
    %6008 = vmatpush2.bf16.msra.mxu0 0
    %6009 = vmatprep.mubr.bf16.mxu0 0
    %6010 = vmatmul.mubr.bf16.gmra.mxu0 %v2491
    %v6011 = vpop.f32.mrf.mxu0
    %v6012 = vadd.f32 0.0, %v6011
    %v6013 = vpop.f32.mrf.mxu0
    %v6014 = vpop.f32.mrf.mxu0
    %v6015 = vpop.f32.mrf.mxu0
    %6016 = vdwg.mxu0
    %v6017 = vadd.f32 %v5577, %v6012
    %6018 = vmatprep.subr.bf16.mxu0 0
    %6019 = vmatpush1.bf16.msra.mxu0 %v5886
    %6020 = vmatprep.subr.bf16.mxu0 0
    %6021 = vmatpush1.bf16.msra.mxu0 %v5885
    %6022 = vmatprep.subr.bf16.mxu0 0
    %6023 = vmatpush1.bf16.msra.mxu0 %v5884
    %6024 = vmatprep.subr.bf16.mxu0 0
    %6025 = vmatpush1.bf16.msra.mxu0 %v5883
    %6026 = vmatprep.subr.bf16.mxu0 0
    %6027 = vmatpush1.bf16.msra.mxu0 %v5882
    %6028 = vmatprep.subr.bf16.mxu0 0
    %6029 = vmatpush1.bf16.msra.mxu0 %v5881
    %6030 = vmatprep.subr.bf16.mxu0 0
    %6031 = vmatpush1.bf16.msra.mxu0 %v5880
    %6032 = vmatprep.subr.bf16.mxu0 0
    %6033 = vmatpush1.bf16.msra.mxu0 %v5879
    %6034 = vmatprep.subr.bf16.mxu0 0
    %6035 = vmatpush2.bf16.msra.mxu0 0
    %6036 = vmatprep.subr.bf16.mxu0 0
    %6037 = vmatpush2.bf16.msra.mxu0 0
    %6038 = vmatprep.subr.bf16.mxu0 0
    %6039 = vmatpush2.bf16.msra.mxu0 0
    %6040 = vmatprep.subr.bf16.mxu0 0
    %6041 = vmatpush2.bf16.msra.mxu0 0
    %6042 = vmatprep.subr.bf16.mxu0 0
    %6043 = vmatpush2.bf16.msra.mxu0 0
    %6044 = vmatprep.subr.bf16.mxu0 0
    %6045 = vmatpush2.bf16.msra.mxu0 0
    %6046 = vmatprep.subr.bf16.mxu0 0
    %6047 = vmatpush2.bf16.msra.mxu0 0
    %6048 = vmatprep.subr.bf16.mxu0 0
    %6049 = vmatpush2.bf16.msra.mxu0 0
    %6050 = vmatprep.mubr.bf16.mxu0 0
    %6051 = vmatmul.mubr.bf16.gmra.mxu0 %v2533
    %v6052 = vpop.f32.mrf.mxu0
    %v6053 = vadd.f32 0.0, %v6052
    %v6054 = vpop.f32.mrf.mxu0
    %v6055 = vpop.f32.mrf.mxu0
    %v6056 = vpop.f32.mrf.mxu0
    %6057 = vdwg.mxu0
    %v6058 = vadd.f32 %v5618, %v6053
    %6059 = vmatprep.subr.bf16.mxu0 0
    %6060 = vmatpush1.bf16.msra.mxu0 %v5886
    %6061 = vmatprep.subr.bf16.mxu0 0
    %6062 = vmatpush1.bf16.msra.mxu0 %v5885
    %6063 = vmatprep.subr.bf16.mxu0 0
    %6064 = vmatpush1.bf16.msra.mxu0 %v5884
    %6065 = vmatprep.subr.bf16.mxu0 0
    %6066 = vmatpush1.bf16.msra.mxu0 %v5883
    %6067 = vmatprep.subr.bf16.mxu0 0
    %6068 = vmatpush1.bf16.msra.mxu0 %v5882
    %6069 = vmatprep.subr.bf16.mxu0 0
    %6070 = vmatpush1.bf16.msra.mxu0 %v5881
    %6071 = vmatprep.subr.bf16.mxu0 0
    %6072 = vmatpush1.bf16.msra.mxu0 %v5880
    %6073 = vmatprep.subr.bf16.mxu0 0
    %6074 = vmatpush1.bf16.msra.mxu0 %v5879
    %6075 = vmatprep.subr.bf16.mxu0 0
    %6076 = vmatpush2.bf16.msra.mxu0 0
    %6077 = vmatprep.subr.bf16.mxu0 0
    %6078 = vmatpush2.bf16.msra.mxu0 0
    %6079 = vmatprep.subr.bf16.mxu0 0
    %6080 = vmatpush2.bf16.msra.mxu0 0
    %6081 = vmatprep.subr.bf16.mxu0 0
    %6082 = vmatpush2.bf16.msra.mxu0 0
    %6083 = vmatprep.subr.bf16.mxu0 0
    %6084 = vmatpush2.bf16.msra.mxu0 0
    %6085 = vmatprep.subr.bf16.mxu0 0
    %6086 = vmatpush2.bf16.msra.mxu0 0
    %6087 = vmatprep.subr.bf16.mxu0 0
    %6088 = vmatpush2.bf16.msra.mxu0 0
    %6089 = vmatprep.subr.bf16.mxu0 0
    %6090 = vmatpush2.bf16.msra.mxu0 0
    %6091 = vmatprep.mubr.bf16.mxu0 0
    %6092 = vmatmul.mubr.bf16.gmra.mxu0 %v2579
    %v6093 = vpop.f32.mrf.mxu0
    %v6094 = vadd.f32 0.0, %v6093
    %v6095 = vpop.f32.mrf.mxu0
    %v6096 = vpop.f32.mrf.mxu0
    %v6097 = vpop.f32.mrf.mxu0
    %6098 = vdwg.mxu0
    %v6099 = vadd.f32 %v5659, %v6094
    %6100 = vmatprep.subr.bf16.mxu0 0
    %6101 = vmatpush1.bf16.msra.mxu0 %v5886
    %6102 = vmatprep.subr.bf16.mxu0 0
    %6103 = vmatpush1.bf16.msra.mxu0 %v5885
    %6104 = vmatprep.subr.bf16.mxu0 0
    %6105 = vmatpush1.bf16.msra.mxu0 %v5884
    %6106 = vmatprep.subr.bf16.mxu0 0
    %6107 = vmatpush1.bf16.msra.mxu0 %v5883
    %6108 = vmatprep.subr.bf16.mxu0 0
    %6109 = vmatpush1.bf16.msra.mxu0 %v5882
    %6110 = vmatprep.subr.bf16.mxu0 0
    %6111 = vmatpush1.bf16.msra.mxu0 %v5881
    %6112 = vmatprep.subr.bf16.mxu0 0
    %6113 = vmatpush1.bf16.msra.mxu0 %v5880
    %6114 = vmatprep.subr.bf16.mxu0 0
    %6115 = vmatpush1.bf16.msra.mxu0 %v5879
    %6116 = vmatprep.subr.bf16.mxu0 0
    %6117 = vmatpush2.bf16.msra.mxu0 0
    %6118 = vmatprep.subr.bf16.mxu0 0
    %6119 = vmatpush2.bf16.msra.mxu0 0
    %6120 = vmatprep.subr.bf16.mxu0 0
    %6121 = vmatpush2.bf16.msra.mxu0 0
    %6122 = vmatprep.subr.bf16.mxu0 0
    %6123 = vmatpush2.bf16.msra.mxu0 0
    %6124 = vmatprep.subr.bf16.mxu0 0
    %6125 = vmatpush2.bf16.msra.mxu0 0
    %6126 = vmatprep.subr.bf16.mxu0 0
    %6127 = vmatpush2.bf16.msra.mxu0 0
    %6128 = vmatprep.subr.bf16.mxu0 0
    %6129 = vmatpush2.bf16.msra.mxu0 0
    %6130 = vmatprep.subr.bf16.mxu0 0
    %6131 = vmatpush2.bf16.msra.mxu0 0
    %6132 = vmatprep.mubr.bf16.mxu0 0
    %6133 = vmatmul.mubr.bf16.gmra.mxu0 %v2622
    %v6134 = vpop.f32.mrf.mxu0
    %v6135 = vadd.f32 0.0, %v6134
    %v6136 = vpop.f32.mrf.mxu0
    %v6137 = vpop.f32.mrf.mxu0
    %v6138 = vpop.f32.mrf.mxu0
    %6139 = vdwg.mxu0
    %v6140 = vadd.f32 %v5700, %v6135
    %v6141 = vld [vmem:[#allocation2 + $0x38] sm:$0x1]
    %6142 = vmatprep.subr.bf16.mxu0 0
    %6143 = vmatpush1.bf16.msra.mxu0 %v5886
    %6144 = vmatprep.subr.bf16.mxu0 0
    %6145 = vmatpush1.bf16.msra.mxu0 %v5885
    %6146 = vmatprep.subr.bf16.mxu0 0
    %6147 = vmatpush1.bf16.msra.mxu0 %v5884
    %6148 = vmatprep.subr.bf16.mxu0 0
    %6149 = vmatpush1.bf16.msra.mxu0 %v5883
    %6150 = vmatprep.subr.bf16.mxu0 0
    %6151 = vmatpush1.bf16.msra.mxu0 %v5882
    %6152 = vmatprep.subr.bf16.mxu0 0
    %6153 = vmatpush1.bf16.msra.mxu0 %v5881
    %6154 = vmatprep.subr.bf16.mxu0 0
    %6155 = vmatpush1.bf16.msra.mxu0 %v5880
    %6156 = vmatprep.subr.bf16.mxu0 0
    %6157 = vmatpush1.bf16.msra.mxu0 %v5879
    %6158 = vmatprep.subr.bf16.mxu0 0
    %6159 = vmatpush2.bf16.msra.mxu0 0
    %6160 = vmatprep.subr.bf16.mxu0 0
    %6161 = vmatpush2.bf16.msra.mxu0 0
    %6162 = vmatprep.subr.bf16.mxu0 0
    %6163 = vmatpush2.bf16.msra.mxu0 0
    %6164 = vmatprep.subr.bf16.mxu0 0
    %6165 = vmatpush2.bf16.msra.mxu0 0
    %6166 = vmatprep.subr.bf16.mxu0 0
    %6167 = vmatpush2.bf16.msra.mxu0 0
    %6168 = vmatprep.subr.bf16.mxu0 0
    %6169 = vmatpush2.bf16.msra.mxu0 0
    %6170 = vmatprep.subr.bf16.mxu0 0
    %6171 = vmatpush2.bf16.msra.mxu0 0
    %6172 = vmatprep.subr.bf16.mxu0 0
    %6173 = vmatpush2.bf16.msra.mxu0 0
    %6174 = vmatprep.mubr.bf16.mxu0 0
    %6175 = vmatmul.mubr.bf16.gmra.mxu0 %v6141
    %v6176 = vpop.f32.mrf.mxu0
    %v6177 = vadd.f32 0.0, %v6176
    %v6178 = vpop.f32.mrf.mxu0
    %v6179 = vpop.f32.mrf.mxu0
    %v6180 = vpop.f32.mrf.mxu0
    %6181 = vdwg.mxu0
    %v6182 = vadd.f32 %v5741, %v6177
    %v6183 = vld [vmem:[#allocation2 + $0x38] sm:$0x4]
    %v6185 = vunpack.c.l.b16 %v6183
    %v6186 = vpack.c.b16 %v6185, %v6185
    %v6187 = vrot.slane %v6186, 2
    %6189 = vmatprep.subr.bf16.mxu0 0
    %6190 = vmatpush1.bf16.msra.mxu0 %v5886
    %6191 = vmatprep.subr.bf16.mxu0 0
    %6192 = vmatpush1.bf16.msra.mxu0 %v5885
    %6193 = vmatprep.subr.bf16.mxu0 0
    %6194 = vmatpush1.bf16.msra.mxu0 %v5884
    %6195 = vmatprep.subr.bf16.mxu0 0
    %6196 = vmatpush1.bf16.msra.mxu0 %v5883
    %6197 = vmatprep.subr.bf16.mxu0 0
    %6198 = vmatpush1.bf16.msra.mxu0 %v5882
    %6199 = vmatprep.subr.bf16.mxu0 0
    %6200 = vmatpush1.bf16.msra.mxu0 %v5881
    %6201 = vmatprep.subr.bf16.mxu0 0
    %6202 = vmatpush1.bf16.msra.mxu0 %v5880
    %6203 = vmatprep.subr.bf16.mxu0 0
    %6204 = vmatpush1.bf16.msra.mxu0 %v5879
    %6205 = vmatprep.subr.bf16.mxu0 0
    %6206 = vmatpush2.bf16.msra.mxu0 0
    %6207 = vmatprep.subr.bf16.mxu0 0
    %6208 = vmatpush2.bf16.msra.mxu0 0
    %6209 = vmatprep.subr.bf16.mxu0 0
    %6210 = vmatpush2.bf16.msra.mxu0 0
    %6211 = vmatprep.subr.bf16.mxu0 0
    %6212 = vmatpush2.bf16.msra.mxu0 0
    %6213 = vmatprep.subr.bf16.mxu0 0
    %6214 = vmatpush2.bf16.msra.mxu0 0
    %6215 = vmatprep.subr.bf16.mxu0 0
    %6216 = vmatpush2.bf16.msra.mxu0 0
    %6217 = vmatprep.subr.bf16.mxu0 0
    %6218 = vmatpush2.bf16.msra.mxu0 0
    %6219 = vmatprep.subr.bf16.mxu0 0
    %6220 = vmatpush2.bf16.msra.mxu0 0
    %6221 = vmatprep.mubr.bf16.mxu0 0
    %6222 = vmatmul.mubr.bf16.gmra.mxu0 %v6187
    %v6223 = vpop.f32.mrf.mxu0
    %v6224 = vadd.f32 0.0, %v6223
    %v6225 = vpop.f32.mrf.mxu0
    %v6226 = vpop.f32.mrf.mxu0
    %v6227 = vpop.f32.mrf.mxu0
    %6228 = vdwg.mxu0
    %v6229 = vadd.f32 %v5782, %v6224
    %v6230 = vld [vmem:[#allocation2 + $0x3c] sm:$0x1]
    %6231 = vmatprep.subr.bf16.mxu0 0
    %6232 = vmatpush1.bf16.msra.mxu0 %v5886
    %6233 = vmatprep.subr.bf16.mxu0 0
    %6234 = vmatpush1.bf16.msra.mxu0 %v5885
    %6235 = vmatprep.subr.bf16.mxu0 0
    %6236 = vmatpush1.bf16.msra.mxu0 %v5884
    %6237 = vmatprep.subr.bf16.mxu0 0
    %6238 = vmatpush1.bf16.msra.mxu0 %v5883
    %6239 = vmatprep.subr.bf16.mxu0 0
    %6240 = vmatpush1.bf16.msra.mxu0 %v5882
    %6241 = vmatprep.subr.bf16.mxu0 0
    %6242 = vmatpush1.bf16.msra.mxu0 %v5881
    %6243 = vmatprep.subr.bf16.mxu0 0
    %6244 = vmatpush1.bf16.msra.mxu0 %v5880
    %6245 = vmatprep.subr.bf16.mxu0 0
    %6246 = vmatpush1.bf16.msra.mxu0 %v5879
    %6247 = vmatprep.subr.bf16.mxu0 0
    %6248 = vmatpush2.bf16.msra.mxu0 0
    %6249 = vmatprep.subr.bf16.mxu0 0
    %6250 = vmatpush2.bf16.msra.mxu0 0
    %6251 = vmatprep.subr.bf16.mxu0 0
    %6252 = vmatpush2.bf16.msra.mxu0 0
    %6253 = vmatprep.subr.bf16.mxu0 0
    %6254 = vmatpush2.bf16.msra.mxu0 0
    %6255 = vmatprep.subr.bf16.mxu0 0
    %6256 = vmatpush2.bf16.msra.mxu0 0
    %6257 = vmatprep.subr.bf16.mxu0 0
    %6258 = vmatpush2.bf16.msra.mxu0 0
    %6259 = vmatprep.subr.bf16.mxu0 0
    %6260 = vmatpush2.bf16.msra.mxu0 0
    %6261 = vmatprep.subr.bf16.mxu0 0
    %6262 = vmatpush2.bf16.msra.mxu0 0
    %6263 = vmatprep.mubr.bf16.mxu0 0
    %6264 = vmatmul.mubr.bf16.gmra.mxu0 %v6230
    %v6265 = vpop.f32.mrf.mxu0
    %v6266 = vadd.f32 0.0, %v6265
    %v6267 = vpop.f32.mrf.mxu0
    %v6268 = vpop.f32.mrf.mxu0
    %v6269 = vpop.f32.mrf.mxu0
    %6270 = vdwg.mxu0
    %v6271 = vadd.f32 %v5829, %v6266
    %s6272 = scalar_lea.vmem %s3, 832
    %v6273 = vld [vmem:[%s6272] sm:$0xf]
    %v6274 = vld [vmem:[%s6272 + $0x4] sm:$0xf]
    %v6275 = vld [vmem:[%s6272 + $0x8] sm:$0xf]
    %v6276 = vld [vmem:[%s6272 + $0xc] sm:$0xf]
    %v6277 = vld [vmem:[%s6272 + $0x10] sm:$0xf]
    %v6278 = vld [vmem:[%s6272 + $0x14] sm:$0xf]
    %v6279 = vld [vmem:[%s6272 + $0x18] sm:$0xf]
    %v6280 = vld [vmem:[%s6272 + $0x1c] sm:$0xf]
    %v6281 = vld [vmem:[%s6272 + $0x20] sm:$0xf]
    %v6282 = vld [vmem:[%s6272 + $0x24] sm:$0xf]
    %v6283 = vld [vmem:[%s6272 + $0x28] sm:$0xf]
    %v6284 = vld [vmem:[%s6272 + $0x2c] sm:$0xf]
    %v6285 = vld [vmem:[%s6272 + $0x30] sm:$0xf]
    %v6286 = vld [vmem:[%s6272 + $0x34] sm:$0xf]
    %v6287 = vld [vmem:[%s6272 + $0x38] sm:$0xf]
    %v6288 = vld [vmem:[%s6272 + $0x3c] sm:$0xf]
    %v6305 = vunpack.c.l.b16 %v6273
    %v6306 = vunpack.c.l.b16 %v6274
    %v6307 = vunpack.c.l.b16 %v6275
    %v6308 = vunpack.c.l.b16 %v6276
    %v6309 = vunpack.c.l.b16 %v6277
    %v6310 = vunpack.c.l.b16 %v6278
    %v6311 = vunpack.c.l.b16 %v6279
    %v6312 = vunpack.c.l.b16 %v6280
    %v6313 = vunpack.c.l.b16 %v6281
    %v6314 = vunpack.c.l.b16 %v6282
    %v6315 = vunpack.c.l.b16 %v6283
    %v6316 = vunpack.c.l.b16 %v6284
    %v6317 = vunpack.c.l.b16 %v6285
    %v6318 = vunpack.c.l.b16 %v6286
    %v6319 = vunpack.c.l.b16 %v6287
    %v6320 = vunpack.c.l.b16 %v6288
    %v6321 = vpack.c.b16 %v6306, %v6305
    %v6322 = vpack.c.b16 %v6308, %v6307
    %v6323 = vpack.c.b16 %v6310, %v6309
    %v6324 = vpack.c.b16 %v6312, %v6311
    %v6325 = vpack.c.b16 %v6314, %v6313
    %v6326 = vpack.c.b16 %v6316, %v6315
    %v6327 = vpack.c.b16 %v6318, %v6317
    %v6328 = vpack.c.b16 %v6320, %v6319
    %6337 = vmatprep.subr.bf16.mxu0 0
    %6338 = vmatpush1.bf16.msra.mxu0 %v6328
    %6339 = vmatprep.subr.bf16.mxu0 0
    %6340 = vmatpush1.bf16.msra.mxu0 %v6327
    %6341 = vmatprep.subr.bf16.mxu0 0
    %6342 = vmatpush1.bf16.msra.mxu0 %v6326
    %6343 = vmatprep.subr.bf16.mxu0 0
    %6344 = vmatpush1.bf16.msra.mxu0 %v6325
    %6345 = vmatprep.subr.bf16.mxu0 0
    %6346 = vmatpush1.bf16.msra.mxu0 %v6324
    %6347 = vmatprep.subr.bf16.mxu0 0
    %6348 = vmatpush1.bf16.msra.mxu0 %v6323
    %6349 = vmatprep.subr.bf16.mxu0 0
    %6350 = vmatpush1.bf16.msra.mxu0 %v6322
    %6351 = vmatprep.subr.bf16.mxu0 0
    %6352 = vmatpush1.bf16.msra.mxu0 %v6321
    %6353 = vmatprep.subr.bf16.mxu0 0
    %6354 = vmatpush2.bf16.msra.mxu0 0
    %6355 = vmatprep.subr.bf16.mxu0 0
    %6356 = vmatpush2.bf16.msra.mxu0 0
    %6357 = vmatprep.subr.bf16.mxu0 0
    %6358 = vmatpush2.bf16.msra.mxu0 0
    %6359 = vmatprep.subr.bf16.mxu0 0
    %6360 = vmatpush2.bf16.msra.mxu0 0
    %6361 = vmatprep.subr.bf16.mxu0 0
    %6362 = vmatpush2.bf16.msra.mxu0 0
    %6363 = vmatprep.subr.bf16.mxu0 0
    %6364 = vmatpush2.bf16.msra.mxu0 0
    %6365 = vmatprep.subr.bf16.mxu0 0
    %6366 = vmatpush2.bf16.msra.mxu0 0
    %6367 = vmatprep.subr.bf16.mxu0 0
    %6368 = vmatpush2.bf16.msra.mxu0 0
    %6369 = vmatprep.mubr.bf16.mxu0 0
    %6370 = vmatmul.mubr.bf16.gmra.mxu0 %v2874
    %v6371 = vpop.f32.mrf.mxu0
    %v6372 = vadd.f32 0.0, %v6371
    %v6373 = vpop.f32.mrf.mxu0
    %v6374 = vpop.f32.mrf.mxu0
    %v6375 = vpop.f32.mrf.mxu0
    %6376 = vdwg.mxu0
    %v6377 = vadd.f32 %v5935, %v6372
    %6378 = vmatprep.subr.bf16.mxu0 0
    %6379 = vmatpush1.bf16.msra.mxu0 %v6328
    %6380 = vmatprep.subr.bf16.mxu0 0
    %6381 = vmatpush1.bf16.msra.mxu0 %v6327
    %6382 = vmatprep.subr.bf16.mxu0 0
    %6383 = vmatpush1.bf16.msra.mxu0 %v6326
    %6384 = vmatprep.subr.bf16.mxu0 0
    %6385 = vmatpush1.bf16.msra.mxu0 %v6325
    %6386 = vmatprep.subr.bf16.mxu0 0
    %6387 = vmatpush1.bf16.msra.mxu0 %v6324
    %6388 = vmatprep.subr.bf16.mxu0 0
    %6389 = vmatpush1.bf16.msra.mxu0 %v6323
    %6390 = vmatprep.subr.bf16.mxu0 0
    %6391 = vmatpush1.bf16.msra.mxu0 %v6322
    %6392 = vmatprep.subr.bf16.mxu0 0
    %6393 = vmatpush1.bf16.msra.mxu0 %v6321
    %6394 = vmatprep.subr.bf16.mxu0 0
    %6395 = vmatpush2.bf16.msra.mxu0 0
    %6396 = vmatprep.subr.bf16.mxu0 0
    %6397 = vmatpush2.bf16.msra.mxu0 0
    %6398 = vmatprep.subr.bf16.mxu0 0
    %6399 = vmatpush2.bf16.msra.mxu0 0
    %6400 = vmatprep.subr.bf16.mxu0 0
    %6401 = vmatpush2.bf16.msra.mxu0 0
    %6402 = vmatprep.subr.bf16.mxu0 0
    %6403 = vmatpush2.bf16.msra.mxu0 0
    %6404 = vmatprep.subr.bf16.mxu0 0
    %6405 = vmatpush2.bf16.msra.mxu0 0
    %6406 = vmatprep.subr.bf16.mxu0 0
    %6407 = vmatpush2.bf16.msra.mxu0 0
    %6408 = vmatprep.subr.bf16.mxu0 0
    %6409 = vmatpush2.bf16.msra.mxu0 0
    %6410 = vmatprep.mubr.bf16.mxu0 0
    %6411 = vmatmul.mubr.bf16.gmra.mxu0 %v2921
    %v6412 = vpop.f32.mrf.mxu0
    %v6413 = vadd.f32 0.0, %v6412
    %v6414 = vpop.f32.mrf.mxu0
    %v6415 = vpop.f32.mrf.mxu0
    %v6416 = vpop.f32.mrf.mxu0
    %6417 = vdwg.mxu0
    %v6418 = vadd.f32 %v5976, %v6413
    %6419 = vmatprep.subr.bf16.mxu0 0
    %6420 = vmatpush1.bf16.msra.mxu0 %v6328
    %6421 = vmatprep.subr.bf16.mxu0 0
    %6422 = vmatpush1.bf16.msra.mxu0 %v6327
    %6423 = vmatprep.subr.bf16.mxu0 0
    %6424 = vmatpush1.bf16.msra.mxu0 %v6326
    %6425 = vmatprep.subr.bf16.mxu0 0
    %6426 = vmatpush1.bf16.msra.mxu0 %v6325
    %6427 = vmatprep.subr.bf16.mxu0 0
    %6428 = vmatpush1.bf16.msra.mxu0 %v6324
    %6429 = vmatprep.subr.bf16.mxu0 0
    %6430 = vmatpush1.bf16.msra.mxu0 %v6323
    %6431 = vmatprep.subr.bf16.mxu0 0
    %6432 = vmatpush1.bf16.msra.mxu0 %v6322
    %6433 = vmatprep.subr.bf16.mxu0 0
    %6434 = vmatpush1.bf16.msra.mxu0 %v6321
    %6435 = vmatprep.subr.bf16.mxu0 0
    %6436 = vmatpush2.bf16.msra.mxu0 0
    %6437 = vmatprep.subr.bf16.mxu0 0
    %6438 = vmatpush2.bf16.msra.mxu0 0
    %6439 = vmatprep.subr.bf16.mxu0 0
    %6440 = vmatpush2.bf16.msra.mxu0 0
    %6441 = vmatprep.subr.bf16.mxu0 0
    %6442 = vmatpush2.bf16.msra.mxu0 0
    %6443 = vmatprep.subr.bf16.mxu0 0
    %6444 = vmatpush2.bf16.msra.mxu0 0
    %6445 = vmatprep.subr.bf16.mxu0 0
    %6446 = vmatpush2.bf16.msra.mxu0 0
    %6447 = vmatprep.subr.bf16.mxu0 0
    %6448 = vmatpush2.bf16.msra.mxu0 0
    %6449 = vmatprep.subr.bf16.mxu0 0
    %6450 = vmatpush2.bf16.msra.mxu0 0
    %6451 = vmatprep.mubr.bf16.mxu0 0
    %6452 = vmatmul.mubr.bf16.gmra.mxu0 %v2968
    %v6453 = vpop.f32.mrf.mxu0
    %v6454 = vadd.f32 0.0, %v6453
    %v6455 = vpop.f32.mrf.mxu0
    %v6456 = vpop.f32.mrf.mxu0
    %v6457 = vpop.f32.mrf.mxu0
    %6458 = vdwg.mxu0
    %v6459 = vadd.f32 %v6017, %v6454
    %6460 = vmatprep.subr.bf16.mxu0 0
    %6461 = vmatpush1.bf16.msra.mxu0 %v6328
    %6462 = vmatprep.subr.bf16.mxu0 0
    %6463 = vmatpush1.bf16.msra.mxu0 %v6327
    %6464 = vmatprep.subr.bf16.mxu0 0
    %6465 = vmatpush1.bf16.msra.mxu0 %v6326
    %6466 = vmatprep.subr.bf16.mxu0 0
    %6467 = vmatpush1.bf16.msra.mxu0 %v6325
    %6468 = vmatprep.subr.bf16.mxu0 0
    %6469 = vmatpush1.bf16.msra.mxu0 %v6324
    %6470 = vmatprep.subr.bf16.mxu0 0
    %6471 = vmatpush1.bf16.msra.mxu0 %v6323
    %6472 = vmatprep.subr.bf16.mxu0 0
    %6473 = vmatpush1.bf16.msra.mxu0 %v6322
    %6474 = vmatprep.subr.bf16.mxu0 0
    %6475 = vmatpush1.bf16.msra.mxu0 %v6321
    %6476 = vmatprep.subr.bf16.mxu0 0
    %6477 = vmatpush2.bf16.msra.mxu0 0
    %6478 = vmatprep.subr.bf16.mxu0 0
    %6479 = vmatpush2.bf16.msra.mxu0 0
    %6480 = vmatprep.subr.bf16.mxu0 0
    %6481 = vmatpush2.bf16.msra.mxu0 0
    %6482 = vmatprep.subr.bf16.mxu0 0
    %6483 = vmatpush2.bf16.msra.mxu0 0
    %6484 = vmatprep.subr.bf16.mxu0 0
    %6485 = vmatpush2.bf16.msra.mxu0 0
    %6486 = vmatprep.subr.bf16.mxu0 0
    %6487 = vmatpush2.bf16.msra.mxu0 0
    %6488 = vmatprep.subr.bf16.mxu0 0
    %6489 = vmatpush2.bf16.msra.mxu0 0
    %6490 = vmatprep.subr.bf16.mxu0 0
    %6491 = vmatpush2.bf16.msra.mxu0 0
    %6492 = vmatprep.mubr.bf16.mxu0 0
    %6493 = vmatmul.mubr.bf16.gmra.mxu0 %v3015
    %v6494 = vpop.f32.mrf.mxu0
    %v6495 = vadd.f32 0.0, %v6494
    %v6496 = vpop.f32.mrf.mxu0
    %v6497 = vpop.f32.mrf.mxu0
    %v6498 = vpop.f32.mrf.mxu0
    %6499 = vdwg.mxu0
    %v6500 = vadd.f32 %v6058, %v6495
    %6501 = vmatprep.subr.bf16.mxu0 0
    %6502 = vmatpush1.bf16.msra.mxu0 %v6328
    %6503 = vmatprep.subr.bf16.mxu0 0
    %6504 = vmatpush1.bf16.msra.mxu0 %v6327
    %6505 = vmatprep.subr.bf16.mxu0 0
    %6506 = vmatpush1.bf16.msra.mxu0 %v6326
    %6507 = vmatprep.subr.bf16.mxu0 0
    %6508 = vmatpush1.bf16.msra.mxu0 %v6325
    %6509 = vmatprep.subr.bf16.mxu0 0
    %6510 = vmatpush1.bf16.msra.mxu0 %v6324
    %6511 = vmatprep.subr.bf16.mxu0 0
    %6512 = vmatpush1.bf16.msra.mxu0 %v6323
    %6513 = vmatprep.subr.bf16.mxu0 0
    %6514 = vmatpush1.bf16.msra.mxu0 %v6322
    %6515 = vmatprep.subr.bf16.mxu0 0
    %6516 = vmatpush1.bf16.msra.mxu0 %v6321
    %6517 = vmatprep.subr.bf16.mxu0 0
    %6518 = vmatpush2.bf16.msra.mxu0 0
    %6519 = vmatprep.subr.bf16.mxu0 0
    %6520 = vmatpush2.bf16.msra.mxu0 0
    %6521 = vmatprep.subr.bf16.mxu0 0
    %6522 = vmatpush2.bf16.msra.mxu0 0
    %6523 = vmatprep.subr.bf16.mxu0 0
    %6524 = vmatpush2.bf16.msra.mxu0 0
    %6525 = vmatprep.subr.bf16.mxu0 0
    %6526 = vmatpush2.bf16.msra.mxu0 0
    %6527 = vmatprep.subr.bf16.mxu0 0
    %6528 = vmatpush2.bf16.msra.mxu0 0
    %6529 = vmatprep.subr.bf16.mxu0 0
    %6530 = vmatpush2.bf16.msra.mxu0 0
    %6531 = vmatprep.subr.bf16.mxu0 0
    %6532 = vmatpush2.bf16.msra.mxu0 0
    %6533 = vmatprep.mubr.bf16.mxu0 0
    %6534 = vmatmul.mubr.bf16.gmra.mxu0 %v3062
    %v6535 = vpop.f32.mrf.mxu0
    %v6536 = vadd.f32 0.0, %v6535
    %v6537 = vpop.f32.mrf.mxu0
    %v6538 = vpop.f32.mrf.mxu0
    %v6539 = vpop.f32.mrf.mxu0
    %6540 = vdwg.mxu0
    %v6541 = vadd.f32 %v6099, %v6536
    %6542 = vmatprep.subr.bf16.mxu0 0
    %6543 = vmatpush1.bf16.msra.mxu0 %v6328
    %6544 = vmatprep.subr.bf16.mxu0 0
    %6545 = vmatpush1.bf16.msra.mxu0 %v6327
    %6546 = vmatprep.subr.bf16.mxu0 0
    %6547 = vmatpush1.bf16.msra.mxu0 %v6326
    %6548 = vmatprep.subr.bf16.mxu0 0
    %6549 = vmatpush1.bf16.msra.mxu0 %v6325
    %6550 = vmatprep.subr.bf16.mxu0 0
    %6551 = vmatpush1.bf16.msra.mxu0 %v6324
    %6552 = vmatprep.subr.bf16.mxu0 0
    %6553 = vmatpush1.bf16.msra.mxu0 %v6323
    %6554 = vmatprep.subr.bf16.mxu0 0
    %6555 = vmatpush1.bf16.msra.mxu0 %v6322
    %6556 = vmatprep.subr.bf16.mxu0 0
    %6557 = vmatpush1.bf16.msra.mxu0 %v6321
    %6558 = vmatprep.subr.bf16.mxu0 0
    %6559 = vmatpush2.bf16.msra.mxu0 0
    %6560 = vmatprep.subr.bf16.mxu0 0
    %6561 = vmatpush2.bf16.msra.mxu0 0
    %6562 = vmatprep.subr.bf16.mxu0 0
    %6563 = vmatpush2.bf16.msra.mxu0 0
    %6564 = vmatprep.subr.bf16.mxu0 0
    %6565 = vmatpush2.bf16.msra.mxu0 0
    %6566 = vmatprep.subr.bf16.mxu0 0
    %6567 = vmatpush2.bf16.msra.mxu0 0
    %6568 = vmatprep.subr.bf16.mxu0 0
    %6569 = vmatpush2.bf16.msra.mxu0 0
    %6570 = vmatprep.subr.bf16.mxu0 0
    %6571 = vmatpush2.bf16.msra.mxu0 0
    %6572 = vmatprep.subr.bf16.mxu0 0
    %6573 = vmatpush2.bf16.msra.mxu0 0
    %6574 = vmatprep.mubr.bf16.mxu0 0
    %6575 = vmatmul.mubr.bf16.gmra.mxu0 %v3109
    %v6576 = vpop.f32.mrf.mxu0
    %v6577 = vadd.f32 0.0, %v6576
    %v6578 = vpop.f32.mrf.mxu0
    %v6579 = vpop.f32.mrf.mxu0
    %v6580 = vpop.f32.mrf.mxu0
    %6581 = vdwg.mxu0
    %v6582 = vadd.f32 %v6140, %v6577
    %v6583 = vld [vmem:[#allocation2 + $0x38] sm:$0x2]
    %v6585 = vunpack.c.l.b16 %v6583
    %v6586 = vpack.c.b16 %v6585, %v6585
    %v6587 = vrot.slane %v6586, 1
    %6589 = vmatprep.subr.bf16.mxu0 0
    %6590 = vmatpush1.bf16.msra.mxu0 %v6328
    %6591 = vmatprep.subr.bf16.mxu0 0
    %6592 = vmatpush1.bf16.msra.mxu0 %v6327
    %6593 = vmatprep.subr.bf16.mxu0 0
    %6594 = vmatpush1.bf16.msra.mxu0 %v6326
    %6595 = vmatprep.subr.bf16.mxu0 0
    %6596 = vmatpush1.bf16.msra.mxu0 %v6325
    %6597 = vmatprep.subr.bf16.mxu0 0
    %6598 = vmatpush1.bf16.msra.mxu0 %v6324
    %6599 = vmatprep.subr.bf16.mxu0 0
    %6600 = vmatpush1.bf16.msra.mxu0 %v6323
    %6601 = vmatprep.subr.bf16.mxu0 0
    %6602 = vmatpush1.bf16.msra.mxu0 %v6322
    %6603 = vmatprep.subr.bf16.mxu0 0
    %6604 = vmatpush1.bf16.msra.mxu0 %v6321
    %6605 = vmatprep.subr.bf16.mxu0 0
    %6606 = vmatpush2.bf16.msra.mxu0 0
    %6607 = vmatprep.subr.bf16.mxu0 0
    %6608 = vmatpush2.bf16.msra.mxu0 0
    %6609 = vmatprep.subr.bf16.mxu0 0
    %6610 = vmatpush2.bf16.msra.mxu0 0
    %6611 = vmatprep.subr.bf16.mxu0 0
    %6612 = vmatpush2.bf16.msra.mxu0 0
    %6613 = vmatprep.subr.bf16.mxu0 0
    %6614 = vmatpush2.bf16.msra.mxu0 0
    %6615 = vmatprep.subr.bf16.mxu0 0
    %6616 = vmatpush2.bf16.msra.mxu0 0
    %6617 = vmatprep.subr.bf16.mxu0 0
    %6618 = vmatpush2.bf16.msra.mxu0 0
    %6619 = vmatprep.subr.bf16.mxu0 0
    %6620 = vmatpush2.bf16.msra.mxu0 0
    %6621 = vmatprep.mubr.bf16.mxu0 0
    %6622 = vmatmul.mubr.bf16.gmra.mxu0 %v6587
    %v6623 = vpop.f32.mrf.mxu0
    %v6624 = vadd.f32 0.0, %v6623
    %v6625 = vpop.f32.mrf.mxu0
    %v6626 = vpop.f32.mrf.mxu0
    %v6627 = vpop.f32.mrf.mxu0
    %6628 = vdwg.mxu0
    %v6629 = vadd.f32 %v6182, %v6624
    %v6630 = vld [vmem:[#allocation2 + $0x38] sm:$0x8]
    %v6632 = vunpack.c.l.b16 %v6630
    %v6633 = vpack.c.b16 %v6632, %v6632
    %v6634 = vrot.slane %v6633, 3
    %6636 = vmatprep.subr.bf16.mxu0 0
    %6637 = vmatpush1.bf16.msra.mxu0 %v6328
    %6638 = vmatprep.subr.bf16.mxu0 0
    %6639 = vmatpush1.bf16.msra.mxu0 %v6327
    %6640 = vmatprep.subr.bf16.mxu0 0
    %6641 = vmatpush1.bf16.msra.mxu0 %v6326
    %6642 = vmatprep.subr.bf16.mxu0 0
    %6643 = vmatpush1.bf16.msra.mxu0 %v6325
    %6644 = vmatprep.subr.bf16.mxu0 0
    %6645 = vmatpush1.bf16.msra.mxu0 %v6324
    %6646 = vmatprep.subr.bf16.mxu0 0
    %6647 = vmatpush1.bf16.msra.mxu0 %v6323
    %6648 = vmatprep.subr.bf16.mxu0 0
    %6649 = vmatpush1.bf16.msra.mxu0 %v6322
    %6650 = vmatprep.subr.bf16.mxu0 0
    %6651 = vmatpush1.bf16.msra.mxu0 %v6321
    %6652 = vmatprep.subr.bf16.mxu0 0
    %6653 = vmatpush2.bf16.msra.mxu0 0
    %6654 = vmatprep.subr.bf16.mxu0 0
    %6655 = vmatpush2.bf16.msra.mxu0 0
    %6656 = vmatprep.subr.bf16.mxu0 0
    %6657 = vmatpush2.bf16.msra.mxu0 0
    %6658 = vmatprep.subr.bf16.mxu0 0
    %6659 = vmatpush2.bf16.msra.mxu0 0
    %6660 = vmatprep.subr.bf16.mxu0 0
    %6661 = vmatpush2.bf16.msra.mxu0 0
    %6662 = vmatprep.subr.bf16.mxu0 0
    %6663 = vmatpush2.bf16.msra.mxu0 0
    %6664 = vmatprep.subr.bf16.mxu0 0
    %6665 = vmatpush2.bf16.msra.mxu0 0
    %6666 = vmatprep.subr.bf16.mxu0 0
    %6667 = vmatpush2.bf16.msra.mxu0 0
    %6668 = vmatprep.mubr.bf16.mxu0 0
    %6669 = vmatmul.mubr.bf16.gmra.mxu0 %v6634
    %v6670 = vpop.f32.mrf.mxu0
    %v6671 = vadd.f32 0.0, %v6670
    %v6672 = vpop.f32.mrf.mxu0
    %v6673 = vpop.f32.mrf.mxu0
    %v6674 = vpop.f32.mrf.mxu0
    %6675 = vdwg.mxu0
    %v6676 = vadd.f32 %v6229, %v6671
    %v6677 = vld [vmem:[#allocation2 + $0x3c] sm:$0x2]
    %v6679 = vunpack.c.l.b16 %v6677
    %v6680 = vpack.c.b16 %v6679, %v6679
    %v6681 = vrot.slane %v6680, 1
    %6683 = vmatprep.subr.bf16.mxu0 0
    %6684 = vmatpush1.bf16.msra.mxu0 %v6328
    %6685 = vmatprep.subr.bf16.mxu0 0
    %6686 = vmatpush1.bf16.msra.mxu0 %v6327
    %6687 = vmatprep.subr.bf16.mxu0 0
    %6688 = vmatpush1.bf16.msra.mxu0 %v6326
    %6689 = vmatprep.subr.bf16.mxu0 0
    %6690 = vmatpush1.bf16.msra.mxu0 %v6325
    %6691 = vmatprep.subr.bf16.mxu0 0
    %6692 = vmatpush1.bf16.msra.mxu0 %v6324
    %6693 = vmatprep.subr.bf16.mxu0 0
    %6694 = vmatpush1.bf16.msra.mxu0 %v6323
    %6695 = vmatprep.subr.bf16.mxu0 0
    %6696 = vmatpush1.bf16.msra.mxu0 %v6322
    %6697 = vmatprep.subr.bf16.mxu0 0
    %6698 = vmatpush1.bf16.msra.mxu0 %v6321
    %6699 = vmatprep.subr.bf16.mxu0 0
    %6700 = vmatpush2.bf16.msra.mxu0 0
    %6701 = vmatprep.subr.bf16.mxu0 0
    %6702 = vmatpush2.bf16.msra.mxu0 0
    %6703 = vmatprep.subr.bf16.mxu0 0
    %6704 = vmatpush2.bf16.msra.mxu0 0
    %6705 = vmatprep.subr.bf16.mxu0 0
    %6706 = vmatpush2.bf16.msra.mxu0 0
    %6707 = vmatprep.subr.bf16.mxu0 0
    %6708 = vmatpush2.bf16.msra.mxu0 0
    %6709 = vmatprep.subr.bf16.mxu0 0
    %6710 = vmatpush2.bf16.msra.mxu0 0
    %6711 = vmatprep.subr.bf16.mxu0 0
    %6712 = vmatpush2.bf16.msra.mxu0 0
    %6713 = vmatprep.subr.bf16.mxu0 0
    %6714 = vmatpush2.bf16.msra.mxu0 0
    %6715 = vmatprep.mubr.bf16.mxu0 0
    %6716 = vmatmul.mubr.bf16.gmra.mxu0 %v6681
    %v6717 = vpop.f32.mrf.mxu0
    %v6718 = vadd.f32 0.0, %v6717
    %v6719 = vpop.f32.mrf.mxu0
    %v6720 = vpop.f32.mrf.mxu0
    %v6721 = vpop.f32.mrf.mxu0
    %6722 = vdwg.mxu0
    %v6723 = vadd.f32 %v6271, %v6718
    %s6724 = scalar_lea.vmem %s3, 896
    %v6725 = vld [vmem:[%s6724] sm:$0xf]
    %v6726 = vld [vmem:[%s6724 + $0x4] sm:$0xf]
    %v6727 = vld [vmem:[%s6724 + $0x8] sm:$0xf]
    %v6728 = vld [vmem:[%s6724 + $0xc] sm:$0xf]
    %v6729 = vld [vmem:[%s6724 + $0x10] sm:$0xf]
    %v6730 = vld [vmem:[%s6724 + $0x14] sm:$0xf]
    %v6731 = vld [vmem:[%s6724 + $0x18] sm:$0xf]
    %v6732 = vld [vmem:[%s6724 + $0x1c] sm:$0xf]
    %v6733 = vld [vmem:[%s6724 + $0x20] sm:$0xf]
    %v6734 = vld [vmem:[%s6724 + $0x24] sm:$0xf]
    %v6735 = vld [vmem:[%s6724 + $0x28] sm:$0xf]
    %v6736 = vld [vmem:[%s6724 + $0x2c] sm:$0xf]
    %v6737 = vld [vmem:[%s6724 + $0x30] sm:$0xf]
    %v6738 = vld [vmem:[%s6724 + $0x34] sm:$0xf]
    %v6739 = vld [vmem:[%s6724 + $0x38] sm:$0xf]
    %v6740 = vld [vmem:[%s6724 + $0x3c] sm:$0xf]
    %v6757 = vunpack.c.l.b16 %v6725
    %v6758 = vunpack.c.l.b16 %v6726
    %v6759 = vunpack.c.l.b16 %v6727
    %v6760 = vunpack.c.l.b16 %v6728
    %v6761 = vunpack.c.l.b16 %v6729
    %v6762 = vunpack.c.l.b16 %v6730
    %v6763 = vunpack.c.l.b16 %v6731
    %v6764 = vunpack.c.l.b16 %v6732
    %v6765 = vunpack.c.l.b16 %v6733
    %v6766 = vunpack.c.l.b16 %v6734
    %v6767 = vunpack.c.l.b16 %v6735
    %v6768 = vunpack.c.l.b16 %v6736
    %v6769 = vunpack.c.l.b16 %v6737
    %v6770 = vunpack.c.l.b16 %v6738
    %v6771 = vunpack.c.l.b16 %v6739
    %v6772 = vunpack.c.l.b16 %v6740
    %v6773 = vpack.c.b16 %v6758, %v6757
    %v6774 = vpack.c.b16 %v6760, %v6759
    %v6775 = vpack.c.b16 %v6762, %v6761
    %v6776 = vpack.c.b16 %v6764, %v6763
    %v6777 = vpack.c.b16 %v6766, %v6765
    %v6778 = vpack.c.b16 %v6768, %v6767
    %v6779 = vpack.c.b16 %v6770, %v6769
    %v6780 = vpack.c.b16 %v6772, %v6771
    %6789 = vmatprep.subr.bf16.mxu0 0
    %6790 = vmatpush1.bf16.msra.mxu0 %v6780
    %6791 = vmatprep.subr.bf16.mxu0 0
    %6792 = vmatpush1.bf16.msra.mxu0 %v6779
    %6793 = vmatprep.subr.bf16.mxu0 0
    %6794 = vmatpush1.bf16.msra.mxu0 %v6778
    %6795 = vmatprep.subr.bf16.mxu0 0
    %6796 = vmatpush1.bf16.msra.mxu0 %v6777
    %6797 = vmatprep.subr.bf16.mxu0 0
    %6798 = vmatpush1.bf16.msra.mxu0 %v6776
    %6799 = vmatprep.subr.bf16.mxu0 0
    %6800 = vmatpush1.bf16.msra.mxu0 %v6775
    %6801 = vmatprep.subr.bf16.mxu0 0
    %6802 = vmatpush1.bf16.msra.mxu0 %v6774
    %6803 = vmatprep.subr.bf16.mxu0 0
    %6804 = vmatpush1.bf16.msra.mxu0 %v6773
    %6805 = vmatprep.subr.bf16.mxu0 0
    %6806 = vmatpush2.bf16.msra.mxu0 0
    %6807 = vmatprep.subr.bf16.mxu0 0
    %6808 = vmatpush2.bf16.msra.mxu0 0
    %6809 = vmatprep.subr.bf16.mxu0 0
    %6810 = vmatpush2.bf16.msra.mxu0 0
    %6811 = vmatprep.subr.bf16.mxu0 0
    %6812 = vmatpush2.bf16.msra.mxu0 0
    %6813 = vmatprep.subr.bf16.mxu0 0
    %6814 = vmatpush2.bf16.msra.mxu0 0
    %6815 = vmatprep.subr.bf16.mxu0 0
    %6816 = vmatpush2.bf16.msra.mxu0 0
    %6817 = vmatprep.subr.bf16.mxu0 0
    %6818 = vmatpush2.bf16.msra.mxu0 0
    %6819 = vmatprep.subr.bf16.mxu0 0
    %6820 = vmatpush2.bf16.msra.mxu0 0
    %6821 = vmatprep.mubr.bf16.mxu0 0
    %6822 = vmatmul.mubr.bf16.gmra.mxu0 %v2448
    %v6823 = vpop.f32.mrf.mxu0
    %v6824 = vadd.f32 0.0, %v6823
    %v6825 = vpop.f32.mrf.mxu0
    %v6826 = vpop.f32.mrf.mxu0
    %v6827 = vpop.f32.mrf.mxu0
    %6828 = vdwg.mxu0
    %v6829 = vadd.f32 %v6377, %v6824
    %6830 = vmatprep.subr.bf16.mxu0 0
    %6831 = vmatpush1.bf16.msra.mxu0 %v6780
    %6832 = vmatprep.subr.bf16.mxu0 0
    %6833 = vmatpush1.bf16.msra.mxu0 %v6779
    %6834 = vmatprep.subr.bf16.mxu0 0
    %6835 = vmatpush1.bf16.msra.mxu0 %v6778
    %6836 = vmatprep.subr.bf16.mxu0 0
    %6837 = vmatpush1.bf16.msra.mxu0 %v6777
    %6838 = vmatprep.subr.bf16.mxu0 0
    %6839 = vmatpush1.bf16.msra.mxu0 %v6776
    %6840 = vmatprep.subr.bf16.mxu0 0
    %6841 = vmatpush1.bf16.msra.mxu0 %v6775
    %6842 = vmatprep.subr.bf16.mxu0 0
    %6843 = vmatpush1.bf16.msra.mxu0 %v6774
    %6844 = vmatprep.subr.bf16.mxu0 0
    %6845 = vmatpush1.bf16.msra.mxu0 %v6773
    %6846 = vmatprep.subr.bf16.mxu0 0
    %6847 = vmatpush2.bf16.msra.mxu0 0
    %6848 = vmatprep.subr.bf16.mxu0 0
    %6849 = vmatpush2.bf16.msra.mxu0 0
    %6850 = vmatprep.subr.bf16.mxu0 0
    %6851 = vmatpush2.bf16.msra.mxu0 0
    %6852 = vmatprep.subr.bf16.mxu0 0
    %6853 = vmatpush2.bf16.msra.mxu0 0
    %6854 = vmatprep.subr.bf16.mxu0 0
    %6855 = vmatpush2.bf16.msra.mxu0 0
    %6856 = vmatprep.subr.bf16.mxu0 0
    %6857 = vmatpush2.bf16.msra.mxu0 0
    %6858 = vmatprep.subr.bf16.mxu0 0
    %6859 = vmatpush2.bf16.msra.mxu0 0
    %6860 = vmatprep.subr.bf16.mxu0 0
    %6861 = vmatpush2.bf16.msra.mxu0 0
    %6862 = vmatprep.mubr.bf16.mxu0 0
    %6863 = vmatmul.mubr.bf16.gmra.mxu0 %v2491
    %v6864 = vpop.f32.mrf.mxu0
    %v6865 = vadd.f32 0.0, %v6864
    %v6866 = vpop.f32.mrf.mxu0
    %v6867 = vpop.f32.mrf.mxu0
    %v6868 = vpop.f32.mrf.mxu0
    %6869 = vdwg.mxu0
    %v6870 = vadd.f32 %v6418, %v6865
    %6871 = vmatprep.subr.bf16.mxu0 0
    %6872 = vmatpush1.bf16.msra.mxu0 %v6780
    %6873 = vmatprep.subr.bf16.mxu0 0
    %6874 = vmatpush1.bf16.msra.mxu0 %v6779
    %6875 = vmatprep.subr.bf16.mxu0 0
    %6876 = vmatpush1.bf16.msra.mxu0 %v6778
    %6877 = vmatprep.subr.bf16.mxu0 0
    %6878 = vmatpush1.bf16.msra.mxu0 %v6777
    %6879 = vmatprep.subr.bf16.mxu0 0
    %6880 = vmatpush1.bf16.msra.mxu0 %v6776
    %6881 = vmatprep.subr.bf16.mxu0 0
    %6882 = vmatpush1.bf16.msra.mxu0 %v6775
    %6883 = vmatprep.subr.bf16.mxu0 0
    %6884 = vmatpush1.bf16.msra.mxu0 %v6774
    %6885 = vmatprep.subr.bf16.mxu0 0
    %6886 = vmatpush1.bf16.msra.mxu0 %v6773
    %6887 = vmatprep.subr.bf16.mxu0 0
    %6888 = vmatpush2.bf16.msra.mxu0 0
    %6889 = vmatprep.subr.bf16.mxu0 0
    %6890 = vmatpush2.bf16.msra.mxu0 0
    %6891 = vmatprep.subr.bf16.mxu0 0
    %6892 = vmatpush2.bf16.msra.mxu0 0
    %6893 = vmatprep.subr.bf16.mxu0 0
    %6894 = vmatpush2.bf16.msra.mxu0 0
    %6895 = vmatprep.subr.bf16.mxu0 0
    %6896 = vmatpush2.bf16.msra.mxu0 0
    %6897 = vmatprep.subr.bf16.mxu0 0
    %6898 = vmatpush2.bf16.msra.mxu0 0
    %6899 = vmatprep.subr.bf16.mxu0 0
    %6900 = vmatpush2.bf16.msra.mxu0 0
    %6901 = vmatprep.subr.bf16.mxu0 0
    %6902 = vmatpush2.bf16.msra.mxu0 0
    %6903 = vmatprep.mubr.bf16.mxu0 0
    %6904 = vmatmul.mubr.bf16.gmra.mxu0 %v3432
    %v6905 = vpop.f32.mrf.mxu0
    %v6906 = vadd.f32 0.0, %v6905
    %v6907 = vpop.f32.mrf.mxu0
    %v6908 = vpop.f32.mrf.mxu0
    %v6909 = vpop.f32.mrf.mxu0
    %6910 = vdwg.mxu0
    %v6911 = vadd.f32 %v6459, %v6906
    %6912 = vmatprep.subr.bf16.mxu0 0
    %6913 = vmatpush1.bf16.msra.mxu0 %v6780
    %6914 = vmatprep.subr.bf16.mxu0 0
    %6915 = vmatpush1.bf16.msra.mxu0 %v6779
    %6916 = vmatprep.subr.bf16.mxu0 0
    %6917 = vmatpush1.bf16.msra.mxu0 %v6778
    %6918 = vmatprep.subr.bf16.mxu0 0
    %6919 = vmatpush1.bf16.msra.mxu0 %v6777
    %6920 = vmatprep.subr.bf16.mxu0 0
    %6921 = vmatpush1.bf16.msra.mxu0 %v6776
    %6922 = vmatprep.subr.bf16.mxu0 0
    %6923 = vmatpush1.bf16.msra.mxu0 %v6775
    %6924 = vmatprep.subr.bf16.mxu0 0
    %6925 = vmatpush1.bf16.msra.mxu0 %v6774
    %6926 = vmatprep.subr.bf16.mxu0 0
    %6927 = vmatpush1.bf16.msra.mxu0 %v6773
    %6928 = vmatprep.subr.bf16.mxu0 0
    %6929 = vmatpush2.bf16.msra.mxu0 0
    %6930 = vmatprep.subr.bf16.mxu0 0
    %6931 = vmatpush2.bf16.msra.mxu0 0
    %6932 = vmatprep.subr.bf16.mxu0 0
    %6933 = vmatpush2.bf16.msra.mxu0 0
    %6934 = vmatprep.subr.bf16.mxu0 0
    %6935 = vmatpush2.bf16.msra.mxu0 0
    %6936 = vmatprep.subr.bf16.mxu0 0
    %6937 = vmatpush2.bf16.msra.mxu0 0
    %6938 = vmatprep.subr.bf16.mxu0 0
    %6939 = vmatpush2.bf16.msra.mxu0 0
    %6940 = vmatprep.subr.bf16.mxu0 0
    %6941 = vmatpush2.bf16.msra.mxu0 0
    %6942 = vmatprep.subr.bf16.mxu0 0
    %6943 = vmatpush2.bf16.msra.mxu0 0
    %6944 = vmatprep.mubr.bf16.mxu0 0
    %6945 = vmatmul.mubr.bf16.gmra.mxu0 %v2579
    %v6946 = vpop.f32.mrf.mxu0
    %v6947 = vadd.f32 0.0, %v6946
    %v6948 = vpop.f32.mrf.mxu0
    %v6949 = vpop.f32.mrf.mxu0
    %v6950 = vpop.f32.mrf.mxu0
    %6951 = vdwg.mxu0
    %v6952 = vadd.f32 %v6500, %v6947
    %6953 = vmatprep.subr.bf16.mxu0 0
    %6954 = vmatpush1.bf16.msra.mxu0 %v6780
    %6955 = vmatprep.subr.bf16.mxu0 0
    %6956 = vmatpush1.bf16.msra.mxu0 %v6779
    %6957 = vmatprep.subr.bf16.mxu0 0
    %6958 = vmatpush1.bf16.msra.mxu0 %v6778
    %6959 = vmatprep.subr.bf16.mxu0 0
    %6960 = vmatpush1.bf16.msra.mxu0 %v6777
    %6961 = vmatprep.subr.bf16.mxu0 0
    %6962 = vmatpush1.bf16.msra.mxu0 %v6776
    %6963 = vmatprep.subr.bf16.mxu0 0
    %6964 = vmatpush1.bf16.msra.mxu0 %v6775
    %6965 = vmatprep.subr.bf16.mxu0 0
    %6966 = vmatpush1.bf16.msra.mxu0 %v6774
    %6967 = vmatprep.subr.bf16.mxu0 0
    %6968 = vmatpush1.bf16.msra.mxu0 %v6773
    %6969 = vmatprep.subr.bf16.mxu0 0
    %6970 = vmatpush2.bf16.msra.mxu0 0
    %6971 = vmatprep.subr.bf16.mxu0 0
    %6972 = vmatpush2.bf16.msra.mxu0 0
    %6973 = vmatprep.subr.bf16.mxu0 0
    %6974 = vmatpush2.bf16.msra.mxu0 0
    %6975 = vmatprep.subr.bf16.mxu0 0
    %6976 = vmatpush2.bf16.msra.mxu0 0
    %6977 = vmatprep.subr.bf16.mxu0 0
    %6978 = vmatpush2.bf16.msra.mxu0 0
    %6979 = vmatprep.subr.bf16.mxu0 0
    %6980 = vmatpush2.bf16.msra.mxu0 0
    %6981 = vmatprep.subr.bf16.mxu0 0
    %6982 = vmatpush2.bf16.msra.mxu0 0
    %6983 = vmatprep.subr.bf16.mxu0 0
    %6984 = vmatpush2.bf16.msra.mxu0 0
    %6985 = vmatprep.mubr.bf16.mxu0 0
    %6986 = vmatmul.mubr.bf16.gmra.mxu0 %v2622
    %v6987 = vpop.f32.mrf.mxu0
    %v6988 = vadd.f32 0.0, %v6987
    %v6989 = vpop.f32.mrf.mxu0
    %v6990 = vpop.f32.mrf.mxu0
    %v6991 = vpop.f32.mrf.mxu0
    %6992 = vdwg.mxu0
    %v6993 = vadd.f32 %v6541, %v6988
    %6994 = vmatprep.subr.bf16.mxu0 0
    %6995 = vmatpush1.bf16.msra.mxu0 %v6780
    %6996 = vmatprep.subr.bf16.mxu0 0
    %6997 = vmatpush1.bf16.msra.mxu0 %v6779
    %6998 = vmatprep.subr.bf16.mxu0 0
    %6999 = vmatpush1.bf16.msra.mxu0 %v6778
    %7000 = vmatprep.subr.bf16.mxu0 0
    %7001 = vmatpush1.bf16.msra.mxu0 %v6777
    %7002 = vmatprep.subr.bf16.mxu0 0
    %7003 = vmatpush1.bf16.msra.mxu0 %v6776
    %7004 = vmatprep.subr.bf16.mxu0 0
    %7005 = vmatpush1.bf16.msra.mxu0 %v6775
    %7006 = vmatprep.subr.bf16.mxu0 0
    %7007 = vmatpush1.bf16.msra.mxu0 %v6774
    %7008 = vmatprep.subr.bf16.mxu0 0
    %7009 = vmatpush1.bf16.msra.mxu0 %v6773
    %7010 = vmatprep.subr.bf16.mxu0 0
    %7011 = vmatpush2.bf16.msra.mxu0 0
    %7012 = vmatprep.subr.bf16.mxu0 0
    %7013 = vmatpush2.bf16.msra.mxu0 0
    %7014 = vmatprep.subr.bf16.mxu0 0
    %7015 = vmatpush2.bf16.msra.mxu0 0
    %7016 = vmatprep.subr.bf16.mxu0 0
    %7017 = vmatpush2.bf16.msra.mxu0 0
    %7018 = vmatprep.subr.bf16.mxu0 0
    %7019 = vmatpush2.bf16.msra.mxu0 0
    %7020 = vmatprep.subr.bf16.mxu0 0
    %7021 = vmatpush2.bf16.msra.mxu0 0
    %7022 = vmatprep.subr.bf16.mxu0 0
    %7023 = vmatpush2.bf16.msra.mxu0 0
    %7024 = vmatprep.subr.bf16.mxu0 0
    %7025 = vmatpush2.bf16.msra.mxu0 0
    %7026 = vmatprep.mubr.bf16.mxu0 0
    %7027 = vmatmul.mubr.bf16.gmra.mxu0 %v3561
    %v7028 = vpop.f32.mrf.mxu0
    %v7029 = vadd.f32 0.0, %v7028
    %v7030 = vpop.f32.mrf.mxu0
    %v7031 = vpop.f32.mrf.mxu0
    %v7032 = vpop.f32.mrf.mxu0
    %7033 = vdwg.mxu0
    %v7034 = vadd.f32 %v6582, %v7029
    %7035 = vmatprep.subr.bf16.mxu0 0
    %7036 = vmatpush1.bf16.msra.mxu0 %v6780
    %7037 = vmatprep.subr.bf16.mxu0 0
    %7038 = vmatpush1.bf16.msra.mxu0 %v6779
    %7039 = vmatprep.subr.bf16.mxu0 0
    %7040 = vmatpush1.bf16.msra.mxu0 %v6778
    %7041 = vmatprep.subr.bf16.mxu0 0
    %7042 = vmatpush1.bf16.msra.mxu0 %v6777
    %7043 = vmatprep.subr.bf16.mxu0 0
    %7044 = vmatpush1.bf16.msra.mxu0 %v6776
    %7045 = vmatprep.subr.bf16.mxu0 0
    %7046 = vmatpush1.bf16.msra.mxu0 %v6775
    %7047 = vmatprep.subr.bf16.mxu0 0
    %7048 = vmatpush1.bf16.msra.mxu0 %v6774
    %7049 = vmatprep.subr.bf16.mxu0 0
    %7050 = vmatpush1.bf16.msra.mxu0 %v6773
    %7051 = vmatprep.subr.bf16.mxu0 0
    %7052 = vmatpush2.bf16.msra.mxu0 0
    %7053 = vmatprep.subr.bf16.mxu0 0
    %7054 = vmatpush2.bf16.msra.mxu0 0
    %7055 = vmatprep.subr.bf16.mxu0 0
    %7056 = vmatpush2.bf16.msra.mxu0 0
    %7057 = vmatprep.subr.bf16.mxu0 0
    %7058 = vmatpush2.bf16.msra.mxu0 0
    %7059 = vmatprep.subr.bf16.mxu0 0
    %7060 = vmatpush2.bf16.msra.mxu0 0
    %7061 = vmatprep.subr.bf16.mxu0 0
    %7062 = vmatpush2.bf16.msra.mxu0 0
    %7063 = vmatprep.subr.bf16.mxu0 0
    %7064 = vmatpush2.bf16.msra.mxu0 0
    %7065 = vmatprep.subr.bf16.mxu0 0
    %7066 = vmatpush2.bf16.msra.mxu0 0
    %7067 = vmatprep.mubr.bf16.mxu0 0
    %7068 = vmatmul.mubr.bf16.gmra.mxu0 %v6187
    %v7069 = vpop.f32.mrf.mxu0
    %v7070 = vadd.f32 0.0, %v7069
    %v7071 = vpop.f32.mrf.mxu0
    %v7072 = vpop.f32.mrf.mxu0
    %v7073 = vpop.f32.mrf.mxu0
    %7074 = vdwg.mxu0
    %v7075 = vadd.f32 %v6629, %v7070
    %7076 = vmatprep.subr.bf16.mxu0 0
    %7077 = vmatpush1.bf16.msra.mxu0 %v6780
    %7078 = vmatprep.subr.bf16.mxu0 0
    %7079 = vmatpush1.bf16.msra.mxu0 %v6779
    %7080 = vmatprep.subr.bf16.mxu0 0
    %7081 = vmatpush1.bf16.msra.mxu0 %v6778
    %7082 = vmatprep.subr.bf16.mxu0 0
    %7083 = vmatpush1.bf16.msra.mxu0 %v6777
    %7084 = vmatprep.subr.bf16.mxu0 0
    %7085 = vmatpush1.bf16.msra.mxu0 %v6776
    %7086 = vmatprep.subr.bf16.mxu0 0
    %7087 = vmatpush1.bf16.msra.mxu0 %v6775
    %7088 = vmatprep.subr.bf16.mxu0 0
    %7089 = vmatpush1.bf16.msra.mxu0 %v6774
    %7090 = vmatprep.subr.bf16.mxu0 0
    %7091 = vmatpush1.bf16.msra.mxu0 %v6773
    %7092 = vmatprep.subr.bf16.mxu0 0
    %7093 = vmatpush2.bf16.msra.mxu0 0
    %7094 = vmatprep.subr.bf16.mxu0 0
    %7095 = vmatpush2.bf16.msra.mxu0 0
    %7096 = vmatprep.subr.bf16.mxu0 0
    %7097 = vmatpush2.bf16.msra.mxu0 0
    %7098 = vmatprep.subr.bf16.mxu0 0
    %7099 = vmatpush2.bf16.msra.mxu0 0
    %7100 = vmatprep.subr.bf16.mxu0 0
    %7101 = vmatpush2.bf16.msra.mxu0 0
    %7102 = vmatprep.subr.bf16.mxu0 0
    %7103 = vmatpush2.bf16.msra.mxu0 0
    %7104 = vmatprep.subr.bf16.mxu0 0
    %7105 = vmatpush2.bf16.msra.mxu0 0
    %7106 = vmatprep.subr.bf16.mxu0 0
    %7107 = vmatpush2.bf16.msra.mxu0 0
    %7108 = vmatprep.mubr.bf16.mxu0 0
    %7109 = vmatmul.mubr.bf16.gmra.mxu0 %v6230
    %v7110 = vpop.f32.mrf.mxu0
    %v7111 = vadd.f32 0.0, %v7110
    %v7112 = vpop.f32.mrf.mxu0
    %v7113 = vpop.f32.mrf.mxu0
    %v7114 = vpop.f32.mrf.mxu0
    %7115 = vdwg.mxu0
    %v7116 = vadd.f32 %v6676, %v7111
    %v7117 = vld [vmem:[#allocation2 + $0x3c] sm:$0x4]
    %v7119 = vunpack.c.l.b16 %v7117
    %v7120 = vpack.c.b16 %v7119, %v7119
    %v7121 = vrot.slane %v7120, 2
    %7123 = vmatprep.subr.bf16.mxu0 0
    %7124 = vmatpush1.bf16.msra.mxu0 %v6780
    %7125 = vmatprep.subr.bf16.mxu0 0
    %7126 = vmatpush1.bf16.msra.mxu0 %v6779
    %7127 = vmatprep.subr.bf16.mxu0 0
    %7128 = vmatpush1.bf16.msra.mxu0 %v6778
    %7129 = vmatprep.subr.bf16.mxu0 0
    %7130 = vmatpush1.bf16.msra.mxu0 %v6777
    %7131 = vmatprep.subr.bf16.mxu0 0
    %7132 = vmatpush1.bf16.msra.mxu0 %v6776
    %7133 = vmatprep.subr.bf16.mxu0 0
    %7134 = vmatpush1.bf16.msra.mxu0 %v6775
    %7135 = vmatprep.subr.bf16.mxu0 0
    %7136 = vmatpush1.bf16.msra.mxu0 %v6774
    %7137 = vmatprep.subr.bf16.mxu0 0
    %7138 = vmatpush1.bf16.msra.mxu0 %v6773
    %7139 = vmatprep.subr.bf16.mxu0 0
    %7140 = vmatpush2.bf16.msra.mxu0 0
    %7141 = vmatprep.subr.bf16.mxu0 0
    %7142 = vmatpush2.bf16.msra.mxu0 0
    %7143 = vmatprep.subr.bf16.mxu0 0
    %7144 = vmatpush2.bf16.msra.mxu0 0
    %7145 = vmatprep.subr.bf16.mxu0 0
    %7146 = vmatpush2.bf16.msra.mxu0 0
    %7147 = vmatprep.subr.bf16.mxu0 0
    %7148 = vmatpush2.bf16.msra.mxu0 0
    %7149 = vmatprep.subr.bf16.mxu0 0
    %7150 = vmatpush2.bf16.msra.mxu0 0
    %7151 = vmatprep.subr.bf16.mxu0 0
    %7152 = vmatpush2.bf16.msra.mxu0 0
    %7153 = vmatprep.subr.bf16.mxu0 0
    %7154 = vmatpush2.bf16.msra.mxu0 0
    %7155 = vmatprep.mubr.bf16.mxu0 0
    %7156 = vmatmul.mubr.bf16.gmra.mxu0 %v7121
    %v7157 = vpop.f32.mrf.mxu0
    %v7158 = vadd.f32 0.0, %v7157
    %v7159 = vpop.f32.mrf.mxu0
    %v7160 = vpop.f32.mrf.mxu0
    %v7161 = vpop.f32.mrf.mxu0
    %7162 = vdwg.mxu0
    %v7163 = vadd.f32 %v6723, %v7158
    %s7164 = scalar_lea.vmem %s3, 960
    %v7165 = vld [vmem:[%s7164] sm:$0xf]
    %v7166 = vld [vmem:[%s7164 + $0x4] sm:$0xf]
    %v7167 = vld [vmem:[%s7164 + $0x8] sm:$0xf]
    %v7168 = vld [vmem:[%s7164 + $0xc] sm:$0xf]
    %v7169 = vld [vmem:[%s7164 + $0x10] sm:$0xf]
    %v7170 = vld [vmem:[%s7164 + $0x14] sm:$0xf]
    %v7171 = vld [vmem:[%s7164 + $0x18] sm:$0xf]
    %v7172 = vld [vmem:[%s7164 + $0x1c] sm:$0xf]
    %v7173 = vld [vmem:[%s7164 + $0x20] sm:$0xf]
    %v7174 = vld [vmem:[%s7164 + $0x24] sm:$0xf]
    %v7175 = vld [vmem:[%s7164 + $0x28] sm:$0xf]
    %v7176 = vld [vmem:[%s7164 + $0x2c] sm:$0xf]
    %v7177 = vld [vmem:[%s7164 + $0x30] sm:$0xf]
    %v7178 = vld [vmem:[%s7164 + $0x34] sm:$0xf]
    %v7179 = vld [vmem:[%s7164 + $0x38] sm:$0xf]
    %v7180 = vld [vmem:[%s7164 + $0x3c] sm:$0xf]
    %v7197 = vunpack.c.l.b16 %v7165
    %v7198 = vunpack.c.l.b16 %v7166
    %v7199 = vunpack.c.l.b16 %v7167
    %v7200 = vunpack.c.l.b16 %v7168
    %v7201 = vunpack.c.l.b16 %v7169
    %v7202 = vunpack.c.l.b16 %v7170
    %v7203 = vunpack.c.l.b16 %v7171
    %v7204 = vunpack.c.l.b16 %v7172
    %v7205 = vunpack.c.l.b16 %v7173
    %v7206 = vunpack.c.l.b16 %v7174
    %v7207 = vunpack.c.l.b16 %v7175
    %v7208 = vunpack.c.l.b16 %v7176
    %v7209 = vunpack.c.l.b16 %v7177
    %v7210 = vunpack.c.l.b16 %v7178
    %v7211 = vunpack.c.l.b16 %v7179
    %v7212 = vunpack.c.l.b16 %v7180
    %v7213 = vpack.c.b16 %v7198, %v7197
    %v7214 = vpack.c.b16 %v7200, %v7199
    %v7215 = vpack.c.b16 %v7202, %v7201
    %v7216 = vpack.c.b16 %v7204, %v7203
    %v7217 = vpack.c.b16 %v7206, %v7205
    %v7218 = vpack.c.b16 %v7208, %v7207
    %v7219 = vpack.c.b16 %v7210, %v7209
    %v7220 = vpack.c.b16 %v7212, %v7211
    %7229 = vmatprep.subr.bf16.mxu0 0
    %7230 = vmatpush1.bf16.msra.mxu0 %v7220
    %7231 = vmatprep.subr.bf16.mxu0 0
    %7232 = vmatpush1.bf16.msra.mxu0 %v7219
    %7233 = vmatprep.subr.bf16.mxu0 0
    %7234 = vmatpush1.bf16.msra.mxu0 %v7218
    %7235 = vmatprep.subr.bf16.mxu0 0
    %7236 = vmatpush1.bf16.msra.mxu0 %v7217
    %7237 = vmatprep.subr.bf16.mxu0 0
    %7238 = vmatpush1.bf16.msra.mxu0 %v7216
    %7239 = vmatprep.subr.bf16.mxu0 0
    %7240 = vmatpush1.bf16.msra.mxu0 %v7215
    %7241 = vmatprep.subr.bf16.mxu0 0
    %7242 = vmatpush1.bf16.msra.mxu0 %v7214
    %7243 = vmatprep.subr.bf16.mxu0 0
    %7244 = vmatpush1.bf16.msra.mxu0 %v7213
    %7245 = vmatprep.subr.bf16.mxu0 0
    %7246 = vmatpush2.bf16.msra.mxu0 0
    %7247 = vmatprep.subr.bf16.mxu0 0
    %7248 = vmatpush2.bf16.msra.mxu0 0
    %7249 = vmatprep.subr.bf16.mxu0 0
    %7250 = vmatpush2.bf16.msra.mxu0 0
    %7251 = vmatprep.subr.bf16.mxu0 0
    %7252 = vmatpush2.bf16.msra.mxu0 0
    %7253 = vmatprep.subr.bf16.mxu0 0
    %7254 = vmatpush2.bf16.msra.mxu0 0
    %7255 = vmatprep.subr.bf16.mxu0 0
    %7256 = vmatpush2.bf16.msra.mxu0 0
    %7257 = vmatprep.subr.bf16.mxu0 0
    %7258 = vmatpush2.bf16.msra.mxu0 0
    %7259 = vmatprep.subr.bf16.mxu0 0
    %7260 = vmatpush2.bf16.msra.mxu0 0
    %7261 = vmatprep.mubr.bf16.mxu0 0
    %7262 = vmatmul.mubr.bf16.gmra.mxu0 %v2921
    %v7263 = vpop.f32.mrf.mxu0
    %v7264 = vadd.f32 0.0, %v7263
    %v7265 = vpop.f32.mrf.mxu0
    %v7266 = vpop.f32.mrf.mxu0
    %v7267 = vpop.f32.mrf.mxu0
    %7268 = vdwg.mxu0
    %v7269 = vadd.f32 %v6829, %v7264
    %7270 = vmatprep.subr.bf16.mxu0 0
    %7271 = vmatpush1.bf16.msra.mxu0 %v7220
    %7272 = vmatprep.subr.bf16.mxu0 0
    %7273 = vmatpush1.bf16.msra.mxu0 %v7219
    %7274 = vmatprep.subr.bf16.mxu0 0
    %7275 = vmatpush1.bf16.msra.mxu0 %v7218
    %7276 = vmatprep.subr.bf16.mxu0 0
    %7277 = vmatpush1.bf16.msra.mxu0 %v7217
    %7278 = vmatprep.subr.bf16.mxu0 0
    %7279 = vmatpush1.bf16.msra.mxu0 %v7216
    %7280 = vmatprep.subr.bf16.mxu0 0
    %7281 = vmatpush1.bf16.msra.mxu0 %v7215
    %7282 = vmatprep.subr.bf16.mxu0 0
    %7283 = vmatpush1.bf16.msra.mxu0 %v7214
    %7284 = vmatprep.subr.bf16.mxu0 0
    %7285 = vmatpush1.bf16.msra.mxu0 %v7213
    %7286 = vmatprep.subr.bf16.mxu0 0
    %7287 = vmatpush2.bf16.msra.mxu0 0
    %7288 = vmatprep.subr.bf16.mxu0 0
    %7289 = vmatpush2.bf16.msra.mxu0 0
    %7290 = vmatprep.subr.bf16.mxu0 0
    %7291 = vmatpush2.bf16.msra.mxu0 0
    %7292 = vmatprep.subr.bf16.mxu0 0
    %7293 = vmatpush2.bf16.msra.mxu0 0
    %7294 = vmatprep.subr.bf16.mxu0 0
    %7295 = vmatpush2.bf16.msra.mxu0 0
    %7296 = vmatprep.subr.bf16.mxu0 0
    %7297 = vmatpush2.bf16.msra.mxu0 0
    %7298 = vmatprep.subr.bf16.mxu0 0
    %7299 = vmatpush2.bf16.msra.mxu0 0
    %7300 = vmatprep.subr.bf16.mxu0 0
    %7301 = vmatpush2.bf16.msra.mxu0 0
    %7302 = vmatprep.mubr.bf16.mxu0 0
    %7303 = vmatmul.mubr.bf16.gmra.mxu0 %v2968
    %v7304 = vpop.f32.mrf.mxu0
    %v7305 = vadd.f32 0.0, %v7304
    %v7306 = vpop.f32.mrf.mxu0
    %v7307 = vpop.f32.mrf.mxu0
    %v7308 = vpop.f32.mrf.mxu0
    %7309 = vdwg.mxu0
    %v7310 = vadd.f32 %v6870, %v7305
    %7311 = vmatprep.subr.bf16.mxu0 0
    %7312 = vmatpush1.bf16.msra.mxu0 %v7220
    %7313 = vmatprep.subr.bf16.mxu0 0
    %7314 = vmatpush1.bf16.msra.mxu0 %v7219
    %7315 = vmatprep.subr.bf16.mxu0 0
    %7316 = vmatpush1.bf16.msra.mxu0 %v7218
    %7317 = vmatprep.subr.bf16.mxu0 0
    %7318 = vmatpush1.bf16.msra.mxu0 %v7217
    %7319 = vmatprep.subr.bf16.mxu0 0
    %7320 = vmatpush1.bf16.msra.mxu0 %v7216
    %7321 = vmatprep.subr.bf16.mxu0 0
    %7322 = vmatpush1.bf16.msra.mxu0 %v7215
    %7323 = vmatprep.subr.bf16.mxu0 0
    %7324 = vmatpush1.bf16.msra.mxu0 %v7214
    %7325 = vmatprep.subr.bf16.mxu0 0
    %7326 = vmatpush1.bf16.msra.mxu0 %v7213
    %7327 = vmatprep.subr.bf16.mxu0 0
    %7328 = vmatpush2.bf16.msra.mxu0 0
    %7329 = vmatprep.subr.bf16.mxu0 0
    %7330 = vmatpush2.bf16.msra.mxu0 0
    %7331 = vmatprep.subr.bf16.mxu0 0
    %7332 = vmatpush2.bf16.msra.mxu0 0
    %7333 = vmatprep.subr.bf16.mxu0 0
    %7334 = vmatpush2.bf16.msra.mxu0 0
    %7335 = vmatprep.subr.bf16.mxu0 0
    %7336 = vmatpush2.bf16.msra.mxu0 0
    %7337 = vmatprep.subr.bf16.mxu0 0
    %7338 = vmatpush2.bf16.msra.mxu0 0
    %7339 = vmatprep.subr.bf16.mxu0 0
    %7340 = vmatpush2.bf16.msra.mxu0 0
    %7341 = vmatprep.subr.bf16.mxu0 0
    %7342 = vmatpush2.bf16.msra.mxu0 0
    %7343 = vmatprep.mubr.bf16.mxu0 0
    %7344 = vmatmul.mubr.bf16.gmra.mxu0 %v3884
    %v7345 = vpop.f32.mrf.mxu0
    %v7346 = vadd.f32 0.0, %v7345
    %v7347 = vpop.f32.mrf.mxu0
    %v7348 = vpop.f32.mrf.mxu0
    %v7349 = vpop.f32.mrf.mxu0
    %7350 = vdwg.mxu0
    %v7351 = vadd.f32 %v6911, %v7346
    %7352 = vmatprep.subr.bf16.mxu0 0
    %7353 = vmatpush1.bf16.msra.mxu0 %v7220
    %7354 = vmatprep.subr.bf16.mxu0 0
    %7355 = vmatpush1.bf16.msra.mxu0 %v7219
    %7356 = vmatprep.subr.bf16.mxu0 0
    %7357 = vmatpush1.bf16.msra.mxu0 %v7218
    %7358 = vmatprep.subr.bf16.mxu0 0
    %7359 = vmatpush1.bf16.msra.mxu0 %v7217
    %7360 = vmatprep.subr.bf16.mxu0 0
    %7361 = vmatpush1.bf16.msra.mxu0 %v7216
    %7362 = vmatprep.subr.bf16.mxu0 0
    %7363 = vmatpush1.bf16.msra.mxu0 %v7215
    %7364 = vmatprep.subr.bf16.mxu0 0
    %7365 = vmatpush1.bf16.msra.mxu0 %v7214
    %7366 = vmatprep.subr.bf16.mxu0 0
    %7367 = vmatpush1.bf16.msra.mxu0 %v7213
    %7368 = vmatprep.subr.bf16.mxu0 0
    %7369 = vmatpush2.bf16.msra.mxu0 0
    %7370 = vmatprep.subr.bf16.mxu0 0
    %7371 = vmatpush2.bf16.msra.mxu0 0
    %7372 = vmatprep.subr.bf16.mxu0 0
    %7373 = vmatpush2.bf16.msra.mxu0 0
    %7374 = vmatprep.subr.bf16.mxu0 0
    %7375 = vmatpush2.bf16.msra.mxu0 0
    %7376 = vmatprep.subr.bf16.mxu0 0
    %7377 = vmatpush2.bf16.msra.mxu0 0
    %7378 = vmatprep.subr.bf16.mxu0 0
    %7379 = vmatpush2.bf16.msra.mxu0 0
    %7380 = vmatprep.subr.bf16.mxu0 0
    %7381 = vmatpush2.bf16.msra.mxu0 0
    %7382 = vmatprep.subr.bf16.mxu0 0
    %7383 = vmatpush2.bf16.msra.mxu0 0
    %7384 = vmatprep.mubr.bf16.mxu0 0
    %7385 = vmatmul.mubr.bf16.gmra.mxu0 %v3062
    %v7386 = vpop.f32.mrf.mxu0
    %v7387 = vadd.f32 0.0, %v7386
    %v7388 = vpop.f32.mrf.mxu0
    %v7389 = vpop.f32.mrf.mxu0
    %v7390 = vpop.f32.mrf.mxu0
    %7391 = vdwg.mxu0
    %v7392 = vadd.f32 %v6952, %v7387
    %7393 = vmatprep.subr.bf16.mxu0 0
    %7394 = vmatpush1.bf16.msra.mxu0 %v7220
    %7395 = vmatprep.subr.bf16.mxu0 0
    %7396 = vmatpush1.bf16.msra.mxu0 %v7219
    %7397 = vmatprep.subr.bf16.mxu0 0
    %7398 = vmatpush1.bf16.msra.mxu0 %v7218
    %7399 = vmatprep.subr.bf16.mxu0 0
    %7400 = vmatpush1.bf16.msra.mxu0 %v7217
    %7401 = vmatprep.subr.bf16.mxu0 0
    %7402 = vmatpush1.bf16.msra.mxu0 %v7216
    %7403 = vmatprep.subr.bf16.mxu0 0
    %7404 = vmatpush1.bf16.msra.mxu0 %v7215
    %7405 = vmatprep.subr.bf16.mxu0 0
    %7406 = vmatpush1.bf16.msra.mxu0 %v7214
    %7407 = vmatprep.subr.bf16.mxu0 0
    %7408 = vmatpush1.bf16.msra.mxu0 %v7213
    %7409 = vmatprep.subr.bf16.mxu0 0
    %7410 = vmatpush2.bf16.msra.mxu0 0
    %7411 = vmatprep.subr.bf16.mxu0 0
    %7412 = vmatpush2.bf16.msra.mxu0 0
    %7413 = vmatprep.subr.bf16.mxu0 0
    %7414 = vmatpush2.bf16.msra.mxu0 0
    %7415 = vmatprep.subr.bf16.mxu0 0
    %7416 = vmatpush2.bf16.msra.mxu0 0
    %7417 = vmatprep.subr.bf16.mxu0 0
    %7418 = vmatpush2.bf16.msra.mxu0 0
    %7419 = vmatprep.subr.bf16.mxu0 0
    %7420 = vmatpush2.bf16.msra.mxu0 0
    %7421 = vmatprep.subr.bf16.mxu0 0
    %7422 = vmatpush2.bf16.msra.mxu0 0
    %7423 = vmatprep.subr.bf16.mxu0 0
    %7424 = vmatpush2.bf16.msra.mxu0 0
    %7425 = vmatprep.mubr.bf16.mxu0 0
    %7426 = vmatmul.mubr.bf16.gmra.mxu0 %v3109
    %v7427 = vpop.f32.mrf.mxu0
    %v7428 = vadd.f32 0.0, %v7427
    %v7429 = vpop.f32.mrf.mxu0
    %v7430 = vpop.f32.mrf.mxu0
    %v7431 = vpop.f32.mrf.mxu0
    %7432 = vdwg.mxu0
    %v7433 = vadd.f32 %v6993, %v7428
    %7434 = vmatprep.subr.bf16.mxu0 0
    %7435 = vmatpush1.bf16.msra.mxu0 %v7220
    %7436 = vmatprep.subr.bf16.mxu0 0
    %7437 = vmatpush1.bf16.msra.mxu0 %v7219
    %7438 = vmatprep.subr.bf16.mxu0 0
    %7439 = vmatpush1.bf16.msra.mxu0 %v7218
    %7440 = vmatprep.subr.bf16.mxu0 0
    %7441 = vmatpush1.bf16.msra.mxu0 %v7217
    %7442 = vmatprep.subr.bf16.mxu0 0
    %7443 = vmatpush1.bf16.msra.mxu0 %v7216
    %7444 = vmatprep.subr.bf16.mxu0 0
    %7445 = vmatpush1.bf16.msra.mxu0 %v7215
    %7446 = vmatprep.subr.bf16.mxu0 0
    %7447 = vmatpush1.bf16.msra.mxu0 %v7214
    %7448 = vmatprep.subr.bf16.mxu0 0
    %7449 = vmatpush1.bf16.msra.mxu0 %v7213
    %7450 = vmatprep.subr.bf16.mxu0 0
    %7451 = vmatpush2.bf16.msra.mxu0 0
    %7452 = vmatprep.subr.bf16.mxu0 0
    %7453 = vmatpush2.bf16.msra.mxu0 0
    %7454 = vmatprep.subr.bf16.mxu0 0
    %7455 = vmatpush2.bf16.msra.mxu0 0
    %7456 = vmatprep.subr.bf16.mxu0 0
    %7457 = vmatpush2.bf16.msra.mxu0 0
    %7458 = vmatprep.subr.bf16.mxu0 0
    %7459 = vmatpush2.bf16.msra.mxu0 0
    %7460 = vmatprep.subr.bf16.mxu0 0
    %7461 = vmatpush2.bf16.msra.mxu0 0
    %7462 = vmatprep.subr.bf16.mxu0 0
    %7463 = vmatpush2.bf16.msra.mxu0 0
    %7464 = vmatprep.subr.bf16.mxu0 0
    %7465 = vmatpush2.bf16.msra.mxu0 0
    %7466 = vmatprep.mubr.bf16.mxu0 0
    %7467 = vmatmul.mubr.bf16.gmra.mxu0 %v4013
    %v7468 = vpop.f32.mrf.mxu0
    %v7469 = vadd.f32 0.0, %v7468
    %v7470 = vpop.f32.mrf.mxu0
    %v7471 = vpop.f32.mrf.mxu0
    %v7472 = vpop.f32.mrf.mxu0
    %7473 = vdwg.mxu0
    %v7474 = vadd.f32 %v7034, %v7469
    %7475 = vmatprep.subr.bf16.mxu0 0
    %7476 = vmatpush1.bf16.msra.mxu0 %v7220
    %7477 = vmatprep.subr.bf16.mxu0 0
    %7478 = vmatpush1.bf16.msra.mxu0 %v7219
    %7479 = vmatprep.subr.bf16.mxu0 0
    %7480 = vmatpush1.bf16.msra.mxu0 %v7218
    %7481 = vmatprep.subr.bf16.mxu0 0
    %7482 = vmatpush1.bf16.msra.mxu0 %v7217
    %7483 = vmatprep.subr.bf16.mxu0 0
    %7484 = vmatpush1.bf16.msra.mxu0 %v7216
    %7485 = vmatprep.subr.bf16.mxu0 0
    %7486 = vmatpush1.bf16.msra.mxu0 %v7215
    %7487 = vmatprep.subr.bf16.mxu0 0
    %7488 = vmatpush1.bf16.msra.mxu0 %v7214
    %7489 = vmatprep.subr.bf16.mxu0 0
    %7490 = vmatpush1.bf16.msra.mxu0 %v7213
    %7491 = vmatprep.subr.bf16.mxu0 0
    %7492 = vmatpush2.bf16.msra.mxu0 0
    %7493 = vmatprep.subr.bf16.mxu0 0
    %7494 = vmatpush2.bf16.msra.mxu0 0
    %7495 = vmatprep.subr.bf16.mxu0 0
    %7496 = vmatpush2.bf16.msra.mxu0 0
    %7497 = vmatprep.subr.bf16.mxu0 0
    %7498 = vmatpush2.bf16.msra.mxu0 0
    %7499 = vmatprep.subr.bf16.mxu0 0
    %7500 = vmatpush2.bf16.msra.mxu0 0
    %7501 = vmatprep.subr.bf16.mxu0 0
    %7502 = vmatpush2.bf16.msra.mxu0 0
    %7503 = vmatprep.subr.bf16.mxu0 0
    %7504 = vmatpush2.bf16.msra.mxu0 0
    %7505 = vmatprep.subr.bf16.mxu0 0
    %7506 = vmatpush2.bf16.msra.mxu0 0
    %7507 = vmatprep.mubr.bf16.mxu0 0
    %7508 = vmatmul.mubr.bf16.gmra.mxu0 %v6634
    %v7509 = vpop.f32.mrf.mxu0
    %v7510 = vadd.f32 0.0, %v7509
    %v7511 = vpop.f32.mrf.mxu0
    %v7512 = vpop.f32.mrf.mxu0
    %v7513 = vpop.f32.mrf.mxu0
    %7514 = vdwg.mxu0
    %v7515 = vadd.f32 %v7075, %v7510
    %7516 = vmatprep.subr.bf16.mxu0 0
    %7517 = vmatpush1.bf16.msra.mxu0 %v7220
    %7518 = vmatprep.subr.bf16.mxu0 0
    %7519 = vmatpush1.bf16.msra.mxu0 %v7219
    %7520 = vmatprep.subr.bf16.mxu0 0
    %7521 = vmatpush1.bf16.msra.mxu0 %v7218
    %7522 = vmatprep.subr.bf16.mxu0 0
    %7523 = vmatpush1.bf16.msra.mxu0 %v7217
    %7524 = vmatprep.subr.bf16.mxu0 0
    %7525 = vmatpush1.bf16.msra.mxu0 %v7216
    %7526 = vmatprep.subr.bf16.mxu0 0
    %7527 = vmatpush1.bf16.msra.mxu0 %v7215
    %7528 = vmatprep.subr.bf16.mxu0 0
    %7529 = vmatpush1.bf16.msra.mxu0 %v7214
    %7530 = vmatprep.subr.bf16.mxu0 0
    %7531 = vmatpush1.bf16.msra.mxu0 %v7213
    %7532 = vmatprep.subr.bf16.mxu0 0
    %7533 = vmatpush2.bf16.msra.mxu0 0
    %7534 = vmatprep.subr.bf16.mxu0 0
    %7535 = vmatpush2.bf16.msra.mxu0 0
    %7536 = vmatprep.subr.bf16.mxu0 0
    %7537 = vmatpush2.bf16.msra.mxu0 0
    %7538 = vmatprep.subr.bf16.mxu0 0
    %7539 = vmatpush2.bf16.msra.mxu0 0
    %7540 = vmatprep.subr.bf16.mxu0 0
    %7541 = vmatpush2.bf16.msra.mxu0 0
    %7542 = vmatprep.subr.bf16.mxu0 0
    %7543 = vmatpush2.bf16.msra.mxu0 0
    %7544 = vmatprep.subr.bf16.mxu0 0
    %7545 = vmatpush2.bf16.msra.mxu0 0
    %7546 = vmatprep.subr.bf16.mxu0 0
    %7547 = vmatpush2.bf16.msra.mxu0 0
    %7548 = vmatprep.mubr.bf16.mxu0 0
    %7549 = vmatmul.mubr.bf16.gmra.mxu0 %v6681
    %v7550 = vpop.f32.mrf.mxu0
    %v7551 = vadd.f32 0.0, %v7550
    %v7552 = vpop.f32.mrf.mxu0
    %v7553 = vpop.f32.mrf.mxu0
    %v7554 = vpop.f32.mrf.mxu0
    %7555 = vdwg.mxu0
    %v7556 = vadd.f32 %v7116, %v7551
    %v7557 = vld [vmem:[#allocation2 + $0x3c] sm:$0x8]
    %v7559 = vunpack.c.l.b16 %v7557
    %v7560 = vpack.c.b16 %v7559, %v7559
    %v7561 = vrot.slane %v7560, 3
    %7563 = vmatprep.subr.bf16.mxu0 0
    %7564 = vmatpush1.bf16.msra.mxu0 %v7220
    %7565 = vmatprep.subr.bf16.mxu0 0
    %7566 = vmatpush1.bf16.msra.mxu0 %v7219
    %7567 = vmatprep.subr.bf16.mxu0 0
    %7568 = vmatpush1.bf16.msra.mxu0 %v7218
    %7569 = vmatprep.subr.bf16.mxu0 0
    %7570 = vmatpush1.bf16.msra.mxu0 %v7217
    %7571 = vmatprep.subr.bf16.mxu0 0
    %7572 = vmatpush1.bf16.msra.mxu0 %v7216
    %7573 = vmatprep.subr.bf16.mxu0 0
    %7574 = vmatpush1.bf16.msra.mxu0 %v7215
    %7575 = vmatprep.subr.bf16.mxu0 0
    %7576 = vmatpush1.bf16.msra.mxu0 %v7214
    %7577 = vmatprep.subr.bf16.mxu0 0
    %7578 = vmatpush1.bf16.msra.mxu0 %v7213
    %7579 = vmatprep.subr.bf16.mxu0 0
    %7580 = vmatpush2.bf16.msra.mxu0 0
    %7581 = vmatprep.subr.bf16.mxu0 0
    %7582 = vmatpush2.bf16.msra.mxu0 0
    %7583 = vmatprep.subr.bf16.mxu0 0
    %7584 = vmatpush2.bf16.msra.mxu0 0
    %7585 = vmatprep.subr.bf16.mxu0 0
    %7586 = vmatpush2.bf16.msra.mxu0 0
    %7587 = vmatprep.subr.bf16.mxu0 0
    %7588 = vmatpush2.bf16.msra.mxu0 0
    %7589 = vmatprep.subr.bf16.mxu0 0
    %7590 = vmatpush2.bf16.msra.mxu0 0
    %7591 = vmatprep.subr.bf16.mxu0 0
    %7592 = vmatpush2.bf16.msra.mxu0 0
    %7593 = vmatprep.subr.bf16.mxu0 0
    %7594 = vmatpush2.bf16.msra.mxu0 0
    %7595 = vmatprep.mubr.bf16.mxu0 0
    %7596 = vmatmul.mubr.bf16.gmra.mxu0 %v7561
    %v7597 = vpop.f32.mrf.mxu0
    %v7598 = vadd.f32 0.0, %v7597
    %v7599 = vpop.f32.mrf.mxu0
    %v7600 = vpop.f32.mrf.mxu0
    %v7601 = vpop.f32.mrf.mxu0
    %7602 = vdwg.mxu0
    %v7603 = vadd.f32 %v7163, %v7598
    %v7605 = vlaneseq
    %v7606 = vshrl.u32 %v7605, 7
    %v7607 = vsub.s32 0, %v7606
    %v7608 = vrot.slane %v374, %v7607
    %v7610 = vadd.f32 %v7269, %v7608
    %v7611 = vmax.f32 %v7610, 0.0
    %v7612 = vpack.c.bf16 %v7611, %v7611
    %v7613 = vadd.f32 %v7310, %v7608
    %v7614 = vmax.f32 %v7613, 0.0
    %v7615 = vpack.c.bf16 %v7614, %v7614
    %v7616 = vadd.f32 %v7351, %v7608
    %v7617 = vmax.f32 %v7616, 0.0
    %v7618 = vpack.c.bf16 %v7617, %v7617
    %v7619 = vadd.f32 %v7392, %v7608
    %v7620 = vmax.f32 %v7619, 0.0
    %v7621 = vpack.c.bf16 %v7620, %v7620
    %v7622 = vadd.f32 %v7433, %v7608
    %v7623 = vmax.f32 %v7622, 0.0
    %v7624 = vpack.c.bf16 %v7623, %v7623
    %v7625 = vadd.f32 %v7474, %v7608
    %v7626 = vmax.f32 %v7625, 0.0
    %v7627 = vpack.c.bf16 %v7626, %v7626
    %v7628 = vadd.f32 %v7515, %v7608
    %v7629 = vmax.f32 %v7628, 0.0
    %v7630 = vpack.c.bf16 %v7629, %v7629
    %v7631 = vadd.f32 %v7556, %v7608
    %v7632 = vmax.f32 %v7631, 0.0
    %v7633 = vpack.c.bf16 %v7632, %v7632
    %v7634 = vadd.f32 %v7603, %v7608
    %v7635 = vmax.f32 %v7634, 0.0
    %v7636 = vpack.c.bf16 %v7635, %v7635
    %v7637 = vld [vmem:[%s6] sm:$0x1]
    %v7638 = vld [vmem:[%s5] sm:$0xf]
    %v7639 = vld [vmem:[%s5 + $0x4] sm:$0xf]
    %v7640 = vld [vmem:[%s5 + $0x8] sm:$0xf]
    %v7641 = vld [vmem:[%s5 + $0xc] sm:$0xf]
    %v7642 = vld [vmem:[%s5 + $0x10] sm:$0xf]
    %v7643 = vld [vmem:[%s5 + $0x14] sm:$0xf]
    %v7644 = vld [vmem:[%s5 + $0x18] sm:$0xf]
    %v7645 = vld [vmem:[%s5 + $0x1c] sm:$0xf]
    %v7646 = vld [vmem:[%s5 + $0x20] sm:$0xf]
    %v7647 = vld [vmem:[%s5 + $0x24] sm:$0xf]
    %v7648 = vld [vmem:[%s5 + $0x28] sm:$0xf]
    %v7649 = vld [vmem:[%s5 + $0x2c] sm:$0xf]
    %v7650 = vld [vmem:[%s5 + $0x30] sm:$0xf]
    %v7651 = vld [vmem:[%s5 + $0x34] sm:$0xf]
    %v7652 = vld [vmem:[%s5 + $0x38] sm:$0xf]
    %v7653 = vld [vmem:[%s5 + $0x3c] sm:$0xf]
    %s7654 = scalar_lea.vmem %s5, 64
    %v7655 = vld [vmem:[%s7654] sm:$0xf]
    %v7656 = vld [vmem:[%s7654 + $0x4] sm:$0xf]
    %v7657 = vld [vmem:[%s7654 + $0x8] sm:$0xf]
    %v7658 = vld [vmem:[%s7654 + $0xc] sm:$0xf]
    %v7659 = vld [vmem:[%s7654 + $0x10] sm:$0xf]
    %v7660 = vld [vmem:[%s7654 + $0x14] sm:$0xf]
    %v7661 = vld [vmem:[%s7654 + $0x18] sm:$0xf]
    %v7662 = vld [vmem:[%s7654 + $0x1c] sm:$0xf]
    %v7663 = vld [vmem:[%s7654 + $0x20] sm:$0xf]
    %v7664 = vld [vmem:[%s7654 + $0x24] sm:$0xf]
    %v7665 = vld [vmem:[%s7654 + $0x28] sm:$0xf]
    %v7666 = vld [vmem:[%s7654 + $0x2c] sm:$0xf]
    %v7667 = vld [vmem:[%s7654 + $0x30] sm:$0xf]
    %v7668 = vld [vmem:[%s7654 + $0x34] sm:$0xf]
    %v7669 = vld [vmem:[%s7654 + $0x38] sm:$0xf]
    %v7670 = vld [vmem:[%s7654 + $0x3c] sm:$0xf]
    %v7687 = vunpack.c.l.b16 %v7655
    %v7688 = vunpack.c.l.b16 %v7656
    %v7689 = vunpack.c.l.b16 %v7657
    %v7690 = vunpack.c.l.b16 %v7658
    %v7691 = vunpack.c.l.b16 %v7659
    %v7692 = vunpack.c.l.b16 %v7660
    %v7693 = vunpack.c.l.b16 %v7661
    %v7694 = vunpack.c.l.b16 %v7662
    %v7695 = vunpack.c.l.b16 %v7663
    %v7696 = vunpack.c.l.b16 %v7664
    %v7697 = vunpack.c.l.b16 %v7665
    %v7698 = vunpack.c.l.b16 %v7666
    %v7699 = vunpack.c.l.b16 %v7667
    %v7700 = vunpack.c.l.b16 %v7668
    %v7701 = vunpack.c.l.b16 %v7669
    %v7702 = vunpack.c.l.b16 %v7670
    %v7703 = vpack.c.b16 %v7688, %v7687
    %v7704 = vpack.c.b16 %v7690, %v7689
    %v7705 = vpack.c.b16 %v7692, %v7691
    %v7706 = vpack.c.b16 %v7694, %v7693
    %v7707 = vpack.c.b16 %v7696, %v7695
    %v7708 = vpack.c.b16 %v7698, %v7697
    %v7709 = vpack.c.b16 %v7700, %v7699
    %v7710 = vpack.c.b16 %v7702, %v7701
    %7719 = vmatprep.subr.bf16.mxu0 0
    %7720 = vmatpush1.bf16.msra.mxu0 %v7710
    %7721 = vmatprep.subr.bf16.mxu0 0
    %7722 = vmatpush1.bf16.msra.mxu0 %v7709
    %7723 = vmatprep.subr.bf16.mxu0 0
    %7724 = vmatpush1.bf16.msra.mxu0 %v7708
    %7725 = vmatprep.subr.bf16.mxu0 0
    %7726 = vmatpush1.bf16.msra.mxu0 %v7707
    %7727 = vmatprep.subr.bf16.mxu0 0
    %7728 = vmatpush1.bf16.msra.mxu0 %v7706
    %7729 = vmatprep.subr.bf16.mxu0 0
    %7730 = vmatpush1.bf16.msra.mxu0 %v7705
    %7731 = vmatprep.subr.bf16.mxu0 0
    %7732 = vmatpush1.bf16.msra.mxu0 %v7704
    %7733 = vmatprep.subr.bf16.mxu0 0
    %7734 = vmatpush1.bf16.msra.mxu0 %v7703
    %7735 = vmatprep.subr.bf16.mxu0 0
    %7736 = vmatpush2.bf16.msra.mxu0 0
    %7737 = vmatprep.subr.bf16.mxu0 0
    %7738 = vmatpush2.bf16.msra.mxu0 0
    %7739 = vmatprep.subr.bf16.mxu0 0
    %7740 = vmatpush2.bf16.msra.mxu0 0
    %7741 = vmatprep.subr.bf16.mxu0 0
    %7742 = vmatpush2.bf16.msra.mxu0 0
    %7743 = vmatprep.subr.bf16.mxu0 0
    %7744 = vmatpush2.bf16.msra.mxu0 0
    %7745 = vmatprep.subr.bf16.mxu0 0
    %7746 = vmatpush2.bf16.msra.mxu0 0
    %7747 = vmatprep.subr.bf16.mxu0 0
    %7748 = vmatpush2.bf16.msra.mxu0 0
    %7749 = vmatprep.subr.bf16.mxu0 0
    %7750 = vmatpush2.bf16.msra.mxu0 0
    %7751 = vmatprep.mubr.bf16.mxu0 0
    %7752 = vmatmul.mubr.bf16.gmra.mxu0 %v7615
    %v7753 = vpop.f32.mrf.mxu0
    %v7754 = vadd.f32 0.0, %v7753
    %v7755 = vpop.f32.mrf.mxu0
    %v7756 = vpop.f32.mrf.mxu0
    %v7757 = vpop.f32.mrf.mxu0
    %7758 = vdwg.mxu0
    %v7775 = vunpack.c.l.b16 %v7638
    %v7776 = vunpack.c.l.b16 %v7639
    %v7777 = vunpack.c.l.b16 %v7640
    %v7778 = vunpack.c.l.b16 %v7641
    %v7779 = vunpack.c.l.b16 %v7642
    %v7780 = vunpack.c.l.b16 %v7643
    %v7781 = vunpack.c.l.b16 %v7644
    %v7782 = vunpack.c.l.b16 %v7645
    %v7783 = vunpack.c.l.b16 %v7646
    %v7784 = vunpack.c.l.b16 %v7647
    %v7785 = vunpack.c.l.b16 %v7648
    %v7786 = vunpack.c.l.b16 %v7649
    %v7787 = vunpack.c.l.b16 %v7650
    %v7788 = vunpack.c.l.b16 %v7651
    %v7789 = vunpack.c.l.b16 %v7652
    %v7790 = vunpack.c.l.b16 %v7653
    %v7791 = vpack.c.b16 %v7776, %v7775
    %v7792 = vpack.c.b16 %v7778, %v7777
    %v7793 = vpack.c.b16 %v7780, %v7779
    %v7794 = vpack.c.b16 %v7782, %v7781
    %v7795 = vpack.c.b16 %v7784, %v7783
    %v7796 = vpack.c.b16 %v7786, %v7785
    %v7797 = vpack.c.b16 %v7788, %v7787
    %v7798 = vpack.c.b16 %v7790, %v7789
    %7807 = vmatprep.subr.bf16.mxu0 0
    %7808 = vmatpush1.bf16.msra.mxu0 %v7798
    %7809 = vmatprep.subr.bf16.mxu0 0
    %7810 = vmatpush1.bf16.msra.mxu0 %v7797
    %7811 = vmatprep.subr.bf16.mxu0 0
    %7812 = vmatpush1.bf16.msra.mxu0 %v7796
    %7813 = vmatprep.subr.bf16.mxu0 0
    %7814 = vmatpush1.bf16.msra.mxu0 %v7795
    %7815 = vmatprep.subr.bf16.mxu0 0
    %7816 = vmatpush1.bf16.msra.mxu0 %v7794
    %7817 = vmatprep.subr.bf16.mxu0 0
    %7818 = vmatpush1.bf16.msra.mxu0 %v7793
    %7819 = vmatprep.subr.bf16.mxu0 0
    %7820 = vmatpush1.bf16.msra.mxu0 %v7792
    %7821 = vmatprep.subr.bf16.mxu0 0
    %7822 = vmatpush1.bf16.msra.mxu0 %v7791
    %7823 = vmatprep.subr.bf16.mxu0 0
    %7824 = vmatpush2.bf16.msra.mxu0 0
    %7825 = vmatprep.subr.bf16.mxu0 0
    %7826 = vmatpush2.bf16.msra.mxu0 0
    %7827 = vmatprep.subr.bf16.mxu0 0
    %7828 = vmatpush2.bf16.msra.mxu0 0
    %7829 = vmatprep.subr.bf16.mxu0 0
    %7830 = vmatpush2.bf16.msra.mxu0 0
    %7831 = vmatprep.subr.bf16.mxu0 0
    %7832 = vmatpush2.bf16.msra.mxu0 0
    %7833 = vmatprep.subr.bf16.mxu0 0
    %7834 = vmatpush2.bf16.msra.mxu0 0
    %7835 = vmatprep.subr.bf16.mxu0 0
    %7836 = vmatpush2.bf16.msra.mxu0 0
    %7837 = vmatprep.subr.bf16.mxu0 0
    %7838 = vmatpush2.bf16.msra.mxu0 0
    %7839 = vmatprep.mubr.bf16.mxu0 0
    %7840 = vmatmul.mubr.bf16.gmra.mxu0 %v7612
    %v7841 = vpop.f32.mrf.mxu0
    %v7842 = vadd.f32 %v7754, %v7841
    %v7843 = vpop.f32.mrf.mxu0
    %v7844 = vpop.f32.mrf.mxu0
    %v7845 = vpop.f32.mrf.mxu0
    %7846 = vdwg.mxu0
    %s7847 = scalar_lea.vmem %s5, 128
    %v7848 = vld [vmem:[%s7847] sm:$0xf]
    %v7849 = vld [vmem:[%s7847 + $0x4] sm:$0xf]
    %v7850 = vld [vmem:[%s7847 + $0x8] sm:$0xf]
    %v7851 = vld [vmem:[%s7847 + $0xc] sm:$0xf]
    %v7852 = vld [vmem:[%s7847 + $0x10] sm:$0xf]
    %v7853 = vld [vmem:[%s7847 + $0x14] sm:$0xf]
    %v7854 = vld [vmem:[%s7847 + $0x18] sm:$0xf]
    %v7855 = vld [vmem:[%s7847 + $0x1c] sm:$0xf]
    %v7856 = vld [vmem:[%s7847 + $0x20] sm:$0xf]
    %v7857 = vld [vmem:[%s7847 + $0x24] sm:$0xf]
    %v7858 = vld [vmem:[%s7847 + $0x28] sm:$0xf]
    %v7859 = vld [vmem:[%s7847 + $0x2c] sm:$0xf]
    %v7860 = vld [vmem:[%s7847 + $0x30] sm:$0xf]
    %v7861 = vld [vmem:[%s7847 + $0x34] sm:$0xf]
    %v7862 = vld [vmem:[%s7847 + $0x38] sm:$0xf]
    %v7863 = vld [vmem:[%s7847 + $0x3c] sm:$0xf]
    %v7880 = vunpack.c.l.b16 %v7848
    %v7881 = vunpack.c.l.b16 %v7849
    %v7882 = vunpack.c.l.b16 %v7850
    %v7883 = vunpack.c.l.b16 %v7851
    %v7884 = vunpack.c.l.b16 %v7852
    %v7885 = vunpack.c.l.b16 %v7853
    %v7886 = vunpack.c.l.b16 %v7854
    %v7887 = vunpack.c.l.b16 %v7855
    %v7888 = vunpack.c.l.b16 %v7856
    %v7889 = vunpack.c.l.b16 %v7857
    %v7890 = vunpack.c.l.b16 %v7858
    %v7891 = vunpack.c.l.b16 %v7859
    %v7892 = vunpack.c.l.b16 %v7860
    %v7893 = vunpack.c.l.b16 %v7861
    %v7894 = vunpack.c.l.b16 %v7862
    %v7895 = vunpack.c.l.b16 %v7863
    %v7896 = vpack.c.b16 %v7881, %v7880
    %v7897 = vpack.c.b16 %v7883, %v7882
    %v7898 = vpack.c.b16 %v7885, %v7884
    %v7899 = vpack.c.b16 %v7887, %v7886
    %v7900 = vpack.c.b16 %v7889, %v7888
    %v7901 = vpack.c.b16 %v7891, %v7890
    %v7902 = vpack.c.b16 %v7893, %v7892
    %v7903 = vpack.c.b16 %v7895, %v7894
    %7912 = vmatprep.subr.bf16.mxu0 0
    %7913 = vmatpush1.bf16.msra.mxu0 %v7903
    %7914 = vmatprep.subr.bf16.mxu0 0
    %7915 = vmatpush1.bf16.msra.mxu0 %v7902
    %7916 = vmatprep.subr.bf16.mxu0 0
    %7917 = vmatpush1.bf16.msra.mxu0 %v7901
    %7918 = vmatprep.subr.bf16.mxu0 0
    %7919 = vmatpush1.bf16.msra.mxu0 %v7900
    %7920 = vmatprep.subr.bf16.mxu0 0
    %7921 = vmatpush1.bf16.msra.mxu0 %v7899
    %7922 = vmatprep.subr.bf16.mxu0 0
    %7923 = vmatpush1.bf16.msra.mxu0 %v7898
    %7924 = vmatprep.subr.bf16.mxu0 0
    %7925 = vmatpush1.bf16.msra.mxu0 %v7897
    %7926 = vmatprep.subr.bf16.mxu0 0
    %7927 = vmatpush1.bf16.msra.mxu0 %v7896
    %7928 = vmatprep.subr.bf16.mxu0 0
    %7929 = vmatpush2.bf16.msra.mxu0 0
    %7930 = vmatprep.subr.bf16.mxu0 0
    %7931 = vmatpush2.bf16.msra.mxu0 0
    %7932 = vmatprep.subr.bf16.mxu0 0
    %7933 = vmatpush2.bf16.msra.mxu0 0
    %7934 = vmatprep.subr.bf16.mxu0 0
    %7935 = vmatpush2.bf16.msra.mxu0 0
    %7936 = vmatprep.subr.bf16.mxu0 0
    %7937 = vmatpush2.bf16.msra.mxu0 0
    %7938 = vmatprep.subr.bf16.mxu0 0
    %7939 = vmatpush2.bf16.msra.mxu0 0
    %7940 = vmatprep.subr.bf16.mxu0 0
    %7941 = vmatpush2.bf16.msra.mxu0 0
    %7942 = vmatprep.subr.bf16.mxu0 0
    %7943 = vmatpush2.bf16.msra.mxu0 0
    %7944 = vmatprep.mubr.bf16.mxu0 0
    %7945 = vmatmul.mubr.bf16.gmra.mxu0 %v7618
    %v7946 = vpop.f32.mrf.mxu0
    %v7947 = vadd.f32 0.0, %v7946
    %v7948 = vpop.f32.mrf.mxu0
    %v7949 = vpop.f32.mrf.mxu0
    %v7950 = vpop.f32.mrf.mxu0
    %7951 = vdwg.mxu0
    %v7952 = vadd.f32 %v7842, %v7947
    %s7953 = scalar_lea.vmem %s5, 192
    %v7954 = vld [vmem:[%s7953] sm:$0xf]
    %v7955 = vld [vmem:[%s7953 + $0x4] sm:$0xf]
    %v7956 = vld [vmem:[%s7953 + $0x8] sm:$0xf]
    %v7957 = vld [vmem:[%s7953 + $0xc] sm:$0xf]
    %v7958 = vld [vmem:[%s7953 + $0x10] sm:$0xf]
    %v7959 = vld [vmem:[%s7953 + $0x14] sm:$0xf]
    %v7960 = vld [vmem:[%s7953 + $0x18] sm:$0xf]
    %v7961 = vld [vmem:[%s7953 + $0x1c] sm:$0xf]
    %v7962 = vld [vmem:[%s7953 + $0x20] sm:$0xf]
    %v7963 = vld [vmem:[%s7953 + $0x24] sm:$0xf]
    %v7964 = vld [vmem:[%s7953 + $0x28] sm:$0xf]
    %v7965 = vld [vmem:[%s7953 + $0x2c] sm:$0xf]
    %v7966 = vld [vmem:[%s7953 + $0x30] sm:$0xf]
    %v7967 = vld [vmem:[%s7953 + $0x34] sm:$0xf]
    %v7968 = vld [vmem:[%s7953 + $0x38] sm:$0xf]
    %v7969 = vld [vmem:[%s7953 + $0x3c] sm:$0xf]
    %v7986 = vunpack.c.l.b16 %v7954
    %v7987 = vunpack.c.l.b16 %v7955
    %v7988 = vunpack.c.l.b16 %v7956
    %v7989 = vunpack.c.l.b16 %v7957
    %v7990 = vunpack.c.l.b16 %v7958
    %v7991 = vunpack.c.l.b16 %v7959
    %v7992 = vunpack.c.l.b16 %v7960
    %v7993 = vunpack.c.l.b16 %v7961
    %v7994 = vunpack.c.l.b16 %v7962
    %v7995 = vunpack.c.l.b16 %v7963
    %v7996 = vunpack.c.l.b16 %v7964
    %v7997 = vunpack.c.l.b16 %v7965
    %v7998 = vunpack.c.l.b16 %v7966
    %v7999 = vunpack.c.l.b16 %v7967
    %v8000 = vunpack.c.l.b16 %v7968
    %v8001 = vunpack.c.l.b16 %v7969
    %v8002 = vpack.c.b16 %v7987, %v7986
    %v8003 = vpack.c.b16 %v7989, %v7988
    %v8004 = vpack.c.b16 %v7991, %v7990
    %v8005 = vpack.c.b16 %v7993, %v7992
    %v8006 = vpack.c.b16 %v7995, %v7994
    %v8007 = vpack.c.b16 %v7997, %v7996
    %v8008 = vpack.c.b16 %v7999, %v7998
    %v8009 = vpack.c.b16 %v8001, %v8000
    %8018 = vmatprep.subr.bf16.mxu0 0
    %8019 = vmatpush1.bf16.msra.mxu0 %v8009
    %8020 = vmatprep.subr.bf16.mxu0 0
    %8021 = vmatpush1.bf16.msra.mxu0 %v8008
    %8022 = vmatprep.subr.bf16.mxu0 0
    %8023 = vmatpush1.bf16.msra.mxu0 %v8007
    %8024 = vmatprep.subr.bf16.mxu0 0
    %8025 = vmatpush1.bf16.msra.mxu0 %v8006
    %8026 = vmatprep.subr.bf16.mxu0 0
    %8027 = vmatpush1.bf16.msra.mxu0 %v8005
    %8028 = vmatprep.subr.bf16.mxu0 0
    %8029 = vmatpush1.bf16.msra.mxu0 %v8004
    %8030 = vmatprep.subr.bf16.mxu0 0
    %8031 = vmatpush1.bf16.msra.mxu0 %v8003
    %8032 = vmatprep.subr.bf16.mxu0 0
    %8033 = vmatpush1.bf16.msra.mxu0 %v8002
    %8034 = vmatprep.subr.bf16.mxu0 0
    %8035 = vmatpush2.bf16.msra.mxu0 0
    %8036 = vmatprep.subr.bf16.mxu0 0
    %8037 = vmatpush2.bf16.msra.mxu0 0
    %8038 = vmatprep.subr.bf16.mxu0 0
    %8039 = vmatpush2.bf16.msra.mxu0 0
    %8040 = vmatprep.subr.bf16.mxu0 0
    %8041 = vmatpush2.bf16.msra.mxu0 0
    %8042 = vmatprep.subr.bf16.mxu0 0
    %8043 = vmatpush2.bf16.msra.mxu0 0
    %8044 = vmatprep.subr.bf16.mxu0 0
    %8045 = vmatpush2.bf16.msra.mxu0 0
    %8046 = vmatprep.subr.bf16.mxu0 0
    %8047 = vmatpush2.bf16.msra.mxu0 0
    %8048 = vmatprep.subr.bf16.mxu0 0
    %8049 = vmatpush2.bf16.msra.mxu0 0
    %8050 = vmatprep.mubr.bf16.mxu0 0
    %8051 = vmatmul.mubr.bf16.gmra.mxu0 %v7621
    %v8052 = vpop.f32.mrf.mxu0
    %v8053 = vadd.f32 0.0, %v8052
    %v8054 = vpop.f32.mrf.mxu0
    %v8055 = vpop.f32.mrf.mxu0
    %v8056 = vpop.f32.mrf.mxu0
    %8057 = vdwg.mxu0
    %v8058 = vadd.f32 %v7952, %v8053
    %s8059 = scalar_lea.vmem %s5, 256
    %v8060 = vld [vmem:[%s8059] sm:$0xf]
    %v8061 = vld [vmem:[%s8059 + $0x4] sm:$0xf]
    %v8062 = vld [vmem:[%s8059 + $0x8] sm:$0xf]
    %v8063 = vld [vmem:[%s8059 + $0xc] sm:$0xf]
    %v8064 = vld [vmem:[%s8059 + $0x10] sm:$0xf]
    %v8065 = vld [vmem:[%s8059 + $0x14] sm:$0xf]
    %v8066 = vld [vmem:[%s8059 + $0x18] sm:$0xf]
    %v8067 = vld [vmem:[%s8059 + $0x1c] sm:$0xf]
    %v8068 = vld [vmem:[%s8059 + $0x20] sm:$0xf]
    %v8069 = vld [vmem:[%s8059 + $0x24] sm:$0xf]
    %v8070 = vld [vmem:[%s8059 + $0x28] sm:$0xf]
    %v8071 = vld [vmem:[%s8059 + $0x2c] sm:$0xf]
    %v8072 = vld [vmem:[%s8059 + $0x30] sm:$0xf]
    %v8073 = vld [vmem:[%s8059 + $0x34] sm:$0xf]
    %v8074 = vld [vmem:[%s8059 + $0x38] sm:$0xf]
    %v8075 = vld [vmem:[%s8059 + $0x3c] sm:$0xf]
    %v8092 = vunpack.c.l.b16 %v8060
    %v8093 = vunpack.c.l.b16 %v8061
    %v8094 = vunpack.c.l.b16 %v8062
    %v8095 = vunpack.c.l.b16 %v8063
    %v8096 = vunpack.c.l.b16 %v8064
    %v8097 = vunpack.c.l.b16 %v8065
    %v8098 = vunpack.c.l.b16 %v8066
    %v8099 = vunpack.c.l.b16 %v8067
    %v8100 = vunpack.c.l.b16 %v8068
    %v8101 = vunpack.c.l.b16 %v8069
    %v8102 = vunpack.c.l.b16 %v8070
    %v8103 = vunpack.c.l.b16 %v8071
    %v8104 = vunpack.c.l.b16 %v8072
    %v8105 = vunpack.c.l.b16 %v8073
    %v8106 = vunpack.c.l.b16 %v8074
    %v8107 = vunpack.c.l.b16 %v8075
    %v8108 = vpack.c.b16 %v8093, %v8092
    %v8109 = vpack.c.b16 %v8095, %v8094
    %v8110 = vpack.c.b16 %v8097, %v8096
    %v8111 = vpack.c.b16 %v8099, %v8098
    %v8112 = vpack.c.b16 %v8101, %v8100
    %v8113 = vpack.c.b16 %v8103, %v8102
    %v8114 = vpack.c.b16 %v8105, %v8104
    %v8115 = vpack.c.b16 %v8107, %v8106
    %8124 = vmatprep.subr.bf16.mxu0 0
    %8125 = vmatpush1.bf16.msra.mxu0 %v8115
    %8126 = vmatprep.subr.bf16.mxu0 0
    %8127 = vmatpush1.bf16.msra.mxu0 %v8114
    %8128 = vmatprep.subr.bf16.mxu0 0
    %8129 = vmatpush1.bf16.msra.mxu0 %v8113
    %8130 = vmatprep.subr.bf16.mxu0 0
    %8131 = vmatpush1.bf16.msra.mxu0 %v8112
    %8132 = vmatprep.subr.bf16.mxu0 0
    %8133 = vmatpush1.bf16.msra.mxu0 %v8111
    %8134 = vmatprep.subr.bf16.mxu0 0
    %8135 = vmatpush1.bf16.msra.mxu0 %v8110
    %8136 = vmatprep.subr.bf16.mxu0 0
    %8137 = vmatpush1.bf16.msra.mxu0 %v8109
    %8138 = vmatprep.subr.bf16.mxu0 0
    %8139 = vmatpush1.bf16.msra.mxu0 %v8108
    %8140 = vmatprep.subr.bf16.mxu0 0
    %8141 = vmatpush2.bf16.msra.mxu0 0
    %8142 = vmatprep.subr.bf16.mxu0 0
    %8143 = vmatpush2.bf16.msra.mxu0 0
    %8144 = vmatprep.subr.bf16.mxu0 0
    %8145 = vmatpush2.bf16.msra.mxu0 0
    %8146 = vmatprep.subr.bf16.mxu0 0
    %8147 = vmatpush2.bf16.msra.mxu0 0
    %8148 = vmatprep.subr.bf16.mxu0 0
    %8149 = vmatpush2.bf16.msra.mxu0 0
    %8150 = vmatprep.subr.bf16.mxu0 0
    %8151 = vmatpush2.bf16.msra.mxu0 0
    %8152 = vmatprep.subr.bf16.mxu0 0
    %8153 = vmatpush2.bf16.msra.mxu0 0
    %8154 = vmatprep.subr.bf16.mxu0 0
    %8155 = vmatpush2.bf16.msra.mxu0 0
    %8156 = vmatprep.mubr.bf16.mxu0 0
    %8157 = vmatmul.mubr.bf16.gmra.mxu0 %v7624
    %v8158 = vpop.f32.mrf.mxu0
    %v8159 = vadd.f32 0.0, %v8158
    %v8160 = vpop.f32.mrf.mxu0
    %v8161 = vpop.f32.mrf.mxu0
    %v8162 = vpop.f32.mrf.mxu0
    %8163 = vdwg.mxu0
    %v8164 = vadd.f32 %v8058, %v8159
    %s8165 = scalar_lea.vmem %s5, 320
    %v8166 = vld [vmem:[%s8165] sm:$0xf]
    %v8167 = vld [vmem:[%s8165 + $0x4] sm:$0xf]
    %v8168 = vld [vmem:[%s8165 + $0x8] sm:$0xf]
    %v8169 = vld [vmem:[%s8165 + $0xc] sm:$0xf]
    %v8170 = vld [vmem:[%s8165 + $0x10] sm:$0xf]
    %v8171 = vld [vmem:[%s8165 + $0x14] sm:$0xf]
    %v8172 = vld [vmem:[%s8165 + $0x18] sm:$0xf]
    %v8173 = vld [vmem:[%s8165 + $0x1c] sm:$0xf]
    %v8174 = vld [vmem:[%s8165 + $0x20] sm:$0xf]
    %v8175 = vld [vmem:[%s8165 + $0x24] sm:$0xf]
    %v8176 = vld [vmem:[%s8165 + $0x28] sm:$0xf]
    %v8177 = vld [vmem:[%s8165 + $0x2c] sm:$0xf]
    %v8178 = vld [vmem:[%s8165 + $0x30] sm:$0xf]
    %v8179 = vld [vmem:[%s8165 + $0x34] sm:$0xf]
    %v8180 = vld [vmem:[%s8165 + $0x38] sm:$0xf]
    %v8181 = vld [vmem:[%s8165 + $0x3c] sm:$0xf]
    %v8198 = vunpack.c.l.b16 %v8166
    %v8199 = vunpack.c.l.b16 %v8167
    %v8200 = vunpack.c.l.b16 %v8168
    %v8201 = vunpack.c.l.b16 %v8169
    %v8202 = vunpack.c.l.b16 %v8170
    %v8203 = vunpack.c.l.b16 %v8171
    %v8204 = vunpack.c.l.b16 %v8172
    %v8205 = vunpack.c.l.b16 %v8173
    %v8206 = vunpack.c.l.b16 %v8174
    %v8207 = vunpack.c.l.b16 %v8175
    %v8208 = vunpack.c.l.b16 %v8176
    %v8209 = vunpack.c.l.b16 %v8177
    %v8210 = vunpack.c.l.b16 %v8178
    %v8211 = vunpack.c.l.b16 %v8179
    %v8212 = vunpack.c.l.b16 %v8180
    %v8213 = vunpack.c.l.b16 %v8181
    %v8214 = vpack.c.b16 %v8199, %v8198
    %v8215 = vpack.c.b16 %v8201, %v8200
    %v8216 = vpack.c.b16 %v8203, %v8202
    %v8217 = vpack.c.b16 %v8205, %v8204
    %v8218 = vpack.c.b16 %v8207, %v8206
    %v8219 = vpack.c.b16 %v8209, %v8208
    %v8220 = vpack.c.b16 %v8211, %v8210
    %v8221 = vpack.c.b16 %v8213, %v8212
    %8230 = vmatprep.subr.bf16.mxu0 0
    %8231 = vmatpush1.bf16.msra.mxu0 %v8221
    %8232 = vmatprep.subr.bf16.mxu0 0
    %8233 = vmatpush1.bf16.msra.mxu0 %v8220
    %8234 = vmatprep.subr.bf16.mxu0 0
    %8235 = vmatpush1.bf16.msra.mxu0 %v8219
    %8236 = vmatprep.subr.bf16.mxu0 0
    %8237 = vmatpush1.bf16.msra.mxu0 %v8218
    %8238 = vmatprep.subr.bf16.mxu0 0
    %8239 = vmatpush1.bf16.msra.mxu0 %v8217
    %8240 = vmatprep.subr.bf16.mxu0 0
    %8241 = vmatpush1.bf16.msra.mxu0 %v8216
    %8242 = vmatprep.subr.bf16.mxu0 0
    %8243 = vmatpush1.bf16.msra.mxu0 %v8215
    %8244 = vmatprep.subr.bf16.mxu0 0
    %8245 = vmatpush1.bf16.msra.mxu0 %v8214
    %8246 = vmatprep.subr.bf16.mxu0 0
    %8247 = vmatpush2.bf16.msra.mxu0 0
    %8248 = vmatprep.subr.bf16.mxu0 0
    %8249 = vmatpush2.bf16.msra.mxu0 0
    %8250 = vmatprep.subr.bf16.mxu0 0
    %8251 = vmatpush2.bf16.msra.mxu0 0
    %8252 = vmatprep.subr.bf16.mxu0 0
    %8253 = vmatpush2.bf16.msra.mxu0 0
    %8254 = vmatprep.subr.bf16.mxu0 0
    %8255 = vmatpush2.bf16.msra.mxu0 0
    %8256 = vmatprep.subr.bf16.mxu0 0
    %8257 = vmatpush2.bf16.msra.mxu0 0
    %8258 = vmatprep.subr.bf16.mxu0 0
    %8259 = vmatpush2.bf16.msra.mxu0 0
    %8260 = vmatprep.subr.bf16.mxu0 0
    %8261 = vmatpush2.bf16.msra.mxu0 0
    %8262 = vmatprep.mubr.bf16.mxu0 0
    %8263 = vmatmul.mubr.bf16.gmra.mxu0 %v7627
    %v8264 = vpop.f32.mrf.mxu0
    %v8265 = vadd.f32 0.0, %v8264
    %v8266 = vpop.f32.mrf.mxu0
    %v8267 = vpop.f32.mrf.mxu0
    %v8268 = vpop.f32.mrf.mxu0
    %8269 = vdwg.mxu0
    %v8270 = vadd.f32 %v8164, %v8265
    %s8271 = scalar_lea.vmem %s5, 384
    %v8272 = vld [vmem:[%s8271] sm:$0xf]
    %v8273 = vld [vmem:[%s8271 + $0x4] sm:$0xf]
    %v8274 = vld [vmem:[%s8271 + $0x8] sm:$0xf]
    %v8275 = vld [vmem:[%s8271 + $0xc] sm:$0xf]
    %v8276 = vld [vmem:[%s8271 + $0x10] sm:$0xf]
    %v8277 = vld [vmem:[%s8271 + $0x14] sm:$0xf]
    %v8278 = vld [vmem:[%s8271 + $0x18] sm:$0xf]
    %v8279 = vld [vmem:[%s8271 + $0x1c] sm:$0xf]
    %v8280 = vld [vmem:[%s8271 + $0x20] sm:$0xf]
    %v8281 = vld [vmem:[%s8271 + $0x24] sm:$0xf]
    %v8282 = vld [vmem:[%s8271 + $0x28] sm:$0xf]
    %v8283 = vld [vmem:[%s8271 + $0x2c] sm:$0xf]
    %v8284 = vld [vmem:[%s8271 + $0x30] sm:$0xf]
    %v8285 = vld [vmem:[%s8271 + $0x34] sm:$0xf]
    %v8286 = vld [vmem:[%s8271 + $0x38] sm:$0xf]
    %v8287 = vld [vmem:[%s8271 + $0x3c] sm:$0xf]
    %v8304 = vunpack.c.l.b16 %v8272
    %v8305 = vunpack.c.l.b16 %v8273
    %v8306 = vunpack.c.l.b16 %v8274
    %v8307 = vunpack.c.l.b16 %v8275
    %v8308 = vunpack.c.l.b16 %v8276
    %v8309 = vunpack.c.l.b16 %v8277
    %v8310 = vunpack.c.l.b16 %v8278
    %v8311 = vunpack.c.l.b16 %v8279
    %v8312 = vunpack.c.l.b16 %v8280
    %v8313 = vunpack.c.l.b16 %v8281
    %v8314 = vunpack.c.l.b16 %v8282
    %v8315 = vunpack.c.l.b16 %v8283
    %v8316 = vunpack.c.l.b16 %v8284
    %v8317 = vunpack.c.l.b16 %v8285
    %v8318 = vunpack.c.l.b16 %v8286
    %v8319 = vunpack.c.l.b16 %v8287
    %v8320 = vpack.c.b16 %v8305, %v8304
    %v8321 = vpack.c.b16 %v8307, %v8306
    %v8322 = vpack.c.b16 %v8309, %v8308
    %v8323 = vpack.c.b16 %v8311, %v8310
    %v8324 = vpack.c.b16 %v8313, %v8312
    %v8325 = vpack.c.b16 %v8315, %v8314
    %v8326 = vpack.c.b16 %v8317, %v8316
    %v8327 = vpack.c.b16 %v8319, %v8318
    %8336 = vmatprep.subr.bf16.mxu0 0
    %8337 = vmatpush1.bf16.msra.mxu0 %v8327
    %8338 = vmatprep.subr.bf16.mxu0 0
    %8339 = vmatpush1.bf16.msra.mxu0 %v8326
    %8340 = vmatprep.subr.bf16.mxu0 0
    %8341 = vmatpush1.bf16.msra.mxu0 %v8325
    %8342 = vmatprep.subr.bf16.mxu0 0
    %8343 = vmatpush1.bf16.msra.mxu0 %v8324
    %8344 = vmatprep.subr.bf16.mxu0 0
    %8345 = vmatpush1.bf16.msra.mxu0 %v8323
    %8346 = vmatprep.subr.bf16.mxu0 0
    %8347 = vmatpush1.bf16.msra.mxu0 %v8322
    %8348 = vmatprep.subr.bf16.mxu0 0
    %8349 = vmatpush1.bf16.msra.mxu0 %v8321
    %8350 = vmatprep.subr.bf16.mxu0 0
    %8351 = vmatpush1.bf16.msra.mxu0 %v8320
    %8352 = vmatprep.subr.bf16.mxu0 0
    %8353 = vmatpush2.bf16.msra.mxu0 0
    %8354 = vmatprep.subr.bf16.mxu0 0
    %8355 = vmatpush2.bf16.msra.mxu0 0
    %8356 = vmatprep.subr.bf16.mxu0 0
    %8357 = vmatpush2.bf16.msra.mxu0 0
    %8358 = vmatprep.subr.bf16.mxu0 0
    %8359 = vmatpush2.bf16.msra.mxu0 0
    %8360 = vmatprep.subr.bf16.mxu0 0
    %8361 = vmatpush2.bf16.msra.mxu0 0
    %8362 = vmatprep.subr.bf16.mxu0 0
    %8363 = vmatpush2.bf16.msra.mxu0 0
    %8364 = vmatprep.subr.bf16.mxu0 0
    %8365 = vmatpush2.bf16.msra.mxu0 0
    %8366 = vmatprep.subr.bf16.mxu0 0
    %8367 = vmatpush2.bf16.msra.mxu0 0
    %8368 = vmatprep.mubr.bf16.mxu0 0
    %8369 = vmatmul.mubr.bf16.gmra.mxu0 %v7630
    %v8370 = vpop.f32.mrf.mxu0
    %v8371 = vadd.f32 0.0, %v8370
    %v8372 = vpop.f32.mrf.mxu0
    %v8373 = vpop.f32.mrf.mxu0
    %v8374 = vpop.f32.mrf.mxu0
    %8375 = vdwg.mxu0
    %v8376 = vadd.f32 %v8270, %v8371
    %s8377 = scalar_lea.vmem %s5, 448
    %v8378 = vld [vmem:[%s8377] sm:$0xf]
    %v8379 = vld [vmem:[%s8377 + $0x4] sm:$0xf]
    %v8380 = vld [vmem:[%s8377 + $0x8] sm:$0xf]
    %v8381 = vld [vmem:[%s8377 + $0xc] sm:$0xf]
    %v8382 = vld [vmem:[%s8377 + $0x10] sm:$0xf]
    %v8383 = vld [vmem:[%s8377 + $0x14] sm:$0xf]
    %v8384 = vld [vmem:[%s8377 + $0x18] sm:$0xf]
    %v8385 = vld [vmem:[%s8377 + $0x1c] sm:$0xf]
    %v8386 = vld [vmem:[%s8377 + $0x20] sm:$0xf]
    %v8387 = vld [vmem:[%s8377 + $0x24] sm:$0xf]
    %v8388 = vld [vmem:[%s8377 + $0x28] sm:$0xf]
    %v8389 = vld [vmem:[%s8377 + $0x2c] sm:$0xf]
    %v8390 = vld [vmem:[%s8377 + $0x30] sm:$0xf]
    %v8391 = vld [vmem:[%s8377 + $0x34] sm:$0xf]
    %v8392 = vld [vmem:[%s8377 + $0x38] sm:$0xf]
    %v8393 = vld [vmem:[%s8377 + $0x3c] sm:$0xf]
    %v8410 = vunpack.c.l.b16 %v8378
    %v8411 = vunpack.c.l.b16 %v8379
    %v8412 = vunpack.c.l.b16 %v8380
    %v8413 = vunpack.c.l.b16 %v8381
    %v8414 = vunpack.c.l.b16 %v8382
    %v8415 = vunpack.c.l.b16 %v8383
    %v8416 = vunpack.c.l.b16 %v8384
    %v8417 = vunpack.c.l.b16 %v8385
    %v8418 = vunpack.c.l.b16 %v8386
    %v8419 = vunpack.c.l.b16 %v8387
    %v8420 = vunpack.c.l.b16 %v8388
    %v8421 = vunpack.c.l.b16 %v8389
    %v8422 = vunpack.c.l.b16 %v8390
    %v8423 = vunpack.c.l.b16 %v8391
    %v8424 = vunpack.c.l.b16 %v8392
    %v8425 = vunpack.c.l.b16 %v8393
    %v8426 = vpack.c.b16 %v8411, %v8410
    %v8427 = vpack.c.b16 %v8413, %v8412
    %v8428 = vpack.c.b16 %v8415, %v8414
    %v8429 = vpack.c.b16 %v8417, %v8416
    %v8430 = vpack.c.b16 %v8419, %v8418
    %v8431 = vpack.c.b16 %v8421, %v8420
    %v8432 = vpack.c.b16 %v8423, %v8422
    %v8433 = vpack.c.b16 %v8425, %v8424
    %8442 = vmatprep.subr.bf16.mxu0 0
    %8443 = vmatpush1.bf16.msra.mxu0 %v8433
    %8444 = vmatprep.subr.bf16.mxu0 0
    %8445 = vmatpush1.bf16.msra.mxu0 %v8432
    %8446 = vmatprep.subr.bf16.mxu0 0
    %8447 = vmatpush1.bf16.msra.mxu0 %v8431
    %8448 = vmatprep.subr.bf16.mxu0 0
    %8449 = vmatpush1.bf16.msra.mxu0 %v8430
    %8450 = vmatprep.subr.bf16.mxu0 0
    %8451 = vmatpush1.bf16.msra.mxu0 %v8429
    %8452 = vmatprep.subr.bf16.mxu0 0
    %8453 = vmatpush1.bf16.msra.mxu0 %v8428
    %8454 = vmatprep.subr.bf16.mxu0 0
    %8455 = vmatpush1.bf16.msra.mxu0 %v8427
    %8456 = vmatprep.subr.bf16.mxu0 0
    %8457 = vmatpush1.bf16.msra.mxu0 %v8426
    %8458 = vmatprep.subr.bf16.mxu0 0
    %8459 = vmatpush2.bf16.msra.mxu0 0
    %8460 = vmatprep.subr.bf16.mxu0 0
    %8461 = vmatpush2.bf16.msra.mxu0 0
    %8462 = vmatprep.subr.bf16.mxu0 0
    %8463 = vmatpush2.bf16.msra.mxu0 0
    %8464 = vmatprep.subr.bf16.mxu0 0
    %8465 = vmatpush2.bf16.msra.mxu0 0
    %8466 = vmatprep.subr.bf16.mxu0 0
    %8467 = vmatpush2.bf16.msra.mxu0 0
    %8468 = vmatprep.subr.bf16.mxu0 0
    %8469 = vmatpush2.bf16.msra.mxu0 0
    %8470 = vmatprep.subr.bf16.mxu0 0
    %8471 = vmatpush2.bf16.msra.mxu0 0
    %8472 = vmatprep.subr.bf16.mxu0 0
    %8473 = vmatpush2.bf16.msra.mxu0 0
    %8474 = vmatprep.mubr.bf16.mxu0 0
    %8475 = vmatmul.mubr.bf16.gmra.mxu0 %v7633
    %v8476 = vpop.f32.mrf.mxu0
    %v8477 = vadd.f32 0.0, %v8476
    %v8478 = vpop.f32.mrf.mxu0
    %v8479 = vpop.f32.mrf.mxu0
    %v8480 = vpop.f32.mrf.mxu0
    %8481 = vdwg.mxu0
    %v8482 = vadd.f32 %v8376, %v8477
    %s8483 = scalar_lea.vmem %s5, 512
    %v8484 = vld [vmem:[%s8483] sm:$0xf]
    %v8485 = vld [vmem:[%s8483 + $0x4] sm:$0xf]
    %v8486 = vld [vmem:[%s8483 + $0x8] sm:$0xf]
    %v8487 = vld [vmem:[%s8483 + $0xc] sm:$0xf]
    %v8488 = vld [vmem:[%s8483 + $0x10] sm:$0xf]
    %v8489 = vld [vmem:[%s8483 + $0x14] sm:$0xf]
    %v8490 = vld [vmem:[%s8483 + $0x18] sm:$0xf]
    %v8491 = vld [vmem:[%s8483 + $0x1c] sm:$0xf]
    %v8492 = vld [vmem:[%s8483 + $0x20] sm:$0xf]
    %v8493 = vld [vmem:[%s8483 + $0x24] sm:$0xf]
    %v8494 = vld [vmem:[%s8483 + $0x28] sm:$0xf]
    %v8495 = vld [vmem:[%s8483 + $0x2c] sm:$0xf]
    %v8496 = vld [vmem:[%s8483 + $0x30] sm:$0xf]
    %v8497 = vld [vmem:[%s8483 + $0x34] sm:$0xf]
    %v8498 = vld [vmem:[%s8483 + $0x38] sm:$0xf]
    %v8499 = vld [vmem:[%s8483 + $0x3c] sm:$0xf]
    %v8516 = vunpack.c.l.b16 %v8484
    %v8517 = vunpack.c.l.b16 %v8485
    %v8518 = vunpack.c.l.b16 %v8486
    %v8519 = vunpack.c.l.b16 %v8487
    %v8520 = vunpack.c.l.b16 %v8488
    %v8521 = vunpack.c.l.b16 %v8489
    %v8522 = vunpack.c.l.b16 %v8490
    %v8523 = vunpack.c.l.b16 %v8491
    %v8524 = vunpack.c.l.b16 %v8492
    %v8525 = vunpack.c.l.b16 %v8493
    %v8526 = vunpack.c.l.b16 %v8494
    %v8527 = vunpack.c.l.b16 %v8495
    %v8528 = vunpack.c.l.b16 %v8496
    %v8529 = vunpack.c.l.b16 %v8497
    %v8530 = vunpack.c.l.b16 %v8498
    %v8531 = vunpack.c.l.b16 %v8499
    %v8532 = vpack.c.b16 %v8517, %v8516
    %v8533 = vpack.c.b16 %v8519, %v8518
    %v8534 = vpack.c.b16 %v8521, %v8520
    %v8535 = vpack.c.b16 %v8523, %v8522
    %v8536 = vpack.c.b16 %v8525, %v8524
    %v8537 = vpack.c.b16 %v8527, %v8526
    %v8538 = vpack.c.b16 %v8529, %v8528
    %v8539 = vpack.c.b16 %v8531, %v8530
    %8548 = vmatprep.subr.bf16.mxu0 0
    %8549 = vmatpush1.bf16.msra.mxu0 %v8539
    %8550 = vmatprep.subr.bf16.mxu0 0
    %8551 = vmatpush1.bf16.msra.mxu0 %v8538
    %8552 = vmatprep.subr.bf16.mxu0 0
    %8553 = vmatpush1.bf16.msra.mxu0 %v8537
    %8554 = vmatprep.subr.bf16.mxu0 0
    %8555 = vmatpush1.bf16.msra.mxu0 %v8536
    %8556 = vmatprep.subr.bf16.mxu0 0
    %8557 = vmatpush1.bf16.msra.mxu0 %v8535
    %8558 = vmatprep.subr.bf16.mxu0 0
    %8559 = vmatpush1.bf16.msra.mxu0 %v8534
    %8560 = vmatprep.subr.bf16.mxu0 0
    %8561 = vmatpush1.bf16.msra.mxu0 %v8533
    %8562 = vmatprep.subr.bf16.mxu0 0
    %8563 = vmatpush1.bf16.msra.mxu0 %v8532
    %8564 = vmatprep.subr.bf16.mxu0 0
    %8565 = vmatpush2.bf16.msra.mxu0 0
    %8566 = vmatprep.subr.bf16.mxu0 0
    %8567 = vmatpush2.bf16.msra.mxu0 0
    %8568 = vmatprep.subr.bf16.mxu0 0
    %8569 = vmatpush2.bf16.msra.mxu0 0
    %8570 = vmatprep.subr.bf16.mxu0 0
    %8571 = vmatpush2.bf16.msra.mxu0 0
    %8572 = vmatprep.subr.bf16.mxu0 0
    %8573 = vmatpush2.bf16.msra.mxu0 0
    %8574 = vmatprep.subr.bf16.mxu0 0
    %8575 = vmatpush2.bf16.msra.mxu0 0
    %8576 = vmatprep.subr.bf16.mxu0 0
    %8577 = vmatpush2.bf16.msra.mxu0 0
    %8578 = vmatprep.subr.bf16.mxu0 0
    %8579 = vmatpush2.bf16.msra.mxu0 0
    %8580 = vmatprep.mubr.bf16.mxu0 0
    %8581 = vmatmul.mubr.bf16.gmra.mxu0 %v7636
    %v8582 = vpop.f32.mrf.mxu0
    %v8583 = vadd.f32 0.0, %v8582
    %v8584 = vpop.f32.mrf.mxu0
    %v8585 = vpop.f32.mrf.mxu0
    %v8586 = vpop.f32.mrf.mxu0
    %8587 = vdwg.mxu0
    %v8588 = vadd.f32 %v8482, %v8583
    %v8590 = vlaneseq
    %v8591 = vshrl.u32 %v8590, 7
    %v8592 = vsub.s32 0, %v8591
    %v8593 = vrot.slane %v7637, %v8592
    %v8595 = vadd.f32 %v8588, %v8593
    %v8596 = vmax.f32 %v8595, 0.0
    %v8597 = vpack.c.bf16 %v8596, %v8596
    %v8598 = vld [vmem:[%s7] sm:$0xff]
    %v8599 = vld [vmem:[%s7 + $0x8] sm:$0xff]
    %v8600 = vld [vmem:[%s7 + $0x10] sm:$0xff]
    %v8601 = vld [vmem:[%s7 + $0x18] sm:$0xff]
    %v8602 = vld [vmem:[%s7 + $0x20] sm:$0xff]
    %v8603 = vld [vmem:[%s7 + $0x28] sm:$0xff]
    %v8604 = vld [vmem:[%s7 + $0x30] sm:$0xff]
    %v8605 = vld [vmem:[%s7 + $0x38] sm:$0xff]
    %v8606 = vld [vmem:[%s7 + $0x40] sm:$0xff]
    %v8607 = vld [vmem:[%s7 + $0x48] sm:$0xff]
    %v8608 = vld [vmem:[%s7 + $0x50] sm:$0xff]
    %v8609 = vld [vmem:[%s7 + $0x58] sm:$0xff]
    %v8610 = vld [vmem:[%s7 + $0x60] sm:$0xff]
    %v8611 = vld [vmem:[%s7 + $0x68] sm:$0xff]
    %v8612 = vld [vmem:[%s7 + $0x70] sm:$0xff]
    %v8613 = vld [vmem:[%s7 + $0x78] sm:$0xff]
    %v8614 = vld [vmem:[%s7 + $0x80] sm:$0xff]
    %v8615 = vld [vmem:[%s7 + $0x88] sm:$0xff]
    %v8616 = vld [vmem:[%s7 + $0x90] sm:$0xff]
    %v8617 = vld [vmem:[%s7 + $0x98] sm:$0xff]
    %v8618 = vld [vmem:[%s7 + $0xa0] sm:$0xff]
    %v8619 = vld [vmem:[%s7 + $0xa8] sm:$0xff]
    %v8620 = vld [vmem:[%s7 + $0xb0] sm:$0xff]
    %v8621 = vld [vmem:[%s7 + $0xb8] sm:$0xff]
    %v8622 = vld [vmem:[%s7 + $0xc0] sm:$0xff]
    %v8623 = vld [vmem:[%s7 + $0xc8] sm:$0xff]
    %v8624 = vld [vmem:[%s7 + $0xd0] sm:$0xff]
    %v8625 = vld [vmem:[%s7 + $0xd8] sm:$0xff]
    %v8626 = vld [vmem:[%s7 + $0xe0] sm:$0xff]
    %v8627 = vld [vmem:[%s7 + $0xe8] sm:$0xff]
    %v8628 = vld [vmem:[%s7 + $0xf0] sm:$0xff]
    %v8629 = vld [vmem:[%s7 + $0xf8] sm:$0xff]
    %v8630 = vld [vmem:[%s8] sm:$0xf]
    %v8632 = vlaneseq
    %v8633 = vshrl.u32 %v8632, 7
    %v8634 = vsub.s32 0, %v8633
    %v8635 = vrot.slane %v8630, %v8634
    %v8636 = vlaneseq
    %v8637 = vshrl.u32 %v8636, 7
    %v8638 = vsub.s32 1, %v8637
    %v8639 = vrot.slane %v8630, %v8638
    %v8640 = vlaneseq
    %v8641 = vshrl.u32 %v8640, 7
    %v8642 = vsub.s32 2, %v8641
    %v8643 = vrot.slane %v8630, %v8642
    %v8644 = vlaneseq
    %v8645 = vshrl.u32 %v8644, 7
    %v8646 = vsub.s32 3, %v8645
    %v8647 = vrot.slane %v8630, %v8646
    %v8684 = vunpack.c.l.b16 %v8598
    %v8685 = vunpack.c.h.b16 %v8598
    %v8686 = vunpack.c.l.b16 %v8599
    %v8687 = vunpack.c.h.b16 %v8599
    %v8688 = vunpack.c.l.b16 %v8600
    %v8689 = vunpack.c.h.b16 %v8600
    %v8690 = vunpack.c.l.b16 %v8601
    %v8691 = vunpack.c.h.b16 %v8601
    %v8692 = vunpack.c.l.b16 %v8602
    %v8693 = vunpack.c.h.b16 %v8602
    %v8694 = vunpack.c.l.b16 %v8603
    %v8695 = vunpack.c.h.b16 %v8603
    %v8696 = vunpack.c.l.b16 %v8604
    %v8697 = vunpack.c.h.b16 %v8604
    %v8698 = vunpack.c.l.b16 %v8605
    %v8699 = vunpack.c.h.b16 %v8605
    %v8700 = vunpack.c.l.b16 %v8606
    %v8701 = vunpack.c.h.b16 %v8606
    %v8702 = vunpack.c.l.b16 %v8607
    %v8703 = vunpack.c.h.b16 %v8607
    %v8704 = vunpack.c.l.b16 %v8608
    %v8705 = vunpack.c.h.b16 %v8608
    %v8706 = vunpack.c.l.b16 %v8609
    %v8707 = vunpack.c.h.b16 %v8609
    %v8708 = vunpack.c.l.b16 %v8610
    %v8709 = vunpack.c.h.b16 %v8610
    %v8710 = vunpack.c.l.b16 %v8611
    %v8711 = vunpack.c.h.b16 %v8611
    %v8712 = vunpack.c.l.b16 %v8612
    %v8713 = vunpack.c.h.b16 %v8612
    %v8714 = vunpack.c.l.b16 %v8613
    %v8715 = vunpack.c.h.b16 %v8613
    %v8716 = vunpack.c.l.b16 %v8614
    %v8717 = vunpack.c.h.b16 %v8614
    %v8718 = vunpack.c.l.b16 %v8615
    %v8719 = vunpack.c.h.b16 %v8615
    %v8720 = vunpack.c.l.b16 %v8616
    %v8721 = vunpack.c.h.b16 %v8616
    %v8722 = vunpack.c.l.b16 %v8617
    %v8723 = vunpack.c.h.b16 %v8617
    %v8724 = vunpack.c.l.b16 %v8618
    %v8725 = vunpack.c.h.b16 %v8618
    %v8726 = vunpack.c.l.b16 %v8619
    %v8727 = vunpack.c.h.b16 %v8619
    %v8728 = vunpack.c.l.b16 %v8620
    %v8729 = vunpack.c.h.b16 %v8620
    %v8730 = vunpack.c.l.b16 %v8621
    %v8731 = vunpack.c.h.b16 %v8621
    %v8732 = vunpack.c.l.b16 %v8622
    %v8733 = vunpack.c.h.b16 %v8622
    %v8734 = vunpack.c.l.b16 %v8623
    %v8735 = vunpack.c.h.b16 %v8623
    %v8736 = vunpack.c.l.b16 %v8624
    %v8737 = vunpack.c.h.b16 %v8624
    %v8738 = vunpack.c.l.b16 %v8625
    %v8739 = vunpack.c.h.b16 %v8625
    %v8740 = vunpack.c.l.b16 %v8626
    %v8741 = vunpack.c.h.b16 %v8626
    %v8742 = vunpack.c.l.b16 %v8627
    %v8743 = vunpack.c.h.b16 %v8627
    %v8744 = vunpack.c.l.b16 %v8628
    %v8745 = vunpack.c.h.b16 %v8628
    %v8746 = vunpack.c.l.b16 %v8629
    %v8747 = vunpack.c.h.b16 %v8629
    %v8748 = vpack.c.b16 %v8688, %v8684
    %v8749 = vpack.c.b16 %v8689, %v8685
    %v8750 = vpack.c.b16 %v8690, %v8686
    %v8751 = vpack.c.b16 %v8691, %v8687
    %v8752 = vpack.c.b16 %v8696, %v8692
    %v8753 = vpack.c.b16 %v8697, %v8693
    %v8754 = vpack.c.b16 %v8698, %v8694
    %v8755 = vpack.c.b16 %v8699, %v8695
    %v8756 = vpack.c.b16 %v8704, %v8700
    %v8757 = vpack.c.b16 %v8705, %v8701
    %v8758 = vpack.c.b16 %v8706, %v8702
    %v8759 = vpack.c.b16 %v8707, %v8703
    %v8760 = vpack.c.b16 %v8712, %v8708
    %v8761 = vpack.c.b16 %v8713, %v8709
    %v8762 = vpack.c.b16 %v8714, %v8710
    %v8763 = vpack.c.b16 %v8715, %v8711
    %v8764 = vpack.c.b16 %v8720, %v8716
    %v8765 = vpack.c.b16 %v8721, %v8717
    %v8766 = vpack.c.b16 %v8722, %v8718
    %v8767 = vpack.c.b16 %v8723, %v8719
    %v8768 = vpack.c.b16 %v8728, %v8724
    %v8769 = vpack.c.b16 %v8729, %v8725
    %v8770 = vpack.c.b16 %v8730, %v8726
    %v8771 = vpack.c.b16 %v8731, %v8727
    %v8772 = vpack.c.b16 %v8736, %v8732
    %v8773 = vpack.c.b16 %v8737, %v8733
    %v8774 = vpack.c.b16 %v8738, %v8734
    %v8775 = vpack.c.b16 %v8739, %v8735
    %v8776 = vpack.c.b16 %v8744, %v8740
    %v8777 = vpack.c.b16 %v8745, %v8741
    %v8778 = vpack.c.b16 %v8746, %v8742
    %v8779 = vpack.c.b16 %v8747, %v8743
    %8812 = vmatprep.subr.bf16.mxu0 %v8777
    %8813 = vmatpush1.bf16.msra.mxu0 %v8776
    %8814 = vmatprep.subr.bf16.mxu0 %v8773
    %8815 = vmatpush1.bf16.msra.mxu0 %v8772
    %8816 = vmatprep.subr.bf16.mxu0 %v8769
    %8817 = vmatpush1.bf16.msra.mxu0 %v8768
    %8818 = vmatprep.subr.bf16.mxu0 %v8765
    %8819 = vmatpush1.bf16.msra.mxu0 %v8764
    %8820 = vmatprep.subr.bf16.mxu0 %v8761
    %8821 = vmatpush1.bf16.msra.mxu0 %v8760
    %8822 = vmatprep.subr.bf16.mxu0 %v8757
    %8823 = vmatpush1.bf16.msra.mxu0 %v8756
    %8824 = vmatprep.subr.bf16.mxu0 %v8753
    %8825 = vmatpush1.bf16.msra.mxu0 %v8752
    %8826 = vmatprep.subr.bf16.mxu0 %v8749
    %8827 = vmatpush1.bf16.msra.mxu0 %v8748
    %8828 = vmatprep.subr.bf16.mxu0 0
    %8829 = vmatpush2.bf16.msra.mxu0 0
    %8830 = vmatprep.subr.bf16.mxu0 0
    %8831 = vmatpush2.bf16.msra.mxu0 0
    %8832 = vmatprep.subr.bf16.mxu0 0
    %8833 = vmatpush2.bf16.msra.mxu0 0
    %8834 = vmatprep.subr.bf16.mxu0 0
    %8835 = vmatpush2.bf16.msra.mxu0 0
    %8836 = vmatprep.subr.bf16.mxu0 0
    %8837 = vmatpush2.bf16.msra.mxu0 0
    %8838 = vmatprep.subr.bf16.mxu0 0
    %8839 = vmatpush2.bf16.msra.mxu0 0
    %8840 = vmatprep.subr.bf16.mxu0 0
    %8841 = vmatpush2.bf16.msra.mxu0 0
    %8842 = vmatprep.subr.bf16.mxu0 0
    %8843 = vmatpush2.bf16.msra.mxu0 0
    %8844 = vmatprep.mubr.bf16.mxu0 0
    %8845 = vmatmul.mubr.bf16.gmra.mxu0 %v8597
    %v8846 = vpop.f32.mrf.mxu0
    %v8847 = vadd.f32 %v8635, %v8846
    %v8848 = vpop.f32.mrf.mxu0
    %v8849 = vadd.f32 %v8639, %v8848
    %v8850 = vpop.f32.mrf.mxu0
    %v8851 = vpop.f32.mrf.mxu0
    %8852 = vdwg.mxu0
    %8853 = vmatprep.subr.bf16.mxu0 %v8779
    %8854 = vmatpush1.bf16.msra.mxu0 %v8778
    %8855 = vmatprep.subr.bf16.mxu0 %v8775
    %8856 = vmatpush1.bf16.msra.mxu0 %v8774
    %8857 = vmatprep.subr.bf16.mxu0 %v8771
    %8858 = vmatpush1.bf16.msra.mxu0 %v8770
    %8859 = vmatprep.subr.bf16.mxu0 %v8767
    %8860 = vmatpush1.bf16.msra.mxu0 %v8766
    %8861 = vmatprep.subr.bf16.mxu0 %v8763
    %8862 = vmatpush1.bf16.msra.mxu0 %v8762
    %8863 = vmatprep.subr.bf16.mxu0 %v8759
    %8864 = vmatpush1.bf16.msra.mxu0 %v8758
    %8865 = vmatprep.subr.bf16.mxu0 %v8755
    %8866 = vmatpush1.bf16.msra.mxu0 %v8754
    %8867 = vmatprep.subr.bf16.mxu0 %v8751
    %8868 = vmatpush1.bf16.msra.mxu0 %v8750
    %8869 = vmatprep.subr.bf16.mxu0 0
    %8870 = vmatpush2.bf16.msra.mxu0 0
    %8871 = vmatprep.subr.bf16.mxu0 0
    %8872 = vmatpush2.bf16.msra.mxu0 0
    %8873 = vmatprep.subr.bf16.mxu0 0
    %8874 = vmatpush2.bf16.msra.mxu0 0
    %8875 = vmatprep.subr.bf16.mxu0 0
    %8876 = vmatpush2.bf16.msra.mxu0 0
    %8877 = vmatprep.subr.bf16.mxu0 0
    %8878 = vmatpush2.bf16.msra.mxu0 0
    %8879 = vmatprep.subr.bf16.mxu0 0
    %8880 = vmatpush2.bf16.msra.mxu0 0
    %8881 = vmatprep.subr.bf16.mxu0 0
    %8882 = vmatpush2.bf16.msra.mxu0 0
    %8883 = vmatprep.subr.bf16.mxu0 0
    %8884 = vmatpush2.bf16.msra.mxu0 0
    %8885 = vmatprep.mubr.bf16.mxu0 0
    %8886 = vmatmul.mubr.bf16.gmra.mxu0 %v8597
    %v8887 = vpop.f32.mrf.mxu0
    %v8888 = vadd.f32 %v8643, %v8887
    %v8889 = vpop.f32.mrf.mxu0
    %v8890 = vadd.f32 %v8647, %v8889
    %v8891 = vpop.f32.mrf.mxu0
    %v8892 = vpop.f32.mrf.mxu0
    %8893 = vdwg.mxu0
    %v8894 = vmax.f32 %v8847, 0.0
    %v8895 = vmax.f32 %v8849, 0.0
    %v8896 = vmax.f32 %v8888, 0.0
    %v8897 = vmax.f32 %v8890, 0.0
    %v8898 = vpack.c.bf16 %v8894, %v8894
    %v8899 = vpack.c.bf16 %v8895, %v8895
    %v8900 = vpack.c.bf16 %v8896, %v8896
    %v8901 = vpack.c.bf16 %v8897, %v8897
    %v8902 = vld [vmem:[%s9] sm:$0xff]
    %v8903 = vld [vmem:[%s9 + $0x8] sm:$0xff]
    %v8904 = vld [vmem:[%s9 + $0x10] sm:$0xff]
    %v8905 = vld [vmem:[%s9 + $0x18] sm:$0xff]
    %v8906 = vld [vmem:[%s9 + $0x20] sm:$0xff]
    %v8907 = vld [vmem:[%s9 + $0x28] sm:$0xff]
    %v8908 = vld [vmem:[%s9 + $0x30] sm:$0xff]
    %v8909 = vld [vmem:[%s9 + $0x38] sm:$0xff]
    %v8910 = vld [vmem:[%s9 + $0x40] sm:$0xff]
    %v8911 = vld [vmem:[%s9 + $0x48] sm:$0xff]
    %v8912 = vld [vmem:[%s9 + $0x50] sm:$0xff]
    %v8913 = vld [vmem:[%s9 + $0x58] sm:$0xff]
    %v8914 = vld [vmem:[%s9 + $0x60] sm:$0xff]
    %v8915 = vld [vmem:[%s9 + $0x68] sm:$0xff]
    %v8916 = vld [vmem:[%s9 + $0x70] sm:$0xff]
    %v8917 = vld [vmem:[%s9 + $0x78] sm:$0xff]
    %v8918 = vld [vmem:[%s9 + $0x80] sm:$0xff]
    %v8919 = vld [vmem:[%s9 + $0x88] sm:$0xff]
    %v8920 = vld [vmem:[%s9 + $0x90] sm:$0xff]
    %v8921 = vld [vmem:[%s9 + $0x98] sm:$0xff]
    %v8922 = vld [vmem:[%s9 + $0xa0] sm:$0xff]
    %v8923 = vld [vmem:[%s9 + $0xa8] sm:$0xff]
    %v8924 = vld [vmem:[%s9 + $0xb0] sm:$0xff]
    %v8925 = vld [vmem:[%s9 + $0xb8] sm:$0xff]
    %v8926 = vld [vmem:[%s9 + $0xc0] sm:$0xff]
    %v8927 = vld [vmem:[%s9 + $0xc8] sm:$0xff]
    %v8928 = vld [vmem:[%s9 + $0xd0] sm:$0xff]
    %v8929 = vld [vmem:[%s9 + $0xd8] sm:$0xff]
    %v8930 = vld [vmem:[%s9 + $0xe0] sm:$0xff]
    %v8931 = vld [vmem:[%s9 + $0xe8] sm:$0xff]
    %v8932 = vld [vmem:[%s9 + $0xf0] sm:$0xff]
    %v8933 = vld [vmem:[%s9 + $0xf8] sm:$0xff]
    %v8934 = vld [vmem:[%s9 + $0x100] sm:$0xff]
    %v8935 = vld [vmem:[%s9 + $0x108] sm:$0xff]
    %v8936 = vld [vmem:[%s9 + $0x110] sm:$0xff]
    %v8937 = vld [vmem:[%s9 + $0x118] sm:$0xff]
    %v8938 = vld [vmem:[%s9 + $0x120] sm:$0xff]
    %v8939 = vld [vmem:[%s9 + $0x128] sm:$0xff]
    %v8940 = vld [vmem:[%s9 + $0x130] sm:$0xff]
    %v8941 = vld [vmem:[%s9 + $0x138] sm:$0xff]
    %v8942 = vld [vmem:[%s9 + $0x140] sm:$0xff]
    %v8943 = vld [vmem:[%s9 + $0x148] sm:$0xff]
    %v8944 = vld [vmem:[%s9 + $0x150] sm:$0xff]
    %v8945 = vld [vmem:[%s9 + $0x158] sm:$0xff]
    %v8946 = vld [vmem:[%s9 + $0x160] sm:$0xff]
    %v8947 = vld [vmem:[%s9 + $0x168] sm:$0xff]
    %v8948 = vld [vmem:[%s9 + $0x170] sm:$0xff]
    %v8949 = vld [vmem:[%s9 + $0x178] sm:$0xff]
    %v8950 = vld [vmem:[%s9 + $0x180] sm:$0xff]
    %v8951 = vld [vmem:[%s9 + $0x188] sm:$0xff]
    %v8952 = vld [vmem:[%s9 + $0x190] sm:$0xff]
    %v8953 = vld [vmem:[%s9 + $0x198] sm:$0xff]
    %v8954 = vld [vmem:[%s9 + $0x1a0] sm:$0xff]
    %v8955 = vld [vmem:[%s9 + $0x1a8] sm:$0xff]
    %v8956 = vld [vmem:[%s9 + $0x1b0] sm:$0xff]
    %v8957 = vld [vmem:[%s9 + $0x1b8] sm:$0xff]
    %v8958 = vld [vmem:[%s9 + $0x1c0] sm:$0xff]
    %v8959 = vld [vmem:[%s9 + $0x1c8] sm:$0xff]
    %v8960 = vld [vmem:[%s9 + $0x1d0] sm:$0xff]
    %v8961 = vld [vmem:[%s9 + $0x1d8] sm:$0xff]
    %v8962 = vld [vmem:[%s9 + $0x1e0] sm:$0xff]
    %v8963 = vld [vmem:[%s9 + $0x1e8] sm:$0xff]
    %v8964 = vld [vmem:[%s9 + $0x1f0] sm:$0xff]
    %v8965 = vld [vmem:[%s9 + $0x1f8] sm:$0xff]
    %v8966 = vld [vmem:[%s9 + $0x200] sm:$0xff]
    %v8967 = vld [vmem:[%s9 + $0x208] sm:$0xff]
    %v8968 = vld [vmem:[%s9 + $0x210] sm:$0xff]
    %v8969 = vld [vmem:[%s9 + $0x218] sm:$0xff]
    %v8970 = vld [vmem:[%s9 + $0x220] sm:$0xff]
    %v8971 = vld [vmem:[%s9 + $0x228] sm:$0xff]
    %v8972 = vld [vmem:[%s9 + $0x230] sm:$0xff]
    %v8973 = vld [vmem:[%s9 + $0x238] sm:$0xff]
    %v8974 = vld [vmem:[%s9 + $0x240] sm:$0xff]
    %v8975 = vld [vmem:[%s9 + $0x248] sm:$0xff]
    %v8976 = vld [vmem:[%s9 + $0x250] sm:$0xff]
    %v8977 = vld [vmem:[%s9 + $0x258] sm:$0xff]
    %v8978 = vld [vmem:[%s9 + $0x260] sm:$0xff]
    %v8979 = vld [vmem:[%s9 + $0x268] sm:$0xff]
    %v8980 = vld [vmem:[%s9 + $0x270] sm:$0xff]
    %v8981 = vld [vmem:[%s9 + $0x278] sm:$0xff]
    %v8982 = vld [vmem:[%s9 + $0x280] sm:$0xff]
    %v8983 = vld [vmem:[%s9 + $0x288] sm:$0xff]
    %v8984 = vld [vmem:[%s9 + $0x290] sm:$0xff]
    %v8985 = vld [vmem:[%s9 + $0x298] sm:$0xff]
    %v8986 = vld [vmem:[%s9 + $0x2a0] sm:$0xff]
    %v8987 = vld [vmem:[%s9 + $0x2a8] sm:$0xff]
    %v8988 = vld [vmem:[%s9 + $0x2b0] sm:$0xff]
    %v8989 = vld [vmem:[%s9 + $0x2b8] sm:$0xff]
    %v8990 = vld [vmem:[%s9 + $0x2c0] sm:$0xff]
    %v8991 = vld [vmem:[%s9 + $0x2c8] sm:$0xff]
    %v8992 = vld [vmem:[%s9 + $0x2d0] sm:$0xff]
    %v8993 = vld [vmem:[%s9 + $0x2d8] sm:$0xff]
    %v8994 = vld [vmem:[%s9 + $0x2e0] sm:$0xff]
    %v8995 = vld [vmem:[%s9 + $0x2e8] sm:$0xff]
    %v8996 = vld [vmem:[%s9 + $0x2f0] sm:$0xff]
    %v8997 = vld [vmem:[%s9 + $0x2f8] sm:$0xff]
    %v8998 = vld [vmem:[%s9 + $0x300] sm:$0xff]
    %v8999 = vld [vmem:[%s9 + $0x308] sm:$0xff]
    %v9000 = vld [vmem:[%s9 + $0x310] sm:$0xff]
    %v9001 = vld [vmem:[%s9 + $0x318] sm:$0xff]
    %v9002 = vld [vmem:[%s9 + $0x320] sm:$0xff]
    %v9003 = vld [vmem:[%s9 + $0x328] sm:$0xff]
    %v9004 = vld [vmem:[%s9 + $0x330] sm:$0xff]
    %v9005 = vld [vmem:[%s9 + $0x338] sm:$0xff]
    %v9006 = vld [vmem:[%s9 + $0x340] sm:$0xff]
    %v9007 = vld [vmem:[%s9 + $0x348] sm:$0xff]
    %v9008 = vld [vmem:[%s9 + $0x350] sm:$0xff]
    %v9009 = vld [vmem:[%s9 + $0x358] sm:$0xff]
    %v9010 = vld [vmem:[%s9 + $0x360] sm:$0xff]
    %v9011 = vld [vmem:[%s9 + $0x368] sm:$0xff]
    %v9012 = vld [vmem:[%s9 + $0x370] sm:$0xff]
    %v9013 = vld [vmem:[%s9 + $0x378] sm:$0xff]
    %v9014 = vld [vmem:[%s9 + $0x380] sm:$0xff]
    %v9015 = vld [vmem:[%s9 + $0x388] sm:$0xff]
    %v9016 = vld [vmem:[%s9 + $0x390] sm:$0xff]
    %v9017 = vld [vmem:[%s9 + $0x398] sm:$0xff]
    %v9018 = vld [vmem:[%s9 + $0x3a0] sm:$0xff]
    %v9019 = vld [vmem:[%s9 + $0x3a8] sm:$0xff]
    %v9020 = vld [vmem:[%s9 + $0x3b0] sm:$0xff]
    %v9021 = vld [vmem:[%s9 + $0x3b8] sm:$0xff]
    %v9022 = vld [vmem:[%s9 + $0x3c0] sm:$0xff]
    %v9023 = vld [vmem:[%s9 + $0x3c8] sm:$0xff]
    %v9024 = vld [vmem:[%s9 + $0x3d0] sm:$0xff]
    %v9025 = vld [vmem:[%s9 + $0x3d8] sm:$0xff]
    %v9026 = vld [vmem:[%s9 + $0x3e0] sm:$0xff]
    %v9027 = vld [vmem:[%s9 + $0x3e8] sm:$0xff]
    %v9028 = vld [vmem:[%s9 + $0x3f0] sm:$0xff]
    %v9029 = vld [vmem:[%s9 + $0x3f8] sm:$0xff]
    %v9030 = vld [vmem:[%s10] sm:$0xf]
    %v9032 = vlaneseq
    %v9033 = vshrl.u32 %v9032, 7
    %v9034 = vsub.s32 0, %v9033
    %v9035 = vrot.slane %v9030, %v9034
    %v9036 = vlaneseq
    %v9037 = vshrl.u32 %v9036, 7
    %v9038 = vsub.s32 1, %v9037
    %v9039 = vrot.slane %v9030, %v9038
    %v9040 = vlaneseq
    %v9041 = vshrl.u32 %v9040, 7
    %v9042 = vsub.s32 2, %v9041
    %v9043 = vrot.slane %v9030, %v9042
    %v9044 = vlaneseq
    %v9045 = vshrl.u32 %v9044, 7
    %v9046 = vsub.s32 3, %v9045
    %v9047 = vrot.slane %v9030, %v9046
    %v9180 = vunpack.c.l.b16 %v8902
    %v9181 = vunpack.c.h.b16 %v8902
    %v9182 = vunpack.c.l.b16 %v8903
    %v9183 = vunpack.c.h.b16 %v8903
    %v9184 = vunpack.c.l.b16 %v8904
    %v9185 = vunpack.c.h.b16 %v8904
    %v9186 = vunpack.c.l.b16 %v8905
    %v9187 = vunpack.c.h.b16 %v8905
    %v9188 = vunpack.c.l.b16 %v8906
    %v9189 = vunpack.c.h.b16 %v8906
    %v9190 = vunpack.c.l.b16 %v8907
    %v9191 = vunpack.c.h.b16 %v8907
    %v9192 = vunpack.c.l.b16 %v8908
    %v9193 = vunpack.c.h.b16 %v8908
    %v9194 = vunpack.c.l.b16 %v8909
    %v9195 = vunpack.c.h.b16 %v8909
    %v9196 = vunpack.c.l.b16 %v8910
    %v9197 = vunpack.c.h.b16 %v8910
    %v9198 = vunpack.c.l.b16 %v8911
    %v9199 = vunpack.c.h.b16 %v8911
    %v9200 = vunpack.c.l.b16 %v8912
    %v9201 = vunpack.c.h.b16 %v8912
    %v9202 = vunpack.c.l.b16 %v8913
    %v9203 = vunpack.c.h.b16 %v8913
    %v9204 = vunpack.c.l.b16 %v8914
    %v9205 = vunpack.c.h.b16 %v8914
    %v9206 = vunpack.c.l.b16 %v8915
    %v9207 = vunpack.c.h.b16 %v8915
    %v9208 = vunpack.c.l.b16 %v8916
    %v9209 = vunpack.c.h.b16 %v8916
    %v9210 = vunpack.c.l.b16 %v8917
    %v9211 = vunpack.c.h.b16 %v8917
    %v9212 = vunpack.c.l.b16 %v8918
    %v9213 = vunpack.c.h.b16 %v8918
    %v9214 = vunpack.c.l.b16 %v8919
    %v9215 = vunpack.c.h.b16 %v8919
    %v9216 = vunpack.c.l.b16 %v8920
    %v9217 = vunpack.c.h.b16 %v8920
    %v9218 = vunpack.c.l.b16 %v8921
    %v9219 = vunpack.c.h.b16 %v8921
    %v9220 = vunpack.c.l.b16 %v8922
    %v9221 = vunpack.c.h.b16 %v8922
    %v9222 = vunpack.c.l.b16 %v8923
    %v9223 = vunpack.c.h.b16 %v8923
    %v9224 = vunpack.c.l.b16 %v8924
    %v9225 = vunpack.c.h.b16 %v8924
    %v9226 = vunpack.c.l.b16 %v8925
    %v9227 = vunpack.c.h.b16 %v8925
    %v9228 = vunpack.c.l.b16 %v8926
    %v9229 = vunpack.c.h.b16 %v8926
    %v9230 = vunpack.c.l.b16 %v8927
    %v9231 = vunpack.c.h.b16 %v8927
    %v9232 = vunpack.c.l.b16 %v8928
    %v9233 = vunpack.c.h.b16 %v8928
    %v9234 = vunpack.c.l.b16 %v8929
    %v9235 = vunpack.c.h.b16 %v8929
    %v9236 = vunpack.c.l.b16 %v8930
    %v9237 = vunpack.c.h.b16 %v8930
    %v9238 = vunpack.c.l.b16 %v8931
    %v9239 = vunpack.c.h.b16 %v8931
    %v9240 = vunpack.c.l.b16 %v8932
    %v9241 = vunpack.c.h.b16 %v8932
    %v9242 = vunpack.c.l.b16 %v8933
    %v9243 = vunpack.c.h.b16 %v8933
    %v9244 = vunpack.c.l.b16 %v8934
    %v9245 = vunpack.c.h.b16 %v8934
    %v9246 = vunpack.c.l.b16 %v8935
    %v9247 = vunpack.c.h.b16 %v8935
    %v9248 = vunpack.c.l.b16 %v8936
    %v9249 = vunpack.c.h.b16 %v8936
    %v9250 = vunpack.c.l.b16 %v8937
    %v9251 = vunpack.c.h.b16 %v8937
    %v9252 = vunpack.c.l.b16 %v8938
    %v9253 = vunpack.c.h.b16 %v8938
    %v9254 = vunpack.c.l.b16 %v8939
    %v9255 = vunpack.c.h.b16 %v8939
    %v9256 = vunpack.c.l.b16 %v8940
    %v9257 = vunpack.c.h.b16 %v8940
    %v9258 = vunpack.c.l.b16 %v8941
    %v9259 = vunpack.c.h.b16 %v8941
    %v9260 = vunpack.c.l.b16 %v8942
    %v9261 = vunpack.c.h.b16 %v8942
    %v9262 = vunpack.c.l.b16 %v8943
    %v9263 = vunpack.c.h.b16 %v8943
    %v9264 = vunpack.c.l.b16 %v8944
    %v9265 = vunpack.c.h.b16 %v8944
    %v9266 = vunpack.c.l.b16 %v8945
    %v9267 = vunpack.c.h.b16 %v8945
    %v9268 = vunpack.c.l.b16 %v8946
    %v9269 = vunpack.c.h.b16 %v8946
    %v9270 = vunpack.c.l.b16 %v8947
    %v9271 = vunpack.c.h.b16 %v8947
    %v9272 = vunpack.c.l.b16 %v8948
    %v9273 = vunpack.c.h.b16 %v8948
    %v9274 = vunpack.c.l.b16 %v8949
    %v9275 = vunpack.c.h.b16 %v8949
    %v9276 = vunpack.c.l.b16 %v8950
    %v9277 = vunpack.c.h.b16 %v8950
    %v9278 = vunpack.c.l.b16 %v8951
    %v9279 = vunpack.c.h.b16 %v8951
    %v9280 = vunpack.c.l.b16 %v8952
    %v9281 = vunpack.c.h.b16 %v8952
    %v9282 = vunpack.c.l.b16 %v8953
    %v9283 = vunpack.c.h.b16 %v8953
    %v9284 = vunpack.c.l.b16 %v8954
    %v9285 = vunpack.c.h.b16 %v8954
    %v9286 = vunpack.c.l.b16 %v8955
    %v9287 = vunpack.c.h.b16 %v8955
    %v9288 = vunpack.c.l.b16 %v8956
    %v9289 = vunpack.c.h.b16 %v8956
    %v9290 = vunpack.c.l.b16 %v8957
    %v9291 = vunpack.c.h.b16 %v8957
    %v9292 = vunpack.c.l.b16 %v8958
    %v9293 = vunpack.c.h.b16 %v8958
    %v9294 = vunpack.c.l.b16 %v8959
    %v9295 = vunpack.c.h.b16 %v8959
    %v9296 = vunpack.c.l.b16 %v8960
    %v9297 = vunpack.c.h.b16 %v8960
    %v9298 = vunpack.c.l.b16 %v8961
    %v9299 = vunpack.c.h.b16 %v8961
    %v9300 = vunpack.c.l.b16 %v8962
    %v9301 = vunpack.c.h.b16 %v8962
    %v9302 = vunpack.c.l.b16 %v8963
    %v9303 = vunpack.c.h.b16 %v8963
    %v9304 = vunpack.c.l.b16 %v8964
    %v9305 = vunpack.c.h.b16 %v8964
    %v9306 = vunpack.c.l.b16 %v8965
    %v9307 = vunpack.c.h.b16 %v8965
    %v9308 = vunpack.c.l.b16 %v8966
    %v9309 = vunpack.c.h.b16 %v8966
    %v9310 = vunpack.c.l.b16 %v8967
    %v9311 = vunpack.c.h.b16 %v8967
    %v9312 = vunpack.c.l.b16 %v8968
    %v9313 = vunpack.c.h.b16 %v8968
    %v9314 = vunpack.c.l.b16 %v8969
    %v9315 = vunpack.c.h.b16 %v8969
    %v9316 = vunpack.c.l.b16 %v8970
    %v9317 = vunpack.c.h.b16 %v8970
    %v9318 = vunpack.c.l.b16 %v8971
    %v9319 = vunpack.c.h.b16 %v8971
    %v9320 = vunpack.c.l.b16 %v8972
    %v9321 = vunpack.c.h.b16 %v8972
    %v9322 = vunpack.c.l.b16 %v8973
    %v9323 = vunpack.c.h.b16 %v8973
    %v9324 = vunpack.c.l.b16 %v8974
    %v9325 = vunpack.c.h.b16 %v8974
    %v9326 = vunpack.c.l.b16 %v8975
    %v9327 = vunpack.c.h.b16 %v8975
    %v9328 = vunpack.c.l.b16 %v8976
    %v9329 = vunpack.c.h.b16 %v8976
    %v9330 = vunpack.c.l.b16 %v8977
    %v9331 = vunpack.c.h.b16 %v8977
    %v9332 = vunpack.c.l.b16 %v8978
    %v9333 = vunpack.c.h.b16 %v8978
    %v9334 = vunpack.c.l.b16 %v8979
    %v9335 = vunpack.c.h.b16 %v8979
    %v9336 = vunpack.c.l.b16 %v8980
    %v9337 = vunpack.c.h.b16 %v8980
    %v9338 = vunpack.c.l.b16 %v8981
    %v9339 = vunpack.c.h.b16 %v8981
    %v9340 = vunpack.c.l.b16 %v8982
    %v9341 = vunpack.c.h.b16 %v8982
    %v9342 = vunpack.c.l.b16 %v8983
    %v9343 = vunpack.c.h.b16 %v8983
    %v9344 = vunpack.c.l.b16 %v8984
    %v9345 = vunpack.c.h.b16 %v8984
    %v9346 = vunpack.c.l.b16 %v8985
    %v9347 = vunpack.c.h.b16 %v8985
    %v9348 = vunpack.c.l.b16 %v8986
    %v9349 = vunpack.c.h.b16 %v8986
    %v9350 = vunpack.c.l.b16 %v8987
    %v9351 = vunpack.c.h.b16 %v8987
    %v9352 = vunpack.c.l.b16 %v8988
    %v9353 = vunpack.c.h.b16 %v8988
    %v9354 = vunpack.c.l.b16 %v8989
    %v9355 = vunpack.c.h.b16 %v8989
    %v9356 = vunpack.c.l.b16 %v8990
    %v9357 = vunpack.c.h.b16 %v8990
    %v9358 = vunpack.c.l.b16 %v8991
    %v9359 = vunpack.c.h.b16 %v8991
    %v9360 = vunpack.c.l.b16 %v8992
    %v9361 = vunpack.c.h.b16 %v8992
    %v9362 = vunpack.c.l.b16 %v8993
    %v9363 = vunpack.c.h.b16 %v8993
    %v9364 = vunpack.c.l.b16 %v8994
    %v9365 = vunpack.c.h.b16 %v8994
    %v9366 = vunpack.c.l.b16 %v8995
    %v9367 = vunpack.c.h.b16 %v8995
    %v9368 = vunpack.c.l.b16 %v8996
    %v9369 = vunpack.c.h.b16 %v8996
    %v9370 = vunpack.c.l.b16 %v8997
    %v9371 = vunpack.c.h.b16 %v8997
    %v9372 = vunpack.c.l.b16 %v8998
    %v9373 = vunpack.c.h.b16 %v8998
    %v9374 = vunpack.c.l.b16 %v8999
    %v9375 = vunpack.c.h.b16 %v8999
    %v9376 = vunpack.c.l.b16 %v9000
    %v9377 = vunpack.c.h.b16 %v9000
    %v9378 = vunpack.c.l.b16 %v9001
    %v9379 = vunpack.c.h.b16 %v9001
    %v9380 = vunpack.c.l.b16 %v9002
    %v9381 = vunpack.c.h.b16 %v9002
    %v9382 = vunpack.c.l.b16 %v9003
    %v9383 = vunpack.c.h.b16 %v9003
    %v9384 = vunpack.c.l.b16 %v9004
    %v9385 = vunpack.c.h.b16 %v9004
    %v9386 = vunpack.c.l.b16 %v9005
    %v9387 = vunpack.c.h.b16 %v9005
    %v9388 = vunpack.c.l.b16 %v9006
    %v9389 = vunpack.c.h.b16 %v9006
    %v9390 = vunpack.c.l.b16 %v9007
    %v9391 = vunpack.c.h.b16 %v9007
    %v9392 = vunpack.c.l.b16 %v9008
    %v9393 = vunpack.c.h.b16 %v9008
    %v9394 = vunpack.c.l.b16 %v9009
    %v9395 = vunpack.c.h.b16 %v9009
    %v9396 = vunpack.c.l.b16 %v9010
    %v9397 = vunpack.c.h.b16 %v9010
    %v9398 = vunpack.c.l.b16 %v9011
    %v9399 = vunpack.c.h.b16 %v9011
    %v9400 = vunpack.c.l.b16 %v9012
    %v9401 = vunpack.c.h.b16 %v9012
    %v9402 = vunpack.c.l.b16 %v9013
    %v9403 = vunpack.c.h.b16 %v9013
    %v9404 = vunpack.c.l.b16 %v9014
    %v9405 = vunpack.c.h.b16 %v9014
    %v9406 = vunpack.c.l.b16 %v9015
    %v9407 = vunpack.c.h.b16 %v9015
    %v9408 = vunpack.c.l.b16 %v9016
    %v9409 = vunpack.c.h.b16 %v9016
    %v9410 = vunpack.c.l.b16 %v9017
    %v9411 = vunpack.c.h.b16 %v9017
    %v9412 = vunpack.c.l.b16 %v9018
    %v9413 = vunpack.c.h.b16 %v9018
    %v9414 = vunpack.c.l.b16 %v9019
    %v9415 = vunpack.c.h.b16 %v9019
    %v9416 = vunpack.c.l.b16 %v9020
    %v9417 = vunpack.c.h.b16 %v9020
    %v9418 = vunpack.c.l.b16 %v9021
    %v9419 = vunpack.c.h.b16 %v9021
    %v9420 = vunpack.c.l.b16 %v9022
    %v9421 = vunpack.c.h.b16 %v9022
    %v9422 = vunpack.c.l.b16 %v9023
    %v9423 = vunpack.c.h.b16 %v9023
    %v9424 = vunpack.c.l.b16 %v9024
    %v9425 = vunpack.c.h.b16 %v9024
    %v9426 = vunpack.c.l.b16 %v9025
    %v9427 = vunpack.c.h.b16 %v9025
    %v9428 = vunpack.c.l.b16 %v9026
    %v9429 = vunpack.c.h.b16 %v9026
    %v9430 = vunpack.c.l.b16 %v9027
    %v9431 = vunpack.c.h.b16 %v9027
    %v9432 = vunpack.c.l.b16 %v9028
    %v9433 = vunpack.c.h.b16 %v9028
    %v9434 = vunpack.c.l.b16 %v9029
    %v9435 = vunpack.c.h.b16 %v9029
    %v9436 = vpack.c.b16 %v9184, %v9180
    %v9437 = vpack.c.b16 %v9185, %v9181
    %v9438 = vpack.c.b16 %v9186, %v9182
    %v9439 = vpack.c.b16 %v9187, %v9183
    %v9440 = vpack.c.b16 %v9192, %v9188
    %v9441 = vpack.c.b16 %v9193, %v9189
    %v9442 = vpack.c.b16 %v9194, %v9190
    %v9443 = vpack.c.b16 %v9195, %v9191
    %v9444 = vpack.c.b16 %v9200, %v9196
    %v9445 = vpack.c.b16 %v9201, %v9197
    %v9446 = vpack.c.b16 %v9202, %v9198
    %v9447 = vpack.c.b16 %v9203, %v9199
    %v9448 = vpack.c.b16 %v9208, %v9204
    %v9449 = vpack.c.b16 %v9209, %v9205
    %v9450 = vpack.c.b16 %v9210, %v9206
    %v9451 = vpack.c.b16 %v9211, %v9207
    %v9452 = vpack.c.b16 %v9216, %v9212
    %v9453 = vpack.c.b16 %v9217, %v9213
    %v9454 = vpack.c.b16 %v9218, %v9214
    %v9455 = vpack.c.b16 %v9219, %v9215
    %v9456 = vpack.c.b16 %v9224, %v9220
    %v9457 = vpack.c.b16 %v9225, %v9221
    %v9458 = vpack.c.b16 %v9226, %v9222
    %v9459 = vpack.c.b16 %v9227, %v9223
    %v9460 = vpack.c.b16 %v9232, %v9228
    %v9461 = vpack.c.b16 %v9233, %v9229
    %v9462 = vpack.c.b16 %v9234, %v9230
    %v9463 = vpack.c.b16 %v9235, %v9231
    %v9464 = vpack.c.b16 %v9240, %v9236
    %v9465 = vpack.c.b16 %v9241, %v9237
    %v9466 = vpack.c.b16 %v9242, %v9238
    %v9467 = vpack.c.b16 %v9243, %v9239
    %v9468 = vpack.c.b16 %v9248, %v9244
    %v9469 = vpack.c.b16 %v9249, %v9245
    %v9470 = vpack.c.b16 %v9250, %v9246
    %v9471 = vpack.c.b16 %v9251, %v9247
    %v9472 = vpack.c.b16 %v9256, %v9252
    %v9473 = vpack.c.b16 %v9257, %v9253
    %v9474 = vpack.c.b16 %v9258, %v9254
    %v9475 = vpack.c.b16 %v9259, %v9255
    %v9476 = vpack.c.b16 %v9264, %v9260
    %v9477 = vpack.c.b16 %v9265, %v9261
    %v9478 = vpack.c.b16 %v9266, %v9262
    %v9479 = vpack.c.b16 %v9267, %v9263
    %v9480 = vpack.c.b16 %v9272, %v9268
    %v9481 = vpack.c.b16 %v9273, %v9269
    %v9482 = vpack.c.b16 %v9274, %v9270
    %v9483 = vpack.c.b16 %v9275, %v9271
    %v9484 = vpack.c.b16 %v9280, %v9276
    %v9485 = vpack.c.b16 %v9281, %v9277
    %v9486 = vpack.c.b16 %v9282, %v9278
    %v9487 = vpack.c.b16 %v9283, %v9279
    %v9488 = vpack.c.b16 %v9288, %v9284
    %v9489 = vpack.c.b16 %v9289, %v9285
    %v9490 = vpack.c.b16 %v9290, %v9286
    %v9491 = vpack.c.b16 %v9291, %v9287
    %v9492 = vpack.c.b16 %v9296, %v9292
    %v9493 = vpack.c.b16 %v9297, %v9293
    %v9494 = vpack.c.b16 %v9298, %v9294
    %v9495 = vpack.c.b16 %v9299, %v9295
    %v9496 = vpack.c.b16 %v9304, %v9300
    %v9497 = vpack.c.b16 %v9305, %v9301
    %v9498 = vpack.c.b16 %v9306, %v9302
    %v9499 = vpack.c.b16 %v9307, %v9303
    %v9500 = vpack.c.b16 %v9312, %v9308
    %v9501 = vpack.c.b16 %v9313, %v9309
    %v9502 = vpack.c.b16 %v9314, %v9310
    %v9503 = vpack.c.b16 %v9315, %v9311
    %v9504 = vpack.c.b16 %v9320, %v9316
    %v9505 = vpack.c.b16 %v9321, %v9317
    %v9506 = vpack.c.b16 %v9322, %v9318
    %v9507 = vpack.c.b16 %v9323, %v9319
    %v9508 = vpack.c.b16 %v9328, %v9324
    %v9509 = vpack.c.b16 %v9329, %v9325
    %v9510 = vpack.c.b16 %v9330, %v9326
    %v9511 = vpack.c.b16 %v9331, %v9327
    %v9512 = vpack.c.b16 %v9336, %v9332
    %v9513 = vpack.c.b16 %v9337, %v9333
    %v9514 = vpack.c.b16 %v9338, %v9334
    %v9515 = vpack.c.b16 %v9339, %v9335
    %v9516 = vpack.c.b16 %v9344, %v9340
    %v9517 = vpack.c.b16 %v9345, %v9341
    %v9518 = vpack.c.b16 %v9346, %v9342
    %v9519 = vpack.c.b16 %v9347, %v9343
    %v9520 = vpack.c.b16 %v9352, %v9348
    %v9521 = vpack.c.b16 %v9353, %v9349
    %v9522 = vpack.c.b16 %v9354, %v9350
    %v9523 = vpack.c.b16 %v9355, %v9351
    %v9524 = vpack.c.b16 %v9360, %v9356
    %v9525 = vpack.c.b16 %v9361, %v9357
    %v9526 = vpack.c.b16 %v9362, %v9358
    %v9527 = vpack.c.b16 %v9363, %v9359
    %v9528 = vpack.c.b16 %v9368, %v9364
    %v9529 = vpack.c.b16 %v9369, %v9365
    %v9530 = vpack.c.b16 %v9370, %v9366
    %v9531 = vpack.c.b16 %v9371, %v9367
    %v9532 = vpack.c.b16 %v9376, %v9372
    %v9533 = vpack.c.b16 %v9377, %v9373
    %v9534 = vpack.c.b16 %v9378, %v9374
    %v9535 = vpack.c.b16 %v9379, %v9375
    %v9536 = vpack.c.b16 %v9384, %v9380
    %v9537 = vpack.c.b16 %v9385, %v9381
    %v9538 = vpack.c.b16 %v9386, %v9382
    %v9539 = vpack.c.b16 %v9387, %v9383
    %v9540 = vpack.c.b16 %v9392, %v9388
    %v9541 = vpack.c.b16 %v9393, %v9389
    %v9542 = vpack.c.b16 %v9394, %v9390
    %v9543 = vpack.c.b16 %v9395, %v9391
    %v9544 = vpack.c.b16 %v9400, %v9396
    %v9545 = vpack.c.b16 %v9401, %v9397
    %v9546 = vpack.c.b16 %v9402, %v9398
    %v9547 = vpack.c.b16 %v9403, %v9399
    %v9548 = vpack.c.b16 %v9408, %v9404
    %v9549 = vpack.c.b16 %v9409, %v9405
    %v9550 = vpack.c.b16 %v9410, %v9406
    %v9551 = vpack.c.b16 %v9411, %v9407
    %v9552 = vpack.c.b16 %v9416, %v9412
    %v9553 = vpack.c.b16 %v9417, %v9413
    %v9554 = vpack.c.b16 %v9418, %v9414
    %v9555 = vpack.c.b16 %v9419, %v9415
    %v9556 = vpack.c.b16 %v9424, %v9420
    %v9557 = vpack.c.b16 %v9425, %v9421
    %v9558 = vpack.c.b16 %v9426, %v9422
    %v9559 = vpack.c.b16 %v9427, %v9423
    %v9560 = vpack.c.b16 %v9432, %v9428
    %v9561 = vpack.c.b16 %v9433, %v9429
    %v9562 = vpack.c.b16 %v9434, %v9430
    %v9563 = vpack.c.b16 %v9435, %v9431
    %9692 = vmatprep.subr.bf16.mxu0 %v9465
    %9693 = vmatpush1.bf16.msra.mxu0 %v9464
    %9694 = vmatprep.subr.bf16.mxu0 %v9461
    %9695 = vmatpush1.bf16.msra.mxu0 %v9460
    %9696 = vmatprep.subr.bf16.mxu0 %v9457
    %9697 = vmatpush1.bf16.msra.mxu0 %v9456
    %9698 = vmatprep.subr.bf16.mxu0 %v9453
    %9699 = vmatpush1.bf16.msra.mxu0 %v9452
    %9700 = vmatprep.subr.bf16.mxu0 %v9449
    %9701 = vmatpush1.bf16.msra.mxu0 %v9448
    %9702 = vmatprep.subr.bf16.mxu0 %v9445
    %9703 = vmatpush1.bf16.msra.mxu0 %v9444
    %9704 = vmatprep.subr.bf16.mxu0 %v9441
    %9705 = vmatpush1.bf16.msra.mxu0 %v9440
    %9706 = vmatprep.subr.bf16.mxu0 %v9437
    %9707 = vmatpush1.bf16.msra.mxu0 %v9436
    %9708 = vmatprep.subr.bf16.mxu0 %v9497
    %9709 = vmatpush2.bf16.msra.mxu0 %v9496
    %9710 = vmatprep.subr.bf16.mxu0 %v9493
    %9711 = vmatpush2.bf16.msra.mxu0 %v9492
    %9712 = vmatprep.subr.bf16.mxu0 %v9489
    %9713 = vmatpush2.bf16.msra.mxu0 %v9488
    %9714 = vmatprep.subr.bf16.mxu0 %v9485
    %9715 = vmatpush2.bf16.msra.mxu0 %v9484
    %9716 = vmatprep.subr.bf16.mxu0 %v9481
    %9717 = vmatpush2.bf16.msra.mxu0 %v9480
    %9718 = vmatprep.subr.bf16.mxu0 %v9477
    %9719 = vmatpush2.bf16.msra.mxu0 %v9476
    %9720 = vmatprep.subr.bf16.mxu0 %v9473
    %9721 = vmatpush2.bf16.msra.mxu0 %v9472
    %9722 = vmatprep.subr.bf16.mxu0 %v9469
    %9723 = vmatpush2.bf16.msra.mxu0 %v9468
    %9724 = vmatprep.mubr.bf16.mxu0 %v8899
    %9725 = vmatmul.mubr.bf16.gmra.mxu0 %v8898
    %v9726 = vpop.f32.mrf.mxu0
    %v9727 = vadd.f32 %v9035, %v9726
    %v9728 = vpop.f32.mrf.mxu0
    %v9729 = vadd.f32 %v9039, %v9728
    %v9730 = vpop.f32.mrf.mxu0
    %v9731 = vpop.f32.mrf.mxu0
    %9732 = vdwg.mxu0
    %9733 = vmatprep.subr.bf16.mxu0 %v9529
    %9734 = vmatpush1.bf16.msra.mxu0 %v9528
    %9735 = vmatprep.subr.bf16.mxu0 %v9525
    %9736 = vmatpush1.bf16.msra.mxu0 %v9524
    %9737 = vmatprep.subr.bf16.mxu0 %v9521
    %9738 = vmatpush1.bf16.msra.mxu0 %v9520
    %9739 = vmatprep.subr.bf16.mxu0 %v9517
    %9740 = vmatpush1.bf16.msra.mxu0 %v9516
    %9741 = vmatprep.subr.bf16.mxu0 %v9513
    %9742 = vmatpush1.bf16.msra.mxu0 %v9512
    %9743 = vmatprep.subr.bf16.mxu0 %v9509
    %9744 = vmatpush1.bf16.msra.mxu0 %v9508
    %9745 = vmatprep.subr.bf16.mxu0 %v9505
    %9746 = vmatpush1.bf16.msra.mxu0 %v9504
    %9747 = vmatprep.subr.bf16.mxu0 %v9501
    %9748 = vmatpush1.bf16.msra.mxu0 %v9500
    %9749 = vmatprep.subr.bf16.mxu0 %v9561
    %9750 = vmatpush2.bf16.msra.mxu0 %v9560
    %9751 = vmatprep.subr.bf16.mxu0 %v9557
    %9752 = vmatpush2.bf16.msra.mxu0 %v9556
    %9753 = vmatprep.subr.bf16.mxu0 %v9553
    %9754 = vmatpush2.bf16.msra.mxu0 %v9552
    %9755 = vmatprep.subr.bf16.mxu0 %v9549
    %9756 = vmatpush2.bf16.msra.mxu0 %v9548
    %9757 = vmatprep.subr.bf16.mxu0 %v9545
    %9758 = vmatpush2.bf16.msra.mxu0 %v9544
    %9759 = vmatprep.subr.bf16.mxu0 %v9541
    %9760 = vmatpush2.bf16.msra.mxu0 %v9540
    %9761 = vmatprep.subr.bf16.mxu0 %v9537
    %9762 = vmatpush2.bf16.msra.mxu0 %v9536
    %9763 = vmatprep.subr.bf16.mxu0 %v9533
    %9764 = vmatpush2.bf16.msra.mxu0 %v9532
    %9765 = vmatprep.mubr.bf16.mxu0 %v8901
    %9766 = vmatmul.mubr.bf16.gmra.mxu0 %v8900
    %v9767 = vpop.f32.mrf.mxu0
    %v9768 = vadd.f32 %v9727, %v9767
    %v9769 = vpop.f32.mrf.mxu0
    %v9770 = vadd.f32 %v9729, %v9769
    %v9771 = vpop.f32.mrf.mxu0
    %v9772 = vpop.f32.mrf.mxu0
    %9773 = vdwg.mxu0
    %9774 = vmatprep.subr.bf16.mxu0 %v9467
    %9775 = vmatpush1.bf16.msra.mxu0 %v9466
    %9776 = vmatprep.subr.bf16.mxu0 %v9463
    %9777 = vmatpush1.bf16.msra.mxu0 %v9462
    %9778 = vmatprep.subr.bf16.mxu0 %v9459
    %9779 = vmatpush1.bf16.msra.mxu0 %v9458
    %9780 = vmatprep.subr.bf16.mxu0 %v9455
    %9781 = vmatpush1.bf16.msra.mxu0 %v9454
    %9782 = vmatprep.subr.bf16.mxu0 %v9451
    %9783 = vmatpush1.bf16.msra.mxu0 %v9450
    %9784 = vmatprep.subr.bf16.mxu0 %v9447
    %9785 = vmatpush1.bf16.msra.mxu0 %v9446
    %9786 = vmatprep.subr.bf16.mxu0 %v9443
    %9787 = vmatpush1.bf16.msra.mxu0 %v9442
    %9788 = vmatprep.subr.bf16.mxu0 %v9439
    %9789 = vmatpush1.bf16.msra.mxu0 %v9438
    %9790 = vmatprep.subr.bf16.mxu0 %v9499
    %9791 = vmatpush2.bf16.msra.mxu0 %v9498
    %9792 = vmatprep.subr.bf16.mxu0 %v9495
    %9793 = vmatpush2.bf16.msra.mxu0 %v9494
    %9794 = vmatprep.subr.bf16.mxu0 %v9491
    %9795 = vmatpush2.bf16.msra.mxu0 %v9490
    %9796 = vmatprep.subr.bf16.mxu0 %v9487
    %9797 = vmatpush2.bf16.msra.mxu0 %v9486
    %9798 = vmatprep.subr.bf16.mxu0 %v9483
    %9799 = vmatpush2.bf16.msra.mxu0 %v9482
    %9800 = vmatprep.subr.bf16.mxu0 %v9479
    %9801 = vmatpush2.bf16.msra.mxu0 %v9478
    %9802 = vmatprep.subr.bf16.mxu0 %v9475
    %9803 = vmatpush2.bf16.msra.mxu0 %v9474
    %9804 = vmatprep.subr.bf16.mxu0 %v9471
    %9805 = vmatpush2.bf16.msra.mxu0 %v9470
    %9806 = vmatprep.mubr.bf16.mxu0 %v8899
    %9807 = vmatmul.mubr.bf16.gmra.mxu0 %v8898
    %v9808 = vpop.f32.mrf.mxu0
    %v9809 = vadd.f32 %v9043, %v9808
    %v9810 = vpop.f32.mrf.mxu0
    %v9811 = vadd.f32 %v9047, %v9810
    %v9812 = vpop.f32.mrf.mxu0
    %v9813 = vpop.f32.mrf.mxu0
    %9814 = vdwg.mxu0
    %9815 = vmatprep.subr.bf16.mxu0 %v9531
    %9816 = vmatpush1.bf16.msra.mxu0 %v9530
    %9817 = vmatprep.subr.bf16.mxu0 %v9527
    %9818 = vmatpush1.bf16.msra.mxu0 %v9526
    %9819 = vmatprep.subr.bf16.mxu0 %v9523
    %9820 = vmatpush1.bf16.msra.mxu0 %v9522
    %9821 = vmatprep.subr.bf16.mxu0 %v9519
    %9822 = vmatpush1.bf16.msra.mxu0 %v9518
    %9823 = vmatprep.subr.bf16.mxu0 %v9515
    %9824 = vmatpush1.bf16.msra.mxu0 %v9514
    %9825 = vmatprep.subr.bf16.mxu0 %v9511
    %9826 = vmatpush1.bf16.msra.mxu0 %v9510
    %9827 = vmatprep.subr.bf16.mxu0 %v9507
    %9828 = vmatpush1.bf16.msra.mxu0 %v9506
    %9829 = vmatprep.subr.bf16.mxu0 %v9503
    %9830 = vmatpush1.bf16.msra.mxu0 %v9502
    %9831 = vmatprep.subr.bf16.mxu0 %v9563
    %9832 = vmatpush2.bf16.msra.mxu0 %v9562
    %9833 = vmatprep.subr.bf16.mxu0 %v9559
    %9834 = vmatpush2.bf16.msra.mxu0 %v9558
    %9835 = vmatprep.subr.bf16.mxu0 %v9555
    %9836 = vmatpush2.bf16.msra.mxu0 %v9554
    %9837 = vmatprep.subr.bf16.mxu0 %v9551
    %9838 = vmatpush2.bf16.msra.mxu0 %v9550
    %9839 = vmatprep.subr.bf16.mxu0 %v9547
    %9840 = vmatpush2.bf16.msra.mxu0 %v9546
    %9841 = vmatprep.subr.bf16.mxu0 %v9543
    %9842 = vmatpush2.bf16.msra.mxu0 %v9542
    %9843 = vmatprep.subr.bf16.mxu0 %v9539
    %9844 = vmatpush2.bf16.msra.mxu0 %v9538
    %9845 = vmatprep.subr.bf16.mxu0 %v9535
    %9846 = vmatpush2.bf16.msra.mxu0 %v9534
    %9847 = vmatprep.mubr.bf16.mxu0 %v8901
    %9848 = vmatmul.mubr.bf16.gmra.mxu0 %v8900
    %v9849 = vpop.f32.mrf.mxu0
    %v9850 = vadd.f32 %v9809, %v9849
    %v9851 = vpop.f32.mrf.mxu0
    %v9852 = vadd.f32 %v9811, %v9851
    %v9853 = vpop.f32.mrf.mxu0
    %v9854 = vpop.f32.mrf.mxu0
    %9855 = vdwg.mxu0
    %v9856 = vmax.f32 %v9768, 0.0
    %v9857 = vmax.f32 %v9770, 0.0
    %v9858 = vmax.f32 %v9850, 0.0
    %v9859 = vmax.f32 %v9852, 0.0
    %v9860 = vpack.c.bf16 %v9856, %v9856
    %v9861 = vpack.c.bf16 %v9857, %v9857
    %v9862 = vpack.c.bf16 %v9858, %v9858
    %v9863 = vpack.c.bf16 %v9859, %v9859
    %v9864 = vld [vmem:[%s11] sm:$0xf]
    %v9865 = vld [vmem:[%s11 + $0x4] sm:$0xf]
    %v9866 = vld [vmem:[%s11 + $0x8] sm:$0xf]
    %v9867 = vld [vmem:[%s11 + $0xc] sm:$0xf]
    %v9868 = vld [vmem:[%s11 + $0x10] sm:$0xf]
    %v9869 = vld [vmem:[%s11 + $0x14] sm:$0xf]
    %v9870 = vld [vmem:[%s11 + $0x18] sm:$0xf]
    %v9871 = vld [vmem:[%s11 + $0x1c] sm:$0xf]
    %v9872 = vld [vmem:[%s11 + $0x20] sm:$0xf]
    %v9873 = vld [vmem:[%s11 + $0x24] sm:$0xf]
    %v9874 = vld [vmem:[%s11 + $0x28] sm:$0xf]
    %v9875 = vld [vmem:[%s11 + $0x2c] sm:$0xf]
    %v9876 = vld [vmem:[%s11 + $0x30] sm:$0xf]
    %v9877 = vld [vmem:[%s11 + $0x34] sm:$0xf]
    %v9878 = vld [vmem:[%s11 + $0x38] sm:$0xf]
    %v9879 = vld [vmem:[%s11 + $0x3c] sm:$0xf]
    %v9880 = vld [vmem:[%s11 + $0x40] sm:$0xf]
    %v9881 = vld [vmem:[%s11 + $0x44] sm:$0xf]
    %v9882 = vld [vmem:[%s11 + $0x48] sm:$0xf]
    %v9883 = vld [vmem:[%s11 + $0x4c] sm:$0xf]
    %v9884 = vld [vmem:[%s11 + $0x50] sm:$0xf]
    %v9885 = vld [vmem:[%s11 + $0x54] sm:$0xf]
    %v9886 = vld [vmem:[%s11 + $0x58] sm:$0xf]
    %v9887 = vld [vmem:[%s11 + $0x5c] sm:$0xf]
    %v9888 = vld [vmem:[%s11 + $0x60] sm:$0xf]
    %v9889 = vld [vmem:[%s11 + $0x64] sm:$0xf]
    %v9890 = vld [vmem:[%s11 + $0x68] sm:$0xf]
    %v9891 = vld [vmem:[%s11 + $0x6c] sm:$0xf]
    %v9892 = vld [vmem:[%s11 + $0x70] sm:$0xf]
    %v9893 = vld [vmem:[%s11 + $0x74] sm:$0xf]
    %v9894 = vld [vmem:[%s11 + $0x78] sm:$0xf]
    %v9895 = vld [vmem:[%s11 + $0x7c] sm:$0xf]
    %v9896 = vld [vmem:[%s11 + $0x80] sm:$0xf]
    %v9897 = vld [vmem:[%s11 + $0x84] sm:$0xf]
    %v9898 = vld [vmem:[%s11 + $0x88] sm:$0xf]
    %v9899 = vld [vmem:[%s11 + $0x8c] sm:$0xf]
    %v9900 = vld [vmem:[%s11 + $0x90] sm:$0xf]
    %v9901 = vld [vmem:[%s11 + $0x94] sm:$0xf]
    %v9902 = vld [vmem:[%s11 + $0x98] sm:$0xf]
    %v9903 = vld [vmem:[%s11 + $0x9c] sm:$0xf]
    %v9904 = vld [vmem:[%s11 + $0xa0] sm:$0xf]
    %v9905 = vld [vmem:[%s11 + $0xa4] sm:$0xf]
    %v9906 = vld [vmem:[%s11 + $0xa8] sm:$0xf]
    %v9907 = vld [vmem:[%s11 + $0xac] sm:$0xf]
    %v9908 = vld [vmem:[%s11 + $0xb0] sm:$0xf]
    %v9909 = vld [vmem:[%s11 + $0xb4] sm:$0xf]
    %v9910 = vld [vmem:[%s11 + $0xb8] sm:$0xf]
    %v9911 = vld [vmem:[%s11 + $0xbc] sm:$0xf]
    %v9912 = vld [vmem:[%s11 + $0xc0] sm:$0xf]
    %v9913 = vld [vmem:[%s11 + $0xc4] sm:$0xf]
    %v9914 = vld [vmem:[%s11 + $0xc8] sm:$0xf]
    %v9915 = vld [vmem:[%s11 + $0xcc] sm:$0xf]
    %v9916 = vld [vmem:[%s11 + $0xd0] sm:$0xf]
    %v9917 = vld [vmem:[%s11 + $0xd4] sm:$0xf]
    %v9918 = vld [vmem:[%s11 + $0xd8] sm:$0xf]
    %v9919 = vld [vmem:[%s11 + $0xdc] sm:$0xf]
    %v9920 = vld [vmem:[%s11 + $0xe0] sm:$0xf]
    %v9921 = vld [vmem:[%s11 + $0xe4] sm:$0xf]
    %v9922 = vld [vmem:[%s11 + $0xe8] sm:$0xf]
    %v9923 = vld [vmem:[%s11 + $0xec] sm:$0xf]
    %v9924 = vld [vmem:[%s11 + $0xf0] sm:$0xf]
    %v9925 = vld [vmem:[%s11 + $0xf4] sm:$0xf]
    %v9926 = vld [vmem:[%s11 + $0xf8] sm:$0xf]
    %v9927 = vld [vmem:[%s11 + $0xfc] sm:$0xf]
    %v9928 = vld [vmem:[%s12] sm:$0x1]
    %v9930 = vlaneseq
    %v9931 = vshrl.u32 %v9930, 7
    %v9932 = vsub.s32 0, %v9931
    %v9933 = vrot.slane %v9928, %v9932
    %v9999 = vunpack.c.l.b16 %v9864
    %v10000 = vunpack.c.l.b16 %v9865
    %v10001 = vunpack.c.l.b16 %v9866
    %v10002 = vunpack.c.l.b16 %v9867
    %v10003 = vunpack.c.l.b16 %v9868
    %v10004 = vunpack.c.l.b16 %v9869
    %v10005 = vunpack.c.l.b16 %v9870
    %v10006 = vunpack.c.l.b16 %v9871
    %v10007 = vunpack.c.l.b16 %v9872
    %v10008 = vunpack.c.l.b16 %v9873
    %v10009 = vunpack.c.l.b16 %v9874
    %v10010 = vunpack.c.l.b16 %v9875
    %v10011 = vunpack.c.l.b16 %v9876
    %v10012 = vunpack.c.l.b16 %v9877
    %v10013 = vunpack.c.l.b16 %v9878
    %v10014 = vunpack.c.l.b16 %v9879
    %v10015 = vunpack.c.l.b16 %v9880
    %v10016 = vunpack.c.l.b16 %v9881
    %v10017 = vunpack.c.l.b16 %v9882
    %v10018 = vunpack.c.l.b16 %v9883
    %v10019 = vunpack.c.l.b16 %v9884
    %v10020 = vunpack.c.l.b16 %v9885
    %v10021 = vunpack.c.l.b16 %v9886
    %v10022 = vunpack.c.l.b16 %v9887
    %v10023 = vunpack.c.l.b16 %v9888
    %v10024 = vunpack.c.l.b16 %v9889
    %v10025 = vunpack.c.l.b16 %v9890
    %v10026 = vunpack.c.l.b16 %v9891
    %v10027 = vunpack.c.l.b16 %v9892
    %v10028 = vunpack.c.l.b16 %v9893
    %v10029 = vunpack.c.l.b16 %v9894
    %v10030 = vunpack.c.l.b16 %v9895
    %v10031 = vunpack.c.l.b16 %v9896
    %v10032 = vunpack.c.l.b16 %v9897
    %v10033 = vunpack.c.l.b16 %v9898
    %v10034 = vunpack.c.l.b16 %v9899
    %v10035 = vunpack.c.l.b16 %v9900
    %v10036 = vunpack.c.l.b16 %v9901
    %v10037 = vunpack.c.l.b16 %v9902
    %v10038 = vunpack.c.l.b16 %v9903
    %v10039 = vunpack.c.l.b16 %v9904
    %v10040 = vunpack.c.l.b16 %v9905
    %v10041 = vunpack.c.l.b16 %v9906
    %v10042 = vunpack.c.l.b16 %v9907
    %v10043 = vunpack.c.l.b16 %v9908
    %v10044 = vunpack.c.l.b16 %v9909
    %v10045 = vunpack.c.l.b16 %v9910
    %v10046 = vunpack.c.l.b16 %v9911
    %v10047 = vunpack.c.l.b16 %v9912
    %v10048 = vunpack.c.l.b16 %v9913
    %v10049 = vunpack.c.l.b16 %v9914
    %v10050 = vunpack.c.l.b16 %v9915
    %v10051 = vunpack.c.l.b16 %v9916
    %v10052 = vunpack.c.l.b16 %v9917
    %v10053 = vunpack.c.l.b16 %v9918
    %v10054 = vunpack.c.l.b16 %v9919
    %v10055 = vunpack.c.l.b16 %v9920
    %v10056 = vunpack.c.l.b16 %v9921
    %v10057 = vunpack.c.l.b16 %v9922
    %v10058 = vunpack.c.l.b16 %v9923
    %v10059 = vunpack.c.l.b16 %v9924
    %v10060 = vunpack.c.l.b16 %v9925
    %v10061 = vunpack.c.l.b16 %v9926
    %v10062 = vunpack.c.l.b16 %v9927
    %v10063 = vpack.c.b16 %v10000, %v9999
    %v10064 = vpack.c.b16 %v10002, %v10001
    %v10065 = vpack.c.b16 %v10004, %v10003
    %v10066 = vpack.c.b16 %v10006, %v10005
    %v10067 = vpack.c.b16 %v10008, %v10007
    %v10068 = vpack.c.b16 %v10010, %v10009
    %v10069 = vpack.c.b16 %v10012, %v10011
    %v10070 = vpack.c.b16 %v10014, %v10013
    %v10071 = vpack.c.b16 %v10016, %v10015
    %v10072 = vpack.c.b16 %v10018, %v10017
    %v10073 = vpack.c.b16 %v10020, %v10019
    %v10074 = vpack.c.b16 %v10022, %v10021
    %v10075 = vpack.c.b16 %v10024, %v10023
    %v10076 = vpack.c.b16 %v10026, %v10025
    %v10077 = vpack.c.b16 %v10028, %v10027
    %v10078 = vpack.c.b16 %v10030, %v10029
    %v10079 = vpack.c.b16 %v10032, %v10031
    %v10080 = vpack.c.b16 %v10034, %v10033
    %v10081 = vpack.c.b16 %v10036, %v10035
    %v10082 = vpack.c.b16 %v10038, %v10037
    %v10083 = vpack.c.b16 %v10040, %v10039
    %v10084 = vpack.c.b16 %v10042, %v10041
    %v10085 = vpack.c.b16 %v10044, %v10043
    %v10086 = vpack.c.b16 %v10046, %v10045
    %v10087 = vpack.c.b16 %v10048, %v10047
    %v10088 = vpack.c.b16 %v10050, %v10049
    %v10089 = vpack.c.b16 %v10052, %v10051
    %v10090 = vpack.c.b16 %v10054, %v10053
    %v10091 = vpack.c.b16 %v10056, %v10055
    %v10092 = vpack.c.b16 %v10058, %v10057
    %v10093 = vpack.c.b16 %v10060, %v10059
    %v10094 = vpack.c.b16 %v10062, %v10061
    %10127 = vmatprep.subr.bf16.mxu0 0
    %10128 = vmatpush1.bf16.msra.mxu0 %v10070
    %10129 = vmatprep.subr.bf16.mxu0 0
    %10130 = vmatpush1.bf16.msra.mxu0 %v10069
    %10131 = vmatprep.subr.bf16.mxu0 0
    %10132 = vmatpush1.bf16.msra.mxu0 %v10068
    %10133 = vmatprep.subr.bf16.mxu0 0
    %10134 = vmatpush1.bf16.msra.mxu0 %v10067
    %10135 = vmatprep.subr.bf16.mxu0 0
    %10136 = vmatpush1.bf16.msra.mxu0 %v10066
    %10137 = vmatprep.subr.bf16.mxu0 0
    %10138 = vmatpush1.bf16.msra.mxu0 %v10065
    %10139 = vmatprep.subr.bf16.mxu0 0
    %10140 = vmatpush1.bf16.msra.mxu0 %v10064
    %10141 = vmatprep.subr.bf16.mxu0 0
    %10142 = vmatpush1.bf16.msra.mxu0 %v10063
    %10143 = vmatprep.subr.bf16.mxu0 0
    %10144 = vmatpush2.bf16.msra.mxu0 %v10078
    %10145 = vmatprep.subr.bf16.mxu0 0
    %10146 = vmatpush2.bf16.msra.mxu0 %v10077
    %10147 = vmatprep.subr.bf16.mxu0 0
    %10148 = vmatpush2.bf16.msra.mxu0 %v10076
    %10149 = vmatprep.subr.bf16.mxu0 0
    %10150 = vmatpush2.bf16.msra.mxu0 %v10075
    %10151 = vmatprep.subr.bf16.mxu0 0
    %10152 = vmatpush2.bf16.msra.mxu0 %v10074
    %10153 = vmatprep.subr.bf16.mxu0 0
    %10154 = vmatpush2.bf16.msra.mxu0 %v10073
    %10155 = vmatprep.subr.bf16.mxu0 0
    %10156 = vmatpush2.bf16.msra.mxu0 %v10072
    %10157 = vmatprep.subr.bf16.mxu0 0
    %10158 = vmatpush2.bf16.msra.mxu0 %v10071
    %10159 = vmatprep.mubr.bf16.mxu0 %v9861
    %10160 = vmatmul.mubr.bf16.gmra.mxu0 %v9860
    %v10161 = vpop.f32.mrf.mxu0
    %v10162 = vadd.f32 %v9933, %v10161
    %v10163 = vpop.f32.mrf.mxu0
    %v10164 = vpop.f32.mrf.mxu0
    %v10165 = vpop.f32.mrf.mxu0
    %10166 = vdwg.mxu0
    %10167 = vmatprep.subr.bf16.mxu0 0
    %10168 = vmatpush1.bf16.msra.mxu0 %v10086
    %10169 = vmatprep.subr.bf16.mxu0 0
    %10170 = vmatpush1.bf16.msra.mxu0 %v10085
    %10171 = vmatprep.subr.bf16.mxu0 0
    %10172 = vmatpush1.bf16.msra.mxu0 %v10084
    %10173 = vmatprep.subr.bf16.mxu0 0
    %10174 = vmatpush1.bf16.msra.mxu0 %v10083
    %10175 = vmatprep.subr.bf16.mxu0 0
    %10176 = vmatpush1.bf16.msra.mxu0 %v10082
    %10177 = vmatprep.subr.bf16.mxu0 0
    %10178 = vmatpush1.bf16.msra.mxu0 %v10081
    %10179 = vmatprep.subr.bf16.mxu0 0
    %10180 = vmatpush1.bf16.msra.mxu0 %v10080
    %10181 = vmatprep.subr.bf16.mxu0 0
    %10182 = vmatpush1.bf16.msra.mxu0 %v10079
    %10183 = vmatprep.subr.bf16.mxu0 0
    %10184 = vmatpush2.bf16.msra.mxu0 %v10094
    %10185 = vmatprep.subr.bf16.mxu0 0
    %10186 = vmatpush2.bf16.msra.mxu0 %v10093
    %10187 = vmatprep.subr.bf16.mxu0 0
    %10188 = vmatpush2.bf16.msra.mxu0 %v10092
    %10189 = vmatprep.subr.bf16.mxu0 0
    %10190 = vmatpush2.bf16.msra.mxu0 %v10091
    %10191 = vmatprep.subr.bf16.mxu0 0
    %10192 = vmatpush2.bf16.msra.mxu0 %v10090
    %10193 = vmatprep.subr.bf16.mxu0 0
    %10194 = vmatpush2.bf16.msra.mxu0 %v10089
    %10195 = vmatprep.subr.bf16.mxu0 0
    %10196 = vmatpush2.bf16.msra.mxu0 %v10088
    %10197 = vmatprep.subr.bf16.mxu0 0
    %10198 = vmatpush2.bf16.msra.mxu0 %v10087
    %10199 = vmatprep.mubr.bf16.mxu0 %v9863
    %10200 = vmatmul.mubr.bf16.gmra.mxu0 %v9862
    %v10201 = vpop.f32.mrf.mxu0
    %v10202 = vadd.f32 %v10162, %v10201
    %v10203 = vpop.f32.mrf.mxu0
    %v10204 = vpop.f32.mrf.mxu0
    %v10205 = vpop.f32.mrf.mxu0
    %10206 = vdwg.mxu0
    %10207 = vst [vmem:[#allocation3] sm:$0x3] %v10202
    // Predicated region
    $region54: #{predictor_rnd_forward.1} parent=1 // pred_check
      _
    $region55: #{predictor_rnd_forward.1} parent=1 // pred_check_branch
      %10209 = sbr.rel (0) target = $region57
    $region56: #{predictor_rnd_forward.1} parent=1 // pred_region
      %s10211 = ssub.s32 32, 32
      %10212 = vsyncadd [#allocation4], %s10211
      %s10214 = sshll.u32 [#allocation3], 4
      %s10215 = int_to_ptr.vmem [resolvable:$true] %s10214
      %10217 = dma.vmem_to_hbm [thread:$0]  %s10215, 32, %s13, [#allocation4]
    $region57: #{predictor_rnd_forward.1} parent=1 // pred_fallthru
      _
    // Predicated region
    $region58: #{predictor_rnd_forward.1} parent=1 // pred_check
      _
    $region59: #{predictor_rnd_forward.1} parent=1 // pred_check_branch
      %10219 = sbr.rel (0) target = $region61
    $region60: #{predictor_rnd_forward.1} parent=1 // pred_region
      %10220 = dma.done [#allocation4], 32
    $region61: #{predictor_rnd_forward.1} parent=1 // pred_fallthru
      _
    %10221 = vsyncpa [#allocation4], 1

</llo_original>
